<compile_context>
chip_gen: v7x
topology: tpu7x:2x2x1
jax: 0.10.0
libtpu: 0.0.40
codegen_flags: <defaults>
</compile_context>

<pallas_src>
import jax
import jax.numpy as jnp
from jax.experimental import pallas as pl
from jax.experimental.pallas import tpu as pltpu

NEG_SLOPE = 0.01  # nn.LeakyReLU default
BN_EPS = 1e-5     # nn.BatchNorm1d default

# Channel sizes of the 5 Conv1d(kernel_size=1) layers.
CHANNELS = [3, 64, 64, 64, 128, 1024]


def _leaky_relu(x):
    # mul + max (2 VALU ops) instead of cmp + mul + select (3 ops).
    return jnp.maximum(x, NEG_SLOPE * x)


def point_encoder_kernel(x_ref, w1_ref, w2_ref, w3_ref, w4_ref, w5_ref, o_ref):
    """One grid step: a (3, tm) channel-major tile of points through all 5 layers.

    Weights are BN-folded and bias-augmented (homogeneous trick), so each layer
    is a single MXU matmul followed by LeakyReLU — no separate bias-add pass.
    """
    tm = x_ref.shape[-1]
    ones = jnp.ones((1, tm), jnp.bfloat16)
    h = jnp.concatenate([x_ref[...].astype(jnp.bfloat16), ones], axis=0)   # (4, tm)
    for w_ref in (w1_ref, w2_ref, w3_ref, w4_ref):
        # (cout+1, cin+1) @ (cin+1, tm) -> (cout+1, tm); last row stays exactly 1.
        h = _leaky_relu(jnp.dot(w_ref[...], h, preferred_element_type=jnp.float32))
        h = h.astype(jnp.bfloat16)
    # Final layer: (1024, 129) @ (129, tm) -> (1024, tm), f32 epilogue,
    # single cast at the store (v5e-friendly).
    out = _leaky_relu(jnp.dot(w5_ref[...], h, preferred_element_type=jnp.float32))
    o_ref[...] = out.astype(o_ref.dtype)


def fold_bn_params(params):
    """Fold eval-mode BatchNorm into the conv weights, then fold the bias in too.

    params[i] = (w (cout, cin), b (cout,), gamma, beta, running_mean, running_var).

    Returns a list of 5 bf16 augmented weights:
      * every layer: last column is the BN-folded bias,
      * every layer except the last: an extra [0 .. 0 1] output row so the
        constant-ones activation row propagates through the whole stack.
    Shapes: (65,4), (65,65), (65,65), (129,65), (1024,129).
    """
    n = len(params)
    aug = []
    for i, (w, b, gamma, beta, mean, var) in enumerate(params):
        scale = gamma / jnp.sqrt(var + BN_EPS)                 # (cout,)
        w_f = w * scale[:, None]                               # (cout, cin)
        b_f = (b - mean) * scale + beta                        # (cout,)
        cout, cin = w_f.shape
        w_aug = jnp.concatenate([w_f, b_f[:, None]], axis=1)   # (cout, cin+1)
        if i < n - 1:
            ones_row = jnp.zeros((1, cin + 1), w_aug.dtype).at[0, cin].set(1.0)
            w_aug = jnp.concatenate([w_aug, ones_row], axis=0)  # (cout+1, cin+1)
        aug.append(w_aug.astype(jnp.bfloat16))
    return aug


def _choose_tm(N, L, cap=2048):
    """Largest legal points-tile: divides L, is a multiple of 128 (or == L),
    <= cap, and keeps >= 2 grid steps when possible (v7x has 2 TensorCores)."""
    cands = []
    if L <= cap:
        cands.append(L)                 # tm == L: one contiguous output DMA/step
    t = 128
    while t <= min(L, cap):
        if L % t == 0:
            cands.append(t)
        t += 128
    if not cands:
        return L                        # fallback: single full-length tile
    cands = sorted(set(cands))
    good = [t for t in cands if N * (L // t) >= 2]
    return (good or cands)[-1]


def point_encoder_forward(x_ncl, params, *, tm=None, out_dtype=jnp.bfloat16):
    """x_ncl: (N, 3, L) float32, PyTorch NCL input. Returns (N, 1024, L) out_dtype."""
    N, C_in, L = x_ncl.shape
    assert C_in == CHANNELS[0]
    C_out = CHANNELS[-1]

    if tm is None:
        tm = _choose_tm(N, L)
    assert L % tm == 0, "pad num_points (L) to a multiple of tm"
    assert tm == L or tm % 128 == 0, "tm must be a multiple of 128 (or equal L)"

    aug_w = fold_bn_params(params)
    args = [x_ncl] + list(aug_w)

    io_map = lambda n, j: (n, 0, j)
    const_map = lambda n, j: (0, 0)

    def build(weight_pipeline_mode):
        in_specs = [pl.BlockSpec((None, C_in, tm), io_map)]
        for w in aug_w:
            if weight_pipeline_mode is None:
                in_specs.append(pl.BlockSpec(w.shape, const_map))
            else:
                in_specs.append(pl.BlockSpec(w.shape, const_map,
                                             pipeline_mode=weight_pipeline_mode))
        return pl.pallas_call(
            point_encoder_kernel,
            out_shape=jax.ShapeDtypeStruct((N, C_out, L), out_dtype),
            grid=(N, L // tm),
            in_specs=in_specs,
            out_specs=pl.BlockSpec((None, C_out, tm), io_map),
            compiler_params=pltpu.CompilerParams(
                dimension_semantics=("parallel", "parallel"),
                vmem_limit_bytes=48 * 1024 * 1024,
            ),
        )

    try:
        # Grid-invariant weights: single-buffer them (double-buffering constants
        # only wastes VMEM/pipeline machinery; matters most on v7x's 64 MiB).
        return build(pl.Buffered(1))(*args)
    except Exception:
        # Portability fallback if this JAX build rejects single-buffered specs.
        return build(None)(*args)


def init_params(key):
    """Deterministic synthetic parameters matching the PyTorch module's shapes."""
    params = []
    for i in range(5):
        cin, cout = CHANNELS[i], CHANNELS[i + 1]
        key, kw, kb, kg, kbe, km, kv = jax.random.split(key, 7)
        # Conv1d weight is (cout, cin, 1) in torch; we store (cout, cin).
        w = jax.random.normal(kw, (cout, cin), jnp.float32) * (1.0 / jnp.sqrt(cin))
        b = jax.random.normal(kb, (cout,), jnp.float32) * 0.01
        gamma = 1.0 + 0.1 * jax.random.normal(kg, (cout,), jnp.float32)
        beta = 0.1 * jax.random.normal(kbe, (cout,), jnp.float32)
        mean = 0.1 * jax.random.normal(km, (cout,), jnp.float32)
        var = jnp.abs(jax.random.normal(kv, (cout,), jnp.float32)) + 0.5
        params.append((w, b, gamma, beta, mean, var))
    return params


def reference_forward_f32(x_ncl, params):
    """Pure-JAX f32 reference with PyTorch eval-mode BN semantics (unfolded)."""
    N, C, L = x_ncl.shape
    h = jnp.transpose(x_ncl, (0, 2, 1)).reshape(N * L, C)
    for (w, b, gamma, beta, mean, var) in params:
        h = h @ w.T + b
        h = gamma * (h - mean) / jnp.sqrt(var + BN_EPS) + beta
        h = jnp.where(h > 0, h, NEG_SLOPE * h)
    return jnp.transpose(h.reshape(N, L, -1), (0, 2, 1))


def reference_forward_kernel_math(x_ncl, aug_w, out_dtype):
    """Pure-JAX reference mirroring the kernel math exactly
    (bf16 augmented weights/activations, f32 accumulation, homogeneous bias)."""
    N, C, L = x_ncl.shape
    h = jnp.concatenate(
        [x_ncl.astype(jnp.bfloat16), jnp.ones((N, 1, L), jnp.bfloat16)], axis=1)
    n = len(aug_w)
    for i, w in enumerate(aug_w):
        out = _leaky_relu(
            jnp.einsum("oc,ncl->nol", w, h, preferred_element_type=jnp.float32))
        h = out.astype(jnp.bfloat16) if i < n - 1 else out
    return h.astype(out_dtype)


if __name__ == "__main__":
    key = jax.random.PRNGKey(0)
    kx, kp = jax.random.split(key)

    N, L = 2, 256                        # small: 2 point clouds, 256 points each
    x = jax.random.normal(kx, (N, 3, L), jnp.float32)
    params = init_params(kp)

    y = point_encoder_forward(x, params)          # bf16 out, tm auto -> L = 256
    y = jax.block_until_ready(y)
    assert y.shape == (N, 1024, L), y.shape
    assert y.dtype == jnp.bfloat16, y.dtype

    # Tight check: identical folded/bias-augmented bf16 math in pure JAX
    # (validates layout, BN fold, and the homogeneous bias trick).
    aug_w = fold_bn_params(params)
    y_tight = reference_forward_kernel_math(x, aug_w, jnp.bfloat16)
    yf = y.astype(jnp.float32)
    tf = y_tight.astype(jnp.float32)
    err_tight = float(jnp.max(jnp.abs(yf - tf)))
    assert jnp.allclose(yf, tf, atol=1e-2, rtol=2e-2), err_tight

    # Loose sanity check against the pure-f32 PyTorch-semantics reference
    # (slack accounts for bf16 weights/activations/bias/output quantization).
    y_ref = reference_forward_f32(x, params)
    err_loose = float(jnp.max(jnp.abs(yf - y_ref)))
    assert jnp.allclose(yf, y_ref, atol=2e-1, rtol=2e-1), err_loose

    print("KERNEL_OK")
</pallas_src>

<mosaic_0001>
module attributes {stable_mosaic.version = 11 : i64} {
  func.func @point_encoder_kernel(%arg0: i32, %arg1: i32, %arg2: memref<1x3x256xf32, #tpu.memory_space<vmem>>, %arg3: memref<65x4xbf16, #tpu.memory_space<vmem>>, %arg4: memref<65x65xbf16, #tpu.memory_space<vmem>>, %arg5: memref<65x65xbf16, #tpu.memory_space<vmem>>, %arg6: memref<129x65xbf16, #tpu.memory_space<vmem>>, %arg7: memref<1024x129xbf16, #tpu.memory_space<vmem>>, %arg8: memref<1x1024x256xbf16, #tpu.memory_space<vmem>>) attributes {dimension_semantics = [#tpu.dimension_semantics<parallel>, #tpu.dimension_semantics<parallel>], iteration_bounds = array<i64: 2, 1>, scalar_prefetch = 0 : i64, scratch_operands = 0 : i64, tpu.core_type = #tpu.core_type<tc>, window_params = [{transform_indices = @transform_0, window_bounds = array<i64: 1, 3, 256>}, {pipeline_mode = #tpu.pipeline_mode<synchronous>, transform_indices = @transform_1, window_bounds = array<i64: 65, 4>}, {pipeline_mode = #tpu.pipeline_mode<synchronous>, transform_indices = @transform_2, window_bounds = array<i64: 65, 65>}, {pipeline_mode = #tpu.pipeline_mode<synchronous>, transform_indices = @transform_3, window_bounds = array<i64: 65, 65>}, {pipeline_mode = #tpu.pipeline_mode<synchronous>, transform_indices = @transform_4, window_bounds = array<i64: 129, 65>}, {pipeline_mode = #tpu.pipeline_mode<synchronous>, transform_indices = @transform_5, window_bounds = array<i64: 1024, 129>}, {transform_indices = @transform_6, window_bounds = array<i64: 1, 1024, 256>}]} {
    %cst = arith.constant 1.000000e+00 : bf16
    %0 = vector.broadcast %cst : bf16 to vector<1x256xbf16>
    %c0 = arith.constant 0 : index
    %c0_0 = arith.constant 0 : index
    %c0_1 = arith.constant 0 : index
    %1 = vector.load %arg2[%c0, %c0_0, %c0_1] : memref<1x3x256xf32, #tpu.memory_space<vmem>>, vector<1x3x256xf32>
    %2 = vector.shape_cast %1 : vector<1x3x256xf32> to vector<3x256xf32>
    %3 = arith.truncf %2 : vector<3x256xf32> to vector<3x256xbf16>
    %4 = tpu.concatenate %3, %0 in 0 : vector<3x256xbf16>, vector<1x256xbf16> -> vector<4x256xbf16>
    %c0_2 = arith.constant 0 : index
    %c0_3 = arith.constant 0 : index
    %5 = vector.load %arg3[%c0_2, %c0_3] : memref<65x4xbf16, #tpu.memory_space<vmem>>, vector<65x4xbf16>
    %cst_4 = arith.constant dense<0.000000e+00> : vector<65x256xf32>
    %6 = tpu.matmul %5, %4, %cst_4 {dimension_numbers = #tpu.dot_dimension_numbers<[1], [0], [0], [1], [0, 0, 1, 1], [], []>} : vector<65x4xbf16>, vector<4x256xbf16>, vector<65x256xf32> -> vector<65x256xf32>
    %cst_5 = arith.constant 0.00999999977 : f32
    %7 = vector.broadcast %cst_5 : f32 to vector<65x256xf32>
    %8 = arith.mulf %7, %6 : vector<65x256xf32>
    %9 = arith.maximumf %6, %8 : vector<65x256xf32>
    %10 = arith.truncf %9 : vector<65x256xf32> to vector<65x256xbf16>
    %c0_6 = arith.constant 0 : index
    %c0_7 = arith.constant 0 : index
    %11 = vector.load %arg4[%c0_6, %c0_7] : memref<65x65xbf16, #tpu.memory_space<vmem>>, vector<65x65xbf16>
    %cst_8 = arith.constant dense<0.000000e+00> : vector<65x256xf32>
    %12 = tpu.matmul %11, %10, %cst_8 {dimension_numbers = #tpu.dot_dimension_numbers<[1], [0], [0], [1], [0, 0, 1, 1], [], []>} : vector<65x65xbf16>, vector<65x256xbf16>, vector<65x256xf32> -> vector<65x256xf32>
    %cst_9 = arith.constant 0.00999999977 : f32
    %13 = vector.broadcast %cst_9 : f32 to vector<65x256xf32>
    %14 = arith.mulf %13, %12 : vector<65x256xf32>
    %15 = arith.maximumf %12, %14 : vector<65x256xf32>
    %16 = arith.truncf %15 : vector<65x256xf32> to vector<65x256xbf16>
    %c0_10 = arith.constant 0 : index
    %c0_11 = arith.constant 0 : index
    %17 = vector.load %arg5[%c0_10, %c0_11] : memref<65x65xbf16, #tpu.memory_space<vmem>>, vector<65x65xbf16>
    %cst_12 = arith.constant dense<0.000000e+00> : vector<65x256xf32>
    %18 = tpu.matmul %17, %16, %cst_12 {dimension_numbers = #tpu.dot_dimension_numbers<[1], [0], [0], [1], [0, 0, 1, 1], [], []>} : vector<65x65xbf16>, vector<65x256xbf16>, vector<65x256xf32> -> vector<65x256xf32>
    %cst_13 = arith.constant 0.00999999977 : f32
    %19 = vector.broadcast %cst_13 : f32 to vector<65x256xf32>
    %20 = arith.mulf %19, %18 : vector<65x256xf32>
    %21 = arith.maximumf %18, %20 : vector<65x256xf32>
    %22 = arith.truncf %21 : vector<65x256xf32> to vector<65x256xbf16>
    %c0_14 = arith.constant 0 : index
    %c0_15 = arith.constant 0 : index
    %23 = vector.load %arg6[%c0_14, %c0_15] : memref<129x65xbf16, #tpu.memory_space<vmem>>, vector<129x65xbf16>
    %cst_16 = arith.constant dense<0.000000e+00> : vector<129x256xf32>
    %24 = tpu.matmul %23, %22, %cst_16 {dimension_numbers = #tpu.dot_dimension_numbers<[1], [0], [0], [1], [0, 0, 1, 1], [], []>} : vector<129x65xbf16>, vector<65x256xbf16>, vector<129x256xf32> -> vector<129x256xf32>
    %cst_17 = arith.constant 0.00999999977 : f32
    %25 = vector.broadcast %cst_17 : f32 to vector<129x256xf32>
    %26 = arith.mulf %25, %24 : vector<129x256xf32>
    %27 = arith.maximumf %24, %26 : vector<129x256xf32>
    %28 = arith.truncf %27 : vector<129x256xf32> to vector<129x256xbf16>
    %c0_18 = arith.constant 0 : index
    %c0_19 = arith.constant 0 : index
    %29 = vector.load %arg7[%c0_18, %c0_19] : memref<1024x129xbf16, #tpu.memory_space<vmem>>, vector<1024x129xbf16>
    %cst_20 = arith.constant dense<0.000000e+00> : vector<1024x256xf32>
    %30 = tpu.matmul %29, %28, %cst_20 {dimension_numbers = #tpu.dot_dimension_numbers<[1], [0], [0], [1], [0, 0, 1, 1], [], []>} : vector<1024x129xbf16>, vector<129x256xbf16>, vector<1024x256xf32> -> vector<1024x256xf32>
    %cst_21 = arith.constant 0.00999999977 : f32
    %31 = vector.broadcast %cst_21 : f32 to vector<1024x256xf32>
    %32 = arith.mulf %31, %30 : vector<1024x256xf32>
    %33 = arith.maximumf %30, %32 : vector<1024x256xf32>
    %34 = arith.truncf %33 : vector<1024x256xf32> to vector<1024x256xbf16>
    %c0_22 = arith.constant 0 : index
    %c0_23 = arith.constant 0 : index
    %c0_24 = arith.constant 0 : index
    %35 = vector.load %arg8[%c0_22, %c0_23, %c0_24] : memref<1x1024x256xbf16, #tpu.memory_space<vmem>>, vector<1x1024x256xbf16>
    %36 = vector.shape_cast %35 : vector<1x1024x256xbf16> to vector<1024x256xbf16>
    %37 = vector.shape_cast %34 : vector<1024x256xbf16> to vector<1x1024x256xbf16>
    tpu.vector_store %arg8[%c0_22, %c0_23, %c0_24], %37 {strides = array<i32>} : memref<1x1024x256xbf16, #tpu.memory_space<vmem>>, vector<1x1024x256xbf16>,
    return
  }
  func.func @transform_0(%arg0: i32, %arg1: i32) -> (i32, i32, i32) {
    %c0_i32 = arith.constant 0 : i32
    %c0_i32_0 = arith.constant 0 : i32
    return %arg0, %c0_i32, %arg1 : i32, i32, i32
  }
  func.func @transform_1(%arg0: i32, %arg1: i32) -> (i32, i32) {
    %c0_i32 = arith.constant 0 : i32
    %c0_i32_0 = arith.constant 0 : i32
    %c0_i32_1 = arith.constant 0 : i32
    return %c0_i32, %c0_i32_0 : i32, i32
  }
  func.func @transform_2(%arg0: i32, %arg1: i32) -> (i32, i32) {
    %c0_i32 = arith.constant 0 : i32
    %c0_i32_0 = arith.constant 0 : i32
    %c0_i32_1 = arith.constant 0 : i32
    return %c0_i32, %c0_i32_0 : i32, i32
  }
  func.func @transform_3(%arg0: i32, %arg1: i32) -> (i32, i32) {
    %c0_i32 = arith.constant 0 : i32
    %c0_i32_0 = arith.constant 0 : i32
    %c0_i32_1 = arith.constant 0 : i32
    return %c0_i32, %c0_i32_0 : i32, i32
  }
  func.func @transform_4(%arg0: i32, %arg1: i32) -> (i32, i32) {
    %c0_i32 = arith.constant 0 : i32
    %c0_i32_0 = arith.constant 0 : i32
    %c0_i32_1 = arith.constant 0 : i32
    return %c0_i32, %c0_i32_0 : i32, i32
  }
  func.func @transform_5(%arg0: i32, %arg1: i32) -> (i32, i32) {
    %c0_i32 = arith.constant 0 : i32
    %c0_i32_0 = arith.constant 0 : i32
    %c0_i32_1 = arith.constant 0 : i32
    return %c0_i32, %c0_i32_0 : i32, i32
  }
  func.func @transform_6(%arg0: i32, %arg1: i32) -> (i32, i32, i32) {
    %c0_i32 = arith.constant 0 : i32
    %c0_i32_0 = arith.constant 0 : i32
    return %arg0, %c0_i32, %arg1 : i32, i32, i32
  }
}

module attributes {stable_mosaic.version = 11 : i64} {
  func.func @point_encoder_kernel(%arg0: i32, %arg1: i32, %arg2: memref<1x3x256xf32, #tpu.memory_space<vmem>>, %arg3: memref<65x4xbf16, #tpu.memory_space<vmem>>, %arg4: memref<65x65xbf16, #tpu.memory_space<vmem>>, %arg5: memref<65x65xbf16, #tpu.memory_space<vmem>>, %arg6: memref<129x65xbf16, #tpu.memory_space<vmem>>, %arg7: memref<1024x129xbf16, #tpu.memory_space<vmem>>, %arg8: memref<1x1024x256xbf16, #tpu.memory_space<vmem>>) attributes {dimension_semantics = [#tpu.dimension_semantics<parallel>, #tpu.dimension_semantics<parallel>], iteration_bounds = array<i64: 2, 1>, scalar_prefetch = 0 : i64, scratch_operands = 0 : i64, tpu.core_type = #tpu.core_type<tc>, window_params = [{transform_indices = @transform_0, window_bounds = array<i64: 1, 3, 256>}, {pipeline_mode = #tpu.pipeline_mode<synchronous>, transform_indices = @transform_1, window_bounds = array<i64: 65, 4>}, {pipeline_mode = #tpu.pipeline_mode<synchronous>, transform_indices = @transform_2, window_bounds = array<i64: 65, 65>}, {pipeline_mode = #tpu.pipeline_mode<synchronous>, transform_indices = @transform_3, window_bounds = array<i64: 65, 65>}, {pipeline_mode = #tpu.pipeline_mode<synchronous>, transform_indices = @transform_4, window_bounds = array<i64: 129, 65>}, {pipeline_mode = #tpu.pipeline_mode<synchronous>, transform_indices = @transform_5, window_bounds = array<i64: 1024, 129>}, {transform_indices = @transform_6, window_bounds = array<i64: 1, 1024, 256>}]} {
    %cst = arith.constant 1.000000e+00 : bf16
    %0 = vector.broadcast %cst : bf16 to vector<1x256xbf16>
    %c0 = arith.constant 0 : index
    %c0_0 = arith.constant 0 : index
    %c0_1 = arith.constant 0 : index
    %1 = vector.load %arg2[%c0, %c0_0, %c0_1] : memref<1x3x256xf32, #tpu.memory_space<vmem>>, vector<1x3x256xf32>
    %2 = vector.shape_cast %1 : vector<1x3x256xf32> to vector<3x256xf32>
    %3 = arith.truncf %2 : vector<3x256xf32> to vector<3x256xbf16>
    %4 = tpu.concatenate %3, %0 in 0 : vector<3x256xbf16>, vector<1x256xbf16> -> vector<4x256xbf16>
    %c0_2 = arith.constant 0 : index
    %c0_3 = arith.constant 0 : index
    %5 = vector.load %arg3[%c0_2, %c0_3] : memref<65x4xbf16, #tpu.memory_space<vmem>>, vector<65x4xbf16>
    %cst_4 = arith.constant dense<0.000000e+00> : vector<65x256xf32>
    %6 = tpu.matmul %5, %4, %cst_4 {dimension_numbers = #tpu.dot_dimension_numbers<[1], [0], [0], [1], [0, 0, 1, 1], [], []>} : vector<65x4xbf16>, vector<4x256xbf16>, vector<65x256xf32> -> vector<65x256xf32>
    %cst_5 = arith.constant 0.00999999977 : f32
    %7 = vector.broadcast %cst_5 : f32 to vector<65x256xf32>
    %8 = arith.mulf %7, %6 : vector<65x256xf32>
    %9 = arith.maximumf %6, %8 : vector<65x256xf32>
    %10 = arith.truncf %9 : vector<65x256xf32> to vector<65x256xbf16>
    %c0_6 = arith.constant 0 : index
    %c0_7 = arith.constant 0 : index
    %11 = vector.load %arg4[%c0_6, %c0_7] : memref<65x65xbf16, #tpu.memory_space<vmem>>, vector<65x65xbf16>
    %cst_8 = arith.constant dense<0.000000e+00> : vector<65x256xf32>
    %12 = tpu.matmul %11, %10, %cst_8 {dimension_numbers = #tpu.dot_dimension_numbers<[1], [0], [0], [1], [0, 0, 1, 1], [], []>} : vector<65x65xbf16>, vector<65x256xbf16>, vector<65x256xf32> -> vector<65x256xf32>
    %cst_9 = arith.constant 0.00999999977 : f32
    %13 = vector.broadcast %cst_9 : f32 to vector<65x256xf32>
    %14 = arith.mulf %13, %12 : vector<65x256xf32>
    %15 = arith.maximumf %12, %14 : vector<65x256xf32>
    %16 = arith.truncf %15 : vector<65x256xf32> to vector<65x256xbf16>
    %c0_10 = arith.constant 0 : index
    %c0_11 = arith.constant 0 : index
    %17 = vector.load %arg5[%c0_10, %c0_11] : memref<65x65xbf16, #tpu.memory_space<vmem>>, vector<65x65xbf16>
    %cst_12 = arith.constant dense<0.000000e+00> : vector<65x256xf32>
    %18 = tpu.matmul %17, %16, %cst_12 {dimension_numbers = #tpu.dot_dimension_numbers<[1], [0], [0], [1], [0, 0, 1, 1], [], []>} : vector<65x65xbf16>, vector<65x256xbf16>, vector<65x256xf32> -> vector<65x256xf32>
    %cst_13 = arith.constant 0.00999999977 : f32
    %19 = vector.broadcast %cst_13 : f32 to vector<65x256xf32>
    %20 = arith.mulf %19, %18 : vector<65x256xf32>
    %21 = arith.maximumf %18, %20 : vector<65x256xf32>
    %22 = arith.truncf %21 : vector<65x256xf32> to vector<65x256xbf16>
    %c0_14 = arith.constant 0 : index
    %c0_15 = arith.constant 0 : index
    %23 = vector.load %arg6[%c0_14, %c0_15] : memref<129x65xbf16, #tpu.memory_space<vmem>>, vector<129x65xbf16>
    %cst_16 = arith.constant dense<0.000000e+00> : vector<129x256xf32>
    %24 = tpu.matmul %23, %22, %cst_16 {dimension_numbers = #tpu.dot_dimension_numbers<[1], [0], [0], [1], [0, 0, 1, 1], [], []>} : vector<129x65xbf16>, vector<65x256xbf16>, vector<129x256xf32> -> vector<129x256xf32>
    %cst_17 = arith.constant 0.00999999977 : f32
    %25 = vector.broadcast %cst_17 : f32 to vector<129x256xf32>
    %26 = arith.mulf %25, %24 : vector<129x256xf32>
    %27 = arith.maximumf %24, %26 : vector<129x256xf32>
    %28 = arith.truncf %27 : vector<129x256xf32> to vector<129x256xbf16>
    %c0_18 = arith.constant 0 : index
    %c0_19 = arith.constant 0 : index
    %29 = vector.load %arg7[%c0_18, %c0_19] : memref<1024x129xbf16, #tpu.memory_space<vmem>>, vector<1024x129xbf16>
    %cst_20 = arith.constant dense<0.000000e+00> : vector<1024x256xf32>
    %30 = tpu.matmul %29, %28, %cst_20 {dimension_numbers = #tpu.dot_dimension_numbers<[1], [0], [0], [1], [0, 0, 1, 1], [], []>} : vector<1024x129xbf16>, vector<129x256xbf16>, vector<1024x256xf32> -> vector<1024x256xf32>
    %cst_21 = arith.constant 0.00999999977 : f32
    %31 = vector.broadcast %cst_21 : f32 to vector<1024x256xf32>
    %32 = arith.mulf %31, %30 : vector<1024x256xf32>
    %33 = arith.maximumf %30, %32 : vector<1024x256xf32>
    %34 = arith.truncf %33 : vector<1024x256xf32> to vector<1024x256xbf16>
    %c0_22 = arith.constant 0 : index
    %c0_23 = arith.constant 0 : index
    %c0_24 = arith.constant 0 : index
    %35 = vector.load %arg8[%c0_22, %c0_23, %c0_24] : memref<1x1024x256xbf16, #tpu.memory_space<vmem>>, vector<1x1024x256xbf16>
    %36 = vector.shape_cast %35 : vector<1x1024x256xbf16> to vector<1024x256xbf16>
    %37 = vector.shape_cast %34 : vector<1024x256xbf16> to vector<1x1024x256xbf16>
    tpu.vector_store %arg8[%c0_22, %c0_23, %c0_24], %37 {strides = array<i32>} : memref<1x1024x256xbf16, #tpu.memory_space<vmem>>, vector<1x1024x256xbf16>,
    return
  }
  func.func @transform_0(%arg0: i32, %arg1: i32) -> (i32, i32, i32) {
    %c0_i32 = arith.constant 0 : i32
    %c0_i32_0 = arith.constant 0 : i32
    return %arg0, %c0_i32, %arg1 : i32, i32, i32
  }
  func.func @transform_1(%arg0: i32, %arg1: i32) -> (i32, i32) {
    %c0_i32 = arith.constant 0 : i32
    %c0_i32_0 = arith.constant 0 : i32
    %c0_i32_1 = arith.constant 0 : i32
    return %c0_i32, %c0_i32_0 : i32, i32
  }
  func.func @transform_2(%arg0: i32, %arg1: i32) -> (i32, i32) {
    %c0_i32 = arith.constant 0 : i32
    %c0_i32_0 = arith.constant 0 : i32
    %c0_i32_1 = arith.constant 0 : i32
    return %c0_i32, %c0_i32_0 : i32, i32
  }
  func.func @transform_3(%arg0: i32, %arg1: i32) -> (i32, i32) {
    %c0_i32 = arith.constant 0 : i32
    %c0_i32_0 = arith.constant 0 : i32
    %c0_i32_1 = arith.constant 0 : i32
    return %c0_i32, %c0_i32_0 : i32, i32
  }
  func.func @transform_4(%arg0: i32, %arg1: i32) -> (i32, i32) {
    %c0_i32 = arith.constant 0 : i32
    %c0_i32_0 = arith.constant 0 : i32
    %c0_i32_1 = arith.constant 0 : i32
    return %c0_i32, %c0_i32_0 : i32, i32
  }
  func.func @transform_5(%arg0: i32, %arg1: i32) -> (i32, i32) {
    %c0_i32 = arith.constant 0 : i32
    %c0_i32_0 = arith.constant 0 : i32
    %c0_i32_1 = arith.constant 0 : i32
    return %c0_i32, %c0_i32_0 : i32, i32
  }
  func.func @transform_6(%arg0: i32, %arg1: i32) -> (i32, i32, i32) {
    %c0_i32 = arith.constant 0 : i32
    %c0_i32_0 = arith.constant 0 : i32
    return %arg0, %c0_i32, %arg1 : i32, i32, i32
  }
}

</mosaic_0001>

<llo_original>
// kernel: tpu_custom_call.1
$region0: #{tpu_custom_call.1}
  #allocation0 [shape = 'u32[]', space=smem, size = 0x4, offset = 0x4, fixed_abs, tag = 'smem constant byte address 0x4 - core index']
  #allocation1 [shape = 'u32[144,128]{1,0:T(1,128)}', space=vmem, size = 0x12000, scoped, tag = 'internal scratch']
  %s0 = inlined_call_operand.vmem [shape: f32[2,3,256], index: 0, kind: input, shape index: {}]
  %s1 = inlined_call_operand.vmem [shape: bf16[65,4], index: 1, kind: input, shape index: {}]
  %s2 = inlined_call_operand.vmem [shape: bf16[65,65], index: 2, kind: input, shape index: {}]
  %s3 = inlined_call_operand.vmem [shape: bf16[65,65], index: 3, kind: input, shape index: {}]
  %s4 = inlined_call_operand.vmem [shape: bf16[129,65], index: 4, kind: input, shape index: {}]
  %s5 = inlined_call_operand.vmem [shape: bf16[1024,129], index: 5, kind: input, shape index: {}]
  %s6 = inlined_call_operand.hbm [shape: bf16[2,1024,256], index: 6, kind: output, shape index: {}]
  %s7 = sld [smem:[#allocation0]]
  $region57: #{tpu_custom_call.1} parent=0
    _
  %s9 = ssub.s32 1, %s7
  %s10 = scalar_select 0, %s9, %s7
  $region1: #{tpu_custom_call.1} parent=0
    #allocation2 [shape = 'u8[1048576]{0}', space=vmem, size = 0x100000, scoped, tag = 'output window, operand 0']
    #allocation3 [shape = 's32[2]{0}', space=sflag, size = 0x8, scoped, tag = 'scoped memory for tpu_custom_call.1']
    %11 = vsyncpa [#allocation3], 0
    %s12 = scalar_lea.sflag [#allocation3], 1
    %13 = vsyncpa %s12, 0
    loop: start=0, step=1, limit=4
    $region2: #{tpu_custom_call.1} parent=1 // loop_pre_header
      _
    $region3: #{tpu_custom_call.1} parent=1 // loop_header
      %s15 = sphi 0, %s19
      %p16 = scmp.ge.s32.totalorder %s15, 4
      %s22 = sphi 0, %s34
      %s23 = sphi 0, %s30
      %s24 = sphi 0, %s22
      %s25 = sphi 0, %s23
      %s26 = sphi 0, %s24
      %s27 = sphi 0, %s25
      %s39 = sphi 0, %s41
      %s42 = sphi 0, %s39
      %s43 = sphi 0, %s42
      %s59 = sphi 0, %s43
      %s63 = sphi 0, %s63
      %s65 = sphi 0, %s63
      %s66 = sphi 0, %s65
      %s80 = sphi 0, %s66
      %s84 = sphi 0, %s84
      %s86 = sphi 0, %s84
      %s87 = sphi 0, %s86
      %s101 = sphi 0, %s87
      %s105 = sphi 0, %s105
      %s107 = sphi 0, %s105
      %s108 = sphi 0, %s107
      %s122 = sphi 0, %s108
      %s126 = sphi 0, %s126
      %s128 = sphi 0, %s126
      %s129 = sphi 0, %s128
      %s143 = sphi 0, %s129
      %s147 = sphi 0, %s147
      %s149 = sphi 0, %s147
      %s150 = sphi 0, %s149
      %s164 = sphi 0, %s150
      %s172 = sphi 0, %s174
      %s175 = sphi 0, %s172
      %s176 = sphi 0, %s175
      %s192 = sphi 0, %s176
    $region4: #{tpu_custom_call.1} parent=1 // loop_header_branch
      %18 = sbr.rel (%p16) target = $region8
    $region5: #{tpu_custom_call.1} parent=1 // loop_body
      %s20 = ssub.s32 %s15, 1
      %s21 = ssub.s32 %s15, 2
      %s28 = sadd.s32 1, %s23
      %p29 = scmp.ge.s32.totalorder %s28, 1
      %s30 = scalar_select %p29, 0, %s28
      %s31 = sadd.s32 1, %s22
      %s32 = scalar_select %p29, %s31, %s22
      %p33 = scmp.ge.s32.totalorder %s32, 2
      %s34 = scalar_select %p33, 0, %s32
      %s35 = ssub.s32 %s22, %s34
      %s36 = ssub.s32 %s23, %s30
      %s37 = sor.u32 %s35, %s36
      %p38 = scmp.eq.s32.totalorder %s37, 0
      %s40 = sadd.s32 %s39, 1
      %s41 = scalar_select %p38, %s39, %s40
      %p44 = pneg %p38
      %p45 = scmp.eq.s32.totalorder %s15, 1
      %p46 = por %p44, %p45
      %p47 = scmp.ne.s32.totalorder %s39, %s42
      %p48 = scmp.eq.s32.totalorder %s15, 0
      %p49 = por %p47, %p48
      %p50 = scmp.ne.s32.totalorder %s39, %s42
      %p51 = scmp.eq.s32.totalorder %s20, 1
      %p52 = por %p50, %p51
      %p53 = scmp.ne.s32.totalorder %s42, %s43
      %p54 = scmp.eq.s32.totalorder %s20, 0
      %p55 = por %p53, %p54
      %p56 = scmp.ne.s32.totalorder %s42, %s43
      %p57 = scmp.eq.s32.totalorder %s21, 1
      %p58 = por %p56, %p57
      %p60 = scmp.ne.s32.totalorder %s43, %s59
      %p61 = scmp.eq.s32.totalorder %s21, 0
      %p62 = por %p60, %p61
      %s64 = sadd.s32 %s63, 1
      %p67 = scmp.eq.s32.totalorder %s15, 1
      %p68 = scmp.ne.s32.totalorder %s63, %s65
      %p69 = scmp.eq.s32.totalorder %s15, 0
      %p70 = por %p68, %p69
      %p71 = scmp.ne.s32.totalorder %s63, %s65
      %p72 = scmp.eq.s32.totalorder %s20, 1
      %p73 = por %p71, %p72
      %p74 = scmp.ne.s32.totalorder %s65, %s66
      %p75 = scmp.eq.s32.totalorder %s20, 0
      %p76 = por %p74, %p75
      %p77 = scmp.ne.s32.totalorder %s65, %s66
      %p78 = scmp.eq.s32.totalorder %s21, 1
      %p79 = por %p77, %p78
      %p81 = scmp.ne.s32.totalorder %s66, %s80
      %p82 = scmp.eq.s32.totalorder %s21, 0
      %p83 = por %p81, %p82
      %s85 = sadd.s32 %s84, 1
      %p88 = scmp.eq.s32.totalorder %s15, 1
      %p89 = scmp.ne.s32.totalorder %s84, %s86
      %p90 = scmp.eq.s32.totalorder %s15, 0
      %p91 = por %p89, %p90
      %p92 = scmp.ne.s32.totalorder %s84, %s86
      %p93 = scmp.eq.s32.totalorder %s20, 1
      %p94 = por %p92, %p93
      %p95 = scmp.ne.s32.totalorder %s86, %s87
      %p96 = scmp.eq.s32.totalorder %s20, 0
      %p97 = por %p95, %p96
      %p98 = scmp.ne.s32.totalorder %s86, %s87
      %p99 = scmp.eq.s32.totalorder %s21, 1
      %p100 = por %p98, %p99
      %p102 = scmp.ne.s32.totalorder %s87, %s101
      %p103 = scmp.eq.s32.totalorder %s21, 0
      %p104 = por %p102, %p103
      %s106 = sadd.s32 %s105, 1
      %p109 = scmp.eq.s32.totalorder %s15, 1
      %p110 = scmp.ne.s32.totalorder %s105, %s107
      %p111 = scmp.eq.s32.totalorder %s15, 0
      %p112 = por %p110, %p111
      %p113 = scmp.ne.s32.totalorder %s105, %s107
      %p114 = scmp.eq.s32.totalorder %s20, 1
      %p115 = por %p113, %p114
      %p116 = scmp.ne.s32.totalorder %s107, %s108
      %p117 = scmp.eq.s32.totalorder %s20, 0
      %p118 = por %p116, %p117
      %p119 = scmp.ne.s32.totalorder %s107, %s108
      %p120 = scmp.eq.s32.totalorder %s21, 1
      %p121 = por %p119, %p120
      %p123 = scmp.ne.s32.totalorder %s108, %s122
      %p124 = scmp.eq.s32.totalorder %s21, 0
      %p125 = por %p123, %p124
      %s127 = sadd.s32 %s126, 1
      %p130 = scmp.eq.s32.totalorder %s15, 1
      %p131 = scmp.ne.s32.totalorder %s126, %s128
      %p132 = scmp.eq.s32.totalorder %s15, 0
      %p133 = por %p131, %p132
      %p134 = scmp.ne.s32.totalorder %s126, %s128
      %p135 = scmp.eq.s32.totalorder %s20, 1
      %p136 = por %p134, %p135
      %p137 = scmp.ne.s32.totalorder %s128, %s129
      %p138 = scmp.eq.s32.totalorder %s20, 0
      %p139 = por %p137, %p138
      %p140 = scmp.ne.s32.totalorder %s128, %s129
      %p141 = scmp.eq.s32.totalorder %s21, 1
      %p142 = por %p140, %p141
      %p144 = scmp.ne.s32.totalorder %s129, %s143
      %p145 = scmp.eq.s32.totalorder %s21, 0
      %p146 = por %p144, %p145
      %s148 = sadd.s32 %s147, 1
      %p151 = scmp.eq.s32.totalorder %s15, 1
      %p152 = scmp.ne.s32.totalorder %s147, %s149
      %p153 = scmp.eq.s32.totalorder %s15, 0
      %p154 = por %p152, %p153
      %p155 = scmp.ne.s32.totalorder %s147, %s149
      %p156 = scmp.eq.s32.totalorder %s20, 1
      %p157 = por %p155, %p156
      %p158 = scmp.ne.s32.totalorder %s149, %s150
      %p159 = scmp.eq.s32.totalorder %s20, 0
      %p160 = por %p158, %p159
      %p161 = scmp.ne.s32.totalorder %s149, %s150
      %p162 = scmp.eq.s32.totalorder %s21, 1
      %p163 = por %p161, %p162
      %p165 = scmp.ne.s32.totalorder %s150, %s164
      %p166 = scmp.eq.s32.totalorder %s21, 0
      %p167 = por %p165, %p166
      %s168 = ssub.s32 %s22, %s34
      %s169 = ssub.s32 %s23, %s30
      %s170 = sor.u32 %s168, %s169
      %p171 = scmp.eq.s32.totalorder %s170, 0
      %s173 = sadd.s32 %s172, 1
      %s174 = scalar_select %p171, %s172, %s173
      %p177 = pneg %p171
      %p178 = scmp.eq.s32.totalorder %s15, 1
      %p179 = por %p177, %p178
      %p180 = scmp.ne.s32.totalorder %s172, %s175
      %p181 = scmp.eq.s32.totalorder %s15, 0
      %p182 = por %p180, %p181
      %p183 = scmp.ne.s32.totalorder %s172, %s175
      %p184 = scmp.eq.s32.totalorder %s20, 1
      %p185 = por %p183, %p184
      %p186 = scmp.ne.s32.totalorder %s175, %s176
      %p187 = scmp.eq.s32.totalorder %s20, 0
      %p188 = por %p186, %p187
      %p189 = scmp.ne.s32.totalorder %s175, %s176
      %p190 = scmp.eq.s32.totalorder %s21, 1
      %p191 = por %p189, %p190
      %p193 = scmp.ne.s32.totalorder %s176, %s192
      %p194 = scmp.eq.s32.totalorder %s21, 0
      %p195 = por %p193, %p194
      %p196 = scmp.le.s32.totalorder 1, %s15
      %p197 = scmp.lt.s32.totalorder %s15, 3
      %p198 = pnand %p196, %p197
      %p199 = pneg %p198
      // Predicated region
      $region9: #{tpu_custom_call.1} parent=5 // pred_check
        _
      $region10: #{tpu_custom_call.1} parent=5 // pred_check_branch
        %201 = sbr.rel (%p198) target = $region12
      $region11: #{tpu_custom_call.1} parent=5 // pred_region
        %s202 = ssub.s32 %s15, 1
        // Predicated region
        $region13: #{tpu_custom_call.1} parent=11 // pred_check
          %p203 = pneg %p76
        $region14: #{tpu_custom_call.1} parent=11 // pred_check_branch
          %205 = sbr.rel (%p203) target = $region16
        $region15: #{tpu_custom_call.1} parent=11 // pred_region
          _
        $region16: #{tpu_custom_call.1} parent=11 // pred_fallthru
          _
        // Predicated region
        $region17: #{tpu_custom_call.1} parent=11 // pred_check
          %p206 = pneg %p97
        $region18: #{tpu_custom_call.1} parent=11 // pred_check_branch
          %208 = sbr.rel (%p206) target = $region20
        $region19: #{tpu_custom_call.1} parent=11 // pred_region
          _
        $region20: #{tpu_custom_call.1} parent=11 // pred_fallthru
          _
        // Predicated region
        $region21: #{tpu_custom_call.1} parent=11 // pred_check
          %p209 = pneg %p118
        $region22: #{tpu_custom_call.1} parent=11 // pred_check_branch
          %211 = sbr.rel (%p209) target = $region24
        $region23: #{tpu_custom_call.1} parent=11 // pred_region
          _
        $region24: #{tpu_custom_call.1} parent=11 // pred_fallthru
          _
        // Predicated region
        $region25: #{tpu_custom_call.1} parent=11 // pred_check
          %p212 = pneg %p139
        $region26: #{tpu_custom_call.1} parent=11 // pred_check_branch
          %214 = sbr.rel (%p212) target = $region28
        $region27: #{tpu_custom_call.1} parent=11 // pred_region
          _
        $region28: #{tpu_custom_call.1} parent=11 // pred_fallthru
          _
        // Predicated region
        $region29: #{tpu_custom_call.1} parent=11 // pred_check
          %p215 = pneg %p160
        $region30: #{tpu_custom_call.1} parent=11 // pred_check_branch
          %217 = sbr.rel (%p215) target = $region32
        $region31: #{tpu_custom_call.1} parent=11 // pred_region
          _
        $region32: #{tpu_custom_call.1} parent=11 // pred_fallthru
          _
      $region12: #{tpu_custom_call.1} parent=5 // pred_fallthru
        _
      %p218 = scmp.lt.s32.totalorder %s15, 2
      // Predicated region
      $region33: #{tpu_custom_call.1} parent=5 // pred_check
        %p219 = pneg %p218
      $region34: #{tpu_custom_call.1} parent=5 // pred_check_branch
        %221 = sbr.rel (%p219) target = $region36
      $region35: #{tpu_custom_call.1} parent=5 // pred_region
        // Predicated region
        $region37: #{tpu_custom_call.1} parent=35 // pred_check
          %p222 = pneg %p49
        $region38: #{tpu_custom_call.1} parent=35 // pred_check_branch
          %224 = sbr.rel (%p222) target = $region40
        $region39: #{tpu_custom_call.1} parent=35 // pred_region
          %s225 = smul.u32 2, %s23
          %p226 = scmp.lt.s32.totalorder %s22, 1
          %s227 = scalar_select %p226, %s22, 1
          %p228 = scmp.lt.s32.totalorder %s225, 1
          %s229 = scalar_select %p228, %s225, 1
          %s230 = smul.addr %s227, 2
          %s231 = sadd.s32 %s229, %s230
          %s232 = smul.addr %s231, 4
          %s233 = scalar_lea.vmem %s0, %s232
          %s234 = smul.u32 2, %s23
        $region40: #{tpu_custom_call.1} parent=35 // pred_fallthru
          _
      $region36: #{tpu_custom_call.1} parent=5 // pred_fallthru
        _
      %p235 = scmp.le.s32.totalorder 1, %s15
      %p236 = scmp.lt.s32.totalorder %s15, 3
      %p237 = pnand %p235, %p236
      %p238 = pneg %p237
      // Predicated region
      $region41: #{tpu_custom_call.1} parent=5 // pred_check
        _
      $region42: #{tpu_custom_call.1} parent=5 // pred_check_branch
        %240 = sbr.rel (%p237) target = $region44
      $region43: #{tpu_custom_call.1} parent=5 // pred_region
        %s241 = ssub.s32 %s15, 1
        %s242 = smul.u32 2, %s25
        %p243 = scmp.lt.s32.totalorder %s24, 1
        %s244 = scalar_select %p243, %s24, 1
        %p245 = scmp.lt.s32.totalorder %s242, 1
        %s246 = scalar_select %p245, %s242, 1
        %s247 = smul.addr %s244, 2
        %s248 = sadd.s32 %s246, %s247
        %s249 = smul.addr %s248, 4
        %s250 = scalar_lea.vmem %s0, %s249
        %p251 = pneg %p55
        %p252 = pneg %p52
        %p253 = pneg %p76
        %p254 = pneg %p73
        %p255 = pneg %p97
        %p256 = pneg %p94
        %p257 = pneg %p118
        %p258 = pneg %p115
        %p259 = pneg %p139
        %p260 = pneg %p136
        %p261 = pneg %p160
        %p262 = pneg %p157
        %p263 = pneg %p188
        %p264 = pneg %p185
        %s265 = sand.u32 %s175, 1
        %s266 = scalar_lea.sflag [#allocation3], %s265
        %s267 = sand.u32 %s175, 1
        %s268 = smul.addr %s267, 1024
        %s269 = scalar_lea.vmem [#allocation2], %s268
        %s270 = smul.u32 2, %s25
        %p271 = scmp.lt.s32.totalorder %s24, 1
        %s272 = scalar_select %p271, %s24, 1
        %p273 = scmp.lt.s32.totalorder %s270, 1
        %s274 = scalar_select %p273, %s270, 1
        %s275 = smul.addr %s272, 2
        %s276 = sadd.s32 %s274, %s275
        %s277 = smul.addr %s276, 4
        %s278 = scalar_lea.vmem %s0, %s277
        %s279 = smul.u32 2, %s25
        %s280 = smul.u32 2, %s25
        %v283 = vld [vmem:[%s278] sm:$0x77]
        %v285 = vcombine.high %v283, %v283
        %v287 = vpack.c.bf16 %v283, %v283
        %v288 = vpack.c.bf16 %v285, %v285
        %vm289 = vcmask 1041408
        %vm290 = vsmask.f32 1280
        %vm291 = vmand %vm289, %vm290
        %v292 = vsel %vm291, %v287, 1065369472
        %v293 = vsel %vm291, %v288, 1065369472
        %v294 = vld [vmem:[%s1] sm:$0xf]
        %v295 = vld [vmem:[%s1 + $0x4] sm:$0xf]
        %v296 = vld [vmem:[%s1 + $0x8] sm:$0xf]
        %v297 = vld [vmem:[%s1 + $0xc] sm:$0xf]
        %v298 = vld [vmem:[%s1 + $0x10] sm:$0xf]
        %v299 = vld [vmem:[%s1 + $0x14] sm:$0xf]
        %v300 = vld [vmem:[%s1 + $0x18] sm:$0xf]
        %v301 = vld [vmem:[%s1 + $0x1c] sm:$0xf]
        %v302 = vld [vmem:[%s1 + $0x20] sm:$0x1]
        %v312 = vunpack.c.l.b16 %v294
        %v313 = vunpack.c.l.b16 %v295
        %v314 = vunpack.c.l.b16 %v296
        %v315 = vunpack.c.l.b16 %v297
        %v316 = vunpack.c.l.b16 %v298
        %v317 = vunpack.c.l.b16 %v299
        %v318 = vunpack.c.l.b16 %v300
        %v319 = vunpack.c.l.b16 %v301
        %v320 = vunpack.c.l.b16 %v302
        %v321 = vpack.c.b16 %v313, %v312
        %v322 = vpack.c.b16 %v315, %v314
        %v323 = vpack.c.b16 %v317, %v316
        %v324 = vpack.c.b16 %v319, %v318
        %v325 = vpack.c.b16 %v320, %v320
        %vm326 = vcmask 31744
        %v328 = vsel %vm326, %v321, 0
        %v331 = vsel %vm326, %v322, 0
        %v334 = vsel %vm326, %v323, 0
        %v337 = vsel %vm326, %v324, 0
        %v340 = vsel %vm326, %v325, 0
        %vm342 = vcmask 1041408
        %v344 = vsel %vm342, %v292, 0
        %v347 = vsel %vm342, %v293, 0
        %349 = vmatprep.subr.bf16.mxu0 %v347
        %350 = vmatpush1.bf16.msra.mxu0 %v344
        %351 = vmatprep.subr.bf16.mxu0 0
        %352 = vmatpush1.bf16.msra.mxu0 0
        %353 = vmatprep.subr.bf16.mxu0 0
        %354 = vmatpush1.bf16.msra.mxu0 0
        %355 = vmatprep.subr.bf16.mxu0 0
        %356 = vmatpush1.bf16.msra.mxu0 0
        %357 = vmatprep.subr.bf16.mxu0 0
        %358 = vmatpush1.bf16.msra.mxu0 0
        %359 = vmatprep.subr.bf16.mxu0 0
        %360 = vmatpush1.bf16.msra.mxu0 0
        %361 = vmatprep.subr.bf16.mxu0 0
        %362 = vmatpush1.bf16.msra.mxu0 0
        %363 = vmatprep.subr.bf16.mxu0 0
        %364 = vmatpush1.bf16.msra.mxu0 0
        %365 = vmatprep.subr.bf16.mxu0 0
        %366 = vmatpush1.bf16.msra.mxu0 0
        %367 = vmatprep.subr.bf16.mxu0 0
        %368 = vmatpush1.bf16.msra.mxu0 0
        %369 = vmatprep.subr.bf16.mxu0 0
        %370 = vmatpush1.bf16.msra.mxu0 0
        %371 = vmatprep.subr.bf16.mxu0 0
        %372 = vmatpush1.bf16.msra.mxu0 0
        %373 = vmatprep.subr.bf16.mxu0 0
        %374 = vmatpush1.bf16.msra.mxu0 0
        %375 = vmatprep.subr.bf16.mxu0 0
        %376 = vmatpush1.bf16.msra.mxu0 0
        %377 = vmatprep.subr.bf16.mxu0 0
        %378 = vmatpush1.bf16.msra.mxu0 0
        %379 = vmatprep.subr.bf16.mxu0 0
        %380 = vmatpush1.bf16.msra.mxu0 0
        %381 = vmatprep.mubr.bf16.mxu0 0
        %382 = vmatmul.mubr.bf16.gmra.mrb[0].mxu0 %v328
        %v383 = vpop.f32.mrb[0].mxu0
        %v384 = vadd.f32 0.0, %v383
        %v385 = vpop.f32.mrb[0].mxu0
        %v386 = vadd.f32 0.0, %v385
        %v387 = vpop.f32.mrb[0].mxu0
        %v388 = vadd.f32 0.0, %v387
        %v389 = vpop.f32.mrb[0].mxu0
        %v390 = vadd.f32 0.0, %v389
        %391 = vmatprep.mubr.bf16.mxu0 0
        %392 = vmatmul.mubr.bf16.gmra.mrb[0].mxu0 %v331
        %v393 = vpop.f32.mrb[0].mxu0
        %v394 = vadd.f32 0.0, %v393
        %v395 = vpop.f32.mrb[0].mxu0
        %v396 = vadd.f32 0.0, %v395
        %v397 = vpop.f32.mrb[0].mxu0
        %v398 = vadd.f32 0.0, %v397
        %v399 = vpop.f32.mrb[0].mxu0
        %v400 = vadd.f32 0.0, %v399
        %401 = vmatprep.mubr.bf16.mxu0 0
        %402 = vmatmul.mubr.bf16.gmra.mrb[0].mxu0 %v334
        %v403 = vpop.f32.mrb[0].mxu0
        %v404 = vadd.f32 0.0, %v403
        %v405 = vpop.f32.mrb[0].mxu0
        %v406 = vadd.f32 0.0, %v405
        %v407 = vpop.f32.mrb[0].mxu0
        %v408 = vadd.f32 0.0, %v407
        %v409 = vpop.f32.mrb[0].mxu0
        %v410 = vadd.f32 0.0, %v409
        %411 = vmatprep.mubr.bf16.mxu0 0
        %412 = vmatmul.mubr.bf16.gmra.mrb[0].mxu0 %v337
        %v413 = vpop.f32.mrb[0].mxu0
        %v414 = vadd.f32 0.0, %v413
        %v415 = vpop.f32.mrb[0].mxu0
        %v416 = vadd.f32 0.0, %v415
        %v417 = vpop.f32.mrb[0].mxu0
        %v418 = vadd.f32 0.0, %v417
        %v419 = vpop.f32.mrb[0].mxu0
        %v420 = vadd.f32 0.0, %v419
        %421 = vmatprep.mubr.bf16.mxu0 0
        %422 = vmatmul.mubr.bf16.gmra.mrb[0].mxu0 %v340
        %v423 = vpop.f32.mrb[0].mxu0
        %v424 = vadd.f32 0.0, %v423
        %v425 = vpop.f32.mrb[0].mxu0
        %v426 = vadd.f32 0.0, %v425
        %v427 = vpop.f32.mrb[0].mxu0
        %v428 = vpop.f32.mrb[0].mxu0
        %429 = vdwg.mxu0
        %v430 = vmul.f32 %v384, 0.01
        %v431 = vmul.f32 %v386, 0.01
        %v432 = vmul.f32 %v388, 0.01
        %v433 = vmul.f32 %v390, 0.01
        %v434 = vmul.f32 %v394, 0.01
        %v435 = vmul.f32 %v396, 0.01
        %v436 = vmul.f32 %v398, 0.01
        %v437 = vmul.f32 %v400, 0.01
        %v438 = vmul.f32 %v404, 0.01
        %v439 = vmul.f32 %v406, 0.01
        %v440 = vmul.f32 %v408, 0.01
        %v441 = vmul.f32 %v410, 0.01
        %v442 = vmul.f32 %v414, 0.01
        %v443 = vmul.f32 %v416, 0.01
        %v444 = vmul.f32 %v418, 0.01
        %v445 = vmul.f32 %v420, 0.01
        %v446 = vmul.f32 %v424, 0.01
        %v447 = vmul.f32 %v426, 0.01
        %v448 = vmax.f32 %v384, %v430
        %v449 = vmax.f32 %v386, %v431
        %v450 = vmax.f32 %v388, %v432
        %v451 = vmax.f32 %v390, %v433
        %v452 = vmax.f32 %v394, %v434
        %v453 = vmax.f32 %v396, %v435
        %v454 = vmax.f32 %v398, %v436
        %v455 = vmax.f32 %v400, %v437
        %v456 = vmax.f32 %v404, %v438
        %v457 = vmax.f32 %v406, %v439
        %v458 = vmax.f32 %v408, %v440
        %v459 = vmax.f32 %v410, %v441
        %v460 = vmax.f32 %v414, %v442
        %v461 = vmax.f32 %v416, %v443
        %v462 = vmax.f32 %v418, %v444
        %v463 = vmax.f32 %v420, %v445
        %v464 = vmax.f32 %v424, %v446
        %v465 = vmax.f32 %v426, %v447
        %v466 = vpack.c.bf16 %v450, %v448
        %v467 = vpack.c.bf16 %v451, %v449
        %v468 = vpack.c.bf16 %v454, %v452
        %v469 = vpack.c.bf16 %v455, %v453
        %v470 = vpack.c.bf16 %v458, %v456
        %v471 = vpack.c.bf16 %v459, %v457
        %v472 = vpack.c.bf16 %v462, %v460
        %v473 = vpack.c.bf16 %v463, %v461
        %v474 = vpack.c.bf16 %v464, %v464
        %v475 = vpack.c.bf16 %v465, %v465
        %v476 = vld [vmem:[%s2] sm:$0xf]
        %v477 = vld [vmem:[%s2 + $0x4] sm:$0xf]
        %v478 = vld [vmem:[%s2 + $0x8] sm:$0xf]
        %v479 = vld [vmem:[%s2 + $0xc] sm:$0xf]
        %v480 = vld [vmem:[%s2 + $0x10] sm:$0xf]
        %v481 = vld [vmem:[%s2 + $0x14] sm:$0xf]
        %v482 = vld [vmem:[%s2 + $0x18] sm:$0xf]
        %v483 = vld [vmem:[%s2 + $0x1c] sm:$0xf]
        %v484 = vld [vmem:[%s2 + $0x20] sm:$0x1]
        %v494 = vunpack.c.l.b16 %v476
        %v495 = vunpack.c.l.b16 %v477
        %v496 = vunpack.c.l.b16 %v478
        %v497 = vunpack.c.l.b16 %v479
        %v498 = vunpack.c.l.b16 %v480
        %v499 = vunpack.c.l.b16 %v481
        %v500 = vunpack.c.l.b16 %v482
        %v501 = vunpack.c.l.b16 %v483
        %v502 = vunpack.c.l.b16 %v484
        %v503 = vpack.c.b16 %v495, %v494
        %v504 = vpack.c.b16 %v497, %v496
        %v505 = vpack.c.b16 %v499, %v498
        %v506 = vpack.c.b16 %v501, %v500
        %v507 = vpack.c.b16 %v502, %v502
        %vm508 = vcmask 531456
        %v510 = vsel %vm508, %v503, 0
        %v513 = vsel %vm508, %v504, 0
        %v516 = vsel %vm508, %v505, 0
        %v519 = vsel %vm508, %v506, 0
        %v522 = vsel %vm508, %v507, 0
        %vm524 = vcmask 1040384
        %v525 = vsel 0, 4294967295, 65535
        %v526 = vsel %vm524, %v525, 0
        %v528 = vand.u32 %v474, %v526
        %v531 = vand.u32 %v475, %v526
        %533 = vmatprep.subr.bf16.mxu0 %v467
        %534 = vmatpush1.bf16.msra.mxu0 %v466
        %535 = vmatprep.subr.bf16.mxu0 %v469
        %536 = vmatpush1.bf16.msra.mxu0 %v468
        %537 = vmatprep.subr.bf16.mxu0 %v471
        %538 = vmatpush1.bf16.msra.mxu0 %v470
        %539 = vmatprep.subr.bf16.mxu0 %v473
        %540 = vmatpush1.bf16.msra.mxu0 %v472
        %541 = vmatprep.subr.bf16.mxu0 %v531
        %542 = vmatpush1.bf16.msra.mxu0 %v528
        %543 = vmatprep.subr.bf16.mxu0 0
        %544 = vmatpush1.bf16.msra.mxu0 0
        %545 = vmatprep.subr.bf16.mxu0 0
        %546 = vmatpush1.bf16.msra.mxu0 0
        %547 = vmatprep.subr.bf16.mxu0 0
        %548 = vmatpush1.bf16.msra.mxu0 0
        %549 = vmatprep.subr.bf16.mxu0 0
        %550 = vmatpush1.bf16.msra.mxu0 0
        %551 = vmatprep.subr.bf16.mxu0 0
        %552 = vmatpush1.bf16.msra.mxu0 0
        %553 = vmatprep.subr.bf16.mxu0 0
        %554 = vmatpush1.bf16.msra.mxu0 0
        %555 = vmatprep.subr.bf16.mxu0 0
        %556 = vmatpush1.bf16.msra.mxu0 0
        %557 = vmatprep.subr.bf16.mxu0 0
        %558 = vmatpush1.bf16.msra.mxu0 0
        %559 = vmatprep.subr.bf16.mxu0 0
        %560 = vmatpush1.bf16.msra.mxu0 0
        %561 = vmatprep.subr.bf16.mxu0 0
        %562 = vmatpush1.bf16.msra.mxu0 0
        %563 = vmatprep.subr.bf16.mxu0 0
        %564 = vmatpush1.bf16.msra.mxu0 0
        %565 = vmatprep.mubr.bf16.mxu0 0
        %566 = vmatmul.mubr.bf16.gmra.mrb[0].mxu0 %v510
        %v567 = vpop.f32.mrb[0].mxu0
        %v568 = vadd.f32 0.0, %v567
        %v569 = vpop.f32.mrb[0].mxu0
        %v570 = vadd.f32 0.0, %v569
        %v571 = vpop.f32.mrb[0].mxu0
        %v572 = vadd.f32 0.0, %v571
        %v573 = vpop.f32.mrb[0].mxu0
        %v574 = vadd.f32 0.0, %v573
        %575 = vmatprep.mubr.bf16.mxu0 0
        %576 = vmatmul.mubr.bf16.gmra.mrb[0].mxu0 %v513
        %v577 = vpop.f32.mrb[0].mxu0
        %v578 = vadd.f32 0.0, %v577
        %v579 = vpop.f32.mrb[0].mxu0
        %v580 = vadd.f32 0.0, %v579
        %v581 = vpop.f32.mrb[0].mxu0
        %v582 = vadd.f32 0.0, %v581
        %v583 = vpop.f32.mrb[0].mxu0
        %v584 = vadd.f32 0.0, %v583
        %585 = vmatprep.mubr.bf16.mxu0 0
        %586 = vmatmul.mubr.bf16.gmra.mrb[0].mxu0 %v516
        %v587 = vpop.f32.mrb[0].mxu0
        %v588 = vadd.f32 0.0, %v587
        %v589 = vpop.f32.mrb[0].mxu0
        %v590 = vadd.f32 0.0, %v589
        %v591 = vpop.f32.mrb[0].mxu0
        %v592 = vadd.f32 0.0, %v591
        %v593 = vpop.f32.mrb[0].mxu0
        %v594 = vadd.f32 0.0, %v593
        %595 = vmatprep.mubr.bf16.mxu0 0
        %596 = vmatmul.mubr.bf16.gmra.mrb[0].mxu0 %v519
        %v597 = vpop.f32.mrb[0].mxu0
        %v598 = vadd.f32 0.0, %v597
        %v599 = vpop.f32.mrb[0].mxu0
        %v600 = vadd.f32 0.0, %v599
        %v601 = vpop.f32.mrb[0].mxu0
        %v602 = vadd.f32 0.0, %v601
        %v603 = vpop.f32.mrb[0].mxu0
        %v604 = vadd.f32 0.0, %v603
        %605 = vmatprep.mubr.bf16.mxu0 0
        %606 = vmatmul.mubr.bf16.gmra.mrb[0].mxu0 %v522
        %v607 = vpop.f32.mrb[0].mxu0
        %v608 = vadd.f32 0.0, %v607
        %v609 = vpop.f32.mrb[0].mxu0
        %v610 = vadd.f32 0.0, %v609
        %v611 = vpop.f32.mrb[0].mxu0
        %v612 = vpop.f32.mrb[0].mxu0
        %613 = vdwg.mxu0
        %v614 = vmul.f32 %v568, 0.01
        %v615 = vmul.f32 %v570, 0.01
        %v616 = vmul.f32 %v572, 0.01
        %v617 = vmul.f32 %v574, 0.01
        %v618 = vmul.f32 %v578, 0.01
        %v619 = vmul.f32 %v580, 0.01
        %v620 = vmul.f32 %v582, 0.01
        %v621 = vmul.f32 %v584, 0.01
        %v622 = vmul.f32 %v588, 0.01
        %v623 = vmul.f32 %v590, 0.01
        %v624 = vmul.f32 %v592, 0.01
        %v625 = vmul.f32 %v594, 0.01
        %v626 = vmul.f32 %v598, 0.01
        %v627 = vmul.f32 %v600, 0.01
        %v628 = vmul.f32 %v602, 0.01
        %v629 = vmul.f32 %v604, 0.01
        %v630 = vmul.f32 %v608, 0.01
        %v631 = vmul.f32 %v610, 0.01
        %v632 = vmax.f32 %v568, %v614
        %v633 = vmax.f32 %v570, %v615
        %v634 = vmax.f32 %v572, %v616
        %v635 = vmax.f32 %v574, %v617
        %v636 = vmax.f32 %v578, %v618
        %v637 = vmax.f32 %v580, %v619
        %v638 = vmax.f32 %v582, %v620
        %v639 = vmax.f32 %v584, %v621
        %v640 = vmax.f32 %v588, %v622
        %v641 = vmax.f32 %v590, %v623
        %v642 = vmax.f32 %v592, %v624
        %v643 = vmax.f32 %v594, %v625
        %v644 = vmax.f32 %v598, %v626
        %v645 = vmax.f32 %v600, %v627
        %v646 = vmax.f32 %v602, %v628
        %v647 = vmax.f32 %v604, %v629
        %v648 = vmax.f32 %v608, %v630
        %v649 = vmax.f32 %v610, %v631
        %v650 = vpack.c.bf16 %v634, %v632
        %v651 = vpack.c.bf16 %v635, %v633
        %v652 = vpack.c.bf16 %v638, %v636
        %v653 = vpack.c.bf16 %v639, %v637
        %v654 = vpack.c.bf16 %v642, %v640
        %v655 = vpack.c.bf16 %v643, %v641
        %v656 = vpack.c.bf16 %v646, %v644
        %v657 = vpack.c.bf16 %v647, %v645
        %v658 = vpack.c.bf16 %v648, %v648
        %v659 = vpack.c.bf16 %v649, %v649
        %v660 = vld [vmem:[%s3] sm:$0xf]
        %v661 = vld [vmem:[%s3 + $0x4] sm:$0xf]
        %v662 = vld [vmem:[%s3 + $0x8] sm:$0xf]
        %v663 = vld [vmem:[%s3 + $0xc] sm:$0xf]
        %v664 = vld [vmem:[%s3 + $0x10] sm:$0xf]
        %v665 = vld [vmem:[%s3 + $0x14] sm:$0xf]
        %v666 = vld [vmem:[%s3 + $0x18] sm:$0xf]
        %v667 = vld [vmem:[%s3 + $0x1c] sm:$0xf]
        %v668 = vld [vmem:[%s3 + $0x20] sm:$0x1]
        %v678 = vunpack.c.l.b16 %v660
        %v679 = vunpack.c.l.b16 %v661
        %v680 = vunpack.c.l.b16 %v662
        %v681 = vunpack.c.l.b16 %v663
        %v682 = vunpack.c.l.b16 %v664
        %v683 = vunpack.c.l.b16 %v665
        %v684 = vunpack.c.l.b16 %v666
        %v685 = vunpack.c.l.b16 %v667
        %v686 = vunpack.c.l.b16 %v668
        %v687 = vpack.c.b16 %v679, %v678
        %v688 = vpack.c.b16 %v681, %v680
        %v689 = vpack.c.b16 %v683, %v682
        %v690 = vpack.c.b16 %v685, %v684
        %v691 = vpack.c.b16 %v686, %v686
        %v693 = vsel %vm508, %v687, 0
        %v696 = vsel %vm508, %v688, 0
        %v699 = vsel %vm508, %v689, 0
        %v702 = vsel %vm508, %v690, 0
        %v705 = vsel %vm508, %v691, 0
        %v708 = vand.u32 %v658, %v526
        %v711 = vand.u32 %v659, %v526
        %713 = vmatprep.subr.bf16.mxu0 %v651
        %714 = vmatpush1.bf16.msra.mxu0 %v650
        %715 = vmatprep.subr.bf16.mxu0 %v653
        %716 = vmatpush1.bf16.msra.mxu0 %v652
        %717 = vmatprep.subr.bf16.mxu0 %v655
        %718 = vmatpush1.bf16.msra.mxu0 %v654
        %719 = vmatprep.subr.bf16.mxu0 %v657
        %720 = vmatpush1.bf16.msra.mxu0 %v656
        %721 = vmatprep.subr.bf16.mxu0 %v711
        %722 = vmatpush1.bf16.msra.mxu0 %v708
        %723 = vmatprep.subr.bf16.mxu0 0
        %724 = vmatpush1.bf16.msra.mxu0 0
        %725 = vmatprep.subr.bf16.mxu0 0
        %726 = vmatpush1.bf16.msra.mxu0 0
        %727 = vmatprep.subr.bf16.mxu0 0
        %728 = vmatpush1.bf16.msra.mxu0 0
        %729 = vmatprep.subr.bf16.mxu0 0
        %730 = vmatpush1.bf16.msra.mxu0 0
        %731 = vmatprep.subr.bf16.mxu0 0
        %732 = vmatpush1.bf16.msra.mxu0 0
        %733 = vmatprep.subr.bf16.mxu0 0
        %734 = vmatpush1.bf16.msra.mxu0 0
        %735 = vmatprep.subr.bf16.mxu0 0
        %736 = vmatpush1.bf16.msra.mxu0 0
        %737 = vmatprep.subr.bf16.mxu0 0
        %738 = vmatpush1.bf16.msra.mxu0 0
        %739 = vmatprep.subr.bf16.mxu0 0
        %740 = vmatpush1.bf16.msra.mxu0 0
        %741 = vmatprep.subr.bf16.mxu0 0
        %742 = vmatpush1.bf16.msra.mxu0 0
        %743 = vmatprep.subr.bf16.mxu0 0
        %744 = vmatpush1.bf16.msra.mxu0 0
        %745 = vmatprep.mubr.bf16.mxu0 0
        %746 = vmatmul.mubr.bf16.gmra.mrb[0].mxu0 %v693
        %v747 = vpop.f32.mrb[0].mxu0
        %v748 = vadd.f32 0.0, %v747
        %v749 = vpop.f32.mrb[0].mxu0
        %v750 = vadd.f32 0.0, %v749
        %v751 = vpop.f32.mrb[0].mxu0
        %v752 = vadd.f32 0.0, %v751
        %v753 = vpop.f32.mrb[0].mxu0
        %v754 = vadd.f32 0.0, %v753
        %755 = vmatprep.mubr.bf16.mxu0 0
        %756 = vmatmul.mubr.bf16.gmra.mrb[0].mxu0 %v696
        %v757 = vpop.f32.mrb[0].mxu0
        %v758 = vadd.f32 0.0, %v757
        %v759 = vpop.f32.mrb[0].mxu0
        %v760 = vadd.f32 0.0, %v759
        %v761 = vpop.f32.mrb[0].mxu0
        %v762 = vadd.f32 0.0, %v761
        %v763 = vpop.f32.mrb[0].mxu0
        %v764 = vadd.f32 0.0, %v763
        %765 = vmatprep.mubr.bf16.mxu0 0
        %766 = vmatmul.mubr.bf16.gmra.mrb[0].mxu0 %v699
        %v767 = vpop.f32.mrb[0].mxu0
        %v768 = vadd.f32 0.0, %v767
        %v769 = vpop.f32.mrb[0].mxu0
        %v770 = vadd.f32 0.0, %v769
        %v771 = vpop.f32.mrb[0].mxu0
        %v772 = vadd.f32 0.0, %v771
        %v773 = vpop.f32.mrb[0].mxu0
        %v774 = vadd.f32 0.0, %v773
        %775 = vmatprep.mubr.bf16.mxu0 0
        %776 = vmatmul.mubr.bf16.gmra.mrb[0].mxu0 %v702
        %v777 = vpop.f32.mrb[0].mxu0
        %v778 = vadd.f32 0.0, %v777
        %v779 = vpop.f32.mrb[0].mxu0
        %v780 = vadd.f32 0.0, %v779
        %v781 = vpop.f32.mrb[0].mxu0
        %v782 = vadd.f32 0.0, %v781
        %v783 = vpop.f32.mrb[0].mxu0
        %v784 = vadd.f32 0.0, %v783
        %785 = vmatprep.mubr.bf16.mxu0 0
        %786 = vmatmul.mubr.bf16.gmra.mrb[0].mxu0 %v705
        %v787 = vpop.f32.mrb[0].mxu0
        %v788 = vadd.f32 0.0, %v787
        %v789 = vpop.f32.mrb[0].mxu0
        %v790 = vadd.f32 0.0, %v789
        %v791 = vpop.f32.mrb[0].mxu0
        %v792 = vpop.f32.mrb[0].mxu0
        %793 = vdwg.mxu0
        %v794 = vmul.f32 %v748, 0.01
        %v795 = vmul.f32 %v750, 0.01
        %v796 = vmul.f32 %v752, 0.01
        %v797 = vmul.f32 %v754, 0.01
        %v798 = vmul.f32 %v758, 0.01
        %v799 = vmul.f32 %v760, 0.01
        %v800 = vmul.f32 %v762, 0.01
        %v801 = vmul.f32 %v764, 0.01
        %v802 = vmul.f32 %v768, 0.01
        %v803 = vmul.f32 %v770, 0.01
        %v804 = vmul.f32 %v772, 0.01
        %v805 = vmul.f32 %v774, 0.01
        %v806 = vmul.f32 %v778, 0.01
        %v807 = vmul.f32 %v780, 0.01
        %v808 = vmul.f32 %v782, 0.01
        %v809 = vmul.f32 %v784, 0.01
        %v810 = vmul.f32 %v788, 0.01
        %v811 = vmul.f32 %v790, 0.01
        %v812 = vmax.f32 %v748, %v794
        %v813 = vmax.f32 %v750, %v795
        %v814 = vmax.f32 %v752, %v796
        %v815 = vmax.f32 %v754, %v797
        %v816 = vmax.f32 %v758, %v798
        %v817 = vmax.f32 %v760, %v799
        %v818 = vmax.f32 %v762, %v800
        %v819 = vmax.f32 %v764, %v801
        %v820 = vmax.f32 %v768, %v802
        %v821 = vmax.f32 %v770, %v803
        %v822 = vmax.f32 %v772, %v804
        %v823 = vmax.f32 %v774, %v805
        %v824 = vmax.f32 %v778, %v806
        %v825 = vmax.f32 %v780, %v807
        %v826 = vmax.f32 %v782, %v808
        %v827 = vmax.f32 %v784, %v809
        %v828 = vmax.f32 %v788, %v810
        %v829 = vmax.f32 %v790, %v811
        %v830 = vpack.c.bf16 %v814, %v812
        %v831 = vpack.c.bf16 %v815, %v813
        %v832 = vpack.c.bf16 %v818, %v816
        %v833 = vpack.c.bf16 %v819, %v817
        %v834 = vpack.c.bf16 %v822, %v820
        %v835 = vpack.c.bf16 %v823, %v821
        %v836 = vpack.c.bf16 %v826, %v824
        %v837 = vpack.c.bf16 %v827, %v825
        %v838 = vpack.c.bf16 %v828, %v828
        %v839 = vpack.c.bf16 %v829, %v829
        %v840 = vld [vmem:[%s4] sm:$0xf]
        %v841 = vld [vmem:[%s4 + $0x4] sm:$0xf]
        %v842 = vld [vmem:[%s4 + $0x8] sm:$0xf]
        %v843 = vld [vmem:[%s4 + $0xc] sm:$0xf]
        %v844 = vld [vmem:[%s4 + $0x10] sm:$0xf]
        %v845 = vld [vmem:[%s4 + $0x14] sm:$0xf]
        %v846 = vld [vmem:[%s4 + $0x18] sm:$0xf]
        %v847 = vld [vmem:[%s4 + $0x1c] sm:$0xf]
        %v848 = vld [vmem:[%s4 + $0x20] sm:$0xf]
        %v849 = vld [vmem:[%s4 + $0x24] sm:$0xf]
        %v850 = vld [vmem:[%s4 + $0x28] sm:$0xf]
        %v851 = vld [vmem:[%s4 + $0x2c] sm:$0xf]
        %v852 = vld [vmem:[%s4 + $0x30] sm:$0xf]
        %v853 = vld [vmem:[%s4 + $0x34] sm:$0xf]
        %v854 = vld [vmem:[%s4 + $0x38] sm:$0xf]
        %v855 = vld [vmem:[%s4 + $0x3c] sm:$0xf]
        %v856 = vld [vmem:[%s4 + $0x40] sm:$0x1]
        %v874 = vunpack.c.l.b16 %v840
        %v875 = vunpack.c.l.b16 %v841
        %v876 = vunpack.c.l.b16 %v842
        %v877 = vunpack.c.l.b16 %v843
        %v878 = vunpack.c.l.b16 %v844
        %v879 = vunpack.c.l.b16 %v845
        %v880 = vunpack.c.l.b16 %v846
        %v881 = vunpack.c.l.b16 %v847
        %v882 = vunpack.c.l.b16 %v848
        %v883 = vunpack.c.l.b16 %v849
        %v884 = vunpack.c.l.b16 %v850
        %v885 = vunpack.c.l.b16 %v851
        %v886 = vunpack.c.l.b16 %v852
        %v887 = vunpack.c.l.b16 %v853
        %v888 = vunpack.c.l.b16 %v854
        %v889 = vunpack.c.l.b16 %v855
        %v890 = vunpack.c.l.b16 %v856
        %v891 = vpack.c.b16 %v875, %v874
        %v892 = vpack.c.b16 %v877, %v876
        %v893 = vpack.c.b16 %v879, %v878
        %v894 = vpack.c.b16 %v881, %v880
        %v895 = vpack.c.b16 %v883, %v882
        %v896 = vpack.c.b16 %v885, %v884
        %v897 = vpack.c.b16 %v887, %v886
        %v898 = vpack.c.b16 %v889, %v888
        %v899 = vpack.c.b16 %v890, %v890
        %v901 = vsel %vm508, %v891, 0
        %v904 = vsel %vm508, %v892, 0
        %v907 = vsel %vm508, %v893, 0
        %v910 = vsel %vm508, %v894, 0
        %v913 = vsel %vm508, %v895, 0
        %v916 = vsel %vm508, %v896, 0
        %v919 = vsel %vm508, %v897, 0
        %v922 = vsel %vm508, %v898, 0
        %v925 = vsel %vm508, %v899, 0
        %v928 = vand.u32 %v838, %v526
        %v931 = vand.u32 %v839, %v526
        %933 = vmatprep.subr.bf16.mxu0 %v831
        %934 = vmatpush1.bf16.msra.mxu0 %v830
        %935 = vmatprep.subr.bf16.mxu0 %v833
        %936 = vmatpush1.bf16.msra.mxu0 %v832
        %937 = vmatprep.subr.bf16.mxu0 %v835
        %938 = vmatpush1.bf16.msra.mxu0 %v834
        %939 = vmatprep.subr.bf16.mxu0 %v837
        %940 = vmatpush1.bf16.msra.mxu0 %v836
        %941 = vmatprep.subr.bf16.mxu0 %v931
        %942 = vmatpush1.bf16.msra.mxu0 %v928
        %943 = vmatprep.subr.bf16.mxu0 0
        %944 = vmatpush1.bf16.msra.mxu0 0
        %945 = vmatprep.subr.bf16.mxu0 0
        %946 = vmatpush1.bf16.msra.mxu0 0
        %947 = vmatprep.subr.bf16.mxu0 0
        %948 = vmatpush1.bf16.msra.mxu0 0
        %949 = vmatprep.subr.bf16.mxu0 0
        %950 = vmatpush1.bf16.msra.mxu0 0
        %951 = vmatprep.subr.bf16.mxu0 0
        %952 = vmatpush1.bf16.msra.mxu0 0
        %953 = vmatprep.subr.bf16.mxu0 0
        %954 = vmatpush1.bf16.msra.mxu0 0
        %955 = vmatprep.subr.bf16.mxu0 0
        %956 = vmatpush1.bf16.msra.mxu0 0
        %957 = vmatprep.subr.bf16.mxu0 0
        %958 = vmatpush1.bf16.msra.mxu0 0
        %959 = vmatprep.subr.bf16.mxu0 0
        %960 = vmatpush1.bf16.msra.mxu0 0
        %961 = vmatprep.subr.bf16.mxu0 0
        %962 = vmatpush1.bf16.msra.mxu0 0
        %963 = vmatprep.subr.bf16.mxu0 0
        %964 = vmatpush1.bf16.msra.mxu0 0
        %965 = vmatprep.mubr.bf16.mxu0 0
        %966 = vmatmul.mubr.bf16.gmra.mrb[0].mxu0 %v901
        %v967 = vpop.f32.mrb[0].mxu0
        %v968 = vadd.f32 0.0, %v967
        %v969 = vpop.f32.mrb[0].mxu0
        %v970 = vadd.f32 0.0, %v969
        %v971 = vpop.f32.mrb[0].mxu0
        %v972 = vadd.f32 0.0, %v971
        %v973 = vpop.f32.mrb[0].mxu0
        %v974 = vadd.f32 0.0, %v973
        %975 = vmatprep.mubr.bf16.mxu0 0
        %976 = vmatmul.mubr.bf16.gmra.mrb[0].mxu0 %v904
        %v977 = vpop.f32.mrb[0].mxu0
        %v978 = vadd.f32 0.0, %v977
        %v979 = vpop.f32.mrb[0].mxu0
        %v980 = vadd.f32 0.0, %v979
        %v981 = vpop.f32.mrb[0].mxu0
        %v982 = vadd.f32 0.0, %v981
        %v983 = vpop.f32.mrb[0].mxu0
        %v984 = vadd.f32 0.0, %v983
        %985 = vmatprep.mubr.bf16.mxu0 0
        %986 = vmatmul.mubr.bf16.gmra.mrb[0].mxu0 %v907
        %v987 = vpop.f32.mrb[0].mxu0
        %v988 = vadd.f32 0.0, %v987
        %v989 = vpop.f32.mrb[0].mxu0
        %v990 = vadd.f32 0.0, %v989
        %v991 = vpop.f32.mrb[0].mxu0
        %v992 = vadd.f32 0.0, %v991
        %v993 = vpop.f32.mrb[0].mxu0
        %v994 = vadd.f32 0.0, %v993
        %995 = vmatprep.mubr.bf16.mxu0 0
        %996 = vmatmul.mubr.bf16.gmra.mrb[0].mxu0 %v910
        %v997 = vpop.f32.mrb[0].mxu0
        %v998 = vadd.f32 0.0, %v997
        %v999 = vpop.f32.mrb[0].mxu0
        %v1000 = vadd.f32 0.0, %v999
        %v1001 = vpop.f32.mrb[0].mxu0
        %v1002 = vadd.f32 0.0, %v1001
        %v1003 = vpop.f32.mrb[0].mxu0
        %v1004 = vadd.f32 0.0, %v1003
        %1005 = vmatprep.mubr.bf16.mxu0 0
        %1006 = vmatmul.mubr.bf16.gmra.mrb[0].mxu0 %v913
        %v1007 = vpop.f32.mrb[0].mxu0
        %v1008 = vadd.f32 0.0, %v1007
        %v1009 = vpop.f32.mrb[0].mxu0
        %v1010 = vadd.f32 0.0, %v1009
        %v1011 = vpop.f32.mrb[0].mxu0
        %v1012 = vadd.f32 0.0, %v1011
        %v1013 = vpop.f32.mrb[0].mxu0
        %v1014 = vadd.f32 0.0, %v1013
        %1015 = vmatprep.mubr.bf16.mxu0 0
        %1016 = vmatmul.mubr.bf16.gmra.mrb[0].mxu0 %v916
        %v1017 = vpop.f32.mrb[0].mxu0
        %v1018 = vadd.f32 0.0, %v1017
        %v1019 = vpop.f32.mrb[0].mxu0
        %v1020 = vadd.f32 0.0, %v1019
        %v1021 = vpop.f32.mrb[0].mxu0
        %v1022 = vadd.f32 0.0, %v1021
        %v1023 = vpop.f32.mrb[0].mxu0
        %v1024 = vadd.f32 0.0, %v1023
        %1025 = vmatprep.mubr.bf16.mxu0 0
        %1026 = vmatmul.mubr.bf16.gmra.mrb[0].mxu0 %v919
        %v1027 = vpop.f32.mrb[0].mxu0
        %v1028 = vadd.f32 0.0, %v1027
        %v1029 = vpop.f32.mrb[0].mxu0
        %v1030 = vadd.f32 0.0, %v1029
        %v1031 = vpop.f32.mrb[0].mxu0
        %v1032 = vadd.f32 0.0, %v1031
        %v1033 = vpop.f32.mrb[0].mxu0
        %v1034 = vadd.f32 0.0, %v1033
        %1035 = vmatprep.mubr.bf16.mxu0 0
        %1036 = vmatmul.mubr.bf16.gmra.mrb[0].mxu0 %v922
        %v1037 = vpop.f32.mrb[0].mxu0
        %v1038 = vadd.f32 0.0, %v1037
        %v1039 = vpop.f32.mrb[0].mxu0
        %v1040 = vadd.f32 0.0, %v1039
        %v1041 = vpop.f32.mrb[0].mxu0
        %v1042 = vadd.f32 0.0, %v1041
        %v1043 = vpop.f32.mrb[0].mxu0
        %v1044 = vadd.f32 0.0, %v1043
        %1045 = vmatprep.mubr.bf16.mxu0 0
        %1046 = vmatmul.mubr.bf16.gmra.mrb[0].mxu0 %v925
        %v1047 = vpop.f32.mrb[0].mxu0
        %v1048 = vadd.f32 0.0, %v1047
        %v1049 = vpop.f32.mrb[0].mxu0
        %v1050 = vadd.f32 0.0, %v1049
        %v1051 = vpop.f32.mrb[0].mxu0
        %v1052 = vpop.f32.mrb[0].mxu0
        %1053 = vdwg.mxu0
        %v1054 = vmul.f32 %v968, 0.01
        %v1055 = vmul.f32 %v970, 0.01
        %v1056 = vmul.f32 %v972, 0.01
        %v1057 = vmul.f32 %v974, 0.01
        %v1058 = vmul.f32 %v978, 0.01
        %v1059 = vmul.f32 %v980, 0.01
        %v1060 = vmul.f32 %v982, 0.01
        %v1061 = vmul.f32 %v984, 0.01
        %v1062 = vmul.f32 %v988, 0.01
        %v1063 = vmul.f32 %v990, 0.01
        %v1064 = vmul.f32 %v992, 0.01
        %v1065 = vmul.f32 %v994, 0.01
        %v1066 = vmul.f32 %v998, 0.01
        %v1067 = vmul.f32 %v1000, 0.01
        %v1068 = vmul.f32 %v1002, 0.01
        %v1069 = vmul.f32 %v1004, 0.01
        %v1070 = vmul.f32 %v1008, 0.01
        %v1071 = vmul.f32 %v1010, 0.01
        %v1072 = vmul.f32 %v1012, 0.01
        %v1073 = vmul.f32 %v1014, 0.01
        %v1074 = vmul.f32 %v1018, 0.01
        %v1075 = vmul.f32 %v1020, 0.01
        %v1076 = vmul.f32 %v1022, 0.01
        %v1077 = vmul.f32 %v1024, 0.01
        %v1078 = vmul.f32 %v1028, 0.01
        %v1079 = vmul.f32 %v1030, 0.01
        %v1080 = vmul.f32 %v1032, 0.01
        %v1081 = vmul.f32 %v1034, 0.01
        %v1082 = vmul.f32 %v1038, 0.01
        %v1083 = vmul.f32 %v1040, 0.01
        %v1084 = vmul.f32 %v1042, 0.01
        %v1085 = vmul.f32 %v1044, 0.01
        %v1086 = vmul.f32 %v1048, 0.01
        %v1087 = vmul.f32 %v1050, 0.01
        %v1088 = vmax.f32 %v968, %v1054
        %v1089 = vmax.f32 %v970, %v1055
        %v1090 = vmax.f32 %v972, %v1056
        %v1091 = vmax.f32 %v974, %v1057
        %v1092 = vmax.f32 %v978, %v1058
        %v1093 = vmax.f32 %v980, %v1059
        %v1094 = vmax.f32 %v982, %v1060
        %v1095 = vmax.f32 %v984, %v1061
        %v1096 = vmax.f32 %v988, %v1062
        %v1097 = vmax.f32 %v990, %v1063
        %v1098 = vmax.f32 %v992, %v1064
        %v1099 = vmax.f32 %v994, %v1065
        %v1100 = vmax.f32 %v998, %v1066
        %v1101 = vmax.f32 %v1000, %v1067
        %v1102 = vmax.f32 %v1002, %v1068
        %v1103 = vmax.f32 %v1004, %v1069
        %v1104 = vmax.f32 %v1008, %v1070
        %v1105 = vmax.f32 %v1010, %v1071
        %v1106 = vmax.f32 %v1012, %v1072
        %v1107 = vmax.f32 %v1014, %v1073
        %v1108 = vmax.f32 %v1018, %v1074
        %v1109 = vmax.f32 %v1020, %v1075
        %v1110 = vmax.f32 %v1022, %v1076
        %v1111 = vmax.f32 %v1024, %v1077
        %v1112 = vmax.f32 %v1028, %v1078
        %v1113 = vmax.f32 %v1030, %v1079
        %v1114 = vmax.f32 %v1032, %v1080
        %v1115 = vmax.f32 %v1034, %v1081
        %v1116 = vmax.f32 %v1038, %v1082
        %v1117 = vmax.f32 %v1040, %v1083
        %v1118 = vmax.f32 %v1042, %v1084
        %v1119 = vmax.f32 %v1044, %v1085
        %v1120 = vmax.f32 %v1048, %v1086
        %v1121 = vmax.f32 %v1050, %v1087
        %v1122 = vpack.c.bf16 %v1090, %v1088
        %v1123 = vpack.c.bf16 %v1091, %v1089
        %v1124 = vpack.c.bf16 %v1094, %v1092
        %v1125 = vpack.c.bf16 %v1095, %v1093
        %v1126 = vpack.c.bf16 %v1098, %v1096
        %v1127 = vpack.c.bf16 %v1099, %v1097
        %v1128 = vpack.c.bf16 %v1102, %v1100
        %v1129 = vpack.c.bf16 %v1103, %v1101
        %v1130 = vpack.c.bf16 %v1106, %v1104
        %v1131 = vpack.c.bf16 %v1107, %v1105
        %v1132 = vpack.c.bf16 %v1110, %v1108
        %v1133 = vpack.c.bf16 %v1111, %v1109
        %v1134 = vpack.c.bf16 %v1114, %v1112
        %v1135 = vpack.c.bf16 %v1115, %v1113
        %v1136 = vpack.c.bf16 %v1118, %v1116
        %v1137 = vpack.c.bf16 %v1119, %v1117
        %v1138 = vpack.c.bf16 %v1120, %v1120
        %v1139 = vpack.c.bf16 %v1121, %v1121
        %v1140 = vld [vmem:[%s5] sm:$0xff]
        %v1141 = vld [vmem:[%s5 + $0x8] sm:$0xff]
        %v1142 = vld [vmem:[%s5 + $0x10] sm:$0xff]
        %v1143 = vld [vmem:[%s5 + $0x18] sm:$0xff]
        %v1144 = vld [vmem:[%s5 + $0x20] sm:$0xff]
        %v1145 = vld [vmem:[%s5 + $0x28] sm:$0xff]
        %v1146 = vld [vmem:[%s5 + $0x30] sm:$0xff]
        %v1147 = vld [vmem:[%s5 + $0x38] sm:$0xff]
        %v1148 = vld [vmem:[%s5 + $0x40] sm:$0xff]
        %v1149 = vld [vmem:[%s5 + $0x48] sm:$0xff]
        %v1150 = vld [vmem:[%s5 + $0x50] sm:$0xff]
        %v1151 = vld [vmem:[%s5 + $0x58] sm:$0xff]
        %v1152 = vld [vmem:[%s5 + $0x60] sm:$0xff]
        %v1153 = vld [vmem:[%s5 + $0x68] sm:$0xff]
        %v1154 = vld [vmem:[%s5 + $0x70] sm:$0xff]
        %v1155 = vld [vmem:[%s5 + $0x78] sm:$0xff]
        %v1156 = vld [vmem:[%s5 + $0x80] sm:$0xff]
        %v1157 = vld [vmem:[%s5 + $0x88] sm:$0xff]
        %v1158 = vld [vmem:[%s5 + $0x90] sm:$0xff]
        %v1159 = vld [vmem:[%s5 + $0x98] sm:$0xff]
        %v1160 = vld [vmem:[%s5 + $0xa0] sm:$0xff]
        %v1161 = vld [vmem:[%s5 + $0xa8] sm:$0xff]
        %v1162 = vld [vmem:[%s5 + $0xb0] sm:$0xff]
        %v1163 = vld [vmem:[%s5 + $0xb8] sm:$0xff]
        %v1164 = vld [vmem:[%s5 + $0xc0] sm:$0xff]
        %v1165 = vld [vmem:[%s5 + $0xc8] sm:$0xff]
        %v1166 = vld [vmem:[%s5 + $0xd0] sm:$0xff]
        %v1167 = vld [vmem:[%s5 + $0xd8] sm:$0xff]
        %v1168 = vld [vmem:[%s5 + $0xe0] sm:$0xff]
        %v1169 = vld [vmem:[%s5 + $0xe8] sm:$0xff]
        %v1170 = vld [vmem:[%s5 + $0xf0] sm:$0xff]
        %v1171 = vld [vmem:[%s5 + $0xf8] sm:$0xff]
        %v1172 = vld [vmem:[%s5 + $0x100] sm:$0xff]
        %v1173 = vld [vmem:[%s5 + $0x108] sm:$0xff]
        %v1174 = vld [vmem:[%s5 + $0x110] sm:$0xff]
        %v1175 = vld [vmem:[%s5 + $0x118] sm:$0xff]
        %v1176 = vld [vmem:[%s5 + $0x120] sm:$0xff]
        %v1177 = vld [vmem:[%s5 + $0x128] sm:$0xff]
        %v1178 = vld [vmem:[%s5 + $0x130] sm:$0xff]
        %v1179 = vld [vmem:[%s5 + $0x138] sm:$0xff]
        %v1180 = vld [vmem:[%s5 + $0x140] sm:$0xff]
        %v1181 = vld [vmem:[%s5 + $0x148] sm:$0xff]
        %v1182 = vld [vmem:[%s5 + $0x150] sm:$0xff]
        %v1183 = vld [vmem:[%s5 + $0x158] sm:$0xff]
        %v1184 = vld [vmem:[%s5 + $0x160] sm:$0xff]
        %v1185 = vld [vmem:[%s5 + $0x168] sm:$0xff]
        %v1186 = vld [vmem:[%s5 + $0x170] sm:$0xff]
        %v1187 = vld [vmem:[%s5 + $0x178] sm:$0xff]
        %v1188 = vld [vmem:[%s5 + $0x180] sm:$0xff]
        %v1189 = vld [vmem:[%s5 + $0x188] sm:$0xff]
        %v1190 = vld [vmem:[%s5 + $0x190] sm:$0xff]
        %v1191 = vld [vmem:[%s5 + $0x198] sm:$0xff]
        %v1192 = vld [vmem:[%s5 + $0x1a0] sm:$0xff]
        %v1193 = vld [vmem:[%s5 + $0x1a8] sm:$0xff]
        %v1194 = vld [vmem:[%s5 + $0x1b0] sm:$0xff]
        %v1195 = vld [vmem:[%s5 + $0x1b8] sm:$0xff]
        %v1196 = vld [vmem:[%s5 + $0x1c0] sm:$0xff]
        %v1197 = vld [vmem:[%s5 + $0x1c8] sm:$0xff]
        %v1198 = vld [vmem:[%s5 + $0x1d0] sm:$0xff]
        %v1199 = vld [vmem:[%s5 + $0x1d8] sm:$0xff]
        %v1200 = vld [vmem:[%s5 + $0x1e0] sm:$0xff]
        %v1201 = vld [vmem:[%s5 + $0x1e8] sm:$0xff]
        %v1202 = vld [vmem:[%s5 + $0x1f0] sm:$0xff]
        %v1203 = vld [vmem:[%s5 + $0x1f8] sm:$0xff]
        %v1204 = vld [vmem:[%s5 + $0x200] sm:$0xff]
        %v1205 = vld [vmem:[%s5 + $0x208] sm:$0xff]
        %v1206 = vld [vmem:[%s5 + $0x210] sm:$0xff]
        %v1207 = vld [vmem:[%s5 + $0x218] sm:$0xff]
        %v1208 = vld [vmem:[%s5 + $0x220] sm:$0xff]
        %v1209 = vld [vmem:[%s5 + $0x228] sm:$0xff]
        %v1210 = vld [vmem:[%s5 + $0x230] sm:$0xff]
        %v1211 = vld [vmem:[%s5 + $0x238] sm:$0xff]
        %v1212 = vld [vmem:[%s5 + $0x240] sm:$0xff]
        %v1213 = vld [vmem:[%s5 + $0x248] sm:$0xff]
        %v1214 = vld [vmem:[%s5 + $0x250] sm:$0xff]
        %v1215 = vld [vmem:[%s5 + $0x258] sm:$0xff]
        %v1216 = vld [vmem:[%s5 + $0x260] sm:$0xff]
        %v1217 = vld [vmem:[%s5 + $0x268] sm:$0xff]
        %v1218 = vld [vmem:[%s5 + $0x270] sm:$0xff]
        %v1219 = vld [vmem:[%s5 + $0x278] sm:$0xff]
        %v1220 = vld [vmem:[%s5 + $0x280] sm:$0xff]
        %v1221 = vld [vmem:[%s5 + $0x288] sm:$0xff]
        %v1222 = vld [vmem:[%s5 + $0x290] sm:$0xff]
        %v1223 = vld [vmem:[%s5 + $0x298] sm:$0xff]
        %v1224 = vld [vmem:[%s5 + $0x2a0] sm:$0xff]
        %v1225 = vld [vmem:[%s5 + $0x2a8] sm:$0xff]
        %v1226 = vld [vmem:[%s5 + $0x2b0] sm:$0xff]
        %v1227 = vld [vmem:[%s5 + $0x2b8] sm:$0xff]
        %v1228 = vld [vmem:[%s5 + $0x2c0] sm:$0xff]
        %v1229 = vld [vmem:[%s5 + $0x2c8] sm:$0xff]
        %v1230 = vld [vmem:[%s5 + $0x2d0] sm:$0xff]
        %v1231 = vld [vmem:[%s5 + $0x2d8] sm:$0xff]
        %v1232 = vld [vmem:[%s5 + $0x2e0] sm:$0xff]
        %v1233 = vld [vmem:[%s5 + $0x2e8] sm:$0xff]
        %v1234 = vld [vmem:[%s5 + $0x2f0] sm:$0xff]
        %v1235 = vld [vmem:[%s5 + $0x2f8] sm:$0xff]
        %v1236 = vld [vmem:[%s5 + $0x300] sm:$0xff]
        %v1237 = vld [vmem:[%s5 + $0x308] sm:$0xff]
        %v1238 = vld [vmem:[%s5 + $0x310] sm:$0xff]
        %v1239 = vld [vmem:[%s5 + $0x318] sm:$0xff]
        %v1240 = vld [vmem:[%s5 + $0x320] sm:$0xff]
        %v1241 = vld [vmem:[%s5 + $0x328] sm:$0xff]
        %v1242 = vld [vmem:[%s5 + $0x330] sm:$0xff]
        %v1243 = vld [vmem:[%s5 + $0x338] sm:$0xff]
        %v1244 = vld [vmem:[%s5 + $0x340] sm:$0xff]
        %v1245 = vld [vmem:[%s5 + $0x348] sm:$0xff]
        %v1246 = vld [vmem:[%s5 + $0x350] sm:$0xff]
        %v1247 = vld [vmem:[%s5 + $0x358] sm:$0xff]
        %v1248 = vld [vmem:[%s5 + $0x360] sm:$0xff]
        %v1249 = vld [vmem:[%s5 + $0x368] sm:$0xff]
        %v1250 = vld [vmem:[%s5 + $0x370] sm:$0xff]
        %v1251 = vld [vmem:[%s5 + $0x378] sm:$0xff]
        %v1252 = vld [vmem:[%s5 + $0x380] sm:$0xff]
        %v1253 = vld [vmem:[%s5 + $0x388] sm:$0xff]
        %v1254 = vld [vmem:[%s5 + $0x390] sm:$0xff]
        %v1255 = vld [vmem:[%s5 + $0x398] sm:$0xff]
        %v1256 = vld [vmem:[%s5 + $0x3a0] sm:$0xff]
        %v1257 = vld [vmem:[%s5 + $0x3a8] sm:$0xff]
        %v1258 = vld [vmem:[%s5 + $0x3b0] sm:$0xff]
        %v1259 = vld [vmem:[%s5 + $0x3b8] sm:$0xff]
        %v1260 = vld [vmem:[%s5 + $0x3c0] sm:$0xff]
        %v1261 = vld [vmem:[%s5 + $0x3c8] sm:$0xff]
        %v1262 = vld [vmem:[%s5 + $0x3d0] sm:$0xff]
        %v1263 = vld [vmem:[%s5 + $0x3d8] sm:$0xff]
        %v1264 = vld [vmem:[%s5 + $0x3e0] sm:$0xff]
        %v1265 = vld [vmem:[%s5 + $0x3e8] sm:$0xff]
        %v1266 = vld [vmem:[%s5 + $0x3f0] sm:$0xff]
        %v1267 = vld [vmem:[%s5 + $0x3f8] sm:$0xff]
        %v1396 = vunpack.c.l.b16 %v1140
        %v1397 = vunpack.c.h.b16 %v1140
        %v1398 = vunpack.c.l.b16 %v1141
        %v1399 = vunpack.c.h.b16 %v1141
        %v1400 = vunpack.c.l.b16 %v1142
        %v1401 = vunpack.c.h.b16 %v1142
        %v1402 = vunpack.c.l.b16 %v1143
        %v1403 = vunpack.c.h.b16 %v1143
        %v1404 = vunpack.c.l.b16 %v1144
        %v1405 = vunpack.c.h.b16 %v1144
        %v1406 = vunpack.c.l.b16 %v1145
        %v1407 = vunpack.c.h.b16 %v1145
        %v1408 = vunpack.c.l.b16 %v1146
        %v1409 = vunpack.c.h.b16 %v1146
        %v1410 = vunpack.c.l.b16 %v1147
        %v1411 = vunpack.c.h.b16 %v1147
        %v1412 = vunpack.c.l.b16 %v1148
        %v1413 = vunpack.c.h.b16 %v1148
        %v1414 = vunpack.c.l.b16 %v1149
        %v1415 = vunpack.c.h.b16 %v1149
        %v1416 = vunpack.c.l.b16 %v1150
        %v1417 = vunpack.c.h.b16 %v1150
        %v1418 = vunpack.c.l.b16 %v1151
        %v1419 = vunpack.c.h.b16 %v1151
        %v1420 = vunpack.c.l.b16 %v1152
        %v1421 = vunpack.c.h.b16 %v1152
        %v1422 = vunpack.c.l.b16 %v1153
        %v1423 = vunpack.c.h.b16 %v1153
        %v1424 = vunpack.c.l.b16 %v1154
        %v1425 = vunpack.c.h.b16 %v1154
        %v1426 = vunpack.c.l.b16 %v1155
        %v1427 = vunpack.c.h.b16 %v1155
        %v1428 = vunpack.c.l.b16 %v1156
        %v1429 = vunpack.c.h.b16 %v1156
        %v1430 = vunpack.c.l.b16 %v1157
        %v1431 = vunpack.c.h.b16 %v1157
        %v1432 = vunpack.c.l.b16 %v1158
        %v1433 = vunpack.c.h.b16 %v1158
        %v1434 = vunpack.c.l.b16 %v1159
        %v1435 = vunpack.c.h.b16 %v1159
        %v1436 = vunpack.c.l.b16 %v1160
        %v1437 = vunpack.c.h.b16 %v1160
        %v1438 = vunpack.c.l.b16 %v1161
        %v1439 = vunpack.c.h.b16 %v1161
        %v1440 = vunpack.c.l.b16 %v1162
        %v1441 = vunpack.c.h.b16 %v1162
        %v1442 = vunpack.c.l.b16 %v1163
        %v1443 = vunpack.c.h.b16 %v1163
        %v1444 = vunpack.c.l.b16 %v1164
        %v1445 = vunpack.c.h.b16 %v1164
        %v1446 = vunpack.c.l.b16 %v1165
        %v1447 = vunpack.c.h.b16 %v1165
        %v1448 = vunpack.c.l.b16 %v1166
        %v1449 = vunpack.c.h.b16 %v1166
        %v1450 = vunpack.c.l.b16 %v1167
        %v1451 = vunpack.c.h.b16 %v1167
        %v1452 = vunpack.c.l.b16 %v1168
        %v1453 = vunpack.c.h.b16 %v1168
        %v1454 = vunpack.c.l.b16 %v1169
        %v1455 = vunpack.c.h.b16 %v1169
        %v1456 = vunpack.c.l.b16 %v1170
        %v1457 = vunpack.c.h.b16 %v1170
        %v1458 = vunpack.c.l.b16 %v1171
        %v1459 = vunpack.c.h.b16 %v1171
        %v1460 = vunpack.c.l.b16 %v1172
        %v1461 = vunpack.c.h.b16 %v1172
        %v1462 = vunpack.c.l.b16 %v1173
        %v1463 = vunpack.c.h.b16 %v1173
        %v1464 = vunpack.c.l.b16 %v1174
        %v1465 = vunpack.c.h.b16 %v1174
        %v1466 = vunpack.c.l.b16 %v1175
        %v1467 = vunpack.c.h.b16 %v1175
        %v1468 = vunpack.c.l.b16 %v1176
        %v1469 = vunpack.c.h.b16 %v1176
        %v1470 = vunpack.c.l.b16 %v1177
        %v1471 = vunpack.c.h.b16 %v1177
        %v1472 = vunpack.c.l.b16 %v1178
        %v1473 = vunpack.c.h.b16 %v1178
        %v1474 = vunpack.c.l.b16 %v1179
        %v1475 = vunpack.c.h.b16 %v1179
        %v1476 = vunpack.c.l.b16 %v1180
        %v1477 = vunpack.c.h.b16 %v1180
        %v1478 = vunpack.c.l.b16 %v1181
        %v1479 = vunpack.c.h.b16 %v1181
        %v1480 = vunpack.c.l.b16 %v1182
        %v1481 = vunpack.c.h.b16 %v1182
        %v1482 = vunpack.c.l.b16 %v1183
        %v1483 = vunpack.c.h.b16 %v1183
        %v1484 = vunpack.c.l.b16 %v1184
        %v1485 = vunpack.c.h.b16 %v1184
        %v1486 = vunpack.c.l.b16 %v1185
        %v1487 = vunpack.c.h.b16 %v1185
        %v1488 = vunpack.c.l.b16 %v1186
        %v1489 = vunpack.c.h.b16 %v1186
        %v1490 = vunpack.c.l.b16 %v1187
        %v1491 = vunpack.c.h.b16 %v1187
        %v1492 = vunpack.c.l.b16 %v1188
        %v1493 = vunpack.c.h.b16 %v1188
        %v1494 = vunpack.c.l.b16 %v1189
        %v1495 = vunpack.c.h.b16 %v1189
        %v1496 = vunpack.c.l.b16 %v1190
        %v1497 = vunpack.c.h.b16 %v1190
        %v1498 = vunpack.c.l.b16 %v1191
        %v1499 = vunpack.c.h.b16 %v1191
        %v1500 = vunpack.c.l.b16 %v1192
        %v1501 = vunpack.c.h.b16 %v1192
        %v1502 = vunpack.c.l.b16 %v1193
        %v1503 = vunpack.c.h.b16 %v1193
        %v1504 = vunpack.c.l.b16 %v1194
        %v1505 = vunpack.c.h.b16 %v1194
        %v1506 = vunpack.c.l.b16 %v1195
        %v1507 = vunpack.c.h.b16 %v1195
        %v1508 = vunpack.c.l.b16 %v1196
        %v1509 = vunpack.c.h.b16 %v1196
        %v1510 = vunpack.c.l.b16 %v1197
        %v1511 = vunpack.c.h.b16 %v1197
        %v1512 = vunpack.c.l.b16 %v1198
        %v1513 = vunpack.c.h.b16 %v1198
        %v1514 = vunpack.c.l.b16 %v1199
        %v1515 = vunpack.c.h.b16 %v1199
        %v1516 = vunpack.c.l.b16 %v1200
        %v1517 = vunpack.c.h.b16 %v1200
        %v1518 = vunpack.c.l.b16 %v1201
        %v1519 = vunpack.c.h.b16 %v1201
        %v1520 = vunpack.c.l.b16 %v1202
        %v1521 = vunpack.c.h.b16 %v1202
        %v1522 = vunpack.c.l.b16 %v1203
        %v1523 = vunpack.c.h.b16 %v1203
        %v1524 = vunpack.c.l.b16 %v1204
        %v1525 = vunpack.c.h.b16 %v1204
        %v1526 = vunpack.c.l.b16 %v1205
        %v1527 = vunpack.c.h.b16 %v1205
        %v1528 = vunpack.c.l.b16 %v1206
        %v1529 = vunpack.c.h.b16 %v1206
        %v1530 = vunpack.c.l.b16 %v1207
        %v1531 = vunpack.c.h.b16 %v1207
        %v1532 = vunpack.c.l.b16 %v1208
        %v1533 = vunpack.c.h.b16 %v1208
        %v1534 = vunpack.c.l.b16 %v1209
        %v1535 = vunpack.c.h.b16 %v1209
        %v1536 = vunpack.c.l.b16 %v1210
        %v1537 = vunpack.c.h.b16 %v1210
        %v1538 = vunpack.c.l.b16 %v1211
        %v1539 = vunpack.c.h.b16 %v1211
        %v1540 = vunpack.c.l.b16 %v1212
        %v1541 = vunpack.c.h.b16 %v1212
        %v1542 = vunpack.c.l.b16 %v1213
        %v1543 = vunpack.c.h.b16 %v1213
        %v1544 = vunpack.c.l.b16 %v1214
        %v1545 = vunpack.c.h.b16 %v1214
        %v1546 = vunpack.c.l.b16 %v1215
        %v1547 = vunpack.c.h.b16 %v1215
        %v1548 = vunpack.c.l.b16 %v1216
        %v1549 = vunpack.c.h.b16 %v1216
        %v1550 = vunpack.c.l.b16 %v1217
        %v1551 = vunpack.c.h.b16 %v1217
        %v1552 = vunpack.c.l.b16 %v1218
        %v1553 = vunpack.c.h.b16 %v1218
        %v1554 = vunpack.c.l.b16 %v1219
        %v1555 = vunpack.c.h.b16 %v1219
        %v1556 = vunpack.c.l.b16 %v1220
        %v1557 = vunpack.c.h.b16 %v1220
        %v1558 = vunpack.c.l.b16 %v1221
        %v1559 = vunpack.c.h.b16 %v1221
        %v1560 = vunpack.c.l.b16 %v1222
        %v1561 = vunpack.c.h.b16 %v1222
        %v1562 = vunpack.c.l.b16 %v1223
        %v1563 = vunpack.c.h.b16 %v1223
        %v1564 = vunpack.c.l.b16 %v1224
        %v1565 = vunpack.c.h.b16 %v1224
        %v1566 = vunpack.c.l.b16 %v1225
        %v1567 = vunpack.c.h.b16 %v1225
        %v1568 = vunpack.c.l.b16 %v1226
        %v1569 = vunpack.c.h.b16 %v1226
        %v1570 = vunpack.c.l.b16 %v1227
        %v1571 = vunpack.c.h.b16 %v1227
        %v1572 = vunpack.c.l.b16 %v1228
        %v1573 = vunpack.c.h.b16 %v1228
        %v1574 = vunpack.c.l.b16 %v1229
        %v1575 = vunpack.c.h.b16 %v1229
        %v1576 = vunpack.c.l.b16 %v1230
        %v1577 = vunpack.c.h.b16 %v1230
        %v1578 = vunpack.c.l.b16 %v1231
        %v1579 = vunpack.c.h.b16 %v1231
        %v1580 = vunpack.c.l.b16 %v1232
        %v1581 = vunpack.c.h.b16 %v1232
        %v1582 = vunpack.c.l.b16 %v1233
        %v1583 = vunpack.c.h.b16 %v1233
        %v1584 = vunpack.c.l.b16 %v1234
        %v1585 = vunpack.c.h.b16 %v1234
        %v1586 = vunpack.c.l.b16 %v1235
        %v1587 = vunpack.c.h.b16 %v1235
        %v1588 = vunpack.c.l.b16 %v1236
        %v1589 = vunpack.c.h.b16 %v1236
        %v1590 = vunpack.c.l.b16 %v1237
        %v1591 = vunpack.c.h.b16 %v1237
        %v1592 = vunpack.c.l.b16 %v1238
        %v1593 = vunpack.c.h.b16 %v1238
        %v1594 = vunpack.c.l.b16 %v1239
        %v1595 = vunpack.c.h.b16 %v1239
        %v1596 = vunpack.c.l.b16 %v1240
        %v1597 = vunpack.c.h.b16 %v1240
        %v1598 = vunpack.c.l.b16 %v1241
        %v1599 = vunpack.c.h.b16 %v1241
        %v1600 = vunpack.c.l.b16 %v1242
        %v1601 = vunpack.c.h.b16 %v1242
        %v1602 = vunpack.c.l.b16 %v1243
        %v1603 = vunpack.c.h.b16 %v1243
        %v1604 = vunpack.c.l.b16 %v1244
        %v1605 = vunpack.c.h.b16 %v1244
        %v1606 = vunpack.c.l.b16 %v1245
        %v1607 = vunpack.c.h.b16 %v1245
        %v1608 = vunpack.c.l.b16 %v1246
        %v1609 = vunpack.c.h.b16 %v1246
        %v1610 = vunpack.c.l.b16 %v1247
        %v1611 = vunpack.c.h.b16 %v1247
        %v1612 = vunpack.c.l.b16 %v1248
        %v1613 = vunpack.c.h.b16 %v1248
        %v1614 = vunpack.c.l.b16 %v1249
        %v1615 = vunpack.c.h.b16 %v1249
        %v1616 = vunpack.c.l.b16 %v1250
        %v1617 = vunpack.c.h.b16 %v1250
        %v1618 = vunpack.c.l.b16 %v1251
        %v1619 = vunpack.c.h.b16 %v1251
        %v1620 = vunpack.c.l.b16 %v1252
        %v1621 = vunpack.c.h.b16 %v1252
        %v1622 = vunpack.c.l.b16 %v1253
        %v1623 = vunpack.c.h.b16 %v1253
        %v1624 = vunpack.c.l.b16 %v1254
        %v1625 = vunpack.c.h.b16 %v1254
        %v1626 = vunpack.c.l.b16 %v1255
        %v1627 = vunpack.c.h.b16 %v1255
        %v1628 = vunpack.c.l.b16 %v1256
        %v1629 = vunpack.c.h.b16 %v1256
        %v1630 = vunpack.c.l.b16 %v1257
        %v1631 = vunpack.c.h.b16 %v1257
        %v1632 = vunpack.c.l.b16 %v1258
        %v1633 = vunpack.c.h.b16 %v1258
        %v1634 = vunpack.c.l.b16 %v1259
        %v1635 = vunpack.c.h.b16 %v1259
        %v1636 = vunpack.c.l.b16 %v1260
        %v1637 = vunpack.c.h.b16 %v1260
        %v1638 = vunpack.c.l.b16 %v1261
        %v1639 = vunpack.c.h.b16 %v1261
        %v1640 = vunpack.c.l.b16 %v1262
        %v1641 = vunpack.c.h.b16 %v1262
        %v1642 = vunpack.c.l.b16 %v1263
        %v1643 = vunpack.c.h.b16 %v1263
        %v1644 = vunpack.c.l.b16 %v1264
        %v1645 = vunpack.c.h.b16 %v1264
        %v1646 = vunpack.c.l.b16 %v1265
        %v1647 = vunpack.c.h.b16 %v1265
        %v1648 = vunpack.c.l.b16 %v1266
        %v1649 = vunpack.c.h.b16 %v1266
        %v1650 = vunpack.c.l.b16 %v1267
        %v1651 = vunpack.c.h.b16 %v1267
        %v1652 = vpack.c.b16 %v1398, %v1396
        %v1653 = vpack.c.b16 %v1399, %v1397
        %v1654 = vpack.c.b16 %v1402, %v1400
        %v1655 = vpack.c.b16 %v1403, %v1401
        %v1656 = vpack.c.b16 %v1406, %v1404
        %v1657 = vpack.c.b16 %v1407, %v1405
        %v1658 = vpack.c.b16 %v1410, %v1408
        %v1659 = vpack.c.b16 %v1411, %v1409
        %v1660 = vpack.c.b16 %v1414, %v1412
        %v1661 = vpack.c.b16 %v1415, %v1413
        %v1662 = vpack.c.b16 %v1418, %v1416
        %v1663 = vpack.c.b16 %v1419, %v1417
        %v1664 = vpack.c.b16 %v1422, %v1420
        %v1665 = vpack.c.b16 %v1423, %v1421
        %v1666 = vpack.c.b16 %v1426, %v1424
        %v1667 = vpack.c.b16 %v1427, %v1425
        %v1668 = vpack.c.b16 %v1430, %v1428
        %v1669 = vpack.c.b16 %v1431, %v1429
        %v1670 = vpack.c.b16 %v1434, %v1432
        %v1671 = vpack.c.b16 %v1435, %v1433
        %v1672 = vpack.c.b16 %v1438, %v1436
        %v1673 = vpack.c.b16 %v1439, %v1437
        %v1674 = vpack.c.b16 %v1442, %v1440
        %v1675 = vpack.c.b16 %v1443, %v1441
        %v1676 = vpack.c.b16 %v1446, %v1444
        %v1677 = vpack.c.b16 %v1447, %v1445
        %v1678 = vpack.c.b16 %v1450, %v1448
        %v1679 = vpack.c.b16 %v1451, %v1449
        %v1680 = vpack.c.b16 %v1454, %v1452
        %v1681 = vpack.c.b16 %v1455, %v1453
        %v1682 = vpack.c.b16 %v1458, %v1456
        %v1683 = vpack.c.b16 %v1459, %v1457
        %v1684 = vpack.c.b16 %v1462, %v1460
        %v1685 = vpack.c.b16 %v1463, %v1461
        %v1686 = vpack.c.b16 %v1466, %v1464
        %v1687 = vpack.c.b16 %v1467, %v1465
        %v1688 = vpack.c.b16 %v1470, %v1468
        %v1689 = vpack.c.b16 %v1471, %v1469
        %v1690 = vpack.c.b16 %v1474, %v1472
        %v1691 = vpack.c.b16 %v1475, %v1473
        %v1692 = vpack.c.b16 %v1478, %v1476
        %v1693 = vpack.c.b16 %v1479, %v1477
        %v1694 = vpack.c.b16 %v1482, %v1480
        %v1695 = vpack.c.b16 %v1483, %v1481
        %v1696 = vpack.c.b16 %v1486, %v1484
        %v1697 = vpack.c.b16 %v1487, %v1485
        %v1698 = vpack.c.b16 %v1490, %v1488
        %v1699 = vpack.c.b16 %v1491, %v1489
        %v1700 = vpack.c.b16 %v1494, %v1492
        %v1701 = vpack.c.b16 %v1495, %v1493
        %v1702 = vpack.c.b16 %v1498, %v1496
        %v1703 = vpack.c.b16 %v1499, %v1497
        %v1704 = vpack.c.b16 %v1502, %v1500
        %v1705 = vpack.c.b16 %v1503, %v1501
        %v1706 = vpack.c.b16 %v1506, %v1504
        %v1707 = vpack.c.b16 %v1507, %v1505
        %v1708 = vpack.c.b16 %v1510, %v1508
        %v1709 = vpack.c.b16 %v1511, %v1509
        %v1710 = vpack.c.b16 %v1514, %v1512
        %v1711 = vpack.c.b16 %v1515, %v1513
        %v1712 = vpack.c.b16 %v1518, %v1516
        %v1713 = vpack.c.b16 %v1519, %v1517
        %v1714 = vpack.c.b16 %v1522, %v1520
        %v1715 = vpack.c.b16 %v1523, %v1521
        %v1716 = vpack.c.b16 %v1526, %v1524
        %v1717 = vpack.c.b16 %v1527, %v1525
        %v1718 = vpack.c.b16 %v1530, %v1528
        %v1719 = vpack.c.b16 %v1531, %v1529
        %v1720 = vpack.c.b16 %v1534, %v1532
        %v1721 = vpack.c.b16 %v1535, %v1533
        %v1722 = vpack.c.b16 %v1538, %v1536
        %v1723 = vpack.c.b16 %v1539, %v1537
        %v1724 = vpack.c.b16 %v1542, %v1540
        %v1725 = vpack.c.b16 %v1543, %v1541
        %v1726 = vpack.c.b16 %v1546, %v1544
        %v1727 = vpack.c.b16 %v1547, %v1545
        %v1728 = vpack.c.b16 %v1550, %v1548
        %v1729 = vpack.c.b16 %v1551, %v1549
        %v1730 = vpack.c.b16 %v1554, %v1552
        %v1731 = vpack.c.b16 %v1555, %v1553
        %v1732 = vpack.c.b16 %v1558, %v1556
        %v1733 = vpack.c.b16 %v1559, %v1557
        %v1734 = vpack.c.b16 %v1562, %v1560
        %v1735 = vpack.c.b16 %v1563, %v1561
        %v1736 = vpack.c.b16 %v1566, %v1564
        %v1737 = vpack.c.b16 %v1567, %v1565
        %v1738 = vpack.c.b16 %v1570, %v1568
        %v1739 = vpack.c.b16 %v1571, %v1569
        %v1740 = vpack.c.b16 %v1574, %v1572
        %v1741 = vpack.c.b16 %v1575, %v1573
        %v1742 = vpack.c.b16 %v1578, %v1576
        %v1743 = vpack.c.b16 %v1579, %v1577
        %v1744 = vpack.c.b16 %v1582, %v1580
        %v1745 = vpack.c.b16 %v1583, %v1581
        %v1746 = vpack.c.b16 %v1586, %v1584
        %v1747 = vpack.c.b16 %v1587, %v1585
        %v1748 = vpack.c.b16 %v1590, %v1588
        %v1749 = vpack.c.b16 %v1591, %v1589
        %v1750 = vpack.c.b16 %v1594, %v1592
        %v1751 = vpack.c.b16 %v1595, %v1593
        %v1752 = vpack.c.b16 %v1598, %v1596
        %v1753 = vpack.c.b16 %v1599, %v1597
        %v1754 = vpack.c.b16 %v1602, %v1600
        %v1755 = vpack.c.b16 %v1603, %v1601
        %v1756 = vpack.c.b16 %v1606, %v1604
        %v1757 = vpack.c.b16 %v1607, %v1605
        %v1758 = vpack.c.b16 %v1610, %v1608
        %v1759 = vpack.c.b16 %v1611, %v1609
        %v1760 = vpack.c.b16 %v1614, %v1612
        %v1761 = vpack.c.b16 %v1615, %v1613
        %v1762 = vpack.c.b16 %v1618, %v1616
        %v1763 = vpack.c.b16 %v1619, %v1617
        %v1764 = vpack.c.b16 %v1622, %v1620
        %v1765 = vpack.c.b16 %v1623, %v1621
        %v1766 = vpack.c.b16 %v1626, %v1624
        %v1767 = vpack.c.b16 %v1627, %v1625
        %v1768 = vpack.c.b16 %v1630, %v1628
        %v1769 = vpack.c.b16 %v1631, %v1629
        %v1770 = vpack.c.b16 %v1634, %v1632
        %v1771 = vpack.c.b16 %v1635, %v1633
        %v1772 = vpack.c.b16 %v1638, %v1636
        %v1773 = vpack.c.b16 %v1639, %v1637
        %v1774 = vpack.c.b16 %v1642, %v1640
        %v1775 = vpack.c.b16 %v1643, %v1641
        %v1776 = vpack.c.b16 %v1646, %v1644
        %v1777 = vpack.c.b16 %v1647, %v1645
        %v1778 = vpack.c.b16 %v1650, %v1648
        %v1779 = vpack.c.b16 %v1651, %v1649
        %vm1844 = vcmask 7168
        %v1846 = vsel %vm1844, %v1653, 0
        %v1849 = vsel %vm1844, %v1655, 0
        %v1852 = vsel %vm1844, %v1657, 0
        %v1855 = vsel %vm1844, %v1659, 0
        %v1858 = vsel %vm1844, %v1661, 0
        %v1861 = vsel %vm1844, %v1663, 0
        %v1864 = vsel %vm1844, %v1665, 0
        %v1867 = vsel %vm1844, %v1667, 0
        %v1870 = vsel %vm1844, %v1669, 0
        %v1873 = vsel %vm1844, %v1671, 0
        %v1876 = vsel %vm1844, %v1673, 0
        %v1879 = vsel %vm1844, %v1675, 0
        %v1882 = vsel %vm1844, %v1677, 0
        %v1885 = vsel %vm1844, %v1679, 0
        %v1888 = vsel %vm1844, %v1681, 0
        %v1891 = vsel %vm1844, %v1683, 0
        %v1894 = vsel %vm1844, %v1685, 0
        %v1897 = vsel %vm1844, %v1687, 0
        %v1900 = vsel %vm1844, %v1689, 0
        %v1903 = vsel %vm1844, %v1691, 0
        %v1906 = vsel %vm1844, %v1693, 0
        %v1909 = vsel %vm1844, %v1695, 0
        %v1912 = vsel %vm1844, %v1697, 0
        %v1915 = vsel %vm1844, %v1699, 0
        %v1918 = vsel %vm1844, %v1701, 0
        %v1921 = vsel %vm1844, %v1703, 0
        %v1924 = vsel %vm1844, %v1705, 0
        %v1927 = vsel %vm1844, %v1707, 0
        %v1930 = vsel %vm1844, %v1709, 0
        %v1933 = vsel %vm1844, %v1711, 0
        %v1936 = vsel %vm1844, %v1713, 0
        %v1939 = vsel %vm1844, %v1715, 0
        %v1942 = vsel %vm1844, %v1717, 0
        %v1945 = vsel %vm1844, %v1719, 0
        %v1948 = vsel %vm1844, %v1721, 0
        %v1951 = vsel %vm1844, %v1723, 0
        %v1954 = vsel %vm1844, %v1725, 0
        %v1957 = vsel %vm1844, %v1727, 0
        %v1960 = vsel %vm1844, %v1729, 0
        %v1963 = vsel %vm1844, %v1731, 0
        %v1966 = vsel %vm1844, %v1733, 0
        %v1969 = vsel %vm1844, %v1735, 0
        %v1972 = vsel %vm1844, %v1737, 0
        %v1975 = vsel %vm1844, %v1739, 0
        %v1978 = vsel %vm1844, %v1741, 0
        %v1981 = vsel %vm1844, %v1743, 0
        %v1984 = vsel %vm1844, %v1745, 0
        %v1987 = vsel %vm1844, %v1747, 0
        %v1990 = vsel %vm1844, %v1749, 0
        %v1993 = vsel %vm1844, %v1751, 0
        %v1996 = vsel %vm1844, %v1753, 0
        %v1999 = vsel %vm1844, %v1755, 0
        %v2002 = vsel %vm1844, %v1757, 0
        %v2005 = vsel %vm1844, %v1759, 0
        %v2008 = vsel %vm1844, %v1761, 0
        %v2011 = vsel %vm1844, %v1763, 0
        %v2014 = vsel %vm1844, %v1765, 0
        %v2017 = vsel %vm1844, %v1767, 0
        %v2020 = vsel %vm1844, %v1769, 0
        %v2023 = vsel %vm1844, %v1771, 0
        %v2026 = vsel %vm1844, %v1773, 0
        %v2029 = vsel %vm1844, %v1775, 0
        %v2032 = vsel %vm1844, %v1777, 0
        %v2035 = vsel %vm1844, %v1779, 0
        %v2038 = vand.u32 %v1138, %v526
        %v2041 = vand.u32 %v1139, %v526
        %2043 = vmatprep.subr.bf16.mxu0 %v1123
        %2044 = vmatpush1.bf16.msra.mxu0 %v1122
        %2045 = vmatprep.subr.bf16.mxu0 %v1125
        %2046 = vmatpush1.bf16.msra.mxu0 %v1124
        %2047 = vmatprep.subr.bf16.mxu0 %v1127
        %2048 = vmatpush1.bf16.msra.mxu0 %v1126
        %2049 = vmatprep.subr.bf16.mxu0 %v1129
        %2050 = vmatpush1.bf16.msra.mxu0 %v1128
        %2051 = vmatprep.subr.bf16.mxu0 %v1131
        %2052 = vmatpush1.bf16.msra.mxu0 %v1130
        %2053 = vmatprep.subr.bf16.mxu0 %v1133
        %2054 = vmatpush1.bf16.msra.mxu0 %v1132
        %2055 = vmatprep.subr.bf16.mxu0 %v1135
        %2056 = vmatpush1.bf16.msra.mxu0 %v1134
        %2057 = vmatprep.subr.bf16.mxu0 %v1137
        %2058 = vmatpush1.bf16.msra.mxu0 %v1136
        %2059 = vmatprep.subr.bf16.mxu0 %v2041
        %2060 = vmatpush1.bf16.msra.mxu0 %v2038
        %2061 = vmatprep.subr.bf16.mxu0 0
        %2062 = vmatpush1.bf16.msra.mxu0 0
        %2063 = vmatprep.subr.bf16.mxu0 0
        %2064 = vmatpush1.bf16.msra.mxu0 0
        %2065 = vmatprep.subr.bf16.mxu0 0
        %2066 = vmatpush1.bf16.msra.mxu0 0
        %2067 = vmatprep.subr.bf16.mxu0 0
        %2068 = vmatpush1.bf16.msra.mxu0 0
        %2069 = vmatprep.subr.bf16.mxu0 0
        %2070 = vmatpush1.bf16.msra.mxu0 0
        %2071 = vmatprep.subr.bf16.mxu0 0
        %2072 = vmatpush1.bf16.msra.mxu0 0
        %2073 = vmatprep.subr.bf16.mxu0 0
        %2074 = vmatpush1.bf16.msra.mxu0 0
        %2075 = vmatprep.mubr.bf16.mxu0 %v1846
        %2076 = vmatmul.mubr.bf16.gmra.mrb[0].mxu0 %v1652
        %v2077 = vpop.f32.mrb[0].mxu0
        %v2078 = vadd.f32 0.0, %v2077
        %v2079 = vpop.f32.mrb[0].mxu0
        %v2080 = vadd.f32 0.0, %v2079
        %v2081 = vpop.f32.mrb[0].mxu0
        %v2082 = vadd.f32 0.0, %v2081
        %v2083 = vpop.f32.mrb[0].mxu0
        %v2084 = vadd.f32 0.0, %v2083
        %2085 = vmatprep.mubr.bf16.mxu0 %v1849
        %2086 = vmatmul.mubr.bf16.gmra.mrb[0].mxu0 %v1654
        %v2087 = vpop.f32.mrb[0].mxu0
        %v2088 = vadd.f32 0.0, %v2087
        %v2089 = vpop.f32.mrb[0].mxu0
        %v2090 = vadd.f32 0.0, %v2089
        %v2091 = vpop.f32.mrb[0].mxu0
        %v2092 = vadd.f32 0.0, %v2091
        %v2093 = vpop.f32.mrb[0].mxu0
        %v2094 = vadd.f32 0.0, %v2093
        %2095 = vmatprep.mubr.bf16.mxu0 %v1852
        %2096 = vmatmul.mubr.bf16.gmra.mrb[0].mxu0 %v1656
        %v2097 = vpop.f32.mrb[0].mxu0
        %v2098 = vadd.f32 0.0, %v2097
        %v2099 = vpop.f32.mrb[0].mxu0
        %v2100 = vadd.f32 0.0, %v2099
        %v2101 = vpop.f32.mrb[0].mxu0
        %v2102 = vadd.f32 0.0, %v2101
        %v2103 = vpop.f32.mrb[0].mxu0
        %v2104 = vadd.f32 0.0, %v2103
        %2105 = vmatprep.mubr.bf16.mxu0 %v1855
        %2106 = vmatmul.mubr.bf16.gmra.mrb[0].mxu0 %v1658
        %v2107 = vpop.f32.mrb[0].mxu0
        %v2108 = vadd.f32 0.0, %v2107
        %v2109 = vpop.f32.mrb[0].mxu0
        %v2110 = vadd.f32 0.0, %v2109
        %v2111 = vpop.f32.mrb[0].mxu0
        %v2112 = vadd.f32 0.0, %v2111
        %v2113 = vpop.f32.mrb[0].mxu0
        %v2114 = vadd.f32 0.0, %v2113
        %2115 = vmatprep.mubr.bf16.mxu0 %v1858
        %2116 = vmatmul.mubr.bf16.gmra.mrb[0].mxu0 %v1660
        %v2117 = vpop.f32.mrb[0].mxu0
        %v2118 = vadd.f32 0.0, %v2117
        %v2119 = vpop.f32.mrb[0].mxu0
        %v2120 = vadd.f32 0.0, %v2119
        %v2121 = vpop.f32.mrb[0].mxu0
        %v2122 = vadd.f32 0.0, %v2121
        %v2123 = vpop.f32.mrb[0].mxu0
        %v2124 = vadd.f32 0.0, %v2123
        %2125 = vmatprep.mubr.bf16.mxu0 %v1861
        %2126 = vmatmul.mubr.bf16.gmra.mrb[0].mxu0 %v1662
        %v2127 = vpop.f32.mrb[0].mxu0
        %v2128 = vadd.f32 0.0, %v2127
        %v2129 = vpop.f32.mrb[0].mxu0
        %v2130 = vadd.f32 0.0, %v2129
        %v2131 = vpop.f32.mrb[0].mxu0
        %v2132 = vadd.f32 0.0, %v2131
        %v2133 = vpop.f32.mrb[0].mxu0
        %v2134 = vadd.f32 0.0, %v2133
        %2135 = vmatprep.mubr.bf16.mxu0 %v1864
        %2136 = vmatmul.mubr.bf16.gmra.mrb[0].mxu0 %v1664
        %v2137 = vpop.f32.mrb[0].mxu0
        %v2138 = vadd.f32 0.0, %v2137
        %v2139 = vpop.f32.mrb[0].mxu0
        %v2140 = vadd.f32 0.0, %v2139
        %v2141 = vpop.f32.mrb[0].mxu0
        %v2142 = vadd.f32 0.0, %v2141
        %v2143 = vpop.f32.mrb[0].mxu0
        %v2144 = vadd.f32 0.0, %v2143
        %2145 = vmatprep.mubr.bf16.mxu0 %v1867
        %2146 = vmatmul.mubr.bf16.gmra.mrb[0].mxu0 %v1666
        %v2147 = vpop.f32.mrb[0].mxu0
        %v2148 = vadd.f32 0.0, %v2147
        %v2149 = vpop.f32.mrb[0].mxu0
        %v2150 = vadd.f32 0.0, %v2149
        %v2151 = vpop.f32.mrb[0].mxu0
        %v2152 = vadd.f32 0.0, %v2151
        %v2153 = vpop.f32.mrb[0].mxu0
        %v2154 = vadd.f32 0.0, %v2153
        %2155 = vmatprep.mubr.bf16.mxu0 %v1870
        %2156 = vmatmul.mubr.bf16.gmra.mrb[0].mxu0 %v1668
        %v2157 = vpop.f32.mrb[0].mxu0
        %v2158 = vadd.f32 0.0, %v2157
        %v2159 = vpop.f32.mrb[0].mxu0
        %v2160 = vadd.f32 0.0, %v2159
        %v2161 = vpop.f32.mrb[0].mxu0
        %v2162 = vadd.f32 0.0, %v2161
        %v2163 = vpop.f32.mrb[0].mxu0
        %v2164 = vadd.f32 0.0, %v2163
        %2165 = vmatprep.mubr.bf16.mxu0 %v1873
        %2166 = vmatmul.mubr.bf16.gmra.mrb[0].mxu0 %v1670
        %v2167 = vpop.f32.mrb[0].mxu0
        %v2168 = vadd.f32 0.0, %v2167
        %v2169 = vpop.f32.mrb[0].mxu0
        %v2170 = vadd.f32 0.0, %v2169
        %v2171 = vpop.f32.mrb[0].mxu0
        %v2172 = vadd.f32 0.0, %v2171
        %v2173 = vpop.f32.mrb[0].mxu0
        %v2174 = vadd.f32 0.0, %v2173
        %2175 = vmatprep.mubr.bf16.mxu0 %v1876
        %2176 = vmatmul.mubr.bf16.gmra.mrb[0].mxu0 %v1672
        %v2177 = vpop.f32.mrb[0].mxu0
        %v2178 = vadd.f32 0.0, %v2177
        %v2179 = vpop.f32.mrb[0].mxu0
        %v2180 = vadd.f32 0.0, %v2179
        %v2181 = vpop.f32.mrb[0].mxu0
        %v2182 = vadd.f32 0.0, %v2181
        %v2183 = vpop.f32.mrb[0].mxu0
        %v2184 = vadd.f32 0.0, %v2183
        %2185 = vmatprep.mubr.bf16.mxu0 %v1879
        %2186 = vmatmul.mubr.bf16.gmra.mrb[0].mxu0 %v1674
        %v2187 = vpop.f32.mrb[0].mxu0
        %v2188 = vadd.f32 0.0, %v2187
        %v2189 = vpop.f32.mrb[0].mxu0
        %v2190 = vadd.f32 0.0, %v2189
        %v2191 = vpop.f32.mrb[0].mxu0
        %v2192 = vadd.f32 0.0, %v2191
        %v2193 = vpop.f32.mrb[0].mxu0
        %v2194 = vadd.f32 0.0, %v2193
        %2195 = vmatprep.mubr.bf16.mxu0 %v1882
        %2196 = vmatmul.mubr.bf16.gmra.mrb[0].mxu0 %v1676
        %v2197 = vpop.f32.mrb[0].mxu0
        %v2198 = vadd.f32 0.0, %v2197
        %v2199 = vpop.f32.mrb[0].mxu0
        %v2200 = vadd.f32 0.0, %v2199
        %v2201 = vpop.f32.mrb[0].mxu0
        %v2202 = vadd.f32 0.0, %v2201
        %v2203 = vpop.f32.mrb[0].mxu0
        %v2204 = vadd.f32 0.0, %v2203
        %2205 = vmatprep.mubr.bf16.mxu0 %v1885
        %2206 = vmatmul.mubr.bf16.gmra.mrb[0].mxu0 %v1678
        %v2207 = vpop.f32.mrb[0].mxu0
        %v2208 = vadd.f32 0.0, %v2207
        %v2209 = vpop.f32.mrb[0].mxu0
        %v2210 = vadd.f32 0.0, %v2209
        %v2211 = vpop.f32.mrb[0].mxu0
        %v2212 = vadd.f32 0.0, %v2211
        %v2213 = vpop.f32.mrb[0].mxu0
        %v2214 = vadd.f32 0.0, %v2213
        %2215 = vmatprep.mubr.bf16.mxu0 %v1888
        %2216 = vmatmul.mubr.bf16.gmra.mrb[0].mxu0 %v1680
        %v2217 = vpop.f32.mrb[0].mxu0
        %v2218 = vadd.f32 0.0, %v2217
        %v2219 = vpop.f32.mrb[0].mxu0
        %v2220 = vadd.f32 0.0, %v2219
        %v2221 = vpop.f32.mrb[0].mxu0
        %v2222 = vadd.f32 0.0, %v2221
        %v2223 = vpop.f32.mrb[0].mxu0
        %v2224 = vadd.f32 0.0, %v2223
        %2225 = vmatprep.mubr.bf16.mxu0 %v1891
        %2226 = vmatmul.mubr.bf16.gmra.mrb[0].mxu0 %v1682
        %v2227 = vpop.f32.mrb[0].mxu0
        %v2228 = vadd.f32 0.0, %v2227
        %v2229 = vpop.f32.mrb[0].mxu0
        %v2230 = vadd.f32 0.0, %v2229
        %v2231 = vpop.f32.mrb[0].mxu0
        %v2232 = vadd.f32 0.0, %v2231
        %v2233 = vpop.f32.mrb[0].mxu0
        %v2234 = vadd.f32 0.0, %v2233
        %2235 = vmatprep.mubr.bf16.mxu0 %v1894
        %2236 = vmatmul.mubr.bf16.gmra.mrb[0].mxu0 %v1684
        %v2237 = vpop.f32.mrb[0].mxu0
        %v2238 = vadd.f32 0.0, %v2237
        %v2239 = vpop.f32.mrb[0].mxu0
        %v2240 = vadd.f32 0.0, %v2239
        %v2241 = vpop.f32.mrb[0].mxu0
        %v2242 = vadd.f32 0.0, %v2241
        %v2243 = vpop.f32.mrb[0].mxu0
        %v2244 = vadd.f32 0.0, %v2243
        %2245 = vmatprep.mubr.bf16.mxu0 %v1897
        %2246 = vmatmul.mubr.bf16.gmra.mrb[0].mxu0 %v1686
        %v2247 = vpop.f32.mrb[0].mxu0
        %v2248 = vadd.f32 0.0, %v2247
        %v2249 = vpop.f32.mrb[0].mxu0
        %v2250 = vadd.f32 0.0, %v2249
        %v2251 = vpop.f32.mrb[0].mxu0
        %v2252 = vadd.f32 0.0, %v2251
        %v2253 = vpop.f32.mrb[0].mxu0
        %v2254 = vadd.f32 0.0, %v2253
        %2255 = vmatprep.mubr.bf16.mxu0 %v1900
        %2256 = vmatmul.mubr.bf16.gmra.mrb[0].mxu0 %v1688
        %v2257 = vpop.f32.mrb[0].mxu0
        %v2258 = vadd.f32 0.0, %v2257
        %v2259 = vpop.f32.mrb[0].mxu0
        %v2260 = vadd.f32 0.0, %v2259
        %v2261 = vpop.f32.mrb[0].mxu0
        %v2262 = vadd.f32 0.0, %v2261
        %v2263 = vpop.f32.mrb[0].mxu0
        %v2264 = vadd.f32 0.0, %v2263
        %2265 = vmatprep.mubr.bf16.mxu0 %v1903
        %2266 = vmatmul.mubr.bf16.gmra.mrb[0].mxu0 %v1690
        %v2267 = vpop.f32.mrb[0].mxu0
        %v2268 = vadd.f32 0.0, %v2267
        %v2269 = vpop.f32.mrb[0].mxu0
        %v2270 = vadd.f32 0.0, %v2269
        %v2271 = vpop.f32.mrb[0].mxu0
        %v2272 = vadd.f32 0.0, %v2271
        %v2273 = vpop.f32.mrb[0].mxu0
        %v2274 = vadd.f32 0.0, %v2273
        %2275 = vmatprep.mubr.bf16.mxu0 %v1906
        %2276 = vmatmul.mubr.bf16.gmra.mrb[0].mxu0 %v1692
        %v2277 = vpop.f32.mrb[0].mxu0
        %v2278 = vadd.f32 0.0, %v2277
        %v2279 = vpop.f32.mrb[0].mxu0
        %v2280 = vadd.f32 0.0, %v2279
        %v2281 = vpop.f32.mrb[0].mxu0
        %v2282 = vadd.f32 0.0, %v2281
        %v2283 = vpop.f32.mrb[0].mxu0
        %v2284 = vadd.f32 0.0, %v2283
        %2285 = vmatprep.mubr.bf16.mxu0 %v1909
        %2286 = vmatmul.mubr.bf16.gmra.mrb[0].mxu0 %v1694
        %v2287 = vpop.f32.mrb[0].mxu0
        %v2288 = vadd.f32 0.0, %v2287
        %v2289 = vpop.f32.mrb[0].mxu0
        %v2290 = vadd.f32 0.0, %v2289
        %v2291 = vpop.f32.mrb[0].mxu0
        %v2292 = vadd.f32 0.0, %v2291
        %v2293 = vpop.f32.mrb[0].mxu0
        %v2294 = vadd.f32 0.0, %v2293
        %2295 = vmatprep.mubr.bf16.mxu0 %v1912
        %2296 = vmatmul.mubr.bf16.gmra.mrb[0].mxu0 %v1696
        %v2297 = vpop.f32.mrb[0].mxu0
        %v2298 = vadd.f32 0.0, %v2297
        %v2299 = vpop.f32.mrb[0].mxu0
        %v2300 = vadd.f32 0.0, %v2299
        %v2301 = vpop.f32.mrb[0].mxu0
        %v2302 = vadd.f32 0.0, %v2301
        %v2303 = vpop.f32.mrb[0].mxu0
        %v2304 = vadd.f32 0.0, %v2303
        %2305 = vmatprep.mubr.bf16.mxu0 %v1915
        %2306 = vmatmul.mubr.bf16.gmra.mrb[0].mxu0 %v1698
        %v2307 = vpop.f32.mrb[0].mxu0
        %v2308 = vadd.f32 0.0, %v2307
        %v2309 = vpop.f32.mrb[0].mxu0
        %v2310 = vadd.f32 0.0, %v2309
        %v2311 = vpop.f32.mrb[0].mxu0
        %v2312 = vadd.f32 0.0, %v2311
        %v2313 = vpop.f32.mrb[0].mxu0
        %v2314 = vadd.f32 0.0, %v2313
        %2315 = vmatprep.mubr.bf16.mxu0 %v1918
        %2316 = vmatmul.mubr.bf16.gmra.mrb[0].mxu0 %v1700
        %v2317 = vpop.f32.mrb[0].mxu0
        %v2318 = vadd.f32 0.0, %v2317
        %v2319 = vpop.f32.mrb[0].mxu0
        %v2320 = vadd.f32 0.0, %v2319
        %v2321 = vpop.f32.mrb[0].mxu0
        %v2322 = vadd.f32 0.0, %v2321
        %v2323 = vpop.f32.mrb[0].mxu0
        %v2324 = vadd.f32 0.0, %v2323
        %2325 = vmatprep.mubr.bf16.mxu0 %v1921
        %2326 = vmatmul.mubr.bf16.gmra.mrb[0].mxu0 %v1702
        %v2327 = vpop.f32.mrb[0].mxu0
        %v2328 = vadd.f32 0.0, %v2327
        %v2329 = vpop.f32.mrb[0].mxu0
        %v2330 = vadd.f32 0.0, %v2329
        %v2331 = vpop.f32.mrb[0].mxu0
        %v2332 = vadd.f32 0.0, %v2331
        %v2333 = vpop.f32.mrb[0].mxu0
        %v2334 = vadd.f32 0.0, %v2333
        %2335 = vmatprep.mubr.bf16.mxu0 %v1924
        %2336 = vmatmul.mubr.bf16.gmra.mrb[0].mxu0 %v1704
        %v2337 = vpop.f32.mrb[0].mxu0
        %v2338 = vadd.f32 0.0, %v2337
        %v2339 = vpop.f32.mrb[0].mxu0
        %v2340 = vadd.f32 0.0, %v2339
        %v2341 = vpop.f32.mrb[0].mxu0
        %v2342 = vadd.f32 0.0, %v2341
        %v2343 = vpop.f32.mrb[0].mxu0
        %v2344 = vadd.f32 0.0, %v2343
        %2345 = vmatprep.mubr.bf16.mxu0 %v1927
        %2346 = vmatmul.mubr.bf16.gmra.mrb[0].mxu0 %v1706
        %v2347 = vpop.f32.mrb[0].mxu0
        %v2348 = vadd.f32 0.0, %v2347
        %v2349 = vpop.f32.mrb[0].mxu0
        %v2350 = vadd.f32 0.0, %v2349
        %v2351 = vpop.f32.mrb[0].mxu0
        %v2352 = vadd.f32 0.0, %v2351
        %v2353 = vpop.f32.mrb[0].mxu0
        %v2354 = vadd.f32 0.0, %v2353
        %2355 = vmatprep.mubr.bf16.mxu0 %v1930
        %2356 = vmatmul.mubr.bf16.gmra.mrb[0].mxu0 %v1708
        %v2357 = vpop.f32.mrb[0].mxu0
        %v2358 = vadd.f32 0.0, %v2357
        %v2359 = vpop.f32.mrb[0].mxu0
        %v2360 = vadd.f32 0.0, %v2359
        %v2361 = vpop.f32.mrb[0].mxu0
        %v2362 = vadd.f32 0.0, %v2361
        %v2363 = vpop.f32.mrb[0].mxu0
        %v2364 = vadd.f32 0.0, %v2363
        %2365 = vmatprep.mubr.bf16.mxu0 %v1933
        %2366 = vmatmul.mubr.bf16.gmra.mrb[0].mxu0 %v1710
        %v2367 = vpop.f32.mrb[0].mxu0
        %v2368 = vadd.f32 0.0, %v2367
        %v2369 = vpop.f32.mrb[0].mxu0
        %v2370 = vadd.f32 0.0, %v2369
        %v2371 = vpop.f32.mrb[0].mxu0
        %v2372 = vadd.f32 0.0, %v2371
        %v2373 = vpop.f32.mrb[0].mxu0
        %v2374 = vadd.f32 0.0, %v2373
        %2375 = vmatprep.mubr.bf16.mxu0 %v1936
        %2376 = vmatmul.mubr.bf16.gmra.mrb[0].mxu0 %v1712
        %v2377 = vpop.f32.mrb[0].mxu0
        %v2378 = vadd.f32 0.0, %v2377
        %v2379 = vpop.f32.mrb[0].mxu0
        %v2380 = vadd.f32 0.0, %v2379
        %v2381 = vpop.f32.mrb[0].mxu0
        %v2382 = vadd.f32 0.0, %v2381
        %v2383 = vpop.f32.mrb[0].mxu0
        %v2384 = vadd.f32 0.0, %v2383
        %2385 = vmatprep.mubr.bf16.mxu0 %v1939
        %2386 = vmatmul.mubr.bf16.gmra.mrb[0].mxu0 %v1714
        %v2387 = vpop.f32.mrb[0].mxu0
        %v2388 = vadd.f32 0.0, %v2387
        %v2389 = vpop.f32.mrb[0].mxu0
        %v2390 = vadd.f32 0.0, %v2389
        %v2391 = vpop.f32.mrb[0].mxu0
        %v2392 = vadd.f32 0.0, %v2391
        %v2393 = vpop.f32.mrb[0].mxu0
        %v2394 = vadd.f32 0.0, %v2393
        %2395 = vmatprep.mubr.bf16.mxu0 %v1942
        %2396 = vmatmul.mubr.bf16.gmra.mrb[0].mxu0 %v1716
        %v2397 = vpop.f32.mrb[0].mxu0
        %v2398 = vadd.f32 0.0, %v2397
        %v2399 = vpop.f32.mrb[0].mxu0
        %v2400 = vadd.f32 0.0, %v2399
        %v2401 = vpop.f32.mrb[0].mxu0
        %v2402 = vadd.f32 0.0, %v2401
        %v2403 = vpop.f32.mrb[0].mxu0
        %v2404 = vadd.f32 0.0, %v2403
        %2405 = vmatprep.mubr.bf16.mxu0 %v1945
        %2406 = vmatmul.mubr.bf16.gmra.mrb[0].mxu0 %v1718
        %v2407 = vpop.f32.mrb[0].mxu0
        %v2408 = vadd.f32 0.0, %v2407
        %v2409 = vpop.f32.mrb[0].mxu0
        %v2410 = vadd.f32 0.0, %v2409
        %v2411 = vpop.f32.mrb[0].mxu0
        %v2412 = vadd.f32 0.0, %v2411
        %v2413 = vpop.f32.mrb[0].mxu0
        %v2414 = vadd.f32 0.0, %v2413
        %2415 = vmatprep.mubr.bf16.mxu0 %v1948
        %2416 = vmatmul.mubr.bf16.gmra.mrb[0].mxu0 %v1720
        %v2417 = vpop.f32.mrb[0].mxu0
        %v2418 = vadd.f32 0.0, %v2417
        %v2419 = vpop.f32.mrb[0].mxu0
        %v2420 = vadd.f32 0.0, %v2419
        %v2421 = vpop.f32.mrb[0].mxu0
        %v2422 = vadd.f32 0.0, %v2421
        %v2423 = vpop.f32.mrb[0].mxu0
        %v2424 = vadd.f32 0.0, %v2423
        %2425 = vmatprep.mubr.bf16.mxu0 %v1951
        %2426 = vmatmul.mubr.bf16.gmra.mrb[0].mxu0 %v1722
        %v2427 = vpop.f32.mrb[0].mxu0
        %v2428 = vadd.f32 0.0, %v2427
        %v2429 = vpop.f32.mrb[0].mxu0
        %v2430 = vadd.f32 0.0, %v2429
        %v2431 = vpop.f32.mrb[0].mxu0
        %v2432 = vadd.f32 0.0, %v2431
        %v2433 = vpop.f32.mrb[0].mxu0
        %v2434 = vadd.f32 0.0, %v2433
        %2435 = vmatprep.mubr.bf16.mxu0 %v1954
        %2436 = vmatmul.mubr.bf16.gmra.mrb[0].mxu0 %v1724
        %v2437 = vpop.f32.mrb[0].mxu0
        %v2438 = vadd.f32 0.0, %v2437
        %v2439 = vpop.f32.mrb[0].mxu0
        %v2440 = vadd.f32 0.0, %v2439
        %v2441 = vpop.f32.mrb[0].mxu0
        %v2442 = vadd.f32 0.0, %v2441
        %v2443 = vpop.f32.mrb[0].mxu0
        %v2444 = vadd.f32 0.0, %v2443
        %2445 = vmatprep.mubr.bf16.mxu0 %v1957
        %2446 = vmatmul.mubr.bf16.gmra.mrb[0].mxu0 %v1726
        %v2447 = vpop.f32.mrb[0].mxu0
        %v2448 = vadd.f32 0.0, %v2447
        %v2449 = vpop.f32.mrb[0].mxu0
        %v2450 = vadd.f32 0.0, %v2449
        %v2451 = vpop.f32.mrb[0].mxu0
        %v2452 = vadd.f32 0.0, %v2451
        %v2453 = vpop.f32.mrb[0].mxu0
        %v2454 = vadd.f32 0.0, %v2453
        %2455 = vmatprep.mubr.bf16.mxu0 %v1960
        %2456 = vmatmul.mubr.bf16.gmra.mrb[0].mxu0 %v1728
        %v2457 = vpop.f32.mrb[0].mxu0
        %v2458 = vadd.f32 0.0, %v2457
        %v2459 = vpop.f32.mrb[0].mxu0
        %v2460 = vadd.f32 0.0, %v2459
        %v2461 = vpop.f32.mrb[0].mxu0
        %v2462 = vadd.f32 0.0, %v2461
        %v2463 = vpop.f32.mrb[0].mxu0
        %v2464 = vadd.f32 0.0, %v2463
        %2465 = vmatprep.mubr.bf16.mxu0 %v1963
        %2466 = vmatmul.mubr.bf16.gmra.mrb[0].mxu0 %v1730
        %v2467 = vpop.f32.mrb[0].mxu0
        %v2468 = vadd.f32 0.0, %v2467
        %v2469 = vpop.f32.mrb[0].mxu0
        %v2470 = vadd.f32 0.0, %v2469
        %v2471 = vpop.f32.mrb[0].mxu0
        %v2472 = vadd.f32 0.0, %v2471
        %v2473 = vpop.f32.mrb[0].mxu0
        %v2474 = vadd.f32 0.0, %v2473
        %2475 = vmatprep.mubr.bf16.mxu0 %v1966
        %2476 = vmatmul.mubr.bf16.gmra.mrb[0].mxu0 %v1732
        %v2477 = vpop.f32.mrb[0].mxu0
        %v2478 = vadd.f32 0.0, %v2477
        %v2479 = vpop.f32.mrb[0].mxu0
        %v2480 = vadd.f32 0.0, %v2479
        %v2481 = vpop.f32.mrb[0].mxu0
        %v2482 = vadd.f32 0.0, %v2481
        %v2483 = vpop.f32.mrb[0].mxu0
        %v2484 = vadd.f32 0.0, %v2483
        %2485 = vmatprep.mubr.bf16.mxu0 %v1969
        %2486 = vmatmul.mubr.bf16.gmra.mrb[0].mxu0 %v1734
        %v2487 = vpop.f32.mrb[0].mxu0
        %v2488 = vadd.f32 0.0, %v2487
        %v2489 = vpop.f32.mrb[0].mxu0
        %v2490 = vadd.f32 0.0, %v2489
        %v2491 = vpop.f32.mrb[0].mxu0
        %v2492 = vadd.f32 0.0, %v2491
        %v2493 = vpop.f32.mrb[0].mxu0
        %v2494 = vadd.f32 0.0, %v2493
        %2495 = vmatprep.mubr.bf16.mxu0 %v1972
        %2496 = vmatmul.mubr.bf16.gmra.mrb[0].mxu0 %v1736
        %v2497 = vpop.f32.mrb[0].mxu0
        %v2498 = vadd.f32 0.0, %v2497
        %v2499 = vpop.f32.mrb[0].mxu0
        %v2500 = vadd.f32 0.0, %v2499
        %v2501 = vpop.f32.mrb[0].mxu0
        %v2502 = vadd.f32 0.0, %v2501
        %v2503 = vpop.f32.mrb[0].mxu0
        %v2504 = vadd.f32 0.0, %v2503
        %2505 = vmatprep.mubr.bf16.mxu0 %v1975
        %2506 = vmatmul.mubr.bf16.gmra.mrb[0].mxu0 %v1738
        %v2507 = vpop.f32.mrb[0].mxu0
        %v2508 = vadd.f32 0.0, %v2507
        %v2509 = vpop.f32.mrb[0].mxu0
        %v2510 = vadd.f32 0.0, %v2509
        %v2511 = vpop.f32.mrb[0].mxu0
        %v2512 = vadd.f32 0.0, %v2511
        %v2513 = vpop.f32.mrb[0].mxu0
        %v2514 = vadd.f32 0.0, %v2513
        %2515 = vmatprep.mubr.bf16.mxu0 %v1978
        %2516 = vmatmul.mubr.bf16.gmra.mrb[0].mxu0 %v1740
        %v2517 = vpop.f32.mrb[0].mxu0
        %v2518 = vadd.f32 0.0, %v2517
        %v2519 = vpop.f32.mrb[0].mxu0
        %v2520 = vadd.f32 0.0, %v2519
        %v2521 = vpop.f32.mrb[0].mxu0
        %v2522 = vadd.f32 0.0, %v2521
        %v2523 = vpop.f32.mrb[0].mxu0
        %v2524 = vadd.f32 0.0, %v2523
        %2525 = vmatprep.mubr.bf16.mxu0 %v1981
        %2526 = vmatmul.mubr.bf16.gmra.mrb[0].mxu0 %v1742
        %v2527 = vpop.f32.mrb[0].mxu0
        %v2528 = vadd.f32 0.0, %v2527
        %v2529 = vpop.f32.mrb[0].mxu0
        %v2530 = vadd.f32 0.0, %v2529
        %v2531 = vpop.f32.mrb[0].mxu0
        %v2532 = vadd.f32 0.0, %v2531
        %v2533 = vpop.f32.mrb[0].mxu0
        %v2534 = vadd.f32 0.0, %v2533
        %2535 = vmatprep.mubr.bf16.mxu0 %v1984
        %2536 = vmatmul.mubr.bf16.gmra.mrb[0].mxu0 %v1744
        %v2537 = vpop.f32.mrb[0].mxu0
        %v2538 = vadd.f32 0.0, %v2537
        %v2539 = vpop.f32.mrb[0].mxu0
        %v2540 = vadd.f32 0.0, %v2539
        %v2541 = vpop.f32.mrb[0].mxu0
        %v2542 = vadd.f32 0.0, %v2541
        %v2543 = vpop.f32.mrb[0].mxu0
        %v2544 = vadd.f32 0.0, %v2543
        %2545 = vmatprep.mubr.bf16.mxu0 %v1987
        %2546 = vmatmul.mubr.bf16.gmra.mrb[0].mxu0 %v1746
        %v2547 = vpop.f32.mrb[0].mxu0
        %v2548 = vadd.f32 0.0, %v2547
        %v2549 = vpop.f32.mrb[0].mxu0
        %v2550 = vadd.f32 0.0, %v2549
        %v2551 = vpop.f32.mrb[0].mxu0
        %v2552 = vadd.f32 0.0, %v2551
        %v2553 = vpop.f32.mrb[0].mxu0
        %v2554 = vadd.f32 0.0, %v2553
        %2555 = vmatprep.mubr.bf16.mxu0 %v1990
        %2556 = vmatmul.mubr.bf16.gmra.mrb[0].mxu0 %v1748
        %v2557 = vpop.f32.mrb[0].mxu0
        %v2558 = vadd.f32 0.0, %v2557
        %v2559 = vpop.f32.mrb[0].mxu0
        %v2560 = vadd.f32 0.0, %v2559
        %v2561 = vpop.f32.mrb[0].mxu0
        %v2562 = vadd.f32 0.0, %v2561
        %v2563 = vpop.f32.mrb[0].mxu0
        %v2564 = vadd.f32 0.0, %v2563
        %2565 = vmatprep.mubr.bf16.mxu0 %v1993
        %2566 = vmatmul.mubr.bf16.gmra.mrb[0].mxu0 %v1750
        %v2567 = vpop.f32.mrb[0].mxu0
        %v2568 = vadd.f32 0.0, %v2567
        %v2569 = vpop.f32.mrb[0].mxu0
        %v2570 = vadd.f32 0.0, %v2569
        %v2571 = vpop.f32.mrb[0].mxu0
        %v2572 = vadd.f32 0.0, %v2571
        %v2573 = vpop.f32.mrb[0].mxu0
        %v2574 = vadd.f32 0.0, %v2573
        %2575 = vmatprep.mubr.bf16.mxu0 %v1996
        %2576 = vmatmul.mubr.bf16.gmra.mrb[0].mxu0 %v1752
        %v2577 = vpop.f32.mrb[0].mxu0
        %v2578 = vadd.f32 0.0, %v2577
        %v2579 = vpop.f32.mrb[0].mxu0
        %v2580 = vadd.f32 0.0, %v2579
        %v2581 = vpop.f32.mrb[0].mxu0
        %v2582 = vadd.f32 0.0, %v2581
        %v2583 = vpop.f32.mrb[0].mxu0
        %v2584 = vadd.f32 0.0, %v2583
        %2585 = vmatprep.mubr.bf16.mxu0 %v1999
        %2586 = vmatmul.mubr.bf16.gmra.mrb[0].mxu0 %v1754
        %v2587 = vpop.f32.mrb[0].mxu0
        %v2588 = vadd.f32 0.0, %v2587
        %v2589 = vpop.f32.mrb[0].mxu0
        %v2590 = vadd.f32 0.0, %v2589
        %v2591 = vpop.f32.mrb[0].mxu0
        %v2592 = vadd.f32 0.0, %v2591
        %v2593 = vpop.f32.mrb[0].mxu0
        %v2594 = vadd.f32 0.0, %v2593
        %2595 = vmatprep.mubr.bf16.mxu0 %v2002
        %2596 = vmatmul.mubr.bf16.gmra.mrb[0].mxu0 %v1756
        %v2597 = vpop.f32.mrb[0].mxu0
        %v2598 = vadd.f32 0.0, %v2597
        %v2599 = vpop.f32.mrb[0].mxu0
        %v2600 = vadd.f32 0.0, %v2599
        %v2601 = vpop.f32.mrb[0].mxu0
        %v2602 = vadd.f32 0.0, %v2601
        %v2603 = vpop.f32.mrb[0].mxu0
        %v2604 = vadd.f32 0.0, %v2603
        %2605 = vmatprep.mubr.bf16.mxu0 %v2005
        %2606 = vmatmul.mubr.bf16.gmra.mrb[0].mxu0 %v1758
        %v2607 = vpop.f32.mrb[0].mxu0
        %v2608 = vadd.f32 0.0, %v2607
        %v2609 = vpop.f32.mrb[0].mxu0
        %v2610 = vadd.f32 0.0, %v2609
        %v2611 = vpop.f32.mrb[0].mxu0
        %v2612 = vadd.f32 0.0, %v2611
        %v2613 = vpop.f32.mrb[0].mxu0
        %v2614 = vadd.f32 0.0, %v2613
        %2615 = vmatprep.mubr.bf16.mxu0 %v2008
        %2616 = vmatmul.mubr.bf16.gmra.mrb[0].mxu0 %v1760
        %v2617 = vpop.f32.mrb[0].mxu0
        %v2618 = vadd.f32 0.0, %v2617
        %v2619 = vpop.f32.mrb[0].mxu0
        %v2620 = vadd.f32 0.0, %v2619
        %v2621 = vpop.f32.mrb[0].mxu0
        %v2622 = vadd.f32 0.0, %v2621
        %v2623 = vpop.f32.mrb[0].mxu0
        %v2624 = vadd.f32 0.0, %v2623
        %2625 = vmatprep.mubr.bf16.mxu0 %v2011
        %2626 = vmatmul.mubr.bf16.gmra.mrb[0].mxu0 %v1762
        %v2627 = vpop.f32.mrb[0].mxu0
        %v2628 = vadd.f32 0.0, %v2627
        %v2629 = vpop.f32.mrb[0].mxu0
        %v2630 = vadd.f32 0.0, %v2629
        %v2631 = vpop.f32.mrb[0].mxu0
        %v2632 = vadd.f32 0.0, %v2631
        %v2633 = vpop.f32.mrb[0].mxu0
        %v2634 = vadd.f32 0.0, %v2633
        %2635 = vmatprep.mubr.bf16.mxu0 %v2014
        %2636 = vmatmul.mubr.bf16.gmra.mrb[0].mxu0 %v1764
        %v2637 = vpop.f32.mrb[0].mxu0
        %v2638 = vadd.f32 0.0, %v2637
        %v2639 = vpop.f32.mrb[0].mxu0
        %v2640 = vadd.f32 0.0, %v2639
        %v2641 = vpop.f32.mrb[0].mxu0
        %v2642 = vadd.f32 0.0, %v2641
        %v2643 = vpop.f32.mrb[0].mxu0
        %v2644 = vadd.f32 0.0, %v2643
        %2645 = vmatprep.mubr.bf16.mxu0 %v2017
        %2646 = vmatmul.mubr.bf16.gmra.mrb[0].mxu0 %v1766
        %v2647 = vpop.f32.mrb[0].mxu0
        %v2648 = vadd.f32 0.0, %v2647
        %v2649 = vpop.f32.mrb[0].mxu0
        %v2650 = vadd.f32 0.0, %v2649
        %v2651 = vpop.f32.mrb[0].mxu0
        %v2652 = vadd.f32 0.0, %v2651
        %v2653 = vpop.f32.mrb[0].mxu0
        %v2654 = vadd.f32 0.0, %v2653
        %2655 = vmatprep.mubr.bf16.mxu0 %v2020
        %2656 = vmatmul.mubr.bf16.gmra.mrb[0].mxu0 %v1768
        %v2657 = vpop.f32.mrb[0].mxu0
        %v2658 = vadd.f32 0.0, %v2657
        %v2659 = vpop.f32.mrb[0].mxu0
        %v2660 = vadd.f32 0.0, %v2659
        %v2661 = vpop.f32.mrb[0].mxu0
        %v2662 = vadd.f32 0.0, %v2661
        %v2663 = vpop.f32.mrb[0].mxu0
        %v2664 = vadd.f32 0.0, %v2663
        %2665 = vmatprep.mubr.bf16.mxu0 %v2023
        %2666 = vmatmul.mubr.bf16.gmra.mrb[0].mxu0 %v1770
        %v2667 = vpop.f32.mrb[0].mxu0
        %v2668 = vadd.f32 0.0, %v2667
        %v2669 = vpop.f32.mrb[0].mxu0
        %v2670 = vadd.f32 0.0, %v2669
        %v2671 = vpop.f32.mrb[0].mxu0
        %v2672 = vadd.f32 0.0, %v2671
        %v2673 = vpop.f32.mrb[0].mxu0
        %v2674 = vadd.f32 0.0, %v2673
        %2675 = vmatprep.mubr.bf16.mxu0 %v2026
        %2676 = vmatmul.mubr.bf16.gmra.mrb[0].mxu0 %v1772
        %v2677 = vpop.f32.mrb[0].mxu0
        %v2678 = vadd.f32 0.0, %v2677
        %v2679 = vpop.f32.mrb[0].mxu0
        %v2680 = vadd.f32 0.0, %v2679
        %v2681 = vpop.f32.mrb[0].mxu0
        %v2682 = vadd.f32 0.0, %v2681
        %v2683 = vpop.f32.mrb[0].mxu0
        %v2684 = vadd.f32 0.0, %v2683
        %2685 = vmatprep.mubr.bf16.mxu0 %v2029
        %2686 = vmatmul.mubr.bf16.gmra.mrb[0].mxu0 %v1774
        %v2687 = vpop.f32.mrb[0].mxu0
        %v2688 = vadd.f32 0.0, %v2687
        %v2689 = vpop.f32.mrb[0].mxu0
        %v2690 = vadd.f32 0.0, %v2689
        %v2691 = vpop.f32.mrb[0].mxu0
        %v2692 = vadd.f32 0.0, %v2691
        %v2693 = vpop.f32.mrb[0].mxu0
        %v2694 = vadd.f32 0.0, %v2693
        %2695 = vmatprep.mubr.bf16.mxu0 %v2032
        %2696 = vmatmul.mubr.bf16.gmra.mrb[0].mxu0 %v1776
        %v2697 = vpop.f32.mrb[0].mxu0
        %v2698 = vadd.f32 0.0, %v2697
        %v2699 = vpop.f32.mrb[0].mxu0
        %v2700 = vadd.f32 0.0, %v2699
        %v2701 = vpop.f32.mrb[0].mxu0
        %v2702 = vadd.f32 0.0, %v2701
        %v2703 = vpop.f32.mrb[0].mxu0
        %v2704 = vadd.f32 0.0, %v2703
        %2705 = vmatprep.mubr.bf16.mxu0 %v2035
        %2706 = vmatmul.mubr.bf16.gmra.mrb[0].mxu0 %v1778
        %v2707 = vpop.f32.mrb[0].mxu0
        %v2708 = vadd.f32 0.0, %v2707
        %v2709 = vpop.f32.mrb[0].mxu0
        %v2710 = vadd.f32 0.0, %v2709
        %v2711 = vpop.f32.mrb[0].mxu0
        %v2712 = vadd.f32 0.0, %v2711
        %v2713 = vpop.f32.mrb[0].mxu0
        %v2714 = vadd.f32 0.0, %v2713
        %2715 = vdwg.mxu0
        %v2716 = vmul.f32 %v2078, 0.01
        %v2717 = vmul.f32 %v2080, 0.01
        %v2718 = vmul.f32 %v2082, 0.01
        %v2719 = vmul.f32 %v2084, 0.01
        %v2720 = vmul.f32 %v2088, 0.01
        %v2721 = vmul.f32 %v2090, 0.01
        %v2722 = vmul.f32 %v2092, 0.01
        %v2723 = vmul.f32 %v2094, 0.01
        %v2724 = vmul.f32 %v2098, 0.01
        %v2725 = vmul.f32 %v2100, 0.01
        %v2726 = vmul.f32 %v2102, 0.01
        %v2727 = vmul.f32 %v2104, 0.01
        %v2728 = vmul.f32 %v2108, 0.01
        %v2729 = vmul.f32 %v2110, 0.01
        %v2730 = vmul.f32 %v2112, 0.01
        %v2731 = vmul.f32 %v2114, 0.01
        %v2732 = vmul.f32 %v2118, 0.01
        %v2733 = vmul.f32 %v2120, 0.01
        %v2734 = vmul.f32 %v2122, 0.01
        %v2735 = vmul.f32 %v2124, 0.01
        %v2736 = vmul.f32 %v2128, 0.01
        %v2737 = vmul.f32 %v2130, 0.01
        %v2738 = vmul.f32 %v2132, 0.01
        %v2739 = vmul.f32 %v2134, 0.01
        %v2740 = vmul.f32 %v2138, 0.01
        %v2741 = vmul.f32 %v2140, 0.01
        %v2742 = vmul.f32 %v2142, 0.01
        %v2743 = vmul.f32 %v2144, 0.01
        %v2744 = vmul.f32 %v2148, 0.01
        %v2745 = vmul.f32 %v2150, 0.01
        %v2746 = vmul.f32 %v2152, 0.01
        %v2747 = vmul.f32 %v2154, 0.01
        %v2748 = vmul.f32 %v2158, 0.01
        %v2749 = vmul.f32 %v2160, 0.01
        %v2750 = vmul.f32 %v2162, 0.01
        %v2751 = vmul.f32 %v2164, 0.01
        %v2752 = vmul.f32 %v2168, 0.01
        %v2753 = vmul.f32 %v2170, 0.01
        %v2754 = vmul.f32 %v2172, 0.01
        %v2755 = vmul.f32 %v2174, 0.01
        %v2756 = vmul.f32 %v2178, 0.01
        %v2757 = vmul.f32 %v2180, 0.01
        %v2758 = vmul.f32 %v2182, 0.01
        %v2759 = vmul.f32 %v2184, 0.01
        %v2760 = vmul.f32 %v2188, 0.01
        %v2761 = vmul.f32 %v2190, 0.01
        %v2762 = vmul.f32 %v2192, 0.01
        %v2763 = vmul.f32 %v2194, 0.01
        %v2764 = vmul.f32 %v2198, 0.01
        %v2765 = vmul.f32 %v2200, 0.01
        %v2766 = vmul.f32 %v2202, 0.01
        %v2767 = vmul.f32 %v2204, 0.01
        %v2768 = vmul.f32 %v2208, 0.01
        %v2769 = vmul.f32 %v2210, 0.01
        %v2770 = vmul.f32 %v2212, 0.01
        %v2771 = vmul.f32 %v2214, 0.01
        %v2772 = vmul.f32 %v2218, 0.01
        %v2773 = vmul.f32 %v2220, 0.01
        %v2774 = vmul.f32 %v2222, 0.01
        %v2775 = vmul.f32 %v2224, 0.01
        %v2776 = vmul.f32 %v2228, 0.01
        %v2777 = vmul.f32 %v2230, 0.01
        %v2778 = vmul.f32 %v2232, 0.01
        %v2779 = vmul.f32 %v2234, 0.01
        %v2780 = vmul.f32 %v2238, 0.01
        %v2781 = vmul.f32 %v2240, 0.01
        %v2782 = vmul.f32 %v2242, 0.01
        %v2783 = vmul.f32 %v2244, 0.01
        %v2784 = vmul.f32 %v2248, 0.01
        %v2785 = vmul.f32 %v2250, 0.01
        %v2786 = vmul.f32 %v2252, 0.01
        %v2787 = vmul.f32 %v2254, 0.01
        %v2788 = vmul.f32 %v2258, 0.01
        %v2789 = vmul.f32 %v2260, 0.01
        %v2790 = vmul.f32 %v2262, 0.01
        %v2791 = vmul.f32 %v2264, 0.01
        %v2792 = vmul.f32 %v2268, 0.01
        %v2793 = vmul.f32 %v2270, 0.01
        %v2794 = vmul.f32 %v2272, 0.01
        %v2795 = vmul.f32 %v2274, 0.01
        %v2796 = vmul.f32 %v2278, 0.01
        %v2797 = vmul.f32 %v2280, 0.01
        %v2798 = vmul.f32 %v2282, 0.01
        %v2799 = vmul.f32 %v2284, 0.01
        %v2800 = vmul.f32 %v2288, 0.01
        %v2801 = vmul.f32 %v2290, 0.01
        %v2802 = vmul.f32 %v2292, 0.01
        %v2803 = vmul.f32 %v2294, 0.01
        %v2804 = vmul.f32 %v2298, 0.01
        %v2805 = vmul.f32 %v2300, 0.01
        %v2806 = vmul.f32 %v2302, 0.01
        %v2807 = vmul.f32 %v2304, 0.01
        %v2808 = vmul.f32 %v2308, 0.01
        %v2809 = vmul.f32 %v2310, 0.01
        %v2810 = vmul.f32 %v2312, 0.01
        %v2811 = vmul.f32 %v2314, 0.01
        %v2812 = vmul.f32 %v2318, 0.01
        %v2813 = vmul.f32 %v2320, 0.01
        %v2814 = vmul.f32 %v2322, 0.01
        %v2815 = vmul.f32 %v2324, 0.01
        %v2816 = vmul.f32 %v2328, 0.01
        %v2817 = vmul.f32 %v2330, 0.01
        %v2818 = vmul.f32 %v2332, 0.01
        %v2819 = vmul.f32 %v2334, 0.01
        %v2820 = vmul.f32 %v2338, 0.01
        %v2821 = vmul.f32 %v2340, 0.01
        %v2822 = vmul.f32 %v2342, 0.01
        %v2823 = vmul.f32 %v2344, 0.01
        %v2824 = vmul.f32 %v2348, 0.01
        %v2825 = vmul.f32 %v2350, 0.01
        %v2826 = vmul.f32 %v2352, 0.01
        %v2827 = vmul.f32 %v2354, 0.01
        %v2828 = vmul.f32 %v2358, 0.01
        %v2829 = vmul.f32 %v2360, 0.01
        %v2830 = vmul.f32 %v2362, 0.01
        %v2831 = vmul.f32 %v2364, 0.01
        %v2832 = vmul.f32 %v2368, 0.01
        %v2833 = vmul.f32 %v2370, 0.01
        %v2834 = vmul.f32 %v2372, 0.01
        %v2835 = vmul.f32 %v2374, 0.01
        %v2836 = vmul.f32 %v2378, 0.01
        %v2837 = vmul.f32 %v2380, 0.01
        %v2838 = vmul.f32 %v2382, 0.01
        %v2839 = vmul.f32 %v2384, 0.01
        %v2840 = vmul.f32 %v2388, 0.01
        %v2841 = vmul.f32 %v2390, 0.01
        %v2842 = vmul.f32 %v2392, 0.01
        %v2843 = vmul.f32 %v2394, 0.01
        %v2844 = vmul.f32 %v2398, 0.01
        %v2845 = vmul.f32 %v2400, 0.01
        %v2846 = vmul.f32 %v2402, 0.01
        %v2847 = vmul.f32 %v2404, 0.01
        %v2848 = vmul.f32 %v2408, 0.01
        %v2849 = vmul.f32 %v2410, 0.01
        %v2850 = vmul.f32 %v2412, 0.01
        %v2851 = vmul.f32 %v2414, 0.01
        %v2852 = vmul.f32 %v2418, 0.01
        %v2853 = vmul.f32 %v2420, 0.01
        %v2854 = vmul.f32 %v2422, 0.01
        %v2855 = vmul.f32 %v2424, 0.01
        %v2856 = vmul.f32 %v2428, 0.01
        %v2857 = vmul.f32 %v2430, 0.01
        %v2858 = vmul.f32 %v2432, 0.01
        %v2859 = vmul.f32 %v2434, 0.01
        %v2860 = vmul.f32 %v2438, 0.01
        %v2861 = vmul.f32 %v2440, 0.01
        %v2862 = vmul.f32 %v2442, 0.01
        %v2863 = vmul.f32 %v2444, 0.01
        %v2864 = vmul.f32 %v2448, 0.01
        %v2865 = vmul.f32 %v2450, 0.01
        %v2866 = vmul.f32 %v2452, 0.01
        %v2867 = vmul.f32 %v2454, 0.01
        %v2868 = vmul.f32 %v2458, 0.01
        %v2869 = vmul.f32 %v2460, 0.01
        %v2870 = vmul.f32 %v2462, 0.01
        %v2871 = vmul.f32 %v2464, 0.01
        %v2872 = vmul.f32 %v2468, 0.01
        %v2873 = vmul.f32 %v2470, 0.01
        %v2874 = vmul.f32 %v2472, 0.01
        %v2875 = vmul.f32 %v2474, 0.01
        %v2876 = vmul.f32 %v2478, 0.01
        %v2877 = vmul.f32 %v2480, 0.01
        %v2878 = vmul.f32 %v2482, 0.01
        %v2879 = vmul.f32 %v2484, 0.01
        %v2880 = vmul.f32 %v2488, 0.01
        %v2881 = vmul.f32 %v2490, 0.01
        %v2882 = vmul.f32 %v2492, 0.01
        %v2883 = vmul.f32 %v2494, 0.01
        %v2884 = vmul.f32 %v2498, 0.01
        %v2885 = vmul.f32 %v2500, 0.01
        %v2886 = vmul.f32 %v2502, 0.01
        %v2887 = vmul.f32 %v2504, 0.01
        %v2888 = vmul.f32 %v2508, 0.01
        %v2889 = vmul.f32 %v2510, 0.01
        %v2890 = vmul.f32 %v2512, 0.01
        %v2891 = vmul.f32 %v2514, 0.01
        %v2892 = vmul.f32 %v2518, 0.01
        %v2893 = vmul.f32 %v2520, 0.01
        %v2894 = vmul.f32 %v2522, 0.01
        %v2895 = vmul.f32 %v2524, 0.01
        %v2896 = vmul.f32 %v2528, 0.01
        %v2897 = vmul.f32 %v2530, 0.01
        %v2898 = vmul.f32 %v2532, 0.01
        %v2899 = vmul.f32 %v2534, 0.01
        %v2900 = vmul.f32 %v2538, 0.01
        %v2901 = vmul.f32 %v2540, 0.01
        %v2902 = vmul.f32 %v2542, 0.01
        %v2903 = vmul.f32 %v2544, 0.01
        %v2904 = vmul.f32 %v2548, 0.01
        %v2905 = vmul.f32 %v2550, 0.01
        %v2906 = vmul.f32 %v2552, 0.01
        %v2907 = vmul.f32 %v2554, 0.01
        %v2908 = vmul.f32 %v2558, 0.01
        %v2909 = vmul.f32 %v2560, 0.01
        %v2910 = vmul.f32 %v2562, 0.01
        %v2911 = vmul.f32 %v2564, 0.01
        %v2912 = vmul.f32 %v2568, 0.01
        %v2913 = vmul.f32 %v2570, 0.01
        %v2914 = vmul.f32 %v2572, 0.01
        %v2915 = vmul.f32 %v2574, 0.01
        %v2916 = vmul.f32 %v2578, 0.01
        %v2917 = vmul.f32 %v2580, 0.01
        %v2918 = vmul.f32 %v2582, 0.01
        %v2919 = vmul.f32 %v2584, 0.01
        %v2920 = vmul.f32 %v2588, 0.01
        %v2921 = vmul.f32 %v2590, 0.01
        %v2922 = vmul.f32 %v2592, 0.01
        %v2923 = vmul.f32 %v2594, 0.01
        %v2924 = vmul.f32 %v2598, 0.01
        %v2925 = vmul.f32 %v2600, 0.01
        %v2926 = vmul.f32 %v2602, 0.01
        %v2927 = vmul.f32 %v2604, 0.01
        %v2928 = vmul.f32 %v2608, 0.01
        %v2929 = vmul.f32 %v2610, 0.01
        %v2930 = vmul.f32 %v2612, 0.01
        %v2931 = vmul.f32 %v2614, 0.01
        %v2932 = vmul.f32 %v2618, 0.01
        %v2933 = vmul.f32 %v2620, 0.01
        %v2934 = vmul.f32 %v2622, 0.01
        %v2935 = vmul.f32 %v2624, 0.01
        %v2936 = vmul.f32 %v2628, 0.01
        %v2937 = vmul.f32 %v2630, 0.01
        %v2938 = vmul.f32 %v2632, 0.01
        %v2939 = vmul.f32 %v2634, 0.01
        %v2940 = vmul.f32 %v2638, 0.01
        %v2941 = vmul.f32 %v2640, 0.01
        %v2942 = vmul.f32 %v2642, 0.01
        %v2943 = vmul.f32 %v2644, 0.01
        %v2944 = vmul.f32 %v2648, 0.01
        %v2945 = vmul.f32 %v2650, 0.01
        %v2946 = vmul.f32 %v2652, 0.01
        %v2947 = vmul.f32 %v2654, 0.01
        %v2948 = vmul.f32 %v2658, 0.01
        %v2949 = vmul.f32 %v2660, 0.01
        %v2950 = vmul.f32 %v2662, 0.01
        %v2951 = vmul.f32 %v2664, 0.01
        %v2952 = vmul.f32 %v2668, 0.01
        %v2953 = vmul.f32 %v2670, 0.01
        %v2954 = vmul.f32 %v2672, 0.01
        %v2955 = vmul.f32 %v2674, 0.01
        %v2956 = vmul.f32 %v2678, 0.01
        %v2957 = vmul.f32 %v2680, 0.01
        %v2958 = vmul.f32 %v2682, 0.01
        %v2959 = vmul.f32 %v2684, 0.01
        %v2960 = vmul.f32 %v2688, 0.01
        %v2961 = vmul.f32 %v2690, 0.01
        %v2962 = vmul.f32 %v2692, 0.01
        %v2963 = vmul.f32 %v2694, 0.01
        %v2964 = vmul.f32 %v2698, 0.01
        %v2965 = vmul.f32 %v2700, 0.01
        %v2966 = vmul.f32 %v2702, 0.01
        %v2967 = vmul.f32 %v2704, 0.01
        %v2968 = vmul.f32 %v2708, 0.01
        %v2969 = vmul.f32 %v2710, 0.01
        %v2970 = vmul.f32 %v2712, 0.01
        %v2971 = vmul.f32 %v2714, 0.01
        %v2972 = vmax.f32 %v2078, %v2716
        %v2973 = vmax.f32 %v2080, %v2717
        %v2974 = vmax.f32 %v2082, %v2718
        %v2975 = vmax.f32 %v2084, %v2719
        %v2976 = vmax.f32 %v2088, %v2720
        %v2977 = vmax.f32 %v2090, %v2721
        %v2978 = vmax.f32 %v2092, %v2722
        %v2979 = vmax.f32 %v2094, %v2723
        %v2980 = vmax.f32 %v2098, %v2724
        %v2981 = vmax.f32 %v2100, %v2725
        %v2982 = vmax.f32 %v2102, %v2726
        %v2983 = vmax.f32 %v2104, %v2727
        %v2984 = vmax.f32 %v2108, %v2728
        %v2985 = vmax.f32 %v2110, %v2729
        %v2986 = vmax.f32 %v2112, %v2730
        %v2987 = vmax.f32 %v2114, %v2731
        %v2988 = vmax.f32 %v2118, %v2732
        %v2989 = vmax.f32 %v2120, %v2733
        %v2990 = vmax.f32 %v2122, %v2734
        %v2991 = vmax.f32 %v2124, %v2735
        %v2992 = vmax.f32 %v2128, %v2736
        %v2993 = vmax.f32 %v2130, %v2737
        %v2994 = vmax.f32 %v2132, %v2738
        %v2995 = vmax.f32 %v2134, %v2739
        %v2996 = vmax.f32 %v2138, %v2740
        %v2997 = vmax.f32 %v2140, %v2741
        %v2998 = vmax.f32 %v2142, %v2742
        %v2999 = vmax.f32 %v2144, %v2743
        %v3000 = vmax.f32 %v2148, %v2744
        %v3001 = vmax.f32 %v2150, %v2745
        %v3002 = vmax.f32 %v2152, %v2746
        %v3003 = vmax.f32 %v2154, %v2747
        %v3004 = vmax.f32 %v2158, %v2748
        %v3005 = vmax.f32 %v2160, %v2749
        %v3006 = vmax.f32 %v2162, %v2750
        %v3007 = vmax.f32 %v2164, %v2751
        %v3008 = vmax.f32 %v2168, %v2752
        %v3009 = vmax.f32 %v2170, %v2753
        %v3010 = vmax.f32 %v2172, %v2754
        %v3011 = vmax.f32 %v2174, %v2755
        %v3012 = vmax.f32 %v2178, %v2756
        %v3013 = vmax.f32 %v2180, %v2757
        %v3014 = vmax.f32 %v2182, %v2758
        %v3015 = vmax.f32 %v2184, %v2759
        %v3016 = vmax.f32 %v2188, %v2760
        %v3017 = vmax.f32 %v2190, %v2761
        %v3018 = vmax.f32 %v2192, %v2762
        %v3019 = vmax.f32 %v2194, %v2763
        %v3020 = vmax.f32 %v2198, %v2764
        %v3021 = vmax.f32 %v2200, %v2765
        %v3022 = vmax.f32 %v2202, %v2766
        %v3023 = vmax.f32 %v2204, %v2767
        %v3024 = vmax.f32 %v2208, %v2768
        %v3025 = vmax.f32 %v2210, %v2769
        %v3026 = vmax.f32 %v2212, %v2770
        %v3027 = vmax.f32 %v2214, %v2771
        %v3028 = vmax.f32 %v2218, %v2772
        %v3029 = vmax.f32 %v2220, %v2773
        %v3030 = vmax.f32 %v2222, %v2774
        %v3031 = vmax.f32 %v2224, %v2775
        %v3032 = vmax.f32 %v2228, %v2776
        %v3033 = vmax.f32 %v2230, %v2777
        %v3034 = vmax.f32 %v2232, %v2778
        %v3035 = vmax.f32 %v2234, %v2779
        %v3036 = vmax.f32 %v2238, %v2780
        %v3037 = vmax.f32 %v2240, %v2781
        %v3038 = vmax.f32 %v2242, %v2782
        %v3039 = vmax.f32 %v2244, %v2783
        %v3040 = vmax.f32 %v2248, %v2784
        %v3041 = vmax.f32 %v2250, %v2785
        %v3042 = vmax.f32 %v2252, %v2786
        %v3043 = vmax.f32 %v2254, %v2787
        %v3044 = vmax.f32 %v2258, %v2788
        %v3045 = vmax.f32 %v2260, %v2789
        %v3046 = vmax.f32 %v2262, %v2790
        %v3047 = vmax.f32 %v2264, %v2791
        %v3048 = vmax.f32 %v2268, %v2792
        %v3049 = vmax.f32 %v2270, %v2793
        %v3050 = vmax.f32 %v2272, %v2794
        %v3051 = vmax.f32 %v2274, %v2795
        %v3052 = vmax.f32 %v2278, %v2796
        %v3053 = vmax.f32 %v2280, %v2797
        %v3054 = vmax.f32 %v2282, %v2798
        %v3055 = vmax.f32 %v2284, %v2799
        %v3056 = vmax.f32 %v2288, %v2800
        %v3057 = vmax.f32 %v2290, %v2801
        %v3058 = vmax.f32 %v2292, %v2802
        %v3059 = vmax.f32 %v2294, %v2803
        %v3060 = vmax.f32 %v2298, %v2804
        %v3061 = vmax.f32 %v2300, %v2805
        %v3062 = vmax.f32 %v2302, %v2806
        %v3063 = vmax.f32 %v2304, %v2807
        %v3064 = vmax.f32 %v2308, %v2808
        %v3065 = vmax.f32 %v2310, %v2809
        %v3066 = vmax.f32 %v2312, %v2810
        %v3067 = vmax.f32 %v2314, %v2811
        %v3068 = vmax.f32 %v2318, %v2812
        %v3069 = vmax.f32 %v2320, %v2813
        %v3070 = vmax.f32 %v2322, %v2814
        %v3071 = vmax.f32 %v2324, %v2815
        %v3072 = vmax.f32 %v2328, %v2816
        %v3073 = vmax.f32 %v2330, %v2817
        %v3074 = vmax.f32 %v2332, %v2818
        %v3075 = vmax.f32 %v2334, %v2819
        %v3076 = vmax.f32 %v2338, %v2820
        %v3077 = vmax.f32 %v2340, %v2821
        %v3078 = vmax.f32 %v2342, %v2822
        %v3079 = vmax.f32 %v2344, %v2823
        %v3080 = vmax.f32 %v2348, %v2824
        %v3081 = vmax.f32 %v2350, %v2825
        %v3082 = vmax.f32 %v2352, %v2826
        %v3083 = vmax.f32 %v2354, %v2827
        %v3084 = vmax.f32 %v2358, %v2828
        %v3085 = vmax.f32 %v2360, %v2829
        %v3086 = vmax.f32 %v2362, %v2830
        %v3087 = vmax.f32 %v2364, %v2831
        %v3088 = vmax.f32 %v2368, %v2832
        %v3089 = vmax.f32 %v2370, %v2833
        %v3090 = vmax.f32 %v2372, %v2834
        %v3091 = vmax.f32 %v2374, %v2835
        %v3092 = vmax.f32 %v2378, %v2836
        %v3093 = vmax.f32 %v2380, %v2837
        %v3094 = vmax.f32 %v2382, %v2838
        %v3095 = vmax.f32 %v2384, %v2839
        %v3096 = vmax.f32 %v2388, %v2840
        %v3097 = vmax.f32 %v2390, %v2841
        %v3098 = vmax.f32 %v2392, %v2842
        %v3099 = vmax.f32 %v2394, %v2843
        %v3100 = vmax.f32 %v2398, %v2844
        %v3101 = vmax.f32 %v2400, %v2845
        %v3102 = vmax.f32 %v2402, %v2846
        %v3103 = vmax.f32 %v2404, %v2847
        %v3104 = vmax.f32 %v2408, %v2848
        %v3105 = vmax.f32 %v2410, %v2849
        %v3106 = vmax.f32 %v2412, %v2850
        %v3107 = vmax.f32 %v2414, %v2851
        %v3108 = vmax.f32 %v2418, %v2852
        %v3109 = vmax.f32 %v2420, %v2853
        %v3110 = vmax.f32 %v2422, %v2854
        %v3111 = vmax.f32 %v2424, %v2855
        %v3112 = vmax.f32 %v2428, %v2856
        %v3113 = vmax.f32 %v2430, %v2857
        %v3114 = vmax.f32 %v2432, %v2858
        %v3115 = vmax.f32 %v2434, %v2859
        %v3116 = vmax.f32 %v2438, %v2860
        %v3117 = vmax.f32 %v2440, %v2861
        %v3118 = vmax.f32 %v2442, %v2862
        %v3119 = vmax.f32 %v2444, %v2863
        %v3120 = vmax.f32 %v2448, %v2864
        %v3121 = vmax.f32 %v2450, %v2865
        %v3122 = vmax.f32 %v2452, %v2866
        %v3123 = vmax.f32 %v2454, %v2867
        %v3124 = vmax.f32 %v2458, %v2868
        %v3125 = vmax.f32 %v2460, %v2869
        %v3126 = vmax.f32 %v2462, %v2870
        %v3127 = vmax.f32 %v2464, %v2871
        %v3128 = vmax.f32 %v2468, %v2872
        %v3129 = vmax.f32 %v2470, %v2873
        %v3130 = vmax.f32 %v2472, %v2874
        %v3131 = vmax.f32 %v2474, %v2875
        %v3132 = vmax.f32 %v2478, %v2876
        %v3133 = vmax.f32 %v2480, %v2877
        %v3134 = vmax.f32 %v2482, %v2878
        %v3135 = vmax.f32 %v2484, %v2879
        %v3136 = vmax.f32 %v2488, %v2880
        %v3137 = vmax.f32 %v2490, %v2881
        %v3138 = vmax.f32 %v2492, %v2882
        %v3139 = vmax.f32 %v2494, %v2883
        %v3140 = vmax.f32 %v2498, %v2884
        %v3141 = vmax.f32 %v2500, %v2885
        %v3142 = vmax.f32 %v2502, %v2886
        %v3143 = vmax.f32 %v2504, %v2887
        %v3144 = vmax.f32 %v2508, %v2888
        %v3145 = vmax.f32 %v2510, %v2889
        %v3146 = vmax.f32 %v2512, %v2890
        %v3147 = vmax.f32 %v2514, %v2891
        %v3148 = vmax.f32 %v2518, %v2892
        %v3149 = vmax.f32 %v2520, %v2893
        %v3150 = vmax.f32 %v2522, %v2894
        %v3151 = vmax.f32 %v2524, %v2895
        %v3152 = vmax.f32 %v2528, %v2896
        %v3153 = vmax.f32 %v2530, %v2897
        %v3154 = vmax.f32 %v2532, %v2898
        %v3155 = vmax.f32 %v2534, %v2899
        %v3156 = vmax.f32 %v2538, %v2900
        %v3157 = vmax.f32 %v2540, %v2901
        %v3158 = vmax.f32 %v2542, %v2902
        %v3159 = vmax.f32 %v2544, %v2903
        %v3160 = vmax.f32 %v2548, %v2904
        %v3161 = vmax.f32 %v2550, %v2905
        %v3162 = vmax.f32 %v2552, %v2906
        %v3163 = vmax.f32 %v2554, %v2907
        %v3164 = vmax.f32 %v2558, %v2908
        %v3165 = vmax.f32 %v2560, %v2909
        %v3166 = vmax.f32 %v2562, %v2910
        %v3167 = vmax.f32 %v2564, %v2911
        %v3168 = vmax.f32 %v2568, %v2912
        %v3169 = vmax.f32 %v2570, %v2913
        %v3170 = vmax.f32 %v2572, %v2914
        %v3171 = vmax.f32 %v2574, %v2915
        %v3172 = vmax.f32 %v2578, %v2916
        %v3173 = vmax.f32 %v2580, %v2917
        %v3174 = vmax.f32 %v2582, %v2918
        %v3175 = vmax.f32 %v2584, %v2919
        %v3176 = vmax.f32 %v2588, %v2920
        %v3177 = vmax.f32 %v2590, %v2921
        %v3178 = vmax.f32 %v2592, %v2922
        %v3179 = vmax.f32 %v2594, %v2923
        %v3180 = vmax.f32 %v2598, %v2924
        %v3181 = vmax.f32 %v2600, %v2925
        %v3182 = vmax.f32 %v2602, %v2926
        %v3183 = vmax.f32 %v2604, %v2927
        %v3184 = vmax.f32 %v2608, %v2928
        %v3185 = vmax.f32 %v2610, %v2929
        %v3186 = vmax.f32 %v2612, %v2930
        %v3187 = vmax.f32 %v2614, %v2931
        %v3188 = vmax.f32 %v2618, %v2932
        %v3189 = vmax.f32 %v2620, %v2933
        %v3190 = vmax.f32 %v2622, %v2934
        %v3191 = vmax.f32 %v2624, %v2935
        %v3192 = vmax.f32 %v2628, %v2936
        %v3193 = vmax.f32 %v2630, %v2937
        %v3194 = vmax.f32 %v2632, %v2938
        %v3195 = vmax.f32 %v2634, %v2939
        %v3196 = vmax.f32 %v2638, %v2940
        %v3197 = vmax.f32 %v2640, %v2941
        %v3198 = vmax.f32 %v2642, %v2942
        %v3199 = vmax.f32 %v2644, %v2943
        %v3200 = vmax.f32 %v2648, %v2944
        %v3201 = vmax.f32 %v2650, %v2945
        %v3202 = vmax.f32 %v2652, %v2946
        %v3203 = vmax.f32 %v2654, %v2947
        %v3204 = vmax.f32 %v2658, %v2948
        %v3205 = vmax.f32 %v2660, %v2949
        %v3206 = vmax.f32 %v2662, %v2950
        %v3207 = vmax.f32 %v2664, %v2951
        %v3208 = vmax.f32 %v2668, %v2952
        %v3209 = vmax.f32 %v2670, %v2953
        %v3210 = vmax.f32 %v2672, %v2954
        %v3211 = vmax.f32 %v2674, %v2955
        %v3212 = vmax.f32 %v2678, %v2956
        %v3213 = vmax.f32 %v2680, %v2957
        %v3214 = vmax.f32 %v2682, %v2958
        %v3215 = vmax.f32 %v2684, %v2959
        %v3216 = vmax.f32 %v2688, %v2960
        %v3217 = vmax.f32 %v2690, %v2961
        %v3218 = vmax.f32 %v2692, %v2962
        %v3219 = vmax.f32 %v2694, %v2963
        %v3220 = vmax.f32 %v2698, %v2964
        %v3221 = vmax.f32 %v2700, %v2965
        %v3222 = vmax.f32 %v2702, %v2966
        %v3223 = vmax.f32 %v2704, %v2967
        %v3224 = vmax.f32 %v2708, %v2968
        %v3225 = vmax.f32 %v2710, %v2969
        %v3226 = vmax.f32 %v2712, %v2970
        %v3227 = vmax.f32 %v2714, %v2971
        %v3228 = vpack.c.bf16 %v2974, %v2972
        %v3229 = vpack.c.bf16 %v2975, %v2973
        %v3230 = vpack.c.bf16 %v2978, %v2976
        %v3231 = vpack.c.bf16 %v2979, %v2977
        %v3232 = vpack.c.bf16 %v2982, %v2980
        %v3233 = vpack.c.bf16 %v2983, %v2981
        %v3234 = vpack.c.bf16 %v2986, %v2984
        %v3235 = vpack.c.bf16 %v2987, %v2985
        %v3236 = vpack.c.bf16 %v2990, %v2988
        %v3237 = vpack.c.bf16 %v2991, %v2989
        %v3238 = vpack.c.bf16 %v2994, %v2992
        %v3239 = vpack.c.bf16 %v2995, %v2993
        %v3240 = vpack.c.bf16 %v2998, %v2996
        %v3241 = vpack.c.bf16 %v2999, %v2997
        %v3242 = vpack.c.bf16 %v3002, %v3000
        %v3243 = vpack.c.bf16 %v3003, %v3001
        %v3244 = vpack.c.bf16 %v3006, %v3004
        %v3245 = vpack.c.bf16 %v3007, %v3005
        %v3246 = vpack.c.bf16 %v3010, %v3008
        %v3247 = vpack.c.bf16 %v3011, %v3009
        %v3248 = vpack.c.bf16 %v3014, %v3012
        %v3249 = vpack.c.bf16 %v3015, %v3013
        %v3250 = vpack.c.bf16 %v3018, %v3016
        %v3251 = vpack.c.bf16 %v3019, %v3017
        %v3252 = vpack.c.bf16 %v3022, %v3020
        %v3253 = vpack.c.bf16 %v3023, %v3021
        %v3254 = vpack.c.bf16 %v3026, %v3024
        %v3255 = vpack.c.bf16 %v3027, %v3025
        %v3256 = vpack.c.bf16 %v3030, %v3028
        %v3257 = vpack.c.bf16 %v3031, %v3029
        %v3258 = vpack.c.bf16 %v3034, %v3032
        %v3259 = vpack.c.bf16 %v3035, %v3033
        %v3260 = vpack.c.bf16 %v3038, %v3036
        %v3261 = vpack.c.bf16 %v3039, %v3037
        %v3262 = vpack.c.bf16 %v3042, %v3040
        %v3263 = vpack.c.bf16 %v3043, %v3041
        %v3264 = vpack.c.bf16 %v3046, %v3044
        %v3265 = vpack.c.bf16 %v3047, %v3045
        %v3266 = vpack.c.bf16 %v3050, %v3048
        %v3267 = vpack.c.bf16 %v3051, %v3049
        %v3268 = vpack.c.bf16 %v3054, %v3052
        %v3269 = vpack.c.bf16 %v3055, %v3053
        %v3270 = vpack.c.bf16 %v3058, %v3056
        %v3271 = vpack.c.bf16 %v3059, %v3057
        %v3272 = vpack.c.bf16 %v3062, %v3060
        %v3273 = vpack.c.bf16 %v3063, %v3061
        %v3274 = vpack.c.bf16 %v3066, %v3064
        %v3275 = vpack.c.bf16 %v3067, %v3065
        %v3276 = vpack.c.bf16 %v3070, %v3068
        %v3277 = vpack.c.bf16 %v3071, %v3069
        %v3278 = vpack.c.bf16 %v3074, %v3072
        %v3279 = vpack.c.bf16 %v3075, %v3073
        %v3280 = vpack.c.bf16 %v3078, %v3076
        %v3281 = vpack.c.bf16 %v3079, %v3077
        %v3282 = vpack.c.bf16 %v3082, %v3080
        %v3283 = vpack.c.bf16 %v3083, %v3081
        %v3284 = vpack.c.bf16 %v3086, %v3084
        %v3285 = vpack.c.bf16 %v3087, %v3085
        %v3286 = vpack.c.bf16 %v3090, %v3088
        %v3287 = vpack.c.bf16 %v3091, %v3089
        %v3288 = vpack.c.bf16 %v3094, %v3092
        %v3289 = vpack.c.bf16 %v3095, %v3093
        %v3290 = vpack.c.bf16 %v3098, %v3096
        %v3291 = vpack.c.bf16 %v3099, %v3097
        %v3292 = vpack.c.bf16 %v3102, %v3100
        %v3293 = vpack.c.bf16 %v3103, %v3101
        %v3294 = vpack.c.bf16 %v3106, %v3104
        %v3295 = vpack.c.bf16 %v3107, %v3105
        %v3296 = vpack.c.bf16 %v3110, %v3108
        %v3297 = vpack.c.bf16 %v3111, %v3109
        %v3298 = vpack.c.bf16 %v3114, %v3112
        %v3299 = vpack.c.bf16 %v3115, %v3113
        %v3300 = vpack.c.bf16 %v3118, %v3116
        %v3301 = vpack.c.bf16 %v3119, %v3117
        %v3302 = vpack.c.bf16 %v3122, %v3120
        %v3303 = vpack.c.bf16 %v3123, %v3121
        %v3304 = vpack.c.bf16 %v3126, %v3124
        %v3305 = vpack.c.bf16 %v3127, %v3125
        %v3306 = vpack.c.bf16 %v3130, %v3128
        %v3307 = vpack.c.bf16 %v3131, %v3129
        %v3308 = vpack.c.bf16 %v3134, %v3132
        %v3309 = vpack.c.bf16 %v3135, %v3133
        %v3310 = vpack.c.bf16 %v3138, %v3136
        %v3311 = vpack.c.bf16 %v3139, %v3137
        %v3312 = vpack.c.bf16 %v3142, %v3140
        %v3313 = vpack.c.bf16 %v3143, %v3141
        %v3314 = vpack.c.bf16 %v3146, %v3144
        %v3315 = vpack.c.bf16 %v3147, %v3145
        %v3316 = vpack.c.bf16 %v3150, %v3148
        %v3317 = vpack.c.bf16 %v3151, %v3149
        %v3318 = vpack.c.bf16 %v3154, %v3152
        %v3319 = vpack.c.bf16 %v3155, %v3153
        %v3320 = vpack.c.bf16 %v3158, %v3156
        %v3321 = vpack.c.bf16 %v3159, %v3157
        %v3322 = vpack.c.bf16 %v3162, %v3160
        %v3323 = vpack.c.bf16 %v3163, %v3161
        %v3324 = vpack.c.bf16 %v3166, %v3164
        %v3325 = vpack.c.bf16 %v3167, %v3165
        %v3326 = vpack.c.bf16 %v3170, %v3168
        %v3327 = vpack.c.bf16 %v3171, %v3169
        %v3328 = vpack.c.bf16 %v3174, %v3172
        %v3329 = vpack.c.bf16 %v3175, %v3173
        %v3330 = vpack.c.bf16 %v3178, %v3176
        %v3331 = vpack.c.bf16 %v3179, %v3177
        %v3332 = vpack.c.bf16 %v3182, %v3180
        %v3333 = vpack.c.bf16 %v3183, %v3181
        %v3334 = vpack.c.bf16 %v3186, %v3184
        %v3335 = vpack.c.bf16 %v3187, %v3185
        %v3336 = vpack.c.bf16 %v3190, %v3188
        %v3337 = vpack.c.bf16 %v3191, %v3189
        %v3338 = vpack.c.bf16 %v3194, %v3192
        %v3339 = vpack.c.bf16 %v3195, %v3193
        %v3340 = vpack.c.bf16 %v3198, %v3196
        %v3341 = vpack.c.bf16 %v3199, %v3197
        %v3342 = vpack.c.bf16 %v3202, %v3200
        %v3343 = vpack.c.bf16 %v3203, %v3201
        %v3344 = vpack.c.bf16 %v3206, %v3204
        %v3345 = vpack.c.bf16 %v3207, %v3205
        %v3346 = vpack.c.bf16 %v3210, %v3208
        %v3347 = vpack.c.bf16 %v3211, %v3209
        %v3348 = vpack.c.bf16 %v3214, %v3212
        %v3349 = vpack.c.bf16 %v3215, %v3213
        %v3350 = vpack.c.bf16 %v3218, %v3216
        %v3351 = vpack.c.bf16 %v3219, %v3217
        %v3352 = vpack.c.bf16 %v3222, %v3220
        %v3353 = vpack.c.bf16 %v3223, %v3221
        %v3354 = vpack.c.bf16 %v3226, %v3224
        %v3355 = vpack.c.bf16 %v3227, %v3225
        %v3484 = vunpack.c.l.b16 %v3228
        %v3485 = vunpack.c.l.b16 %v3229
        %v3486 = vunpack.c.h.b16 %v3228
        %v3487 = vunpack.c.h.b16 %v3229
        %v3488 = vunpack.c.l.b16 %v3230
        %v3489 = vunpack.c.l.b16 %v3231
        %v3490 = vunpack.c.h.b16 %v3230
        %v3491 = vunpack.c.h.b16 %v3231
        %v3492 = vunpack.c.l.b16 %v3232
        %v3493 = vunpack.c.l.b16 %v3233
        %v3494 = vunpack.c.h.b16 %v3232
        %v3495 = vunpack.c.h.b16 %v3233
        %v3496 = vunpack.c.l.b16 %v3234
        %v3497 = vunpack.c.l.b16 %v3235
        %v3498 = vunpack.c.h.b16 %v3234
        %v3499 = vunpack.c.h.b16 %v3235
        %v3500 = vunpack.c.l.b16 %v3236
        %v3501 = vunpack.c.l.b16 %v3237
        %v3502 = vunpack.c.h.b16 %v3236
        %v3503 = vunpack.c.h.b16 %v3237
        %v3504 = vunpack.c.l.b16 %v3238
        %v3505 = vunpack.c.l.b16 %v3239
        %v3506 = vunpack.c.h.b16 %v3238
        %v3507 = vunpack.c.h.b16 %v3239
        %v3508 = vunpack.c.l.b16 %v3240
        %v3509 = vunpack.c.l.b16 %v3241
        %v3510 = vunpack.c.h.b16 %v3240
        %v3511 = vunpack.c.h.b16 %v3241
        %v3512 = vunpack.c.l.b16 %v3242
        %v3513 = vunpack.c.l.b16 %v3243
        %v3514 = vunpack.c.h.b16 %v3242
        %v3515 = vunpack.c.h.b16 %v3243
        %v3516 = vunpack.c.l.b16 %v3244
        %v3517 = vunpack.c.l.b16 %v3245
        %v3518 = vunpack.c.h.b16 %v3244
        %v3519 = vunpack.c.h.b16 %v3245
        %v3520 = vunpack.c.l.b16 %v3246
        %v3521 = vunpack.c.l.b16 %v3247
        %v3522 = vunpack.c.h.b16 %v3246
        %v3523 = vunpack.c.h.b16 %v3247
        %v3524 = vunpack.c.l.b16 %v3248
        %v3525 = vunpack.c.l.b16 %v3249
        %v3526 = vunpack.c.h.b16 %v3248
        %v3527 = vunpack.c.h.b16 %v3249
        %v3528 = vunpack.c.l.b16 %v3250
        %v3529 = vunpack.c.l.b16 %v3251
        %v3530 = vunpack.c.h.b16 %v3250
        %v3531 = vunpack.c.h.b16 %v3251
        %v3532 = vunpack.c.l.b16 %v3252
        %v3533 = vunpack.c.l.b16 %v3253
        %v3534 = vunpack.c.h.b16 %v3252
        %v3535 = vunpack.c.h.b16 %v3253
        %v3536 = vunpack.c.l.b16 %v3254
        %v3537 = vunpack.c.l.b16 %v3255
        %v3538 = vunpack.c.h.b16 %v3254
        %v3539 = vunpack.c.h.b16 %v3255
        %v3540 = vunpack.c.l.b16 %v3256
        %v3541 = vunpack.c.l.b16 %v3257
        %v3542 = vunpack.c.h.b16 %v3256
        %v3543 = vunpack.c.h.b16 %v3257
        %v3544 = vunpack.c.l.b16 %v3258
        %v3545 = vunpack.c.l.b16 %v3259
        %v3546 = vunpack.c.h.b16 %v3258
        %v3547 = vunpack.c.h.b16 %v3259
        %v3548 = vunpack.c.l.b16 %v3260
        %v3549 = vunpack.c.l.b16 %v3261
        %v3550 = vunpack.c.h.b16 %v3260
        %v3551 = vunpack.c.h.b16 %v3261
        %v3552 = vunpack.c.l.b16 %v3262
        %v3553 = vunpack.c.l.b16 %v3263
        %v3554 = vunpack.c.h.b16 %v3262
        %v3555 = vunpack.c.h.b16 %v3263
        %v3556 = vunpack.c.l.b16 %v3264
        %v3557 = vunpack.c.l.b16 %v3265
        %v3558 = vunpack.c.h.b16 %v3264
        %v3559 = vunpack.c.h.b16 %v3265
        %v3560 = vunpack.c.l.b16 %v3266
        %v3561 = vunpack.c.l.b16 %v3267
        %v3562 = vunpack.c.h.b16 %v3266
        %v3563 = vunpack.c.h.b16 %v3267
        %v3564 = vunpack.c.l.b16 %v3268
        %v3565 = vunpack.c.l.b16 %v3269
        %v3566 = vunpack.c.h.b16 %v3268
        %v3567 = vunpack.c.h.b16 %v3269
        %v3568 = vunpack.c.l.b16 %v3270
        %v3569 = vunpack.c.l.b16 %v3271
        %v3570 = vunpack.c.h.b16 %v3270
        %v3571 = vunpack.c.h.b16 %v3271
        %v3572 = vunpack.c.l.b16 %v3272
        %v3573 = vunpack.c.l.b16 %v3273
        %v3574 = vunpack.c.h.b16 %v3272
        %v3575 = vunpack.c.h.b16 %v3273
        %v3576 = vunpack.c.l.b16 %v3274
        %v3577 = vunpack.c.l.b16 %v3275
        %v3578 = vunpack.c.h.b16 %v3274
        %v3579 = vunpack.c.h.b16 %v3275
        %v3580 = vunpack.c.l.b16 %v3276
        %v3581 = vunpack.c.l.b16 %v3277
        %v3582 = vunpack.c.h.b16 %v3276
        %v3583 = vunpack.c.h.b16 %v3277
        %v3584 = vunpack.c.l.b16 %v3278
        %v3585 = vunpack.c.l.b16 %v3279
        %v3586 = vunpack.c.h.b16 %v3278
        %v3587 = vunpack.c.h.b16 %v3279
        %v3588 = vunpack.c.l.b16 %v3280
        %v3589 = vunpack.c.l.b16 %v3281
        %v3590 = vunpack.c.h.b16 %v3280
        %v3591 = vunpack.c.h.b16 %v3281
        %v3592 = vunpack.c.l.b16 %v3282
        %v3593 = vunpack.c.l.b16 %v3283
        %v3594 = vunpack.c.h.b16 %v3282
        %v3595 = vunpack.c.h.b16 %v3283
        %v3596 = vunpack.c.l.b16 %v3284
        %v3597 = vunpack.c.l.b16 %v3285
        %v3598 = vunpack.c.h.b16 %v3284
        %v3599 = vunpack.c.h.b16 %v3285
        %v3600 = vunpack.c.l.b16 %v3286
        %v3601 = vunpack.c.l.b16 %v3287
        %v3602 = vunpack.c.h.b16 %v3286
        %v3603 = vunpack.c.h.b16 %v3287
        %v3604 = vunpack.c.l.b16 %v3288
        %v3605 = vunpack.c.l.b16 %v3289
        %v3606 = vunpack.c.h.b16 %v3288
        %v3607 = vunpack.c.h.b16 %v3289
        %v3608 = vunpack.c.l.b16 %v3290
        %v3609 = vunpack.c.l.b16 %v3291
        %v3610 = vunpack.c.h.b16 %v3290
        %v3611 = vunpack.c.h.b16 %v3291
        %v3612 = vunpack.c.l.b16 %v3292
        %v3613 = vunpack.c.l.b16 %v3293
        %v3614 = vunpack.c.h.b16 %v3292
        %v3615 = vunpack.c.h.b16 %v3293
        %v3616 = vunpack.c.l.b16 %v3294
        %v3617 = vunpack.c.l.b16 %v3295
        %v3618 = vunpack.c.h.b16 %v3294
        %v3619 = vunpack.c.h.b16 %v3295
        %v3620 = vunpack.c.l.b16 %v3296
        %v3621 = vunpack.c.l.b16 %v3297
        %v3622 = vunpack.c.h.b16 %v3296
        %v3623 = vunpack.c.h.b16 %v3297
        %v3624 = vunpack.c.l.b16 %v3298
        %v3625 = vunpack.c.l.b16 %v3299
        %v3626 = vunpack.c.h.b16 %v3298
        %v3627 = vunpack.c.h.b16 %v3299
        %v3628 = vunpack.c.l.b16 %v3300
        %v3629 = vunpack.c.l.b16 %v3301
        %v3630 = vunpack.c.h.b16 %v3300
        %v3631 = vunpack.c.h.b16 %v3301
        %v3632 = vunpack.c.l.b16 %v3302
        %v3633 = vunpack.c.l.b16 %v3303
        %v3634 = vunpack.c.h.b16 %v3302
        %v3635 = vunpack.c.h.b16 %v3303
        %v3636 = vunpack.c.l.b16 %v3304
        %v3637 = vunpack.c.l.b16 %v3305
        %v3638 = vunpack.c.h.b16 %v3304
        %v3639 = vunpack.c.h.b16 %v3305
        %v3640 = vunpack.c.l.b16 %v3306
        %v3641 = vunpack.c.l.b16 %v3307
        %v3642 = vunpack.c.h.b16 %v3306
        %v3643 = vunpack.c.h.b16 %v3307
        %v3644 = vunpack.c.l.b16 %v3308
        %v3645 = vunpack.c.l.b16 %v3309
        %v3646 = vunpack.c.h.b16 %v3308
        %v3647 = vunpack.c.h.b16 %v3309
        %v3648 = vunpack.c.l.b16 %v3310
        %v3649 = vunpack.c.l.b16 %v3311
        %v3650 = vunpack.c.h.b16 %v3310
        %v3651 = vunpack.c.h.b16 %v3311
        %v3652 = vunpack.c.l.b16 %v3312
        %v3653 = vunpack.c.l.b16 %v3313
        %v3654 = vunpack.c.h.b16 %v3312
        %v3655 = vunpack.c.h.b16 %v3313
        %v3656 = vunpack.c.l.b16 %v3314
        %v3657 = vunpack.c.l.b16 %v3315
        %v3658 = vunpack.c.h.b16 %v3314
        %v3659 = vunpack.c.h.b16 %v3315
        %v3660 = vunpack.c.l.b16 %v3316
        %v3661 = vunpack.c.l.b16 %v3317
        %v3662 = vunpack.c.h.b16 %v3316
        %v3663 = vunpack.c.h.b16 %v3317
        %v3664 = vunpack.c.l.b16 %v3318
        %v3665 = vunpack.c.l.b16 %v3319
        %v3666 = vunpack.c.h.b16 %v3318
        %v3667 = vunpack.c.h.b16 %v3319
        %v3668 = vunpack.c.l.b16 %v3320
        %v3669 = vunpack.c.l.b16 %v3321
        %v3670 = vunpack.c.h.b16 %v3320
        %v3671 = vunpack.c.h.b16 %v3321
        %v3672 = vunpack.c.l.b16 %v3322
        %v3673 = vunpack.c.l.b16 %v3323
        %v3674 = vunpack.c.h.b16 %v3322
        %v3675 = vunpack.c.h.b16 %v3323
        %v3676 = vunpack.c.l.b16 %v3324
        %v3677 = vunpack.c.l.b16 %v3325
        %v3678 = vunpack.c.h.b16 %v3324
        %v3679 = vunpack.c.h.b16 %v3325
        %v3680 = vunpack.c.l.b16 %v3326
        %v3681 = vunpack.c.l.b16 %v3327
        %v3682 = vunpack.c.h.b16 %v3326
        %v3683 = vunpack.c.h.b16 %v3327
        %v3684 = vunpack.c.l.b16 %v3328
        %v3685 = vunpack.c.l.b16 %v3329
        %v3686 = vunpack.c.h.b16 %v3328
        %v3687 = vunpack.c.h.b16 %v3329
        %v3688 = vunpack.c.l.b16 %v3330
        %v3689 = vunpack.c.l.b16 %v3331
        %v3690 = vunpack.c.h.b16 %v3330
        %v3691 = vunpack.c.h.b16 %v3331
        %v3692 = vunpack.c.l.b16 %v3332
        %v3693 = vunpack.c.l.b16 %v3333
        %v3694 = vunpack.c.h.b16 %v3332
        %v3695 = vunpack.c.h.b16 %v3333
        %v3696 = vunpack.c.l.b16 %v3334
        %v3697 = vunpack.c.l.b16 %v3335
        %v3698 = vunpack.c.h.b16 %v3334
        %v3699 = vunpack.c.h.b16 %v3335
        %v3700 = vunpack.c.l.b16 %v3336
        %v3701 = vunpack.c.l.b16 %v3337
        %v3702 = vunpack.c.h.b16 %v3336
        %v3703 = vunpack.c.h.b16 %v3337
        %v3704 = vunpack.c.l.b16 %v3338
        %v3705 = vunpack.c.l.b16 %v3339
        %v3706 = vunpack.c.h.b16 %v3338
        %v3707 = vunpack.c.h.b16 %v3339
        %v3708 = vunpack.c.l.b16 %v3340
        %v3709 = vunpack.c.l.b16 %v3341
        %v3710 = vunpack.c.h.b16 %v3340
        %v3711 = vunpack.c.h.b16 %v3341
        %v3712 = vunpack.c.l.b16 %v3342
        %v3713 = vunpack.c.l.b16 %v3343
        %v3714 = vunpack.c.h.b16 %v3342
        %v3715 = vunpack.c.h.b16 %v3343
        %v3716 = vunpack.c.l.b16 %v3344
        %v3717 = vunpack.c.l.b16 %v3345
        %v3718 = vunpack.c.h.b16 %v3344
        %v3719 = vunpack.c.h.b16 %v3345
        %v3720 = vunpack.c.l.b16 %v3346
        %v3721 = vunpack.c.l.b16 %v3347
        %v3722 = vunpack.c.h.b16 %v3346
        %v3723 = vunpack.c.h.b16 %v3347
        %v3724 = vunpack.c.l.b16 %v3348
        %v3725 = vunpack.c.l.b16 %v3349
        %v3726 = vunpack.c.h.b16 %v3348
        %v3727 = vunpack.c.h.b16 %v3349
        %v3728 = vunpack.c.l.b16 %v3350
        %v3729 = vunpack.c.l.b16 %v3351
        %v3730 = vunpack.c.h.b16 %v3350
        %v3731 = vunpack.c.h.b16 %v3351
        %v3732 = vunpack.c.l.b16 %v3352
        %v3733 = vunpack.c.l.b16 %v3353
        %v3734 = vunpack.c.h.b16 %v3352
        %v3735 = vunpack.c.h.b16 %v3353
        %v3736 = vunpack.c.l.b16 %v3354
        %v3737 = vunpack.c.l.b16 %v3355
        %v3738 = vunpack.c.h.b16 %v3354
        %v3739 = vunpack.c.h.b16 %v3355
        %v3740 = vpack.c.b16 %v3485, %v3484
        %v3741 = vpack.c.b16 %v3487, %v3486
        %v3742 = vpack.c.b16 %v3489, %v3488
        %v3743 = vpack.c.b16 %v3491, %v3490
        %v3744 = vpack.c.b16 %v3493, %v3492
        %v3745 = vpack.c.b16 %v3495, %v3494
        %v3746 = vpack.c.b16 %v3497, %v3496
        %v3747 = vpack.c.b16 %v3499, %v3498
        %v3748 = vpack.c.b16 %v3501, %v3500
        %v3749 = vpack.c.b16 %v3503, %v3502
        %v3750 = vpack.c.b16 %v3505, %v3504
        %v3751 = vpack.c.b16 %v3507, %v3506
        %v3752 = vpack.c.b16 %v3509, %v3508
        %v3753 = vpack.c.b16 %v3511, %v3510
        %v3754 = vpack.c.b16 %v3513, %v3512
        %v3755 = vpack.c.b16 %v3515, %v3514
        %v3756 = vpack.c.b16 %v3517, %v3516
        %v3757 = vpack.c.b16 %v3519, %v3518
        %v3758 = vpack.c.b16 %v3521, %v3520
        %v3759 = vpack.c.b16 %v3523, %v3522
        %v3760 = vpack.c.b16 %v3525, %v3524
        %v3761 = vpack.c.b16 %v3527, %v3526
        %v3762 = vpack.c.b16 %v3529, %v3528
        %v3763 = vpack.c.b16 %v3531, %v3530
        %v3764 = vpack.c.b16 %v3533, %v3532
        %v3765 = vpack.c.b16 %v3535, %v3534
        %v3766 = vpack.c.b16 %v3537, %v3536
        %v3767 = vpack.c.b16 %v3539, %v3538
        %v3768 = vpack.c.b16 %v3541, %v3540
        %v3769 = vpack.c.b16 %v3543, %v3542
        %v3770 = vpack.c.b16 %v3545, %v3544
        %v3771 = vpack.c.b16 %v3547, %v3546
        %v3772 = vpack.c.b16 %v3549, %v3548
        %v3773 = vpack.c.b16 %v3551, %v3550
        %v3774 = vpack.c.b16 %v3553, %v3552
        %v3775 = vpack.c.b16 %v3555, %v3554
        %v3776 = vpack.c.b16 %v3557, %v3556
        %v3777 = vpack.c.b16 %v3559, %v3558
        %v3778 = vpack.c.b16 %v3561, %v3560
        %v3779 = vpack.c.b16 %v3563, %v3562
        %v3780 = vpack.c.b16 %v3565, %v3564
        %v3781 = vpack.c.b16 %v3567, %v3566
        %v3782 = vpack.c.b16 %v3569, %v3568
        %v3783 = vpack.c.b16 %v3571, %v3570
        %v3784 = vpack.c.b16 %v3573, %v3572
        %v3785 = vpack.c.b16 %v3575, %v3574
        %v3786 = vpack.c.b16 %v3577, %v3576
        %v3787 = vpack.c.b16 %v3579, %v3578
        %v3788 = vpack.c.b16 %v3581, %v3580
        %v3789 = vpack.c.b16 %v3583, %v3582
        %v3790 = vpack.c.b16 %v3585, %v3584
        %v3791 = vpack.c.b16 %v3587, %v3586
        %v3792 = vpack.c.b16 %v3589, %v3588
        %v3793 = vpack.c.b16 %v3591, %v3590
        %v3794 = vpack.c.b16 %v3593, %v3592
        %v3795 = vpack.c.b16 %v3595, %v3594
        %v3796 = vpack.c.b16 %v3597, %v3596
        %v3797 = vpack.c.b16 %v3599, %v3598
        %v3798 = vpack.c.b16 %v3601, %v3600
        %v3799 = vpack.c.b16 %v3603, %v3602
        %v3800 = vpack.c.b16 %v3605, %v3604
        %v3801 = vpack.c.b16 %v3607, %v3606
        %v3802 = vpack.c.b16 %v3609, %v3608
        %v3803 = vpack.c.b16 %v3611, %v3610
        %v3804 = vpack.c.b16 %v3613, %v3612
        %v3805 = vpack.c.b16 %v3615, %v3614
        %v3806 = vpack.c.b16 %v3617, %v3616
        %v3807 = vpack.c.b16 %v3619, %v3618
        %v3808 = vpack.c.b16 %v3621, %v3620
        %v3809 = vpack.c.b16 %v3623, %v3622
        %v3810 = vpack.c.b16 %v3625, %v3624
        %v3811 = vpack.c.b16 %v3627, %v3626
        %v3812 = vpack.c.b16 %v3629, %v3628
        %v3813 = vpack.c.b16 %v3631, %v3630
        %v3814 = vpack.c.b16 %v3633, %v3632
        %v3815 = vpack.c.b16 %v3635, %v3634
        %v3816 = vpack.c.b16 %v3637, %v3636
        %v3817 = vpack.c.b16 %v3639, %v3638
        %v3818 = vpack.c.b16 %v3641, %v3640
        %v3819 = vpack.c.b16 %v3643, %v3642
        %v3820 = vpack.c.b16 %v3645, %v3644
        %v3821 = vpack.c.b16 %v3647, %v3646
        %v3822 = vpack.c.b16 %v3649, %v3648
        %v3823 = vpack.c.b16 %v3651, %v3650
        %v3824 = vpack.c.b16 %v3653, %v3652
        %v3825 = vpack.c.b16 %v3655, %v3654
        %v3826 = vpack.c.b16 %v3657, %v3656
        %v3827 = vpack.c.b16 %v3659, %v3658
        %v3828 = vpack.c.b16 %v3661, %v3660
        %v3829 = vpack.c.b16 %v3663, %v3662
        %v3830 = vpack.c.b16 %v3665, %v3664
        %v3831 = vpack.c.b16 %v3667, %v3666
        %v3832 = vpack.c.b16 %v3669, %v3668
        %v3833 = vpack.c.b16 %v3671, %v3670
        %v3834 = vpack.c.b16 %v3673, %v3672
        %v3835 = vpack.c.b16 %v3675, %v3674
        %v3836 = vpack.c.b16 %v3677, %v3676
        %v3837 = vpack.c.b16 %v3679, %v3678
        %v3838 = vpack.c.b16 %v3681, %v3680
        %v3839 = vpack.c.b16 %v3683, %v3682
        %v3840 = vpack.c.b16 %v3685, %v3684
        %v3841 = vpack.c.b16 %v3687, %v3686
        %v3842 = vpack.c.b16 %v3689, %v3688
        %v3843 = vpack.c.b16 %v3691, %v3690
        %v3844 = vpack.c.b16 %v3693, %v3692
        %v3845 = vpack.c.b16 %v3695, %v3694
        %v3846 = vpack.c.b16 %v3697, %v3696
        %v3847 = vpack.c.b16 %v3699, %v3698
        %v3848 = vpack.c.b16 %v3701, %v3700
        %v3849 = vpack.c.b16 %v3703, %v3702
        %v3850 = vpack.c.b16 %v3705, %v3704
        %v3851 = vpack.c.b16 %v3707, %v3706
        %v3852 = vpack.c.b16 %v3709, %v3708
        %v3853 = vpack.c.b16 %v3711, %v3710
        %v3854 = vpack.c.b16 %v3713, %v3712
        %v3855 = vpack.c.b16 %v3715, %v3714
        %v3856 = vpack.c.b16 %v3717, %v3716
        %v3857 = vpack.c.b16 %v3719, %v3718
        %v3858 = vpack.c.b16 %v3721, %v3720
        %v3859 = vpack.c.b16 %v3723, %v3722
        %v3860 = vpack.c.b16 %v3725, %v3724
        %v3861 = vpack.c.b16 %v3727, %v3726
        %v3862 = vpack.c.b16 %v3729, %v3728
        %v3863 = vpack.c.b16 %v3731, %v3730
        %v3864 = vpack.c.b16 %v3733, %v3732
        %v3865 = vpack.c.b16 %v3735, %v3734
        %v3866 = vpack.c.b16 %v3737, %v3736
        %v3867 = vpack.c.b16 %v3739, %v3738
        %3996 = vst [vmem:[%s269] sm:$0xff] %v3740
        %3997 = vst [vmem:[%s269 + $0x8] sm:$0xff] %v3741
        %3998 = vst [vmem:[%s269 + $0x10] sm:$0xff] %v3742
        %3999 = vst [vmem:[%s269 + $0x18] sm:$0xff] %v3743
        %4000 = vst [vmem:[%s269 + $0x20] sm:$0xff] %v3744
        %4001 = vst [vmem:[%s269 + $0x28] sm:$0xff] %v3745
        %4002 = vst [vmem:[%s269 + $0x30] sm:$0xff] %v3746
        %4003 = vst [vmem:[%s269 + $0x38] sm:$0xff] %v3747
        %4004 = vst [vmem:[%s269 + $0x40] sm:$0xff] %v3748
        %4005 = vst [vmem:[%s269 + $0x48] sm:$0xff] %v3749
        %4006 = vst [vmem:[%s269 + $0x50] sm:$0xff] %v3750
        %4007 = vst [vmem:[%s269 + $0x58] sm:$0xff] %v3751
        %4008 = vst [vmem:[%s269 + $0x60] sm:$0xff] %v3752
        %4009 = vst [vmem:[%s269 + $0x68] sm:$0xff] %v3753
        %4010 = vst [vmem:[%s269 + $0x70] sm:$0xff] %v3754
        %4011 = vst [vmem:[%s269 + $0x78] sm:$0xff] %v3755
        %4012 = vst [vmem:[%s269 + $0x80] sm:$0xff] %v3756
        %4013 = vst [vmem:[%s269 + $0x88] sm:$0xff] %v3757
        %4014 = vst [vmem:[%s269 + $0x90] sm:$0xff] %v3758
        %4015 = vst [vmem:[%s269 + $0x98] sm:$0xff] %v3759
        %4016 = vst [vmem:[%s269 + $0xa0] sm:$0xff] %v3760
        %4017 = vst [vmem:[%s269 + $0xa8] sm:$0xff] %v3761
        %4018 = vst [vmem:[%s269 + $0xb0] sm:$0xff] %v3762
        %4019 = vst [vmem:[%s269 + $0xb8] sm:$0xff] %v3763
        %4020 = vst [vmem:[%s269 + $0xc0] sm:$0xff] %v3764
        %4021 = vst [vmem:[%s269 + $0xc8] sm:$0xff] %v3765
        %4022 = vst [vmem:[%s269 + $0xd0] sm:$0xff] %v3766
        %4023 = vst [vmem:[%s269 + $0xd8] sm:$0xff] %v3767
        %4024 = vst [vmem:[%s269 + $0xe0] sm:$0xff] %v3768
        %4025 = vst [vmem:[%s269 + $0xe8] sm:$0xff] %v3769
        %4026 = vst [vmem:[%s269 + $0xf0] sm:$0xff] %v3770
        %4027 = vst [vmem:[%s269 + $0xf8] sm:$0xff] %v3771
        %4028 = vst [vmem:[%s269 + $0x100] sm:$0xff] %v3772
        %4029 = vst [vmem:[%s269 + $0x108] sm:$0xff] %v3773
        %4030 = vst [vmem:[%s269 + $0x110] sm:$0xff] %v3774
        %4031 = vst [vmem:[%s269 + $0x118] sm:$0xff] %v3775
        %4032 = vst [vmem:[%s269 + $0x120] sm:$0xff] %v3776
        %4033 = vst [vmem:[%s269 + $0x128] sm:$0xff] %v3777
        %4034 = vst [vmem:[%s269 + $0x130] sm:$0xff] %v3778
        %4035 = vst [vmem:[%s269 + $0x138] sm:$0xff] %v3779
        %4036 = vst [vmem:[%s269 + $0x140] sm:$0xff] %v3780
        %4037 = vst [vmem:[%s269 + $0x148] sm:$0xff] %v3781
        %4038 = vst [vmem:[%s269 + $0x150] sm:$0xff] %v3782
        %4039 = vst [vmem:[%s269 + $0x158] sm:$0xff] %v3783
        %4040 = vst [vmem:[%s269 + $0x160] sm:$0xff] %v3784
        %4041 = vst [vmem:[%s269 + $0x168] sm:$0xff] %v3785
        %4042 = vst [vmem:[%s269 + $0x170] sm:$0xff] %v3786
        %4043 = vst [vmem:[%s269 + $0x178] sm:$0xff] %v3787
        %4044 = vst [vmem:[%s269 + $0x180] sm:$0xff] %v3788
        %4045 = vst [vmem:[%s269 + $0x188] sm:$0xff] %v3789
        %4046 = vst [vmem:[%s269 + $0x190] sm:$0xff] %v3790
        %4047 = vst [vmem:[%s269 + $0x198] sm:$0xff] %v3791
        %4048 = vst [vmem:[%s269 + $0x1a0] sm:$0xff] %v3792
        %4049 = vst [vmem:[%s269 + $0x1a8] sm:$0xff] %v3793
        %4050 = vst [vmem:[%s269 + $0x1b0] sm:$0xff] %v3794
        %4051 = vst [vmem:[%s269 + $0x1b8] sm:$0xff] %v3795
        %4052 = vst [vmem:[%s269 + $0x1c0] sm:$0xff] %v3796
        %4053 = vst [vmem:[%s269 + $0x1c8] sm:$0xff] %v3797
        %4054 = vst [vmem:[%s269 + $0x1d0] sm:$0xff] %v3798
        %4055 = vst [vmem:[%s269 + $0x1d8] sm:$0xff] %v3799
        %4056 = vst [vmem:[%s269 + $0x1e0] sm:$0xff] %v3800
        %4057 = vst [vmem:[%s269 + $0x1e8] sm:$0xff] %v3801
        %4058 = vst [vmem:[%s269 + $0x1f0] sm:$0xff] %v3802
        %4059 = vst [vmem:[%s269 + $0x1f8] sm:$0xff] %v3803
        %4060 = vst [vmem:[%s269 + $0x200] sm:$0xff] %v3804
        %4061 = vst [vmem:[%s269 + $0x208] sm:$0xff] %v3805
        %4062 = vst [vmem:[%s269 + $0x210] sm:$0xff] %v3806
        %4063 = vst [vmem:[%s269 + $0x218] sm:$0xff] %v3807
        %4064 = vst [vmem:[%s269 + $0x220] sm:$0xff] %v3808
        %4065 = vst [vmem:[%s269 + $0x228] sm:$0xff] %v3809
        %4066 = vst [vmem:[%s269 + $0x230] sm:$0xff] %v3810
        %4067 = vst [vmem:[%s269 + $0x238] sm:$0xff] %v3811
        %4068 = vst [vmem:[%s269 + $0x240] sm:$0xff] %v3812
        %4069 = vst [vmem:[%s269 + $0x248] sm:$0xff] %v3813
        %4070 = vst [vmem:[%s269 + $0x250] sm:$0xff] %v3814
        %4071 = vst [vmem:[%s269 + $0x258] sm:$0xff] %v3815
        %4072 = vst [vmem:[%s269 + $0x260] sm:$0xff] %v3816
        %4073 = vst [vmem:[%s269 + $0x268] sm:$0xff] %v3817
        %4074 = vst [vmem:[%s269 + $0x270] sm:$0xff] %v3818
        %4075 = vst [vmem:[%s269 + $0x278] sm:$0xff] %v3819
        %4076 = vst [vmem:[%s269 + $0x280] sm:$0xff] %v3820
        %4077 = vst [vmem:[%s269 + $0x288] sm:$0xff] %v3821
        %4078 = vst [vmem:[%s269 + $0x290] sm:$0xff] %v3822
        %4079 = vst [vmem:[%s269 + $0x298] sm:$0xff] %v3823
        %4080 = vst [vmem:[%s269 + $0x2a0] sm:$0xff] %v3824
        %4081 = vst [vmem:[%s269 + $0x2a8] sm:$0xff] %v3825
        %4082 = vst [vmem:[%s269 + $0x2b0] sm:$0xff] %v3826
        %4083 = vst [vmem:[%s269 + $0x2b8] sm:$0xff] %v3827
        %4084 = vst [vmem:[%s269 + $0x2c0] sm:$0xff] %v3828
        %4085 = vst [vmem:[%s269 + $0x2c8] sm:$0xff] %v3829
        %4086 = vst [vmem:[%s269 + $0x2d0] sm:$0xff] %v3830
        %4087 = vst [vmem:[%s269 + $0x2d8] sm:$0xff] %v3831
        %4088 = vst [vmem:[%s269 + $0x2e0] sm:$0xff] %v3832
        %4089 = vst [vmem:[%s269 + $0x2e8] sm:$0xff] %v3833
        %4090 = vst [vmem:[%s269 + $0x2f0] sm:$0xff] %v3834
        %4091 = vst [vmem:[%s269 + $0x2f8] sm:$0xff] %v3835
        %4092 = vst [vmem:[%s269 + $0x300] sm:$0xff] %v3836
        %4093 = vst [vmem:[%s269 + $0x308] sm:$0xff] %v3837
        %4094 = vst [vmem:[%s269 + $0x310] sm:$0xff] %v3838
        %4095 = vst [vmem:[%s269 + $0x318] sm:$0xff] %v3839
        %4096 = vst [vmem:[%s269 + $0x320] sm:$0xff] %v3840
        %4097 = vst [vmem:[%s269 + $0x328] sm:$0xff] %v3841
        %4098 = vst [vmem:[%s269 + $0x330] sm:$0xff] %v3842
        %4099 = vst [vmem:[%s269 + $0x338] sm:$0xff] %v3843
        %4100 = vst [vmem:[%s269 + $0x340] sm:$0xff] %v3844
        %4101 = vst [vmem:[%s269 + $0x348] sm:$0xff] %v3845
        %4102 = vst [vmem:[%s269 + $0x350] sm:$0xff] %v3846
        %4103 = vst [vmem:[%s269 + $0x358] sm:$0xff] %v3847
        %4104 = vst [vmem:[%s269 + $0x360] sm:$0xff] %v3848
        %4105 = vst [vmem:[%s269 + $0x368] sm:$0xff] %v3849
        %4106 = vst [vmem:[%s269 + $0x370] sm:$0xff] %v3850
        %4107 = vst [vmem:[%s269 + $0x378] sm:$0xff] %v3851
        %4108 = vst [vmem:[%s269 + $0x380] sm:$0xff] %v3852
        %4109 = vst [vmem:[%s269 + $0x388] sm:$0xff] %v3853
        %4110 = vst [vmem:[%s269 + $0x390] sm:$0xff] %v3854
        %4111 = vst [vmem:[%s269 + $0x398] sm:$0xff] %v3855
        %4112 = vst [vmem:[%s269 + $0x3a0] sm:$0xff] %v3856
        %4113 = vst [vmem:[%s269 + $0x3a8] sm:$0xff] %v3857
        %4114 = vst [vmem:[%s269 + $0x3b0] sm:$0xff] %v3858
        %4115 = vst [vmem:[%s269 + $0x3b8] sm:$0xff] %v3859
        %4116 = vst [vmem:[%s269 + $0x3c0] sm:$0xff] %v3860
        %4117 = vst [vmem:[%s269 + $0x3c8] sm:$0xff] %v3861
        %4118 = vst [vmem:[%s269 + $0x3d0] sm:$0xff] %v3862
        %4119 = vst [vmem:[%s269 + $0x3d8] sm:$0xff] %v3863
        %4120 = vst [vmem:[%s269 + $0x3e0] sm:$0xff] %v3864
        %4121 = vst [vmem:[%s269 + $0x3e8] sm:$0xff] %v3865
        %4122 = vst [vmem:[%s269 + $0x3f0] sm:$0xff] %v3866
        %4123 = vst [vmem:[%s269 + $0x3f8] sm:$0xff] %v3867
        %s4124 = sand.u32 %s175, 1
        %s4125 = scalar_lea.sflag [#allocation3], %s4124
        %s4126 = sand.u32 %s175, 1
        %s4127 = smul.addr %s4126, 1024
        %s4128 = scalar_lea.vmem [#allocation2], %s4127
        // Predicated region
        $region45: #{tpu_custom_call.1} parent=43 // pred_check
          %p4129 = pneg %p185
        $region46: #{tpu_custom_call.1} parent=43 // pred_check_branch
          %4131 = sbr.rel (%p4129) target = $region48
        $region47: #{tpu_custom_call.1} parent=43 // pred_region
          %s4132 = smul.u32 2, %s25
          %s4134 = ssub.s32 16384, 16384
          %4135 = vsyncadd %s4125, %s4134
          %s4136 = smul.addr %s24, 256
          %s4137 = sadd.s32 %s4132, %s4136
          %s4138 = smul.addr %s4137, 64
          %s4139 = scalar_lea.hbm %s6, %s4138
          %s4140 = sshll.u32 %s4128, 4
          %s4141 = int_to_ptr.vmem [resolvable:$true] %s4140
          %4146 = dma.vmem_to_hbm [thread:$0]  %s4141, 16384, %s4139, %s4125, 128, 128, 8
        $region48: #{tpu_custom_call.1} parent=43 // pred_fallthru
          _
      $region44: #{tpu_custom_call.1} parent=5 // pred_fallthru
        _
      %p4147 = scmp.le.s32.totalorder 2, %s15
      // Predicated region
      $region49: #{tpu_custom_call.1} parent=5 // pred_check
        %p4148 = pneg %p4147
      $region50: #{tpu_custom_call.1} parent=5 // pred_check_branch
        %4150 = sbr.rel (%p4148) target = $region52
      $region51: #{tpu_custom_call.1} parent=5 // pred_region
        %s4151 = ssub.s32 %s15, 2
        // Predicated region
        $region53: #{tpu_custom_call.1} parent=51 // pred_check
          %p4152 = pneg %p191
        $region54: #{tpu_custom_call.1} parent=51 // pred_check_branch
          %4154 = sbr.rel (%p4152) target = $region56
        $region55: #{tpu_custom_call.1} parent=51 // pred_region
          %s4155 = sand.u32 %s176, 1
          %s4156 = scalar_lea.sflag [#allocation3], %s4155
          %s4157 = sand.u32 %s176, 1
          %s4158 = smul.addr %s4157, 1024
          %s4159 = scalar_lea.vmem [#allocation2], %s4158
          %4160 = dma.done %s4156, 16384
        $region56: #{tpu_custom_call.1} parent=51 // pred_fallthru
          _
      $region52: #{tpu_custom_call.1} parent=5 // pred_fallthru
        _
    $region6: #{tpu_custom_call.1} parent=1 // loop_footer
      %s19 = sadd.s32 1, %s15
    $region7: #{tpu_custom_call.1} parent=1 // loop_footer_branch
      %14 = sbr.rel target = $region3
    $region8: #{tpu_custom_call.1} parent=1 // loop_exit
      _
    %4161 = vsyncpa [#allocation3], 1
    %s4162 = scalar_lea.sflag [#allocation3], 1
    %4163 = vsyncpa %s4162, 1

// kernel: tpu_custom_call.1
$region0: #{tpu_custom_call.1}
  #allocation0 [shape = 'u32[]', space=smem, size = 0x4, offset = 0x4, fixed_abs, tag = 'smem constant byte address 0x4 - core index']
  #allocation1 [shape = 'u32[144,128]{1,0:T(1,128)}', space=vmem, size = 0x12000, scoped, tag = 'internal scratch']
  %s0 = inlined_call_operand.vmem [shape: f32[2,3,256], index: 0, kind: input, shape index: {}]
  %s1 = inlined_call_operand.vmem [shape: bf16[65,4], index: 1, kind: input, shape index: {}]
  %s2 = inlined_call_operand.vmem [shape: bf16[65,65], index: 2, kind: input, shape index: {}]
  %s3 = inlined_call_operand.vmem [shape: bf16[65,65], index: 3, kind: input, shape index: {}]
  %s4 = inlined_call_operand.vmem [shape: bf16[129,65], index: 4, kind: input, shape index: {}]
  %s5 = inlined_call_operand.vmem [shape: bf16[1024,129], index: 5, kind: input, shape index: {}]
  %s6 = inlined_call_operand.hbm [shape: bf16[2,1024,256], index: 6, kind: output, shape index: {}]
  %s7 = sld [smem:[#allocation0]]
  $region57: #{tpu_custom_call.1} parent=0
    _
  %s9 = ssub.s32 1, %s7
  %s10 = scalar_select 0, %s9, %s7
  $region1: #{tpu_custom_call.1} parent=0
    #allocation2 [shape = 'u8[1048576]{0}', space=vmem, size = 0x100000, scoped, tag = 'output window, operand 0']
    #allocation3 [shape = 's32[2]{0}', space=sflag, size = 0x8, scoped, tag = 'scoped memory for tpu_custom_call.1']
    %11 = vsyncpa [#allocation3], 0
    %s12 = scalar_lea.sflag [#allocation3], 1
    %13 = vsyncpa %s12, 0
    loop: start=0, step=1, limit=4
    $region2: #{tpu_custom_call.1} parent=1 // loop_pre_header
      _
    $region3: #{tpu_custom_call.1} parent=1 // loop_header
      %s15 = sphi 0, %s19
      %p16 = scmp.ge.s32.totalorder %s15, 4
      %s22 = sphi 0, %s34
      %s23 = sphi 0, %s30
      %s24 = sphi 0, %s22
      %s25 = sphi 0, %s23
      %s26 = sphi 0, %s24
      %s27 = sphi 0, %s25
      %s39 = sphi 0, %s41
      %s42 = sphi 0, %s39
      %s43 = sphi 0, %s42
      %s59 = sphi 0, %s43
      %s63 = sphi 0, %s63
      %s65 = sphi 0, %s63
      %s66 = sphi 0, %s65
      %s80 = sphi 0, %s66
      %s84 = sphi 0, %s84
      %s86 = sphi 0, %s84
      %s87 = sphi 0, %s86
      %s101 = sphi 0, %s87
      %s105 = sphi 0, %s105
      %s107 = sphi 0, %s105
      %s108 = sphi 0, %s107
      %s122 = sphi 0, %s108
      %s126 = sphi 0, %s126
      %s128 = sphi 0, %s126
      %s129 = sphi 0, %s128
      %s143 = sphi 0, %s129
      %s147 = sphi 0, %s147
      %s149 = sphi 0, %s147
      %s150 = sphi 0, %s149
      %s164 = sphi 0, %s150
      %s172 = sphi 0, %s174
      %s175 = sphi 0, %s172
      %s176 = sphi 0, %s175
      %s192 = sphi 0, %s176
    $region4: #{tpu_custom_call.1} parent=1 // loop_header_branch
      %18 = sbr.rel (%p16) target = $region8
    $region5: #{tpu_custom_call.1} parent=1 // loop_body
      %s20 = ssub.s32 %s15, 1
      %s21 = ssub.s32 %s15, 2
      %s28 = sadd.s32 1, %s23
      %p29 = scmp.ge.s32.totalorder %s28, 1
      %s30 = scalar_select %p29, 0, %s28
      %s31 = sadd.s32 1, %s22
      %s32 = scalar_select %p29, %s31, %s22
      %p33 = scmp.ge.s32.totalorder %s32, 2
      %s34 = scalar_select %p33, 0, %s32
      %s35 = ssub.s32 %s22, %s34
      %s36 = ssub.s32 %s23, %s30
      %s37 = sor.u32 %s35, %s36
      %p38 = scmp.eq.s32.totalorder %s37, 0
      %s40 = sadd.s32 %s39, 1
      %s41 = scalar_select %p38, %s39, %s40
      %p44 = pneg %p38
      %p45 = scmp.eq.s32.totalorder %s15, 1
      %p46 = por %p44, %p45
      %p47 = scmp.ne.s32.totalorder %s39, %s42
      %p48 = scmp.eq.s32.totalorder %s15, 0
      %p49 = por %p47, %p48
      %p50 = scmp.ne.s32.totalorder %s39, %s42
      %p51 = scmp.eq.s32.totalorder %s20, 1
      %p52 = por %p50, %p51
      %p53 = scmp.ne.s32.totalorder %s42, %s43
      %p54 = scmp.eq.s32.totalorder %s20, 0
      %p55 = por %p53, %p54
      %p56 = scmp.ne.s32.totalorder %s42, %s43
      %p57 = scmp.eq.s32.totalorder %s21, 1
      %p58 = por %p56, %p57
      %p60 = scmp.ne.s32.totalorder %s43, %s59
      %p61 = scmp.eq.s32.totalorder %s21, 0
      %p62 = por %p60, %p61
      %s64 = sadd.s32 %s63, 1
      %p67 = scmp.eq.s32.totalorder %s15, 1
      %p68 = scmp.ne.s32.totalorder %s63, %s65
      %p69 = scmp.eq.s32.totalorder %s15, 0
      %p70 = por %p68, %p69
      %p71 = scmp.ne.s32.totalorder %s63, %s65
      %p72 = scmp.eq.s32.totalorder %s20, 1
      %p73 = por %p71, %p72
      %p74 = scmp.ne.s32.totalorder %s65, %s66
      %p75 = scmp.eq.s32.totalorder %s20, 0
      %p76 = por %p74, %p75
      %p77 = scmp.ne.s32.totalorder %s65, %s66
      %p78 = scmp.eq.s32.totalorder %s21, 1
      %p79 = por %p77, %p78
      %p81 = scmp.ne.s32.totalorder %s66, %s80
      %p82 = scmp.eq.s32.totalorder %s21, 0
      %p83 = por %p81, %p82
      %s85 = sadd.s32 %s84, 1
      %p88 = scmp.eq.s32.totalorder %s15, 1
      %p89 = scmp.ne.s32.totalorder %s84, %s86
      %p90 = scmp.eq.s32.totalorder %s15, 0
      %p91 = por %p89, %p90
      %p92 = scmp.ne.s32.totalorder %s84, %s86
      %p93 = scmp.eq.s32.totalorder %s20, 1
      %p94 = por %p92, %p93
      %p95 = scmp.ne.s32.totalorder %s86, %s87
      %p96 = scmp.eq.s32.totalorder %s20, 0
      %p97 = por %p95, %p96
      %p98 = scmp.ne.s32.totalorder %s86, %s87
      %p99 = scmp.eq.s32.totalorder %s21, 1
      %p100 = por %p98, %p99
      %p102 = scmp.ne.s32.totalorder %s87, %s101
      %p103 = scmp.eq.s32.totalorder %s21, 0
      %p104 = por %p102, %p103
      %s106 = sadd.s32 %s105, 1
      %p109 = scmp.eq.s32.totalorder %s15, 1
      %p110 = scmp.ne.s32.totalorder %s105, %s107
      %p111 = scmp.eq.s32.totalorder %s15, 0
      %p112 = por %p110, %p111
      %p113 = scmp.ne.s32.totalorder %s105, %s107
      %p114 = scmp.eq.s32.totalorder %s20, 1
      %p115 = por %p113, %p114
      %p116 = scmp.ne.s32.totalorder %s107, %s108
      %p117 = scmp.eq.s32.totalorder %s20, 0
      %p118 = por %p116, %p117
      %p119 = scmp.ne.s32.totalorder %s107, %s108
      %p120 = scmp.eq.s32.totalorder %s21, 1
      %p121 = por %p119, %p120
      %p123 = scmp.ne.s32.totalorder %s108, %s122
      %p124 = scmp.eq.s32.totalorder %s21, 0
      %p125 = por %p123, %p124
      %s127 = sadd.s32 %s126, 1
      %p130 = scmp.eq.s32.totalorder %s15, 1
      %p131 = scmp.ne.s32.totalorder %s126, %s128
      %p132 = scmp.eq.s32.totalorder %s15, 0
      %p133 = por %p131, %p132
      %p134 = scmp.ne.s32.totalorder %s126, %s128
      %p135 = scmp.eq.s32.totalorder %s20, 1
      %p136 = por %p134, %p135
      %p137 = scmp.ne.s32.totalorder %s128, %s129
      %p138 = scmp.eq.s32.totalorder %s20, 0
      %p139 = por %p137, %p138
      %p140 = scmp.ne.s32.totalorder %s128, %s129
      %p141 = scmp.eq.s32.totalorder %s21, 1
      %p142 = por %p140, %p141
      %p144 = scmp.ne.s32.totalorder %s129, %s143
      %p145 = scmp.eq.s32.totalorder %s21, 0
      %p146 = por %p144, %p145
      %s148 = sadd.s32 %s147, 1
      %p151 = scmp.eq.s32.totalorder %s15, 1
      %p152 = scmp.ne.s32.totalorder %s147, %s149
      %p153 = scmp.eq.s32.totalorder %s15, 0
      %p154 = por %p152, %p153
      %p155 = scmp.ne.s32.totalorder %s147, %s149
      %p156 = scmp.eq.s32.totalorder %s20, 1
      %p157 = por %p155, %p156
      %p158 = scmp.ne.s32.totalorder %s149, %s150
      %p159 = scmp.eq.s32.totalorder %s20, 0
      %p160 = por %p158, %p159
      %p161 = scmp.ne.s32.totalorder %s149, %s150
      %p162 = scmp.eq.s32.totalorder %s21, 1
      %p163 = por %p161, %p162
      %p165 = scmp.ne.s32.totalorder %s150, %s164
      %p166 = scmp.eq.s32.totalorder %s21, 0
      %p167 = por %p165, %p166
      %s168 = ssub.s32 %s22, %s34
      %s169 = ssub.s32 %s23, %s30
      %s170 = sor.u32 %s168, %s169
      %p171 = scmp.eq.s32.totalorder %s170, 0
      %s173 = sadd.s32 %s172, 1
      %s174 = scalar_select %p171, %s172, %s173
      %p177 = pneg %p171
      %p178 = scmp.eq.s32.totalorder %s15, 1
      %p179 = por %p177, %p178
      %p180 = scmp.ne.s32.totalorder %s172, %s175
      %p181 = scmp.eq.s32.totalorder %s15, 0
      %p182 = por %p180, %p181
      %p183 = scmp.ne.s32.totalorder %s172, %s175
      %p184 = scmp.eq.s32.totalorder %s20, 1
      %p185 = por %p183, %p184
      %p186 = scmp.ne.s32.totalorder %s175, %s176
      %p187 = scmp.eq.s32.totalorder %s20, 0
      %p188 = por %p186, %p187
      %p189 = scmp.ne.s32.totalorder %s175, %s176
      %p190 = scmp.eq.s32.totalorder %s21, 1
      %p191 = por %p189, %p190
      %p193 = scmp.ne.s32.totalorder %s176, %s192
      %p194 = scmp.eq.s32.totalorder %s21, 0
      %p195 = por %p193, %p194
      %p196 = scmp.le.s32.totalorder 1, %s15
      %p197 = scmp.lt.s32.totalorder %s15, 3
      %p198 = pnand %p196, %p197
      %p199 = pneg %p198
      // Predicated region
      $region9: #{tpu_custom_call.1} parent=5 // pred_check
        _
      $region10: #{tpu_custom_call.1} parent=5 // pred_check_branch
        %201 = sbr.rel (%p198) target = $region12
      $region11: #{tpu_custom_call.1} parent=5 // pred_region
        %s202 = ssub.s32 %s15, 1
        // Predicated region
        $region13: #{tpu_custom_call.1} parent=11 // pred_check
          %p203 = pneg %p76
        $region14: #{tpu_custom_call.1} parent=11 // pred_check_branch
          %205 = sbr.rel (%p203) target = $region16
        $region15: #{tpu_custom_call.1} parent=11 // pred_region
          _
        $region16: #{tpu_custom_call.1} parent=11 // pred_fallthru
          _
        // Predicated region
        $region17: #{tpu_custom_call.1} parent=11 // pred_check
          %p206 = pneg %p97
        $region18: #{tpu_custom_call.1} parent=11 // pred_check_branch
          %208 = sbr.rel (%p206) target = $region20
        $region19: #{tpu_custom_call.1} parent=11 // pred_region
          _
        $region20: #{tpu_custom_call.1} parent=11 // pred_fallthru
          _
        // Predicated region
        $region21: #{tpu_custom_call.1} parent=11 // pred_check
          %p209 = pneg %p118
        $region22: #{tpu_custom_call.1} parent=11 // pred_check_branch
          %211 = sbr.rel (%p209) target = $region24
        $region23: #{tpu_custom_call.1} parent=11 // pred_region
          _
        $region24: #{tpu_custom_call.1} parent=11 // pred_fallthru
          _
        // Predicated region
        $region25: #{tpu_custom_call.1} parent=11 // pred_check
          %p212 = pneg %p139
        $region26: #{tpu_custom_call.1} parent=11 // pred_check_branch
          %214 = sbr.rel (%p212) target = $region28
        $region27: #{tpu_custom_call.1} parent=11 // pred_region
          _
        $region28: #{tpu_custom_call.1} parent=11 // pred_fallthru
          _
        // Predicated region
        $region29: #{tpu_custom_call.1} parent=11 // pred_check
          %p215 = pneg %p160
        $region30: #{tpu_custom_call.1} parent=11 // pred_check_branch
          %217 = sbr.rel (%p215) target = $region32
        $region31: #{tpu_custom_call.1} parent=11 // pred_region
          _
        $region32: #{tpu_custom_call.1} parent=11 // pred_fallthru
          _
      $region12: #{tpu_custom_call.1} parent=5 // pred_fallthru
        _
      %p218 = scmp.lt.s32.totalorder %s15, 2
      // Predicated region
      $region33: #{tpu_custom_call.1} parent=5 // pred_check
        %p219 = pneg %p218
      $region34: #{tpu_custom_call.1} parent=5 // pred_check_branch
        %221 = sbr.rel (%p219) target = $region36
      $region35: #{tpu_custom_call.1} parent=5 // pred_region
        // Predicated region
        $region37: #{tpu_custom_call.1} parent=35 // pred_check
          %p222 = pneg %p49
        $region38: #{tpu_custom_call.1} parent=35 // pred_check_branch
          %224 = sbr.rel (%p222) target = $region40
        $region39: #{tpu_custom_call.1} parent=35 // pred_region
          %s225 = smul.u32 2, %s23
          %p226 = scmp.lt.s32.totalorder %s22, 1
          %s227 = scalar_select %p226, %s22, 1
          %p228 = scmp.lt.s32.totalorder %s225, 1
          %s229 = scalar_select %p228, %s225, 1
          %s230 = smul.addr %s227, 2
          %s231 = sadd.s32 %s229, %s230
          %s232 = smul.addr %s231, 4
          %s233 = scalar_lea.vmem %s0, %s232
          %s234 = smul.u32 2, %s23
        $region40: #{tpu_custom_call.1} parent=35 // pred_fallthru
          _
      $region36: #{tpu_custom_call.1} parent=5 // pred_fallthru
        _
      %p235 = scmp.le.s32.totalorder 1, %s15
      %p236 = scmp.lt.s32.totalorder %s15, 3
      %p237 = pnand %p235, %p236
      %p238 = pneg %p237
      // Predicated region
      $region41: #{tpu_custom_call.1} parent=5 // pred_check
        _
      $region42: #{tpu_custom_call.1} parent=5 // pred_check_branch
        %240 = sbr.rel (%p237) target = $region44
      $region43: #{tpu_custom_call.1} parent=5 // pred_region
        %s241 = ssub.s32 %s15, 1
        %s242 = smul.u32 2, %s25
        %p243 = scmp.lt.s32.totalorder %s24, 1
        %s244 = scalar_select %p243, %s24, 1
        %p245 = scmp.lt.s32.totalorder %s242, 1
        %s246 = scalar_select %p245, %s242, 1
        %s247 = smul.addr %s244, 2
        %s248 = sadd.s32 %s246, %s247
        %s249 = smul.addr %s248, 4
        %s250 = scalar_lea.vmem %s0, %s249
        %p251 = pneg %p55
        %p252 = pneg %p52
        %p253 = pneg %p76
        %p254 = pneg %p73
        %p255 = pneg %p97
        %p256 = pneg %p94
        %p257 = pneg %p118
        %p258 = pneg %p115
        %p259 = pneg %p139
        %p260 = pneg %p136
        %p261 = pneg %p160
        %p262 = pneg %p157
        %p263 = pneg %p188
        %p264 = pneg %p185
        %s265 = sand.u32 %s175, 1
        %s266 = scalar_lea.sflag [#allocation3], %s265
        %s267 = sand.u32 %s175, 1
        %s268 = smul.addr %s267, 1024
        %s269 = scalar_lea.vmem [#allocation2], %s268
        %s270 = smul.u32 2, %s25
        %p271 = scmp.lt.s32.totalorder %s24, 1
        %s272 = scalar_select %p271, %s24, 1
        %p273 = scmp.lt.s32.totalorder %s270, 1
        %s274 = scalar_select %p273, %s270, 1
        %s275 = smul.addr %s272, 2
        %s276 = sadd.s32 %s274, %s275
        %s277 = smul.addr %s276, 4
        %s278 = scalar_lea.vmem %s0, %s277
        %s279 = smul.u32 2, %s25
        %s280 = smul.u32 2, %s25
        %v283 = vld [vmem:[%s278] sm:$0x77]
        %v285 = vcombine.high %v283, %v283
        %v287 = vpack.c.bf16 %v283, %v283
        %v288 = vpack.c.bf16 %v285, %v285
        %vm289 = vcmask 1041408
        %vm290 = vsmask.f32 1280
        %vm291 = vmand %vm289, %vm290
        %v292 = vsel %vm291, %v287, 1065369472
        %v293 = vsel %vm291, %v288, 1065369472
        %v294 = vld [vmem:[%s1] sm:$0xf]
        %v295 = vld [vmem:[%s1 + $0x4] sm:$0xf]
        %v296 = vld [vmem:[%s1 + $0x8] sm:$0xf]
        %v297 = vld [vmem:[%s1 + $0xc] sm:$0xf]
        %v298 = vld [vmem:[%s1 + $0x10] sm:$0xf]
        %v299 = vld [vmem:[%s1 + $0x14] sm:$0xf]
        %v300 = vld [vmem:[%s1 + $0x18] sm:$0xf]
        %v301 = vld [vmem:[%s1 + $0x1c] sm:$0xf]
        %v302 = vld [vmem:[%s1 + $0x20] sm:$0x1]
        %v312 = vunpack.c.l.b16 %v294
        %v313 = vunpack.c.l.b16 %v295
        %v314 = vunpack.c.l.b16 %v296
        %v315 = vunpack.c.l.b16 %v297
        %v316 = vunpack.c.l.b16 %v298
        %v317 = vunpack.c.l.b16 %v299
        %v318 = vunpack.c.l.b16 %v300
        %v319 = vunpack.c.l.b16 %v301
        %v320 = vunpack.c.l.b16 %v302
        %v321 = vpack.c.b16 %v313, %v312
        %v322 = vpack.c.b16 %v315, %v314
        %v323 = vpack.c.b16 %v317, %v316
        %v324 = vpack.c.b16 %v319, %v318
        %v325 = vpack.c.b16 %v320, %v320
        %vm326 = vcmask 31744
        %v328 = vsel %vm326, %v321, 0
        %v331 = vsel %vm326, %v322, 0
        %v334 = vsel %vm326, %v323, 0
        %v337 = vsel %vm326, %v324, 0
        %v340 = vsel %vm326, %v325, 0
        %vm342 = vcmask 1041408
        %v344 = vsel %vm342, %v292, 0
        %v347 = vsel %vm342, %v293, 0
        %349 = vmatprep.subr.bf16.mxu0 %v347
        %350 = vmatpush1.bf16.msra.mxu0 %v344
        %351 = vmatprep.subr.bf16.mxu0 0
        %352 = vmatpush1.bf16.msra.mxu0 0
        %353 = vmatprep.subr.bf16.mxu0 0
        %354 = vmatpush1.bf16.msra.mxu0 0
        %355 = vmatprep.subr.bf16.mxu0 0
        %356 = vmatpush1.bf16.msra.mxu0 0
        %357 = vmatprep.subr.bf16.mxu0 0
        %358 = vmatpush1.bf16.msra.mxu0 0
        %359 = vmatprep.subr.bf16.mxu0 0
        %360 = vmatpush1.bf16.msra.mxu0 0
        %361 = vmatprep.subr.bf16.mxu0 0
        %362 = vmatpush1.bf16.msra.mxu0 0
        %363 = vmatprep.subr.bf16.mxu0 0
        %364 = vmatpush1.bf16.msra.mxu0 0
        %365 = vmatprep.subr.bf16.mxu0 0
        %366 = vmatpush1.bf16.msra.mxu0 0
        %367 = vmatprep.subr.bf16.mxu0 0
        %368 = vmatpush1.bf16.msra.mxu0 0
        %369 = vmatprep.subr.bf16.mxu0 0
        %370 = vmatpush1.bf16.msra.mxu0 0
        %371 = vmatprep.subr.bf16.mxu0 0
        %372 = vmatpush1.bf16.msra.mxu0 0
        %373 = vmatprep.subr.bf16.mxu0 0
        %374 = vmatpush1.bf16.msra.mxu0 0
        %375 = vmatprep.subr.bf16.mxu0 0
        %376 = vmatpush1.bf16.msra.mxu0 0
        %377 = vmatprep.subr.bf16.mxu0 0
        %378 = vmatpush1.bf16.msra.mxu0 0
        %379 = vmatprep.subr.bf16.mxu0 0
        %380 = vmatpush1.bf16.msra.mxu0 0
        %381 = vmatprep.mubr.bf16.mxu0 0
        %382 = vmatmul.mubr.bf16.gmra.mrb[0].mxu0 %v328
        %v383 = vpop.f32.mrb[0].mxu0
        %v384 = vadd.f32 0.0, %v383
        %v385 = vpop.f32.mrb[0].mxu0
        %v386 = vadd.f32 0.0, %v385
        %v387 = vpop.f32.mrb[0].mxu0
        %v388 = vadd.f32 0.0, %v387
        %v389 = vpop.f32.mrb[0].mxu0
        %v390 = vadd.f32 0.0, %v389
        %391 = vmatprep.mubr.bf16.mxu0 0
        %392 = vmatmul.mubr.bf16.gmra.mrb[0].mxu0 %v331
        %v393 = vpop.f32.mrb[0].mxu0
        %v394 = vadd.f32 0.0, %v393
        %v395 = vpop.f32.mrb[0].mxu0
        %v396 = vadd.f32 0.0, %v395
        %v397 = vpop.f32.mrb[0].mxu0
        %v398 = vadd.f32 0.0, %v397
        %v399 = vpop.f32.mrb[0].mxu0
        %v400 = vadd.f32 0.0, %v399
        %401 = vmatprep.mubr.bf16.mxu0 0
        %402 = vmatmul.mubr.bf16.gmra.mrb[0].mxu0 %v334
        %v403 = vpop.f32.mrb[0].mxu0
        %v404 = vadd.f32 0.0, %v403
        %v405 = vpop.f32.mrb[0].mxu0
        %v406 = vadd.f32 0.0, %v405
        %v407 = vpop.f32.mrb[0].mxu0
        %v408 = vadd.f32 0.0, %v407
        %v409 = vpop.f32.mrb[0].mxu0
        %v410 = vadd.f32 0.0, %v409
        %411 = vmatprep.mubr.bf16.mxu0 0
        %412 = vmatmul.mubr.bf16.gmra.mrb[0].mxu0 %v337
        %v413 = vpop.f32.mrb[0].mxu0
        %v414 = vadd.f32 0.0, %v413
        %v415 = vpop.f32.mrb[0].mxu0
        %v416 = vadd.f32 0.0, %v415
        %v417 = vpop.f32.mrb[0].mxu0
        %v418 = vadd.f32 0.0, %v417
        %v419 = vpop.f32.mrb[0].mxu0
        %v420 = vadd.f32 0.0, %v419
        %421 = vmatprep.mubr.bf16.mxu0 0
        %422 = vmatmul.mubr.bf16.gmra.mrb[0].mxu0 %v340
        %v423 = vpop.f32.mrb[0].mxu0
        %v424 = vadd.f32 0.0, %v423
        %v425 = vpop.f32.mrb[0].mxu0
        %v426 = vadd.f32 0.0, %v425
        %v427 = vpop.f32.mrb[0].mxu0
        %v428 = vpop.f32.mrb[0].mxu0
        %429 = vdwg.mxu0
        %v430 = vmul.f32 %v384, 0.01
        %v431 = vmul.f32 %v386, 0.01
        %v432 = vmul.f32 %v388, 0.01
        %v433 = vmul.f32 %v390, 0.01
        %v434 = vmul.f32 %v394, 0.01
        %v435 = vmul.f32 %v396, 0.01
        %v436 = vmul.f32 %v398, 0.01
        %v437 = vmul.f32 %v400, 0.01
        %v438 = vmul.f32 %v404, 0.01
        %v439 = vmul.f32 %v406, 0.01
        %v440 = vmul.f32 %v408, 0.01
        %v441 = vmul.f32 %v410, 0.01
        %v442 = vmul.f32 %v414, 0.01
        %v443 = vmul.f32 %v416, 0.01
        %v444 = vmul.f32 %v418, 0.01
        %v445 = vmul.f32 %v420, 0.01
        %v446 = vmul.f32 %v424, 0.01
        %v447 = vmul.f32 %v426, 0.01
        %v448 = vmax.f32 %v384, %v430
        %v449 = vmax.f32 %v386, %v431
        %v450 = vmax.f32 %v388, %v432
        %v451 = vmax.f32 %v390, %v433
        %v452 = vmax.f32 %v394, %v434
        %v453 = vmax.f32 %v396, %v435
        %v454 = vmax.f32 %v398, %v436
        %v455 = vmax.f32 %v400, %v437
        %v456 = vmax.f32 %v404, %v438
        %v457 = vmax.f32 %v406, %v439
        %v458 = vmax.f32 %v408, %v440
        %v459 = vmax.f32 %v410, %v441
        %v460 = vmax.f32 %v414, %v442
        %v461 = vmax.f32 %v416, %v443
        %v462 = vmax.f32 %v418, %v444
        %v463 = vmax.f32 %v420, %v445
        %v464 = vmax.f32 %v424, %v446
        %v465 = vmax.f32 %v426, %v447
        %v466 = vpack.c.bf16 %v450, %v448
        %v467 = vpack.c.bf16 %v451, %v449
        %v468 = vpack.c.bf16 %v454, %v452
        %v469 = vpack.c.bf16 %v455, %v453
        %v470 = vpack.c.bf16 %v458, %v456
        %v471 = vpack.c.bf16 %v459, %v457
        %v472 = vpack.c.bf16 %v462, %v460
        %v473 = vpack.c.bf16 %v463, %v461
        %v474 = vpack.c.bf16 %v464, %v464
        %v475 = vpack.c.bf16 %v465, %v465
        %v476 = vld [vmem:[%s2] sm:$0xf]
        %v477 = vld [vmem:[%s2 + $0x4] sm:$0xf]
        %v478 = vld [vmem:[%s2 + $0x8] sm:$0xf]
        %v479 = vld [vmem:[%s2 + $0xc] sm:$0xf]
        %v480 = vld [vmem:[%s2 + $0x10] sm:$0xf]
        %v481 = vld [vmem:[%s2 + $0x14] sm:$0xf]
        %v482 = vld [vmem:[%s2 + $0x18] sm:$0xf]
        %v483 = vld [vmem:[%s2 + $0x1c] sm:$0xf]
        %v484 = vld [vmem:[%s2 + $0x20] sm:$0x1]
        %v494 = vunpack.c.l.b16 %v476
        %v495 = vunpack.c.l.b16 %v477
        %v496 = vunpack.c.l.b16 %v478
        %v497 = vunpack.c.l.b16 %v479
        %v498 = vunpack.c.l.b16 %v480
        %v499 = vunpack.c.l.b16 %v481
        %v500 = vunpack.c.l.b16 %v482
        %v501 = vunpack.c.l.b16 %v483
        %v502 = vunpack.c.l.b16 %v484
        %v503 = vpack.c.b16 %v495, %v494
        %v504 = vpack.c.b16 %v497, %v496
        %v505 = vpack.c.b16 %v499, %v498
        %v506 = vpack.c.b16 %v501, %v500
        %v507 = vpack.c.b16 %v502, %v502
        %vm508 = vcmask 531456
        %v510 = vsel %vm508, %v503, 0
        %v513 = vsel %vm508, %v504, 0
        %v516 = vsel %vm508, %v505, 0
        %v519 = vsel %vm508, %v506, 0
        %v522 = vsel %vm508, %v507, 0
        %vm524 = vcmask 1040384
        %v525 = vsel 0, 4294967295, 65535
        %v526 = vsel %vm524, %v525, 0
        %v528 = vand.u32 %v474, %v526
        %v531 = vand.u32 %v475, %v526
        %533 = vmatprep.subr.bf16.mxu0 %v467
        %534 = vmatpush1.bf16.msra.mxu0 %v466
        %535 = vmatprep.subr.bf16.mxu0 %v469
        %536 = vmatpush1.bf16.msra.mxu0 %v468
        %537 = vmatprep.subr.bf16.mxu0 %v471
        %538 = vmatpush1.bf16.msra.mxu0 %v470
        %539 = vmatprep.subr.bf16.mxu0 %v473
        %540 = vmatpush1.bf16.msra.mxu0 %v472
        %541 = vmatprep.subr.bf16.mxu0 %v531
        %542 = vmatpush1.bf16.msra.mxu0 %v528
        %543 = vmatprep.subr.bf16.mxu0 0
        %544 = vmatpush1.bf16.msra.mxu0 0
        %545 = vmatprep.subr.bf16.mxu0 0
        %546 = vmatpush1.bf16.msra.mxu0 0
        %547 = vmatprep.subr.bf16.mxu0 0
        %548 = vmatpush1.bf16.msra.mxu0 0
        %549 = vmatprep.subr.bf16.mxu0 0
        %550 = vmatpush1.bf16.msra.mxu0 0
        %551 = vmatprep.subr.bf16.mxu0 0
        %552 = vmatpush1.bf16.msra.mxu0 0
        %553 = vmatprep.subr.bf16.mxu0 0
        %554 = vmatpush1.bf16.msra.mxu0 0
        %555 = vmatprep.subr.bf16.mxu0 0
        %556 = vmatpush1.bf16.msra.mxu0 0
        %557 = vmatprep.subr.bf16.mxu0 0
        %558 = vmatpush1.bf16.msra.mxu0 0
        %559 = vmatprep.subr.bf16.mxu0 0
        %560 = vmatpush1.bf16.msra.mxu0 0
        %561 = vmatprep.subr.bf16.mxu0 0
        %562 = vmatpush1.bf16.msra.mxu0 0
        %563 = vmatprep.subr.bf16.mxu0 0
        %564 = vmatpush1.bf16.msra.mxu0 0
        %565 = vmatprep.mubr.bf16.mxu0 0
        %566 = vmatmul.mubr.bf16.gmra.mrb[0].mxu0 %v510
        %v567 = vpop.f32.mrb[0].mxu0
        %v568 = vadd.f32 0.0, %v567
        %v569 = vpop.f32.mrb[0].mxu0
        %v570 = vadd.f32 0.0, %v569
        %v571 = vpop.f32.mrb[0].mxu0
        %v572 = vadd.f32 0.0, %v571
        %v573 = vpop.f32.mrb[0].mxu0
        %v574 = vadd.f32 0.0, %v573
        %575 = vmatprep.mubr.bf16.mxu0 0
        %576 = vmatmul.mubr.bf16.gmra.mrb[0].mxu0 %v513
        %v577 = vpop.f32.mrb[0].mxu0
        %v578 = vadd.f32 0.0, %v577
        %v579 = vpop.f32.mrb[0].mxu0
        %v580 = vadd.f32 0.0, %v579
        %v581 = vpop.f32.mrb[0].mxu0
        %v582 = vadd.f32 0.0, %v581
        %v583 = vpop.f32.mrb[0].mxu0
        %v584 = vadd.f32 0.0, %v583
        %585 = vmatprep.mubr.bf16.mxu0 0
        %586 = vmatmul.mubr.bf16.gmra.mrb[0].mxu0 %v516
        %v587 = vpop.f32.mrb[0].mxu0
        %v588 = vadd.f32 0.0, %v587
        %v589 = vpop.f32.mrb[0].mxu0
        %v590 = vadd.f32 0.0, %v589
        %v591 = vpop.f32.mrb[0].mxu0
        %v592 = vadd.f32 0.0, %v591
        %v593 = vpop.f32.mrb[0].mxu0
        %v594 = vadd.f32 0.0, %v593
        %595 = vmatprep.mubr.bf16.mxu0 0
        %596 = vmatmul.mubr.bf16.gmra.mrb[0].mxu0 %v519
        %v597 = vpop.f32.mrb[0].mxu0
        %v598 = vadd.f32 0.0, %v597
        %v599 = vpop.f32.mrb[0].mxu0
        %v600 = vadd.f32 0.0, %v599
        %v601 = vpop.f32.mrb[0].mxu0
        %v602 = vadd.f32 0.0, %v601
        %v603 = vpop.f32.mrb[0].mxu0
        %v604 = vadd.f32 0.0, %v603
        %605 = vmatprep.mubr.bf16.mxu0 0
        %606 = vmatmul.mubr.bf16.gmra.mrb[0].mxu0 %v522
        %v607 = vpop.f32.mrb[0].mxu0
        %v608 = vadd.f32 0.0, %v607
        %v609 = vpop.f32.mrb[0].mxu0
        %v610 = vadd.f32 0.0, %v609
        %v611 = vpop.f32.mrb[0].mxu0
        %v612 = vpop.f32.mrb[0].mxu0
        %613 = vdwg.mxu0
        %v614 = vmul.f32 %v568, 0.01
        %v615 = vmul.f32 %v570, 0.01
        %v616 = vmul.f32 %v572, 0.01
        %v617 = vmul.f32 %v574, 0.01
        %v618 = vmul.f32 %v578, 0.01
        %v619 = vmul.f32 %v580, 0.01
        %v620 = vmul.f32 %v582, 0.01
        %v621 = vmul.f32 %v584, 0.01
        %v622 = vmul.f32 %v588, 0.01
        %v623 = vmul.f32 %v590, 0.01
        %v624 = vmul.f32 %v592, 0.01
        %v625 = vmul.f32 %v594, 0.01
        %v626 = vmul.f32 %v598, 0.01
        %v627 = vmul.f32 %v600, 0.01
        %v628 = vmul.f32 %v602, 0.01
        %v629 = vmul.f32 %v604, 0.01
        %v630 = vmul.f32 %v608, 0.01
        %v631 = vmul.f32 %v610, 0.01
        %v632 = vmax.f32 %v568, %v614
        %v633 = vmax.f32 %v570, %v615
        %v634 = vmax.f32 %v572, %v616
        %v635 = vmax.f32 %v574, %v617
        %v636 = vmax.f32 %v578, %v618
        %v637 = vmax.f32 %v580, %v619
        %v638 = vmax.f32 %v582, %v620
        %v639 = vmax.f32 %v584, %v621
        %v640 = vmax.f32 %v588, %v622
        %v641 = vmax.f32 %v590, %v623
        %v642 = vmax.f32 %v592, %v624
        %v643 = vmax.f32 %v594, %v625
        %v644 = vmax.f32 %v598, %v626
        %v645 = vmax.f32 %v600, %v627
        %v646 = vmax.f32 %v602, %v628
        %v647 = vmax.f32 %v604, %v629
        %v648 = vmax.f32 %v608, %v630
        %v649 = vmax.f32 %v610, %v631
        %v650 = vpack.c.bf16 %v634, %v632
        %v651 = vpack.c.bf16 %v635, %v633
        %v652 = vpack.c.bf16 %v638, %v636
        %v653 = vpack.c.bf16 %v639, %v637
        %v654 = vpack.c.bf16 %v642, %v640
        %v655 = vpack.c.bf16 %v643, %v641
        %v656 = vpack.c.bf16 %v646, %v644
        %v657 = vpack.c.bf16 %v647, %v645
        %v658 = vpack.c.bf16 %v648, %v648
        %v659 = vpack.c.bf16 %v649, %v649
        %v660 = vld [vmem:[%s3] sm:$0xf]
        %v661 = vld [vmem:[%s3 + $0x4] sm:$0xf]
        %v662 = vld [vmem:[%s3 + $0x8] sm:$0xf]
        %v663 = vld [vmem:[%s3 + $0xc] sm:$0xf]
        %v664 = vld [vmem:[%s3 + $0x10] sm:$0xf]
        %v665 = vld [vmem:[%s3 + $0x14] sm:$0xf]
        %v666 = vld [vmem:[%s3 + $0x18] sm:$0xf]
        %v667 = vld [vmem:[%s3 + $0x1c] sm:$0xf]
        %v668 = vld [vmem:[%s3 + $0x20] sm:$0x1]
        %v678 = vunpack.c.l.b16 %v660
        %v679 = vunpack.c.l.b16 %v661
        %v680 = vunpack.c.l.b16 %v662
        %v681 = vunpack.c.l.b16 %v663
        %v682 = vunpack.c.l.b16 %v664
        %v683 = vunpack.c.l.b16 %v665
        %v684 = vunpack.c.l.b16 %v666
        %v685 = vunpack.c.l.b16 %v667
        %v686 = vunpack.c.l.b16 %v668
        %v687 = vpack.c.b16 %v679, %v678
        %v688 = vpack.c.b16 %v681, %v680
        %v689 = vpack.c.b16 %v683, %v682
        %v690 = vpack.c.b16 %v685, %v684
        %v691 = vpack.c.b16 %v686, %v686
        %v693 = vsel %vm508, %v687, 0
        %v696 = vsel %vm508, %v688, 0
        %v699 = vsel %vm508, %v689, 0
        %v702 = vsel %vm508, %v690, 0
        %v705 = vsel %vm508, %v691, 0
        %v708 = vand.u32 %v658, %v526
        %v711 = vand.u32 %v659, %v526
        %713 = vmatprep.subr.bf16.mxu0 %v651
        %714 = vmatpush1.bf16.msra.mxu0 %v650
        %715 = vmatprep.subr.bf16.mxu0 %v653
        %716 = vmatpush1.bf16.msra.mxu0 %v652
        %717 = vmatprep.subr.bf16.mxu0 %v655
        %718 = vmatpush1.bf16.msra.mxu0 %v654
        %719 = vmatprep.subr.bf16.mxu0 %v657
        %720 = vmatpush1.bf16.msra.mxu0 %v656
        %721 = vmatprep.subr.bf16.mxu0 %v711
        %722 = vmatpush1.bf16.msra.mxu0 %v708
        %723 = vmatprep.subr.bf16.mxu0 0
        %724 = vmatpush1.bf16.msra.mxu0 0
        %725 = vmatprep.subr.bf16.mxu0 0
        %726 = vmatpush1.bf16.msra.mxu0 0
        %727 = vmatprep.subr.bf16.mxu0 0
        %728 = vmatpush1.bf16.msra.mxu0 0
        %729 = vmatprep.subr.bf16.mxu0 0
        %730 = vmatpush1.bf16.msra.mxu0 0
        %731 = vmatprep.subr.bf16.mxu0 0
        %732 = vmatpush1.bf16.msra.mxu0 0
        %733 = vmatprep.subr.bf16.mxu0 0
        %734 = vmatpush1.bf16.msra.mxu0 0
        %735 = vmatprep.subr.bf16.mxu0 0
        %736 = vmatpush1.bf16.msra.mxu0 0
        %737 = vmatprep.subr.bf16.mxu0 0
        %738 = vmatpush1.bf16.msra.mxu0 0
        %739 = vmatprep.subr.bf16.mxu0 0
        %740 = vmatpush1.bf16.msra.mxu0 0
        %741 = vmatprep.subr.bf16.mxu0 0
        %742 = vmatpush1.bf16.msra.mxu0 0
        %743 = vmatprep.subr.bf16.mxu0 0
        %744 = vmatpush1.bf16.msra.mxu0 0
        %745 = vmatprep.mubr.bf16.mxu0 0
        %746 = vmatmul.mubr.bf16.gmra.mrb[0].mxu0 %v693
        %v747 = vpop.f32.mrb[0].mxu0
        %v748 = vadd.f32 0.0, %v747
        %v749 = vpop.f32.mrb[0].mxu0
        %v750 = vadd.f32 0.0, %v749
        %v751 = vpop.f32.mrb[0].mxu0
        %v752 = vadd.f32 0.0, %v751
        %v753 = vpop.f32.mrb[0].mxu0
        %v754 = vadd.f32 0.0, %v753
        %755 = vmatprep.mubr.bf16.mxu0 0
        %756 = vmatmul.mubr.bf16.gmra.mrb[0].mxu0 %v696
        %v757 = vpop.f32.mrb[0].mxu0
        %v758 = vadd.f32 0.0, %v757
        %v759 = vpop.f32.mrb[0].mxu0
        %v760 = vadd.f32 0.0, %v759
        %v761 = vpop.f32.mrb[0].mxu0
        %v762 = vadd.f32 0.0, %v761
        %v763 = vpop.f32.mrb[0].mxu0
        %v764 = vadd.f32 0.0, %v763
        %765 = vmatprep.mubr.bf16.mxu0 0
        %766 = vmatmul.mubr.bf16.gmra.mrb[0].mxu0 %v699
        %v767 = vpop.f32.mrb[0].mxu0
        %v768 = vadd.f32 0.0, %v767
        %v769 = vpop.f32.mrb[0].mxu0
        %v770 = vadd.f32 0.0, %v769
        %v771 = vpop.f32.mrb[0].mxu0
        %v772 = vadd.f32 0.0, %v771
        %v773 = vpop.f32.mrb[0].mxu0
        %v774 = vadd.f32 0.0, %v773
        %775 = vmatprep.mubr.bf16.mxu0 0
        %776 = vmatmul.mubr.bf16.gmra.mrb[0].mxu0 %v702
        %v777 = vpop.f32.mrb[0].mxu0
        %v778 = vadd.f32 0.0, %v777
        %v779 = vpop.f32.mrb[0].mxu0
        %v780 = vadd.f32 0.0, %v779
        %v781 = vpop.f32.mrb[0].mxu0
        %v782 = vadd.f32 0.0, %v781
        %v783 = vpop.f32.mrb[0].mxu0
        %v784 = vadd.f32 0.0, %v783
        %785 = vmatprep.mubr.bf16.mxu0 0
        %786 = vmatmul.mubr.bf16.gmra.mrb[0].mxu0 %v705
        %v787 = vpop.f32.mrb[0].mxu0
        %v788 = vadd.f32 0.0, %v787
        %v789 = vpop.f32.mrb[0].mxu0
        %v790 = vadd.f32 0.0, %v789
        %v791 = vpop.f32.mrb[0].mxu0
        %v792 = vpop.f32.mrb[0].mxu0
        %793 = vdwg.mxu0
        %v794 = vmul.f32 %v748, 0.01
        %v795 = vmul.f32 %v750, 0.01
        %v796 = vmul.f32 %v752, 0.01
        %v797 = vmul.f32 %v754, 0.01
        %v798 = vmul.f32 %v758, 0.01
        %v799 = vmul.f32 %v760, 0.01
        %v800 = vmul.f32 %v762, 0.01
        %v801 = vmul.f32 %v764, 0.01
        %v802 = vmul.f32 %v768, 0.01
        %v803 = vmul.f32 %v770, 0.01
        %v804 = vmul.f32 %v772, 0.01
        %v805 = vmul.f32 %v774, 0.01
        %v806 = vmul.f32 %v778, 0.01
        %v807 = vmul.f32 %v780, 0.01
        %v808 = vmul.f32 %v782, 0.01
        %v809 = vmul.f32 %v784, 0.01
        %v810 = vmul.f32 %v788, 0.01
        %v811 = vmul.f32 %v790, 0.01
        %v812 = vmax.f32 %v748, %v794
        %v813 = vmax.f32 %v750, %v795
        %v814 = vmax.f32 %v752, %v796
        %v815 = vmax.f32 %v754, %v797
        %v816 = vmax.f32 %v758, %v798
        %v817 = vmax.f32 %v760, %v799
        %v818 = vmax.f32 %v762, %v800
        %v819 = vmax.f32 %v764, %v801
        %v820 = vmax.f32 %v768, %v802
        %v821 = vmax.f32 %v770, %v803
        %v822 = vmax.f32 %v772, %v804
        %v823 = vmax.f32 %v774, %v805
        %v824 = vmax.f32 %v778, %v806
        %v825 = vmax.f32 %v780, %v807
        %v826 = vmax.f32 %v782, %v808
        %v827 = vmax.f32 %v784, %v809
        %v828 = vmax.f32 %v788, %v810
        %v829 = vmax.f32 %v790, %v811
        %v830 = vpack.c.bf16 %v814, %v812
        %v831 = vpack.c.bf16 %v815, %v813
        %v832 = vpack.c.bf16 %v818, %v816
        %v833 = vpack.c.bf16 %v819, %v817
        %v834 = vpack.c.bf16 %v822, %v820
        %v835 = vpack.c.bf16 %v823, %v821
        %v836 = vpack.c.bf16 %v826, %v824
        %v837 = vpack.c.bf16 %v827, %v825
        %v838 = vpack.c.bf16 %v828, %v828
        %v839 = vpack.c.bf16 %v829, %v829
        %v840 = vld [vmem:[%s4] sm:$0xf]
        %v841 = vld [vmem:[%s4 + $0x4] sm:$0xf]
        %v842 = vld [vmem:[%s4 + $0x8] sm:$0xf]
        %v843 = vld [vmem:[%s4 + $0xc] sm:$0xf]
        %v844 = vld [vmem:[%s4 + $0x10] sm:$0xf]
        %v845 = vld [vmem:[%s4 + $0x14] sm:$0xf]
        %v846 = vld [vmem:[%s4 + $0x18] sm:$0xf]
        %v847 = vld [vmem:[%s4 + $0x1c] sm:$0xf]
        %v848 = vld [vmem:[%s4 + $0x20] sm:$0xf]
        %v849 = vld [vmem:[%s4 + $0x24] sm:$0xf]
        %v850 = vld [vmem:[%s4 + $0x28] sm:$0xf]
        %v851 = vld [vmem:[%s4 + $0x2c] sm:$0xf]
        %v852 = vld [vmem:[%s4 + $0x30] sm:$0xf]
        %v853 = vld [vmem:[%s4 + $0x34] sm:$0xf]
        %v854 = vld [vmem:[%s4 + $0x38] sm:$0xf]
        %v855 = vld [vmem:[%s4 + $0x3c] sm:$0xf]
        %v856 = vld [vmem:[%s4 + $0x40] sm:$0x1]
        %v874 = vunpack.c.l.b16 %v840
        %v875 = vunpack.c.l.b16 %v841
        %v876 = vunpack.c.l.b16 %v842
        %v877 = vunpack.c.l.b16 %v843
        %v878 = vunpack.c.l.b16 %v844
        %v879 = vunpack.c.l.b16 %v845
        %v880 = vunpack.c.l.b16 %v846
        %v881 = vunpack.c.l.b16 %v847
        %v882 = vunpack.c.l.b16 %v848
        %v883 = vunpack.c.l.b16 %v849
        %v884 = vunpack.c.l.b16 %v850
        %v885 = vunpack.c.l.b16 %v851
        %v886 = vunpack.c.l.b16 %v852
        %v887 = vunpack.c.l.b16 %v853
        %v888 = vunpack.c.l.b16 %v854
        %v889 = vunpack.c.l.b16 %v855
        %v890 = vunpack.c.l.b16 %v856
        %v891 = vpack.c.b16 %v875, %v874
        %v892 = vpack.c.b16 %v877, %v876
        %v893 = vpack.c.b16 %v879, %v878
        %v894 = vpack.c.b16 %v881, %v880
        %v895 = vpack.c.b16 %v883, %v882
        %v896 = vpack.c.b16 %v885, %v884
        %v897 = vpack.c.b16 %v887, %v886
        %v898 = vpack.c.b16 %v889, %v888
        %v899 = vpack.c.b16 %v890, %v890
        %v901 = vsel %vm508, %v891, 0
        %v904 = vsel %vm508, %v892, 0
        %v907 = vsel %vm508, %v893, 0
        %v910 = vsel %vm508, %v894, 0
        %v913 = vsel %vm508, %v895, 0
        %v916 = vsel %vm508, %v896, 0
        %v919 = vsel %vm508, %v897, 0
        %v922 = vsel %vm508, %v898, 0
        %v925 = vsel %vm508, %v899, 0
        %v928 = vand.u32 %v838, %v526
        %v931 = vand.u32 %v839, %v526
        %933 = vmatprep.subr.bf16.mxu0 %v831
        %934 = vmatpush1.bf16.msra.mxu0 %v830
        %935 = vmatprep.subr.bf16.mxu0 %v833
        %936 = vmatpush1.bf16.msra.mxu0 %v832
        %937 = vmatprep.subr.bf16.mxu0 %v835
        %938 = vmatpush1.bf16.msra.mxu0 %v834
        %939 = vmatprep.subr.bf16.mxu0 %v837
        %940 = vmatpush1.bf16.msra.mxu0 %v836
        %941 = vmatprep.subr.bf16.mxu0 %v931
        %942 = vmatpush1.bf16.msra.mxu0 %v928
        %943 = vmatprep.subr.bf16.mxu0 0
        %944 = vmatpush1.bf16.msra.mxu0 0
        %945 = vmatprep.subr.bf16.mxu0 0
        %946 = vmatpush1.bf16.msra.mxu0 0
        %947 = vmatprep.subr.bf16.mxu0 0
        %948 = vmatpush1.bf16.msra.mxu0 0
        %949 = vmatprep.subr.bf16.mxu0 0
        %950 = vmatpush1.bf16.msra.mxu0 0
        %951 = vmatprep.subr.bf16.mxu0 0
        %952 = vmatpush1.bf16.msra.mxu0 0
        %953 = vmatprep.subr.bf16.mxu0 0
        %954 = vmatpush1.bf16.msra.mxu0 0
        %955 = vmatprep.subr.bf16.mxu0 0
        %956 = vmatpush1.bf16.msra.mxu0 0
        %957 = vmatprep.subr.bf16.mxu0 0
        %958 = vmatpush1.bf16.msra.mxu0 0
        %959 = vmatprep.subr.bf16.mxu0 0
        %960 = vmatpush1.bf16.msra.mxu0 0
        %961 = vmatprep.subr.bf16.mxu0 0
        %962 = vmatpush1.bf16.msra.mxu0 0
        %963 = vmatprep.subr.bf16.mxu0 0
        %964 = vmatpush1.bf16.msra.mxu0 0
        %965 = vmatprep.mubr.bf16.mxu0 0
        %966 = vmatmul.mubr.bf16.gmra.mrb[0].mxu0 %v901
        %v967 = vpop.f32.mrb[0].mxu0
        %v968 = vadd.f32 0.0, %v967
        %v969 = vpop.f32.mrb[0].mxu0
        %v970 = vadd.f32 0.0, %v969
        %v971 = vpop.f32.mrb[0].mxu0
        %v972 = vadd.f32 0.0, %v971
        %v973 = vpop.f32.mrb[0].mxu0
        %v974 = vadd.f32 0.0, %v973
        %975 = vmatprep.mubr.bf16.mxu0 0
        %976 = vmatmul.mubr.bf16.gmra.mrb[0].mxu0 %v904
        %v977 = vpop.f32.mrb[0].mxu0
        %v978 = vadd.f32 0.0, %v977
        %v979 = vpop.f32.mrb[0].mxu0
        %v980 = vadd.f32 0.0, %v979
        %v981 = vpop.f32.mrb[0].mxu0
        %v982 = vadd.f32 0.0, %v981
        %v983 = vpop.f32.mrb[0].mxu0
        %v984 = vadd.f32 0.0, %v983
        %985 = vmatprep.mubr.bf16.mxu0 0
        %986 = vmatmul.mubr.bf16.gmra.mrb[0].mxu0 %v907
        %v987 = vpop.f32.mrb[0].mxu0
        %v988 = vadd.f32 0.0, %v987
        %v989 = vpop.f32.mrb[0].mxu0
        %v990 = vadd.f32 0.0, %v989
        %v991 = vpop.f32.mrb[0].mxu0
        %v992 = vadd.f32 0.0, %v991
        %v993 = vpop.f32.mrb[0].mxu0
        %v994 = vadd.f32 0.0, %v993
        %995 = vmatprep.mubr.bf16.mxu0 0
        %996 = vmatmul.mubr.bf16.gmra.mrb[0].mxu0 %v910
        %v997 = vpop.f32.mrb[0].mxu0
        %v998 = vadd.f32 0.0, %v997
        %v999 = vpop.f32.mrb[0].mxu0
        %v1000 = vadd.f32 0.0, %v999
        %v1001 = vpop.f32.mrb[0].mxu0
        %v1002 = vadd.f32 0.0, %v1001
        %v1003 = vpop.f32.mrb[0].mxu0
        %v1004 = vadd.f32 0.0, %v1003
        %1005 = vmatprep.mubr.bf16.mxu0 0
        %1006 = vmatmul.mubr.bf16.gmra.mrb[0].mxu0 %v913
        %v1007 = vpop.f32.mrb[0].mxu0
        %v1008 = vadd.f32 0.0, %v1007
        %v1009 = vpop.f32.mrb[0].mxu0
        %v1010 = vadd.f32 0.0, %v1009
        %v1011 = vpop.f32.mrb[0].mxu0
        %v1012 = vadd.f32 0.0, %v1011
        %v1013 = vpop.f32.mrb[0].mxu0
        %v1014 = vadd.f32 0.0, %v1013
        %1015 = vmatprep.mubr.bf16.mxu0 0
        %1016 = vmatmul.mubr.bf16.gmra.mrb[0].mxu0 %v916
        %v1017 = vpop.f32.mrb[0].mxu0
        %v1018 = vadd.f32 0.0, %v1017
        %v1019 = vpop.f32.mrb[0].mxu0
        %v1020 = vadd.f32 0.0, %v1019
        %v1021 = vpop.f32.mrb[0].mxu0
        %v1022 = vadd.f32 0.0, %v1021
        %v1023 = vpop.f32.mrb[0].mxu0
        %v1024 = vadd.f32 0.0, %v1023
        %1025 = vmatprep.mubr.bf16.mxu0 0
        %1026 = vmatmul.mubr.bf16.gmra.mrb[0].mxu0 %v919
        %v1027 = vpop.f32.mrb[0].mxu0
        %v1028 = vadd.f32 0.0, %v1027
        %v1029 = vpop.f32.mrb[0].mxu0
        %v1030 = vadd.f32 0.0, %v1029
        %v1031 = vpop.f32.mrb[0].mxu0
        %v1032 = vadd.f32 0.0, %v1031
        %v1033 = vpop.f32.mrb[0].mxu0
        %v1034 = vadd.f32 0.0, %v1033
        %1035 = vmatprep.mubr.bf16.mxu0 0
        %1036 = vmatmul.mubr.bf16.gmra.mrb[0].mxu0 %v922
        %v1037 = vpop.f32.mrb[0].mxu0
        %v1038 = vadd.f32 0.0, %v1037
        %v1039 = vpop.f32.mrb[0].mxu0
        %v1040 = vadd.f32 0.0, %v1039
        %v1041 = vpop.f32.mrb[0].mxu0
        %v1042 = vadd.f32 0.0, %v1041
        %v1043 = vpop.f32.mrb[0].mxu0
        %v1044 = vadd.f32 0.0, %v1043
        %1045 = vmatprep.mubr.bf16.mxu0 0
        %1046 = vmatmul.mubr.bf16.gmra.mrb[0].mxu0 %v925
        %v1047 = vpop.f32.mrb[0].mxu0
        %v1048 = vadd.f32 0.0, %v1047
        %v1049 = vpop.f32.mrb[0].mxu0
        %v1050 = vadd.f32 0.0, %v1049
        %v1051 = vpop.f32.mrb[0].mxu0
        %v1052 = vpop.f32.mrb[0].mxu0
        %1053 = vdwg.mxu0
        %v1054 = vmul.f32 %v968, 0.01
        %v1055 = vmul.f32 %v970, 0.01
        %v1056 = vmul.f32 %v972, 0.01
        %v1057 = vmul.f32 %v974, 0.01
        %v1058 = vmul.f32 %v978, 0.01
        %v1059 = vmul.f32 %v980, 0.01
        %v1060 = vmul.f32 %v982, 0.01
        %v1061 = vmul.f32 %v984, 0.01
        %v1062 = vmul.f32 %v988, 0.01
        %v1063 = vmul.f32 %v990, 0.01
        %v1064 = vmul.f32 %v992, 0.01
        %v1065 = vmul.f32 %v994, 0.01
        %v1066 = vmul.f32 %v998, 0.01
        %v1067 = vmul.f32 %v1000, 0.01
        %v1068 = vmul.f32 %v1002, 0.01
        %v1069 = vmul.f32 %v1004, 0.01
        %v1070 = vmul.f32 %v1008, 0.01
        %v1071 = vmul.f32 %v1010, 0.01
        %v1072 = vmul.f32 %v1012, 0.01
        %v1073 = vmul.f32 %v1014, 0.01
        %v1074 = vmul.f32 %v1018, 0.01
        %v1075 = vmul.f32 %v1020, 0.01
        %v1076 = vmul.f32 %v1022, 0.01
        %v1077 = vmul.f32 %v1024, 0.01
        %v1078 = vmul.f32 %v1028, 0.01
        %v1079 = vmul.f32 %v1030, 0.01
        %v1080 = vmul.f32 %v1032, 0.01
        %v1081 = vmul.f32 %v1034, 0.01
        %v1082 = vmul.f32 %v1038, 0.01
        %v1083 = vmul.f32 %v1040, 0.01
        %v1084 = vmul.f32 %v1042, 0.01
        %v1085 = vmul.f32 %v1044, 0.01
        %v1086 = vmul.f32 %v1048, 0.01
        %v1087 = vmul.f32 %v1050, 0.01
        %v1088 = vmax.f32 %v968, %v1054
        %v1089 = vmax.f32 %v970, %v1055
        %v1090 = vmax.f32 %v972, %v1056
        %v1091 = vmax.f32 %v974, %v1057
        %v1092 = vmax.f32 %v978, %v1058
        %v1093 = vmax.f32 %v980, %v1059
        %v1094 = vmax.f32 %v982, %v1060
        %v1095 = vmax.f32 %v984, %v1061
        %v1096 = vmax.f32 %v988, %v1062
        %v1097 = vmax.f32 %v990, %v1063
        %v1098 = vmax.f32 %v992, %v1064
        %v1099 = vmax.f32 %v994, %v1065
        %v1100 = vmax.f32 %v998, %v1066
        %v1101 = vmax.f32 %v1000, %v1067
        %v1102 = vmax.f32 %v1002, %v1068
        %v1103 = vmax.f32 %v1004, %v1069
        %v1104 = vmax.f32 %v1008, %v1070
        %v1105 = vmax.f32 %v1010, %v1071
        %v1106 = vmax.f32 %v1012, %v1072
        %v1107 = vmax.f32 %v1014, %v1073
        %v1108 = vmax.f32 %v1018, %v1074
        %v1109 = vmax.f32 %v1020, %v1075
        %v1110 = vmax.f32 %v1022, %v1076
        %v1111 = vmax.f32 %v1024, %v1077
        %v1112 = vmax.f32 %v1028, %v1078
        %v1113 = vmax.f32 %v1030, %v1079
        %v1114 = vmax.f32 %v1032, %v1080
        %v1115 = vmax.f32 %v1034, %v1081
        %v1116 = vmax.f32 %v1038, %v1082
        %v1117 = vmax.f32 %v1040, %v1083
        %v1118 = vmax.f32 %v1042, %v1084
        %v1119 = vmax.f32 %v1044, %v1085
        %v1120 = vmax.f32 %v1048, %v1086
        %v1121 = vmax.f32 %v1050, %v1087
        %v1122 = vpack.c.bf16 %v1090, %v1088
        %v1123 = vpack.c.bf16 %v1091, %v1089
        %v1124 = vpack.c.bf16 %v1094, %v1092
        %v1125 = vpack.c.bf16 %v1095, %v1093
        %v1126 = vpack.c.bf16 %v1098, %v1096
        %v1127 = vpack.c.bf16 %v1099, %v1097
        %v1128 = vpack.c.bf16 %v1102, %v1100
        %v1129 = vpack.c.bf16 %v1103, %v1101
        %v1130 = vpack.c.bf16 %v1106, %v1104
        %v1131 = vpack.c.bf16 %v1107, %v1105
        %v1132 = vpack.c.bf16 %v1110, %v1108
        %v1133 = vpack.c.bf16 %v1111, %v1109
        %v1134 = vpack.c.bf16 %v1114, %v1112
        %v1135 = vpack.c.bf16 %v1115, %v1113
        %v1136 = vpack.c.bf16 %v1118, %v1116
        %v1137 = vpack.c.bf16 %v1119, %v1117
        %v1138 = vpack.c.bf16 %v1120, %v1120
        %v1139 = vpack.c.bf16 %v1121, %v1121
        %v1140 = vld [vmem:[%s5] sm:$0xff]
        %v1141 = vld [vmem:[%s5 + $0x8] sm:$0xff]
        %v1142 = vld [vmem:[%s5 + $0x10] sm:$0xff]
        %v1143 = vld [vmem:[%s5 + $0x18] sm:$0xff]
        %v1144 = vld [vmem:[%s5 + $0x20] sm:$0xff]
        %v1145 = vld [vmem:[%s5 + $0x28] sm:$0xff]
        %v1146 = vld [vmem:[%s5 + $0x30] sm:$0xff]
        %v1147 = vld [vmem:[%s5 + $0x38] sm:$0xff]
        %v1148 = vld [vmem:[%s5 + $0x40] sm:$0xff]
        %v1149 = vld [vmem:[%s5 + $0x48] sm:$0xff]
        %v1150 = vld [vmem:[%s5 + $0x50] sm:$0xff]
        %v1151 = vld [vmem:[%s5 + $0x58] sm:$0xff]
        %v1152 = vld [vmem:[%s5 + $0x60] sm:$0xff]
        %v1153 = vld [vmem:[%s5 + $0x68] sm:$0xff]
        %v1154 = vld [vmem:[%s5 + $0x70] sm:$0xff]
        %v1155 = vld [vmem:[%s5 + $0x78] sm:$0xff]
        %v1156 = vld [vmem:[%s5 + $0x80] sm:$0xff]
        %v1157 = vld [vmem:[%s5 + $0x88] sm:$0xff]
        %v1158 = vld [vmem:[%s5 + $0x90] sm:$0xff]
        %v1159 = vld [vmem:[%s5 + $0x98] sm:$0xff]
        %v1160 = vld [vmem:[%s5 + $0xa0] sm:$0xff]
        %v1161 = vld [vmem:[%s5 + $0xa8] sm:$0xff]
        %v1162 = vld [vmem:[%s5 + $0xb0] sm:$0xff]
        %v1163 = vld [vmem:[%s5 + $0xb8] sm:$0xff]
        %v1164 = vld [vmem:[%s5 + $0xc0] sm:$0xff]
        %v1165 = vld [vmem:[%s5 + $0xc8] sm:$0xff]
        %v1166 = vld [vmem:[%s5 + $0xd0] sm:$0xff]
        %v1167 = vld [vmem:[%s5 + $0xd8] sm:$0xff]
        %v1168 = vld [vmem:[%s5 + $0xe0] sm:$0xff]
        %v1169 = vld [vmem:[%s5 + $0xe8] sm:$0xff]
        %v1170 = vld [vmem:[%s5 + $0xf0] sm:$0xff]
        %v1171 = vld [vmem:[%s5 + $0xf8] sm:$0xff]
        %v1172 = vld [vmem:[%s5 + $0x100] sm:$0xff]
        %v1173 = vld [vmem:[%s5 + $0x108] sm:$0xff]
        %v1174 = vld [vmem:[%s5 + $0x110] sm:$0xff]
        %v1175 = vld [vmem:[%s5 + $0x118] sm:$0xff]
        %v1176 = vld [vmem:[%s5 + $0x120] sm:$0xff]
        %v1177 = vld [vmem:[%s5 + $0x128] sm:$0xff]
        %v1178 = vld [vmem:[%s5 + $0x130] sm:$0xff]
        %v1179 = vld [vmem:[%s5 + $0x138] sm:$0xff]
        %v1180 = vld [vmem:[%s5 + $0x140] sm:$0xff]
        %v1181 = vld [vmem:[%s5 + $0x148] sm:$0xff]
        %v1182 = vld [vmem:[%s5 + $0x150] sm:$0xff]
        %v1183 = vld [vmem:[%s5 + $0x158] sm:$0xff]
        %v1184 = vld [vmem:[%s5 + $0x160] sm:$0xff]
        %v1185 = vld [vmem:[%s5 + $0x168] sm:$0xff]
        %v1186 = vld [vmem:[%s5 + $0x170] sm:$0xff]
        %v1187 = vld [vmem:[%s5 + $0x178] sm:$0xff]
        %v1188 = vld [vmem:[%s5 + $0x180] sm:$0xff]
        %v1189 = vld [vmem:[%s5 + $0x188] sm:$0xff]
        %v1190 = vld [vmem:[%s5 + $0x190] sm:$0xff]
        %v1191 = vld [vmem:[%s5 + $0x198] sm:$0xff]
        %v1192 = vld [vmem:[%s5 + $0x1a0] sm:$0xff]
        %v1193 = vld [vmem:[%s5 + $0x1a8] sm:$0xff]
        %v1194 = vld [vmem:[%s5 + $0x1b0] sm:$0xff]
        %v1195 = vld [vmem:[%s5 + $0x1b8] sm:$0xff]
        %v1196 = vld [vmem:[%s5 + $0x1c0] sm:$0xff]
        %v1197 = vld [vmem:[%s5 + $0x1c8] sm:$0xff]
        %v1198 = vld [vmem:[%s5 + $0x1d0] sm:$0xff]
        %v1199 = vld [vmem:[%s5 + $0x1d8] sm:$0xff]
        %v1200 = vld [vmem:[%s5 + $0x1e0] sm:$0xff]
        %v1201 = vld [vmem:[%s5 + $0x1e8] sm:$0xff]
        %v1202 = vld [vmem:[%s5 + $0x1f0] sm:$0xff]
        %v1203 = vld [vmem:[%s5 + $0x1f8] sm:$0xff]
        %v1204 = vld [vmem:[%s5 + $0x200] sm:$0xff]
        %v1205 = vld [vmem:[%s5 + $0x208] sm:$0xff]
        %v1206 = vld [vmem:[%s5 + $0x210] sm:$0xff]
        %v1207 = vld [vmem:[%s5 + $0x218] sm:$0xff]
        %v1208 = vld [vmem:[%s5 + $0x220] sm:$0xff]
        %v1209 = vld [vmem:[%s5 + $0x228] sm:$0xff]
        %v1210 = vld [vmem:[%s5 + $0x230] sm:$0xff]
        %v1211 = vld [vmem:[%s5 + $0x238] sm:$0xff]
        %v1212 = vld [vmem:[%s5 + $0x240] sm:$0xff]
        %v1213 = vld [vmem:[%s5 + $0x248] sm:$0xff]
        %v1214 = vld [vmem:[%s5 + $0x250] sm:$0xff]
        %v1215 = vld [vmem:[%s5 + $0x258] sm:$0xff]
        %v1216 = vld [vmem:[%s5 + $0x260] sm:$0xff]
        %v1217 = vld [vmem:[%s5 + $0x268] sm:$0xff]
        %v1218 = vld [vmem:[%s5 + $0x270] sm:$0xff]
        %v1219 = vld [vmem:[%s5 + $0x278] sm:$0xff]
        %v1220 = vld [vmem:[%s5 + $0x280] sm:$0xff]
        %v1221 = vld [vmem:[%s5 + $0x288] sm:$0xff]
        %v1222 = vld [vmem:[%s5 + $0x290] sm:$0xff]
        %v1223 = vld [vmem:[%s5 + $0x298] sm:$0xff]
        %v1224 = vld [vmem:[%s5 + $0x2a0] sm:$0xff]
        %v1225 = vld [vmem:[%s5 + $0x2a8] sm:$0xff]
        %v1226 = vld [vmem:[%s5 + $0x2b0] sm:$0xff]
        %v1227 = vld [vmem:[%s5 + $0x2b8] sm:$0xff]
        %v1228 = vld [vmem:[%s5 + $0x2c0] sm:$0xff]
        %v1229 = vld [vmem:[%s5 + $0x2c8] sm:$0xff]
        %v1230 = vld [vmem:[%s5 + $0x2d0] sm:$0xff]
        %v1231 = vld [vmem:[%s5 + $0x2d8] sm:$0xff]
        %v1232 = vld [vmem:[%s5 + $0x2e0] sm:$0xff]
        %v1233 = vld [vmem:[%s5 + $0x2e8] sm:$0xff]
        %v1234 = vld [vmem:[%s5 + $0x2f0] sm:$0xff]
        %v1235 = vld [vmem:[%s5 + $0x2f8] sm:$0xff]
        %v1236 = vld [vmem:[%s5 + $0x300] sm:$0xff]
        %v1237 = vld [vmem:[%s5 + $0x308] sm:$0xff]
        %v1238 = vld [vmem:[%s5 + $0x310] sm:$0xff]
        %v1239 = vld [vmem:[%s5 + $0x318] sm:$0xff]
        %v1240 = vld [vmem:[%s5 + $0x320] sm:$0xff]
        %v1241 = vld [vmem:[%s5 + $0x328] sm:$0xff]
        %v1242 = vld [vmem:[%s5 + $0x330] sm:$0xff]
        %v1243 = vld [vmem:[%s5 + $0x338] sm:$0xff]
        %v1244 = vld [vmem:[%s5 + $0x340] sm:$0xff]
        %v1245 = vld [vmem:[%s5 + $0x348] sm:$0xff]
        %v1246 = vld [vmem:[%s5 + $0x350] sm:$0xff]
        %v1247 = vld [vmem:[%s5 + $0x358] sm:$0xff]
        %v1248 = vld [vmem:[%s5 + $0x360] sm:$0xff]
        %v1249 = vld [vmem:[%s5 + $0x368] sm:$0xff]
        %v1250 = vld [vmem:[%s5 + $0x370] sm:$0xff]
        %v1251 = vld [vmem:[%s5 + $0x378] sm:$0xff]
        %v1252 = vld [vmem:[%s5 + $0x380] sm:$0xff]
        %v1253 = vld [vmem:[%s5 + $0x388] sm:$0xff]
        %v1254 = vld [vmem:[%s5 + $0x390] sm:$0xff]
        %v1255 = vld [vmem:[%s5 + $0x398] sm:$0xff]
        %v1256 = vld [vmem:[%s5 + $0x3a0] sm:$0xff]
        %v1257 = vld [vmem:[%s5 + $0x3a8] sm:$0xff]
        %v1258 = vld [vmem:[%s5 + $0x3b0] sm:$0xff]
        %v1259 = vld [vmem:[%s5 + $0x3b8] sm:$0xff]
        %v1260 = vld [vmem:[%s5 + $0x3c0] sm:$0xff]
        %v1261 = vld [vmem:[%s5 + $0x3c8] sm:$0xff]
        %v1262 = vld [vmem:[%s5 + $0x3d0] sm:$0xff]
        %v1263 = vld [vmem:[%s5 + $0x3d8] sm:$0xff]
        %v1264 = vld [vmem:[%s5 + $0x3e0] sm:$0xff]
        %v1265 = vld [vmem:[%s5 + $0x3e8] sm:$0xff]
        %v1266 = vld [vmem:[%s5 + $0x3f0] sm:$0xff]
        %v1267 = vld [vmem:[%s5 + $0x3f8] sm:$0xff]
        %v1396 = vunpack.c.l.b16 %v1140
        %v1397 = vunpack.c.h.b16 %v1140
        %v1398 = vunpack.c.l.b16 %v1141
        %v1399 = vunpack.c.h.b16 %v1141
        %v1400 = vunpack.c.l.b16 %v1142
        %v1401 = vunpack.c.h.b16 %v1142
        %v1402 = vunpack.c.l.b16 %v1143
        %v1403 = vunpack.c.h.b16 %v1143
        %v1404 = vunpack.c.l.b16 %v1144
        %v1405 = vunpack.c.h.b16 %v1144
        %v1406 = vunpack.c.l.b16 %v1145
        %v1407 = vunpack.c.h.b16 %v1145
        %v1408 = vunpack.c.l.b16 %v1146
        %v1409 = vunpack.c.h.b16 %v1146
        %v1410 = vunpack.c.l.b16 %v1147
        %v1411 = vunpack.c.h.b16 %v1147
        %v1412 = vunpack.c.l.b16 %v1148
        %v1413 = vunpack.c.h.b16 %v1148
        %v1414 = vunpack.c.l.b16 %v1149
        %v1415 = vunpack.c.h.b16 %v1149
        %v1416 = vunpack.c.l.b16 %v1150
        %v1417 = vunpack.c.h.b16 %v1150
        %v1418 = vunpack.c.l.b16 %v1151
        %v1419 = vunpack.c.h.b16 %v1151
        %v1420 = vunpack.c.l.b16 %v1152
        %v1421 = vunpack.c.h.b16 %v1152
        %v1422 = vunpack.c.l.b16 %v1153
        %v1423 = vunpack.c.h.b16 %v1153
        %v1424 = vunpack.c.l.b16 %v1154
        %v1425 = vunpack.c.h.b16 %v1154
        %v1426 = vunpack.c.l.b16 %v1155
        %v1427 = vunpack.c.h.b16 %v1155
        %v1428 = vunpack.c.l.b16 %v1156
        %v1429 = vunpack.c.h.b16 %v1156
        %v1430 = vunpack.c.l.b16 %v1157
        %v1431 = vunpack.c.h.b16 %v1157
        %v1432 = vunpack.c.l.b16 %v1158
        %v1433 = vunpack.c.h.b16 %v1158
        %v1434 = vunpack.c.l.b16 %v1159
        %v1435 = vunpack.c.h.b16 %v1159
        %v1436 = vunpack.c.l.b16 %v1160
        %v1437 = vunpack.c.h.b16 %v1160
        %v1438 = vunpack.c.l.b16 %v1161
        %v1439 = vunpack.c.h.b16 %v1161
        %v1440 = vunpack.c.l.b16 %v1162
        %v1441 = vunpack.c.h.b16 %v1162
        %v1442 = vunpack.c.l.b16 %v1163
        %v1443 = vunpack.c.h.b16 %v1163
        %v1444 = vunpack.c.l.b16 %v1164
        %v1445 = vunpack.c.h.b16 %v1164
        %v1446 = vunpack.c.l.b16 %v1165
        %v1447 = vunpack.c.h.b16 %v1165
        %v1448 = vunpack.c.l.b16 %v1166
        %v1449 = vunpack.c.h.b16 %v1166
        %v1450 = vunpack.c.l.b16 %v1167
        %v1451 = vunpack.c.h.b16 %v1167
        %v1452 = vunpack.c.l.b16 %v1168
        %v1453 = vunpack.c.h.b16 %v1168
        %v1454 = vunpack.c.l.b16 %v1169
        %v1455 = vunpack.c.h.b16 %v1169
        %v1456 = vunpack.c.l.b16 %v1170
        %v1457 = vunpack.c.h.b16 %v1170
        %v1458 = vunpack.c.l.b16 %v1171
        %v1459 = vunpack.c.h.b16 %v1171
        %v1460 = vunpack.c.l.b16 %v1172
        %v1461 = vunpack.c.h.b16 %v1172
        %v1462 = vunpack.c.l.b16 %v1173
        %v1463 = vunpack.c.h.b16 %v1173
        %v1464 = vunpack.c.l.b16 %v1174
        %v1465 = vunpack.c.h.b16 %v1174
        %v1466 = vunpack.c.l.b16 %v1175
        %v1467 = vunpack.c.h.b16 %v1175
        %v1468 = vunpack.c.l.b16 %v1176
        %v1469 = vunpack.c.h.b16 %v1176
        %v1470 = vunpack.c.l.b16 %v1177
        %v1471 = vunpack.c.h.b16 %v1177
        %v1472 = vunpack.c.l.b16 %v1178
        %v1473 = vunpack.c.h.b16 %v1178
        %v1474 = vunpack.c.l.b16 %v1179
        %v1475 = vunpack.c.h.b16 %v1179
        %v1476 = vunpack.c.l.b16 %v1180
        %v1477 = vunpack.c.h.b16 %v1180
        %v1478 = vunpack.c.l.b16 %v1181
        %v1479 = vunpack.c.h.b16 %v1181
        %v1480 = vunpack.c.l.b16 %v1182
        %v1481 = vunpack.c.h.b16 %v1182
        %v1482 = vunpack.c.l.b16 %v1183
        %v1483 = vunpack.c.h.b16 %v1183
        %v1484 = vunpack.c.l.b16 %v1184
        %v1485 = vunpack.c.h.b16 %v1184
        %v1486 = vunpack.c.l.b16 %v1185
        %v1487 = vunpack.c.h.b16 %v1185
        %v1488 = vunpack.c.l.b16 %v1186
        %v1489 = vunpack.c.h.b16 %v1186
        %v1490 = vunpack.c.l.b16 %v1187
        %v1491 = vunpack.c.h.b16 %v1187
        %v1492 = vunpack.c.l.b16 %v1188
        %v1493 = vunpack.c.h.b16 %v1188
        %v1494 = vunpack.c.l.b16 %v1189
        %v1495 = vunpack.c.h.b16 %v1189
        %v1496 = vunpack.c.l.b16 %v1190
        %v1497 = vunpack.c.h.b16 %v1190
        %v1498 = vunpack.c.l.b16 %v1191
        %v1499 = vunpack.c.h.b16 %v1191
        %v1500 = vunpack.c.l.b16 %v1192
        %v1501 = vunpack.c.h.b16 %v1192
        %v1502 = vunpack.c.l.b16 %v1193
        %v1503 = vunpack.c.h.b16 %v1193
        %v1504 = vunpack.c.l.b16 %v1194
        %v1505 = vunpack.c.h.b16 %v1194
        %v1506 = vunpack.c.l.b16 %v1195
        %v1507 = vunpack.c.h.b16 %v1195
        %v1508 = vunpack.c.l.b16 %v1196
        %v1509 = vunpack.c.h.b16 %v1196
        %v1510 = vunpack.c.l.b16 %v1197
        %v1511 = vunpack.c.h.b16 %v1197
        %v1512 = vunpack.c.l.b16 %v1198
        %v1513 = vunpack.c.h.b16 %v1198
        %v1514 = vunpack.c.l.b16 %v1199
        %v1515 = vunpack.c.h.b16 %v1199
        %v1516 = vunpack.c.l.b16 %v1200
        %v1517 = vunpack.c.h.b16 %v1200
        %v1518 = vunpack.c.l.b16 %v1201
        %v1519 = vunpack.c.h.b16 %v1201
        %v1520 = vunpack.c.l.b16 %v1202
        %v1521 = vunpack.c.h.b16 %v1202
        %v1522 = vunpack.c.l.b16 %v1203
        %v1523 = vunpack.c.h.b16 %v1203
        %v1524 = vunpack.c.l.b16 %v1204
        %v1525 = vunpack.c.h.b16 %v1204
        %v1526 = vunpack.c.l.b16 %v1205
        %v1527 = vunpack.c.h.b16 %v1205
        %v1528 = vunpack.c.l.b16 %v1206
        %v1529 = vunpack.c.h.b16 %v1206
        %v1530 = vunpack.c.l.b16 %v1207
        %v1531 = vunpack.c.h.b16 %v1207
        %v1532 = vunpack.c.l.b16 %v1208
        %v1533 = vunpack.c.h.b16 %v1208
        %v1534 = vunpack.c.l.b16 %v1209
        %v1535 = vunpack.c.h.b16 %v1209
        %v1536 = vunpack.c.l.b16 %v1210
        %v1537 = vunpack.c.h.b16 %v1210
        %v1538 = vunpack.c.l.b16 %v1211
        %v1539 = vunpack.c.h.b16 %v1211
        %v1540 = vunpack.c.l.b16 %v1212
        %v1541 = vunpack.c.h.b16 %v1212
        %v1542 = vunpack.c.l.b16 %v1213
        %v1543 = vunpack.c.h.b16 %v1213
        %v1544 = vunpack.c.l.b16 %v1214
        %v1545 = vunpack.c.h.b16 %v1214
        %v1546 = vunpack.c.l.b16 %v1215
        %v1547 = vunpack.c.h.b16 %v1215
        %v1548 = vunpack.c.l.b16 %v1216
        %v1549 = vunpack.c.h.b16 %v1216
        %v1550 = vunpack.c.l.b16 %v1217
        %v1551 = vunpack.c.h.b16 %v1217
        %v1552 = vunpack.c.l.b16 %v1218
        %v1553 = vunpack.c.h.b16 %v1218
        %v1554 = vunpack.c.l.b16 %v1219
        %v1555 = vunpack.c.h.b16 %v1219
        %v1556 = vunpack.c.l.b16 %v1220
        %v1557 = vunpack.c.h.b16 %v1220
        %v1558 = vunpack.c.l.b16 %v1221
        %v1559 = vunpack.c.h.b16 %v1221
        %v1560 = vunpack.c.l.b16 %v1222
        %v1561 = vunpack.c.h.b16 %v1222
        %v1562 = vunpack.c.l.b16 %v1223
        %v1563 = vunpack.c.h.b16 %v1223
        %v1564 = vunpack.c.l.b16 %v1224
        %v1565 = vunpack.c.h.b16 %v1224
        %v1566 = vunpack.c.l.b16 %v1225
        %v1567 = vunpack.c.h.b16 %v1225
        %v1568 = vunpack.c.l.b16 %v1226
        %v1569 = vunpack.c.h.b16 %v1226
        %v1570 = vunpack.c.l.b16 %v1227
        %v1571 = vunpack.c.h.b16 %v1227
        %v1572 = vunpack.c.l.b16 %v1228
        %v1573 = vunpack.c.h.b16 %v1228
        %v1574 = vunpack.c.l.b16 %v1229
        %v1575 = vunpack.c.h.b16 %v1229
        %v1576 = vunpack.c.l.b16 %v1230
        %v1577 = vunpack.c.h.b16 %v1230
        %v1578 = vunpack.c.l.b16 %v1231
        %v1579 = vunpack.c.h.b16 %v1231
        %v1580 = vunpack.c.l.b16 %v1232
        %v1581 = vunpack.c.h.b16 %v1232
        %v1582 = vunpack.c.l.b16 %v1233
        %v1583 = vunpack.c.h.b16 %v1233
        %v1584 = vunpack.c.l.b16 %v1234
        %v1585 = vunpack.c.h.b16 %v1234
        %v1586 = vunpack.c.l.b16 %v1235
        %v1587 = vunpack.c.h.b16 %v1235
        %v1588 = vunpack.c.l.b16 %v1236
        %v1589 = vunpack.c.h.b16 %v1236
        %v1590 = vunpack.c.l.b16 %v1237
        %v1591 = vunpack.c.h.b16 %v1237
        %v1592 = vunpack.c.l.b16 %v1238
        %v1593 = vunpack.c.h.b16 %v1238
        %v1594 = vunpack.c.l.b16 %v1239
        %v1595 = vunpack.c.h.b16 %v1239
        %v1596 = vunpack.c.l.b16 %v1240
        %v1597 = vunpack.c.h.b16 %v1240
        %v1598 = vunpack.c.l.b16 %v1241
        %v1599 = vunpack.c.h.b16 %v1241
        %v1600 = vunpack.c.l.b16 %v1242
        %v1601 = vunpack.c.h.b16 %v1242
        %v1602 = vunpack.c.l.b16 %v1243
        %v1603 = vunpack.c.h.b16 %v1243
        %v1604 = vunpack.c.l.b16 %v1244
        %v1605 = vunpack.c.h.b16 %v1244
        %v1606 = vunpack.c.l.b16 %v1245
        %v1607 = vunpack.c.h.b16 %v1245
        %v1608 = vunpack.c.l.b16 %v1246
        %v1609 = vunpack.c.h.b16 %v1246
        %v1610 = vunpack.c.l.b16 %v1247
        %v1611 = vunpack.c.h.b16 %v1247
        %v1612 = vunpack.c.l.b16 %v1248
        %v1613 = vunpack.c.h.b16 %v1248
        %v1614 = vunpack.c.l.b16 %v1249
        %v1615 = vunpack.c.h.b16 %v1249
        %v1616 = vunpack.c.l.b16 %v1250
        %v1617 = vunpack.c.h.b16 %v1250
        %v1618 = vunpack.c.l.b16 %v1251
        %v1619 = vunpack.c.h.b16 %v1251
        %v1620 = vunpack.c.l.b16 %v1252
        %v1621 = vunpack.c.h.b16 %v1252
        %v1622 = vunpack.c.l.b16 %v1253
        %v1623 = vunpack.c.h.b16 %v1253
        %v1624 = vunpack.c.l.b16 %v1254
        %v1625 = vunpack.c.h.b16 %v1254
        %v1626 = vunpack.c.l.b16 %v1255
        %v1627 = vunpack.c.h.b16 %v1255
        %v1628 = vunpack.c.l.b16 %v1256
        %v1629 = vunpack.c.h.b16 %v1256
        %v1630 = vunpack.c.l.b16 %v1257
        %v1631 = vunpack.c.h.b16 %v1257
        %v1632 = vunpack.c.l.b16 %v1258
        %v1633 = vunpack.c.h.b16 %v1258
        %v1634 = vunpack.c.l.b16 %v1259
        %v1635 = vunpack.c.h.b16 %v1259
        %v1636 = vunpack.c.l.b16 %v1260
        %v1637 = vunpack.c.h.b16 %v1260
        %v1638 = vunpack.c.l.b16 %v1261
        %v1639 = vunpack.c.h.b16 %v1261
        %v1640 = vunpack.c.l.b16 %v1262
        %v1641 = vunpack.c.h.b16 %v1262
        %v1642 = vunpack.c.l.b16 %v1263
        %v1643 = vunpack.c.h.b16 %v1263
        %v1644 = vunpack.c.l.b16 %v1264
        %v1645 = vunpack.c.h.b16 %v1264
        %v1646 = vunpack.c.l.b16 %v1265
        %v1647 = vunpack.c.h.b16 %v1265
        %v1648 = vunpack.c.l.b16 %v1266
        %v1649 = vunpack.c.h.b16 %v1266
        %v1650 = vunpack.c.l.b16 %v1267
        %v1651 = vunpack.c.h.b16 %v1267
        %v1652 = vpack.c.b16 %v1398, %v1396
        %v1653 = vpack.c.b16 %v1399, %v1397
        %v1654 = vpack.c.b16 %v1402, %v1400
        %v1655 = vpack.c.b16 %v1403, %v1401
        %v1656 = vpack.c.b16 %v1406, %v1404
        %v1657 = vpack.c.b16 %v1407, %v1405
        %v1658 = vpack.c.b16 %v1410, %v1408
        %v1659 = vpack.c.b16 %v1411, %v1409
        %v1660 = vpack.c.b16 %v1414, %v1412
        %v1661 = vpack.c.b16 %v1415, %v1413
        %v1662 = vpack.c.b16 %v1418, %v1416
        %v1663 = vpack.c.b16 %v1419, %v1417
        %v1664 = vpack.c.b16 %v1422, %v1420
        %v1665 = vpack.c.b16 %v1423, %v1421
        %v1666 = vpack.c.b16 %v1426, %v1424
        %v1667 = vpack.c.b16 %v1427, %v1425
        %v1668 = vpack.c.b16 %v1430, %v1428
        %v1669 = vpack.c.b16 %v1431, %v1429
        %v1670 = vpack.c.b16 %v1434, %v1432
        %v1671 = vpack.c.b16 %v1435, %v1433
        %v1672 = vpack.c.b16 %v1438, %v1436
        %v1673 = vpack.c.b16 %v1439, %v1437
        %v1674 = vpack.c.b16 %v1442, %v1440
        %v1675 = vpack.c.b16 %v1443, %v1441
        %v1676 = vpack.c.b16 %v1446, %v1444
        %v1677 = vpack.c.b16 %v1447, %v1445
        %v1678 = vpack.c.b16 %v1450, %v1448
        %v1679 = vpack.c.b16 %v1451, %v1449
        %v1680 = vpack.c.b16 %v1454, %v1452
        %v1681 = vpack.c.b16 %v1455, %v1453
        %v1682 = vpack.c.b16 %v1458, %v1456
        %v1683 = vpack.c.b16 %v1459, %v1457
        %v1684 = vpack.c.b16 %v1462, %v1460
        %v1685 = vpack.c.b16 %v1463, %v1461
        %v1686 = vpack.c.b16 %v1466, %v1464
        %v1687 = vpack.c.b16 %v1467, %v1465
        %v1688 = vpack.c.b16 %v1470, %v1468
        %v1689 = vpack.c.b16 %v1471, %v1469
        %v1690 = vpack.c.b16 %v1474, %v1472
        %v1691 = vpack.c.b16 %v1475, %v1473
        %v1692 = vpack.c.b16 %v1478, %v1476
        %v1693 = vpack.c.b16 %v1479, %v1477
        %v1694 = vpack.c.b16 %v1482, %v1480
        %v1695 = vpack.c.b16 %v1483, %v1481
        %v1696 = vpack.c.b16 %v1486, %v1484
        %v1697 = vpack.c.b16 %v1487, %v1485
        %v1698 = vpack.c.b16 %v1490, %v1488
        %v1699 = vpack.c.b16 %v1491, %v1489
        %v1700 = vpack.c.b16 %v1494, %v1492
        %v1701 = vpack.c.b16 %v1495, %v1493
        %v1702 = vpack.c.b16 %v1498, %v1496
        %v1703 = vpack.c.b16 %v1499, %v1497
        %v1704 = vpack.c.b16 %v1502, %v1500
        %v1705 = vpack.c.b16 %v1503, %v1501
        %v1706 = vpack.c.b16 %v1506, %v1504
        %v1707 = vpack.c.b16 %v1507, %v1505
        %v1708 = vpack.c.b16 %v1510, %v1508
        %v1709 = vpack.c.b16 %v1511, %v1509
        %v1710 = vpack.c.b16 %v1514, %v1512
        %v1711 = vpack.c.b16 %v1515, %v1513
        %v1712 = vpack.c.b16 %v1518, %v1516
        %v1713 = vpack.c.b16 %v1519, %v1517
        %v1714 = vpack.c.b16 %v1522, %v1520
        %v1715 = vpack.c.b16 %v1523, %v1521
        %v1716 = vpack.c.b16 %v1526, %v1524
        %v1717 = vpack.c.b16 %v1527, %v1525
        %v1718 = vpack.c.b16 %v1530, %v1528
        %v1719 = vpack.c.b16 %v1531, %v1529
        %v1720 = vpack.c.b16 %v1534, %v1532
        %v1721 = vpack.c.b16 %v1535, %v1533
        %v1722 = vpack.c.b16 %v1538, %v1536
        %v1723 = vpack.c.b16 %v1539, %v1537
        %v1724 = vpack.c.b16 %v1542, %v1540
        %v1725 = vpack.c.b16 %v1543, %v1541
        %v1726 = vpack.c.b16 %v1546, %v1544
        %v1727 = vpack.c.b16 %v1547, %v1545
        %v1728 = vpack.c.b16 %v1550, %v1548
        %v1729 = vpack.c.b16 %v1551, %v1549
        %v1730 = vpack.c.b16 %v1554, %v1552
        %v1731 = vpack.c.b16 %v1555, %v1553
        %v1732 = vpack.c.b16 %v1558, %v1556
        %v1733 = vpack.c.b16 %v1559, %v1557
        %v1734 = vpack.c.b16 %v1562, %v1560
        %v1735 = vpack.c.b16 %v1563, %v1561
        %v1736 = vpack.c.b16 %v1566, %v1564
        %v1737 = vpack.c.b16 %v1567, %v1565
        %v1738 = vpack.c.b16 %v1570, %v1568
        %v1739 = vpack.c.b16 %v1571, %v1569
        %v1740 = vpack.c.b16 %v1574, %v1572
        %v1741 = vpack.c.b16 %v1575, %v1573
        %v1742 = vpack.c.b16 %v1578, %v1576
        %v1743 = vpack.c.b16 %v1579, %v1577
        %v1744 = vpack.c.b16 %v1582, %v1580
        %v1745 = vpack.c.b16 %v1583, %v1581
        %v1746 = vpack.c.b16 %v1586, %v1584
        %v1747 = vpack.c.b16 %v1587, %v1585
        %v1748 = vpack.c.b16 %v1590, %v1588
        %v1749 = vpack.c.b16 %v1591, %v1589
        %v1750 = vpack.c.b16 %v1594, %v1592
        %v1751 = vpack.c.b16 %v1595, %v1593
        %v1752 = vpack.c.b16 %v1598, %v1596
        %v1753 = vpack.c.b16 %v1599, %v1597
        %v1754 = vpack.c.b16 %v1602, %v1600
        %v1755 = vpack.c.b16 %v1603, %v1601
        %v1756 = vpack.c.b16 %v1606, %v1604
        %v1757 = vpack.c.b16 %v1607, %v1605
        %v1758 = vpack.c.b16 %v1610, %v1608
        %v1759 = vpack.c.b16 %v1611, %v1609
        %v1760 = vpack.c.b16 %v1614, %v1612
        %v1761 = vpack.c.b16 %v1615, %v1613
        %v1762 = vpack.c.b16 %v1618, %v1616
        %v1763 = vpack.c.b16 %v1619, %v1617
        %v1764 = vpack.c.b16 %v1622, %v1620
        %v1765 = vpack.c.b16 %v1623, %v1621
        %v1766 = vpack.c.b16 %v1626, %v1624
        %v1767 = vpack.c.b16 %v1627, %v1625
        %v1768 = vpack.c.b16 %v1630, %v1628
        %v1769 = vpack.c.b16 %v1631, %v1629
        %v1770 = vpack.c.b16 %v1634, %v1632
        %v1771 = vpack.c.b16 %v1635, %v1633
        %v1772 = vpack.c.b16 %v1638, %v1636
        %v1773 = vpack.c.b16 %v1639, %v1637
        %v1774 = vpack.c.b16 %v1642, %v1640
        %v1775 = vpack.c.b16 %v1643, %v1641
        %v1776 = vpack.c.b16 %v1646, %v1644
        %v1777 = vpack.c.b16 %v1647, %v1645
        %v1778 = vpack.c.b16 %v1650, %v1648
        %v1779 = vpack.c.b16 %v1651, %v1649
        %vm1844 = vcmask 7168
        %v1846 = vsel %vm1844, %v1653, 0
        %v1849 = vsel %vm1844, %v1655, 0
        %v1852 = vsel %vm1844, %v1657, 0
        %v1855 = vsel %vm1844, %v1659, 0
        %v1858 = vsel %vm1844, %v1661, 0
        %v1861 = vsel %vm1844, %v1663, 0
        %v1864 = vsel %vm1844, %v1665, 0
        %v1867 = vsel %vm1844, %v1667, 0
        %v1870 = vsel %vm1844, %v1669, 0
        %v1873 = vsel %vm1844, %v1671, 0
        %v1876 = vsel %vm1844, %v1673, 0
        %v1879 = vsel %vm1844, %v1675, 0
        %v1882 = vsel %vm1844, %v1677, 0
        %v1885 = vsel %vm1844, %v1679, 0
        %v1888 = vsel %vm1844, %v1681, 0
        %v1891 = vsel %vm1844, %v1683, 0
        %v1894 = vsel %vm1844, %v1685, 0
        %v1897 = vsel %vm1844, %v1687, 0
        %v1900 = vsel %vm1844, %v1689, 0
        %v1903 = vsel %vm1844, %v1691, 0
        %v1906 = vsel %vm1844, %v1693, 0
        %v1909 = vsel %vm1844, %v1695, 0
        %v1912 = vsel %vm1844, %v1697, 0
        %v1915 = vsel %vm1844, %v1699, 0
        %v1918 = vsel %vm1844, %v1701, 0
        %v1921 = vsel %vm1844, %v1703, 0
        %v1924 = vsel %vm1844, %v1705, 0
        %v1927 = vsel %vm1844, %v1707, 0
        %v1930 = vsel %vm1844, %v1709, 0
        %v1933 = vsel %vm1844, %v1711, 0
        %v1936 = vsel %vm1844, %v1713, 0
        %v1939 = vsel %vm1844, %v1715, 0
        %v1942 = vsel %vm1844, %v1717, 0
        %v1945 = vsel %vm1844, %v1719, 0
        %v1948 = vsel %vm1844, %v1721, 0
        %v1951 = vsel %vm1844, %v1723, 0
        %v1954 = vsel %vm1844, %v1725, 0
        %v1957 = vsel %vm1844, %v1727, 0
        %v1960 = vsel %vm1844, %v1729, 0
        %v1963 = vsel %vm1844, %v1731, 0
        %v1966 = vsel %vm1844, %v1733, 0
        %v1969 = vsel %vm1844, %v1735, 0
        %v1972 = vsel %vm1844, %v1737, 0
        %v1975 = vsel %vm1844, %v1739, 0
        %v1978 = vsel %vm1844, %v1741, 0
        %v1981 = vsel %vm1844, %v1743, 0
        %v1984 = vsel %vm1844, %v1745, 0
        %v1987 = vsel %vm1844, %v1747, 0
        %v1990 = vsel %vm1844, %v1749, 0
        %v1993 = vsel %vm1844, %v1751, 0
        %v1996 = vsel %vm1844, %v1753, 0
        %v1999 = vsel %vm1844, %v1755, 0
        %v2002 = vsel %vm1844, %v1757, 0
        %v2005 = vsel %vm1844, %v1759, 0
        %v2008 = vsel %vm1844, %v1761, 0
        %v2011 = vsel %vm1844, %v1763, 0
        %v2014 = vsel %vm1844, %v1765, 0
        %v2017 = vsel %vm1844, %v1767, 0
        %v2020 = vsel %vm1844, %v1769, 0
        %v2023 = vsel %vm1844, %v1771, 0
        %v2026 = vsel %vm1844, %v1773, 0
        %v2029 = vsel %vm1844, %v1775, 0
        %v2032 = vsel %vm1844, %v1777, 0
        %v2035 = vsel %vm1844, %v1779, 0
        %v2038 = vand.u32 %v1138, %v526
        %v2041 = vand.u32 %v1139, %v526
        %2043 = vmatprep.subr.bf16.mxu0 %v1123
        %2044 = vmatpush1.bf16.msra.mxu0 %v1122
        %2045 = vmatprep.subr.bf16.mxu0 %v1125
        %2046 = vmatpush1.bf16.msra.mxu0 %v1124
        %2047 = vmatprep.subr.bf16.mxu0 %v1127
        %2048 = vmatpush1.bf16.msra.mxu0 %v1126
        %2049 = vmatprep.subr.bf16.mxu0 %v1129
        %2050 = vmatpush1.bf16.msra.mxu0 %v1128
        %2051 = vmatprep.subr.bf16.mxu0 %v1131
        %2052 = vmatpush1.bf16.msra.mxu0 %v1130
        %2053 = vmatprep.subr.bf16.mxu0 %v1133
        %2054 = vmatpush1.bf16.msra.mxu0 %v1132
        %2055 = vmatprep.subr.bf16.mxu0 %v1135
        %2056 = vmatpush1.bf16.msra.mxu0 %v1134
        %2057 = vmatprep.subr.bf16.mxu0 %v1137
        %2058 = vmatpush1.bf16.msra.mxu0 %v1136
        %2059 = vmatprep.subr.bf16.mxu0 %v2041
        %2060 = vmatpush1.bf16.msra.mxu0 %v2038
        %2061 = vmatprep.subr.bf16.mxu0 0
        %2062 = vmatpush1.bf16.msra.mxu0 0
        %2063 = vmatprep.subr.bf16.mxu0 0
        %2064 = vmatpush1.bf16.msra.mxu0 0
        %2065 = vmatprep.subr.bf16.mxu0 0
        %2066 = vmatpush1.bf16.msra.mxu0 0
        %2067 = vmatprep.subr.bf16.mxu0 0
        %2068 = vmatpush1.bf16.msra.mxu0 0
        %2069 = vmatprep.subr.bf16.mxu0 0
        %2070 = vmatpush1.bf16.msra.mxu0 0
        %2071 = vmatprep.subr.bf16.mxu0 0
        %2072 = vmatpush1.bf16.msra.mxu0 0
        %2073 = vmatprep.subr.bf16.mxu0 0
        %2074 = vmatpush1.bf16.msra.mxu0 0
        %2075 = vmatprep.mubr.bf16.mxu0 %v1846
        %2076 = vmatmul.mubr.bf16.gmra.mrb[0].mxu0 %v1652
        %v2077 = vpop.f32.mrb[0].mxu0
        %v2078 = vadd.f32 0.0, %v2077
        %v2079 = vpop.f32.mrb[0].mxu0
        %v2080 = vadd.f32 0.0, %v2079
        %v2081 = vpop.f32.mrb[0].mxu0
        %v2082 = vadd.f32 0.0, %v2081
        %v2083 = vpop.f32.mrb[0].mxu0
        %v2084 = vadd.f32 0.0, %v2083
        %2085 = vmatprep.mubr.bf16.mxu0 %v1849
        %2086 = vmatmul.mubr.bf16.gmra.mrb[0].mxu0 %v1654
        %v2087 = vpop.f32.mrb[0].mxu0
        %v2088 = vadd.f32 0.0, %v2087
        %v2089 = vpop.f32.mrb[0].mxu0
        %v2090 = vadd.f32 0.0, %v2089
        %v2091 = vpop.f32.mrb[0].mxu0
        %v2092 = vadd.f32 0.0, %v2091
        %v2093 = vpop.f32.mrb[0].mxu0
        %v2094 = vadd.f32 0.0, %v2093
        %2095 = vmatprep.mubr.bf16.mxu0 %v1852
        %2096 = vmatmul.mubr.bf16.gmra.mrb[0].mxu0 %v1656
        %v2097 = vpop.f32.mrb[0].mxu0
        %v2098 = vadd.f32 0.0, %v2097
        %v2099 = vpop.f32.mrb[0].mxu0
        %v2100 = vadd.f32 0.0, %v2099
        %v2101 = vpop.f32.mrb[0].mxu0
        %v2102 = vadd.f32 0.0, %v2101
        %v2103 = vpop.f32.mrb[0].mxu0
        %v2104 = vadd.f32 0.0, %v2103
        %2105 = vmatprep.mubr.bf16.mxu0 %v1855
        %2106 = vmatmul.mubr.bf16.gmra.mrb[0].mxu0 %v1658
        %v2107 = vpop.f32.mrb[0].mxu0
        %v2108 = vadd.f32 0.0, %v2107
        %v2109 = vpop.f32.mrb[0].mxu0
        %v2110 = vadd.f32 0.0, %v2109
        %v2111 = vpop.f32.mrb[0].mxu0
        %v2112 = vadd.f32 0.0, %v2111
        %v2113 = vpop.f32.mrb[0].mxu0
        %v2114 = vadd.f32 0.0, %v2113
        %2115 = vmatprep.mubr.bf16.mxu0 %v1858
        %2116 = vmatmul.mubr.bf16.gmra.mrb[0].mxu0 %v1660
        %v2117 = vpop.f32.mrb[0].mxu0
        %v2118 = vadd.f32 0.0, %v2117
        %v2119 = vpop.f32.mrb[0].mxu0
        %v2120 = vadd.f32 0.0, %v2119
        %v2121 = vpop.f32.mrb[0].mxu0
        %v2122 = vadd.f32 0.0, %v2121
        %v2123 = vpop.f32.mrb[0].mxu0
        %v2124 = vadd.f32 0.0, %v2123
        %2125 = vmatprep.mubr.bf16.mxu0 %v1861
        %2126 = vmatmul.mubr.bf16.gmra.mrb[0].mxu0 %v1662
        %v2127 = vpop.f32.mrb[0].mxu0
        %v2128 = vadd.f32 0.0, %v2127
        %v2129 = vpop.f32.mrb[0].mxu0
        %v2130 = vadd.f32 0.0, %v2129
        %v2131 = vpop.f32.mrb[0].mxu0
        %v2132 = vadd.f32 0.0, %v2131
        %v2133 = vpop.f32.mrb[0].mxu0
        %v2134 = vadd.f32 0.0, %v2133
        %2135 = vmatprep.mubr.bf16.mxu0 %v1864
        %2136 = vmatmul.mubr.bf16.gmra.mrb[0].mxu0 %v1664
        %v2137 = vpop.f32.mrb[0].mxu0
        %v2138 = vadd.f32 0.0, %v2137
        %v2139 = vpop.f32.mrb[0].mxu0
        %v2140 = vadd.f32 0.0, %v2139
        %v2141 = vpop.f32.mrb[0].mxu0
        %v2142 = vadd.f32 0.0, %v2141
        %v2143 = vpop.f32.mrb[0].mxu0
        %v2144 = vadd.f32 0.0, %v2143
        %2145 = vmatprep.mubr.bf16.mxu0 %v1867
        %2146 = vmatmul.mubr.bf16.gmra.mrb[0].mxu0 %v1666
        %v2147 = vpop.f32.mrb[0].mxu0
        %v2148 = vadd.f32 0.0, %v2147
        %v2149 = vpop.f32.mrb[0].mxu0
        %v2150 = vadd.f32 0.0, %v2149
        %v2151 = vpop.f32.mrb[0].mxu0
        %v2152 = vadd.f32 0.0, %v2151
        %v2153 = vpop.f32.mrb[0].mxu0
        %v2154 = vadd.f32 0.0, %v2153
        %2155 = vmatprep.mubr.bf16.mxu0 %v1870
        %2156 = vmatmul.mubr.bf16.gmra.mrb[0].mxu0 %v1668
        %v2157 = vpop.f32.mrb[0].mxu0
        %v2158 = vadd.f32 0.0, %v2157
        %v2159 = vpop.f32.mrb[0].mxu0
        %v2160 = vadd.f32 0.0, %v2159
        %v2161 = vpop.f32.mrb[0].mxu0
        %v2162 = vadd.f32 0.0, %v2161
        %v2163 = vpop.f32.mrb[0].mxu0
        %v2164 = vadd.f32 0.0, %v2163
        %2165 = vmatprep.mubr.bf16.mxu0 %v1873
        %2166 = vmatmul.mubr.bf16.gmra.mrb[0].mxu0 %v1670
        %v2167 = vpop.f32.mrb[0].mxu0
        %v2168 = vadd.f32 0.0, %v2167
        %v2169 = vpop.f32.mrb[0].mxu0
        %v2170 = vadd.f32 0.0, %v2169
        %v2171 = vpop.f32.mrb[0].mxu0
        %v2172 = vadd.f32 0.0, %v2171
        %v2173 = vpop.f32.mrb[0].mxu0
        %v2174 = vadd.f32 0.0, %v2173
        %2175 = vmatprep.mubr.bf16.mxu0 %v1876
        %2176 = vmatmul.mubr.bf16.gmra.mrb[0].mxu0 %v1672
        %v2177 = vpop.f32.mrb[0].mxu0
        %v2178 = vadd.f32 0.0, %v2177
        %v2179 = vpop.f32.mrb[0].mxu0
        %v2180 = vadd.f32 0.0, %v2179
        %v2181 = vpop.f32.mrb[0].mxu0
        %v2182 = vadd.f32 0.0, %v2181
        %v2183 = vpop.f32.mrb[0].mxu0
        %v2184 = vadd.f32 0.0, %v2183
        %2185 = vmatprep.mubr.bf16.mxu0 %v1879
        %2186 = vmatmul.mubr.bf16.gmra.mrb[0].mxu0 %v1674
        %v2187 = vpop.f32.mrb[0].mxu0
        %v2188 = vadd.f32 0.0, %v2187
        %v2189 = vpop.f32.mrb[0].mxu0
        %v2190 = vadd.f32 0.0, %v2189
        %v2191 = vpop.f32.mrb[0].mxu0
        %v2192 = vadd.f32 0.0, %v2191
        %v2193 = vpop.f32.mrb[0].mxu0
        %v2194 = vadd.f32 0.0, %v2193
        %2195 = vmatprep.mubr.bf16.mxu0 %v1882
        %2196 = vmatmul.mubr.bf16.gmra.mrb[0].mxu0 %v1676
        %v2197 = vpop.f32.mrb[0].mxu0
        %v2198 = vadd.f32 0.0, %v2197
        %v2199 = vpop.f32.mrb[0].mxu0
        %v2200 = vadd.f32 0.0, %v2199
        %v2201 = vpop.f32.mrb[0].mxu0
        %v2202 = vadd.f32 0.0, %v2201
        %v2203 = vpop.f32.mrb[0].mxu0
        %v2204 = vadd.f32 0.0, %v2203
        %2205 = vmatprep.mubr.bf16.mxu0 %v1885
        %2206 = vmatmul.mubr.bf16.gmra.mrb[0].mxu0 %v1678
        %v2207 = vpop.f32.mrb[0].mxu0
        %v2208 = vadd.f32 0.0, %v2207
        %v2209 = vpop.f32.mrb[0].mxu0
        %v2210 = vadd.f32 0.0, %v2209
        %v2211 = vpop.f32.mrb[0].mxu0
        %v2212 = vadd.f32 0.0, %v2211
        %v2213 = vpop.f32.mrb[0].mxu0
        %v2214 = vadd.f32 0.0, %v2213
        %2215 = vmatprep.mubr.bf16.mxu0 %v1888
        %2216 = vmatmul.mubr.bf16.gmra.mrb[0].mxu0 %v1680
        %v2217 = vpop.f32.mrb[0].mxu0
        %v2218 = vadd.f32 0.0, %v2217
        %v2219 = vpop.f32.mrb[0].mxu0
        %v2220 = vadd.f32 0.0, %v2219
        %v2221 = vpop.f32.mrb[0].mxu0
        %v2222 = vadd.f32 0.0, %v2221
        %v2223 = vpop.f32.mrb[0].mxu0
        %v2224 = vadd.f32 0.0, %v2223
        %2225 = vmatprep.mubr.bf16.mxu0 %v1891
        %2226 = vmatmul.mubr.bf16.gmra.mrb[0].mxu0 %v1682
        %v2227 = vpop.f32.mrb[0].mxu0
        %v2228 = vadd.f32 0.0, %v2227
        %v2229 = vpop.f32.mrb[0].mxu0
        %v2230 = vadd.f32 0.0, %v2229
        %v2231 = vpop.f32.mrb[0].mxu0
        %v2232 = vadd.f32 0.0, %v2231
        %v2233 = vpop.f32.mrb[0].mxu0
        %v2234 = vadd.f32 0.0, %v2233
        %2235 = vmatprep.mubr.bf16.mxu0 %v1894
        %2236 = vmatmul.mubr.bf16.gmra.mrb[0].mxu0 %v1684
        %v2237 = vpop.f32.mrb[0].mxu0
        %v2238 = vadd.f32 0.0, %v2237
        %v2239 = vpop.f32.mrb[0].mxu0
        %v2240 = vadd.f32 0.0, %v2239
        %v2241 = vpop.f32.mrb[0].mxu0
        %v2242 = vadd.f32 0.0, %v2241
        %v2243 = vpop.f32.mrb[0].mxu0
        %v2244 = vadd.f32 0.0, %v2243
        %2245 = vmatprep.mubr.bf16.mxu0 %v1897
        %2246 = vmatmul.mubr.bf16.gmra.mrb[0].mxu0 %v1686
        %v2247 = vpop.f32.mrb[0].mxu0
        %v2248 = vadd.f32 0.0, %v2247
        %v2249 = vpop.f32.mrb[0].mxu0
        %v2250 = vadd.f32 0.0, %v2249
        %v2251 = vpop.f32.mrb[0].mxu0
        %v2252 = vadd.f32 0.0, %v2251
        %v2253 = vpop.f32.mrb[0].mxu0
        %v2254 = vadd.f32 0.0, %v2253
        %2255 = vmatprep.mubr.bf16.mxu0 %v1900
        %2256 = vmatmul.mubr.bf16.gmra.mrb[0].mxu0 %v1688
        %v2257 = vpop.f32.mrb[0].mxu0
        %v2258 = vadd.f32 0.0, %v2257
        %v2259 = vpop.f32.mrb[0].mxu0
        %v2260 = vadd.f32 0.0, %v2259
        %v2261 = vpop.f32.mrb[0].mxu0
        %v2262 = vadd.f32 0.0, %v2261
        %v2263 = vpop.f32.mrb[0].mxu0
        %v2264 = vadd.f32 0.0, %v2263
        %2265 = vmatprep.mubr.bf16.mxu0 %v1903
        %2266 = vmatmul.mubr.bf16.gmra.mrb[0].mxu0 %v1690
        %v2267 = vpop.f32.mrb[0].mxu0
        %v2268 = vadd.f32 0.0, %v2267
        %v2269 = vpop.f32.mrb[0].mxu0
        %v2270 = vadd.f32 0.0, %v2269
        %v2271 = vpop.f32.mrb[0].mxu0
        %v2272 = vadd.f32 0.0, %v2271
        %v2273 = vpop.f32.mrb[0].mxu0
        %v2274 = vadd.f32 0.0, %v2273
        %2275 = vmatprep.mubr.bf16.mxu0 %v1906
        %2276 = vmatmul.mubr.bf16.gmra.mrb[0].mxu0 %v1692
        %v2277 = vpop.f32.mrb[0].mxu0
        %v2278 = vadd.f32 0.0, %v2277
        %v2279 = vpop.f32.mrb[0].mxu0
        %v2280 = vadd.f32 0.0, %v2279
        %v2281 = vpop.f32.mrb[0].mxu0
        %v2282 = vadd.f32 0.0, %v2281
        %v2283 = vpop.f32.mrb[0].mxu0
        %v2284 = vadd.f32 0.0, %v2283
        %2285 = vmatprep.mubr.bf16.mxu0 %v1909
        %2286 = vmatmul.mubr.bf16.gmra.mrb[0].mxu0 %v1694
        %v2287 = vpop.f32.mrb[0].mxu0
        %v2288 = vadd.f32 0.0, %v2287
        %v2289 = vpop.f32.mrb[0].mxu0
        %v2290 = vadd.f32 0.0, %v2289
        %v2291 = vpop.f32.mrb[0].mxu0
        %v2292 = vadd.f32 0.0, %v2291
        %v2293 = vpop.f32.mrb[0].mxu0
        %v2294 = vadd.f32 0.0, %v2293
        %2295 = vmatprep.mubr.bf16.mxu0 %v1912
        %2296 = vmatmul.mubr.bf16.gmra.mrb[0].mxu0 %v1696
        %v2297 = vpop.f32.mrb[0].mxu0
        %v2298 = vadd.f32 0.0, %v2297
        %v2299 = vpop.f32.mrb[0].mxu0
        %v2300 = vadd.f32 0.0, %v2299
        %v2301 = vpop.f32.mrb[0].mxu0
        %v2302 = vadd.f32 0.0, %v2301
        %v2303 = vpop.f32.mrb[0].mxu0
        %v2304 = vadd.f32 0.0, %v2303
        %2305 = vmatprep.mubr.bf16.mxu0 %v1915
        %2306 = vmatmul.mubr.bf16.gmra.mrb[0].mxu0 %v1698
        %v2307 = vpop.f32.mrb[0].mxu0
        %v2308 = vadd.f32 0.0, %v2307
        %v2309 = vpop.f32.mrb[0].mxu0
        %v2310 = vadd.f32 0.0, %v2309
        %v2311 = vpop.f32.mrb[0].mxu0
        %v2312 = vadd.f32 0.0, %v2311
        %v2313 = vpop.f32.mrb[0].mxu0
        %v2314 = vadd.f32 0.0, %v2313
        %2315 = vmatprep.mubr.bf16.mxu0 %v1918
        %2316 = vmatmul.mubr.bf16.gmra.mrb[0].mxu0 %v1700
        %v2317 = vpop.f32.mrb[0].mxu0
        %v2318 = vadd.f32 0.0, %v2317
        %v2319 = vpop.f32.mrb[0].mxu0
        %v2320 = vadd.f32 0.0, %v2319
        %v2321 = vpop.f32.mrb[0].mxu0
        %v2322 = vadd.f32 0.0, %v2321
        %v2323 = vpop.f32.mrb[0].mxu0
        %v2324 = vadd.f32 0.0, %v2323
        %2325 = vmatprep.mubr.bf16.mxu0 %v1921
        %2326 = vmatmul.mubr.bf16.gmra.mrb[0].mxu0 %v1702
        %v2327 = vpop.f32.mrb[0].mxu0
        %v2328 = vadd.f32 0.0, %v2327
        %v2329 = vpop.f32.mrb[0].mxu0
        %v2330 = vadd.f32 0.0, %v2329
        %v2331 = vpop.f32.mrb[0].mxu0
        %v2332 = vadd.f32 0.0, %v2331
        %v2333 = vpop.f32.mrb[0].mxu0
        %v2334 = vadd.f32 0.0, %v2333
        %2335 = vmatprep.mubr.bf16.mxu0 %v1924
        %2336 = vmatmul.mubr.bf16.gmra.mrb[0].mxu0 %v1704
        %v2337 = vpop.f32.mrb[0].mxu0
        %v2338 = vadd.f32 0.0, %v2337
        %v2339 = vpop.f32.mrb[0].mxu0
        %v2340 = vadd.f32 0.0, %v2339
        %v2341 = vpop.f32.mrb[0].mxu0
        %v2342 = vadd.f32 0.0, %v2341
        %v2343 = vpop.f32.mrb[0].mxu0
        %v2344 = vadd.f32 0.0, %v2343
        %2345 = vmatprep.mubr.bf16.mxu0 %v1927
        %2346 = vmatmul.mubr.bf16.gmra.mrb[0].mxu0 %v1706
        %v2347 = vpop.f32.mrb[0].mxu0
        %v2348 = vadd.f32 0.0, %v2347
        %v2349 = vpop.f32.mrb[0].mxu0
        %v2350 = vadd.f32 0.0, %v2349
        %v2351 = vpop.f32.mrb[0].mxu0
        %v2352 = vadd.f32 0.0, %v2351
        %v2353 = vpop.f32.mrb[0].mxu0
        %v2354 = vadd.f32 0.0, %v2353
        %2355 = vmatprep.mubr.bf16.mxu0 %v1930
        %2356 = vmatmul.mubr.bf16.gmra.mrb[0].mxu0 %v1708
        %v2357 = vpop.f32.mrb[0].mxu0
        %v2358 = vadd.f32 0.0, %v2357
        %v2359 = vpop.f32.mrb[0].mxu0
        %v2360 = vadd.f32 0.0, %v2359
        %v2361 = vpop.f32.mrb[0].mxu0
        %v2362 = vadd.f32 0.0, %v2361
        %v2363 = vpop.f32.mrb[0].mxu0
        %v2364 = vadd.f32 0.0, %v2363
        %2365 = vmatprep.mubr.bf16.mxu0 %v1933
        %2366 = vmatmul.mubr.bf16.gmra.mrb[0].mxu0 %v1710
        %v2367 = vpop.f32.mrb[0].mxu0
        %v2368 = vadd.f32 0.0, %v2367
        %v2369 = vpop.f32.mrb[0].mxu0
        %v2370 = vadd.f32 0.0, %v2369
        %v2371 = vpop.f32.mrb[0].mxu0
        %v2372 = vadd.f32 0.0, %v2371
        %v2373 = vpop.f32.mrb[0].mxu0
        %v2374 = vadd.f32 0.0, %v2373
        %2375 = vmatprep.mubr.bf16.mxu0 %v1936
        %2376 = vmatmul.mubr.bf16.gmra.mrb[0].mxu0 %v1712
        %v2377 = vpop.f32.mrb[0].mxu0
        %v2378 = vadd.f32 0.0, %v2377
        %v2379 = vpop.f32.mrb[0].mxu0
        %v2380 = vadd.f32 0.0, %v2379
        %v2381 = vpop.f32.mrb[0].mxu0
        %v2382 = vadd.f32 0.0, %v2381
        %v2383 = vpop.f32.mrb[0].mxu0
        %v2384 = vadd.f32 0.0, %v2383
        %2385 = vmatprep.mubr.bf16.mxu0 %v1939
        %2386 = vmatmul.mubr.bf16.gmra.mrb[0].mxu0 %v1714
        %v2387 = vpop.f32.mrb[0].mxu0
        %v2388 = vadd.f32 0.0, %v2387
        %v2389 = vpop.f32.mrb[0].mxu0
        %v2390 = vadd.f32 0.0, %v2389
        %v2391 = vpop.f32.mrb[0].mxu0
        %v2392 = vadd.f32 0.0, %v2391
        %v2393 = vpop.f32.mrb[0].mxu0
        %v2394 = vadd.f32 0.0, %v2393
        %2395 = vmatprep.mubr.bf16.mxu0 %v1942
        %2396 = vmatmul.mubr.bf16.gmra.mrb[0].mxu0 %v1716
        %v2397 = vpop.f32.mrb[0].mxu0
        %v2398 = vadd.f32 0.0, %v2397
        %v2399 = vpop.f32.mrb[0].mxu0
        %v2400 = vadd.f32 0.0, %v2399
        %v2401 = vpop.f32.mrb[0].mxu0
        %v2402 = vadd.f32 0.0, %v2401
        %v2403 = vpop.f32.mrb[0].mxu0
        %v2404 = vadd.f32 0.0, %v2403
        %2405 = vmatprep.mubr.bf16.mxu0 %v1945
        %2406 = vmatmul.mubr.bf16.gmra.mrb[0].mxu0 %v1718
        %v2407 = vpop.f32.mrb[0].mxu0
        %v2408 = vadd.f32 0.0, %v2407
        %v2409 = vpop.f32.mrb[0].mxu0
        %v2410 = vadd.f32 0.0, %v2409
        %v2411 = vpop.f32.mrb[0].mxu0
        %v2412 = vadd.f32 0.0, %v2411
        %v2413 = vpop.f32.mrb[0].mxu0
        %v2414 = vadd.f32 0.0, %v2413
        %2415 = vmatprep.mubr.bf16.mxu0 %v1948
        %2416 = vmatmul.mubr.bf16.gmra.mrb[0].mxu0 %v1720
        %v2417 = vpop.f32.mrb[0].mxu0
        %v2418 = vadd.f32 0.0, %v2417
        %v2419 = vpop.f32.mrb[0].mxu0
        %v2420 = vadd.f32 0.0, %v2419
        %v2421 = vpop.f32.mrb[0].mxu0
        %v2422 = vadd.f32 0.0, %v2421
        %v2423 = vpop.f32.mrb[0].mxu0
        %v2424 = vadd.f32 0.0, %v2423
        %2425 = vmatprep.mubr.bf16.mxu0 %v1951
        %2426 = vmatmul.mubr.bf16.gmra.mrb[0].mxu0 %v1722
        %v2427 = vpop.f32.mrb[0].mxu0
        %v2428 = vadd.f32 0.0, %v2427
        %v2429 = vpop.f32.mrb[0].mxu0
        %v2430 = vadd.f32 0.0, %v2429
        %v2431 = vpop.f32.mrb[0].mxu0
        %v2432 = vadd.f32 0.0, %v2431
        %v2433 = vpop.f32.mrb[0].mxu0
        %v2434 = vadd.f32 0.0, %v2433
        %2435 = vmatprep.mubr.bf16.mxu0 %v1954
        %2436 = vmatmul.mubr.bf16.gmra.mrb[0].mxu0 %v1724
        %v2437 = vpop.f32.mrb[0].mxu0
        %v2438 = vadd.f32 0.0, %v2437
        %v2439 = vpop.f32.mrb[0].mxu0
        %v2440 = vadd.f32 0.0, %v2439
        %v2441 = vpop.f32.mrb[0].mxu0
        %v2442 = vadd.f32 0.0, %v2441
        %v2443 = vpop.f32.mrb[0].mxu0
        %v2444 = vadd.f32 0.0, %v2443
        %2445 = vmatprep.mubr.bf16.mxu0 %v1957
        %2446 = vmatmul.mubr.bf16.gmra.mrb[0].mxu0 %v1726
        %v2447 = vpop.f32.mrb[0].mxu0
        %v2448 = vadd.f32 0.0, %v2447
        %v2449 = vpop.f32.mrb[0].mxu0
        %v2450 = vadd.f32 0.0, %v2449
        %v2451 = vpop.f32.mrb[0].mxu0
        %v2452 = vadd.f32 0.0, %v2451
        %v2453 = vpop.f32.mrb[0].mxu0
        %v2454 = vadd.f32 0.0, %v2453
        %2455 = vmatprep.mubr.bf16.mxu0 %v1960
        %2456 = vmatmul.mubr.bf16.gmra.mrb[0].mxu0 %v1728
        %v2457 = vpop.f32.mrb[0].mxu0
        %v2458 = vadd.f32 0.0, %v2457
        %v2459 = vpop.f32.mrb[0].mxu0
        %v2460 = vadd.f32 0.0, %v2459
        %v2461 = vpop.f32.mrb[0].mxu0
        %v2462 = vadd.f32 0.0, %v2461
        %v2463 = vpop.f32.mrb[0].mxu0
        %v2464 = vadd.f32 0.0, %v2463
        %2465 = vmatprep.mubr.bf16.mxu0 %v1963
        %2466 = vmatmul.mubr.bf16.gmra.mrb[0].mxu0 %v1730
        %v2467 = vpop.f32.mrb[0].mxu0
        %v2468 = vadd.f32 0.0, %v2467
        %v2469 = vpop.f32.mrb[0].mxu0
        %v2470 = vadd.f32 0.0, %v2469
        %v2471 = vpop.f32.mrb[0].mxu0
        %v2472 = vadd.f32 0.0, %v2471
        %v2473 = vpop.f32.mrb[0].mxu0
        %v2474 = vadd.f32 0.0, %v2473
        %2475 = vmatprep.mubr.bf16.mxu0 %v1966
        %2476 = vmatmul.mubr.bf16.gmra.mrb[0].mxu0 %v1732
        %v2477 = vpop.f32.mrb[0].mxu0
        %v2478 = vadd.f32 0.0, %v2477
        %v2479 = vpop.f32.mrb[0].mxu0
        %v2480 = vadd.f32 0.0, %v2479
        %v2481 = vpop.f32.mrb[0].mxu0
        %v2482 = vadd.f32 0.0, %v2481
        %v2483 = vpop.f32.mrb[0].mxu0
        %v2484 = vadd.f32 0.0, %v2483
        %2485 = vmatprep.mubr.bf16.mxu0 %v1969
        %2486 = vmatmul.mubr.bf16.gmra.mrb[0].mxu0 %v1734
        %v2487 = vpop.f32.mrb[0].mxu0
        %v2488 = vadd.f32 0.0, %v2487
        %v2489 = vpop.f32.mrb[0].mxu0
        %v2490 = vadd.f32 0.0, %v2489
        %v2491 = vpop.f32.mrb[0].mxu0
        %v2492 = vadd.f32 0.0, %v2491
        %v2493 = vpop.f32.mrb[0].mxu0
        %v2494 = vadd.f32 0.0, %v2493
        %2495 = vmatprep.mubr.bf16.mxu0 %v1972
        %2496 = vmatmul.mubr.bf16.gmra.mrb[0].mxu0 %v1736
        %v2497 = vpop.f32.mrb[0].mxu0
        %v2498 = vadd.f32 0.0, %v2497
        %v2499 = vpop.f32.mrb[0].mxu0
        %v2500 = vadd.f32 0.0, %v2499
        %v2501 = vpop.f32.mrb[0].mxu0
        %v2502 = vadd.f32 0.0, %v2501
        %v2503 = vpop.f32.mrb[0].mxu0
        %v2504 = vadd.f32 0.0, %v2503
        %2505 = vmatprep.mubr.bf16.mxu0 %v1975
        %2506 = vmatmul.mubr.bf16.gmra.mrb[0].mxu0 %v1738
        %v2507 = vpop.f32.mrb[0].mxu0
        %v2508 = vadd.f32 0.0, %v2507
        %v2509 = vpop.f32.mrb[0].mxu0
        %v2510 = vadd.f32 0.0, %v2509
        %v2511 = vpop.f32.mrb[0].mxu0
        %v2512 = vadd.f32 0.0, %v2511
        %v2513 = vpop.f32.mrb[0].mxu0
        %v2514 = vadd.f32 0.0, %v2513
        %2515 = vmatprep.mubr.bf16.mxu0 %v1978
        %2516 = vmatmul.mubr.bf16.gmra.mrb[0].mxu0 %v1740
        %v2517 = vpop.f32.mrb[0].mxu0
        %v2518 = vadd.f32 0.0, %v2517
        %v2519 = vpop.f32.mrb[0].mxu0
        %v2520 = vadd.f32 0.0, %v2519
        %v2521 = vpop.f32.mrb[0].mxu0
        %v2522 = vadd.f32 0.0, %v2521
        %v2523 = vpop.f32.mrb[0].mxu0
        %v2524 = vadd.f32 0.0, %v2523
        %2525 = vmatprep.mubr.bf16.mxu0 %v1981
        %2526 = vmatmul.mubr.bf16.gmra.mrb[0].mxu0 %v1742
        %v2527 = vpop.f32.mrb[0].mxu0
        %v2528 = vadd.f32 0.0, %v2527
        %v2529 = vpop.f32.mrb[0].mxu0
        %v2530 = vadd.f32 0.0, %v2529
        %v2531 = vpop.f32.mrb[0].mxu0
        %v2532 = vadd.f32 0.0, %v2531
        %v2533 = vpop.f32.mrb[0].mxu0
        %v2534 = vadd.f32 0.0, %v2533
        %2535 = vmatprep.mubr.bf16.mxu0 %v1984
        %2536 = vmatmul.mubr.bf16.gmra.mrb[0].mxu0 %v1744
        %v2537 = vpop.f32.mrb[0].mxu0
        %v2538 = vadd.f32 0.0, %v2537
        %v2539 = vpop.f32.mrb[0].mxu0
        %v2540 = vadd.f32 0.0, %v2539
        %v2541 = vpop.f32.mrb[0].mxu0
        %v2542 = vadd.f32 0.0, %v2541
        %v2543 = vpop.f32.mrb[0].mxu0
        %v2544 = vadd.f32 0.0, %v2543
        %2545 = vmatprep.mubr.bf16.mxu0 %v1987
        %2546 = vmatmul.mubr.bf16.gmra.mrb[0].mxu0 %v1746
        %v2547 = vpop.f32.mrb[0].mxu0
        %v2548 = vadd.f32 0.0, %v2547
        %v2549 = vpop.f32.mrb[0].mxu0
        %v2550 = vadd.f32 0.0, %v2549
        %v2551 = vpop.f32.mrb[0].mxu0
        %v2552 = vadd.f32 0.0, %v2551
        %v2553 = vpop.f32.mrb[0].mxu0
        %v2554 = vadd.f32 0.0, %v2553
        %2555 = vmatprep.mubr.bf16.mxu0 %v1990
        %2556 = vmatmul.mubr.bf16.gmra.mrb[0].mxu0 %v1748
        %v2557 = vpop.f32.mrb[0].mxu0
        %v2558 = vadd.f32 0.0, %v2557
        %v2559 = vpop.f32.mrb[0].mxu0
        %v2560 = vadd.f32 0.0, %v2559
        %v2561 = vpop.f32.mrb[0].mxu0
        %v2562 = vadd.f32 0.0, %v2561
        %v2563 = vpop.f32.mrb[0].mxu0
        %v2564 = vadd.f32 0.0, %v2563
        %2565 = vmatprep.mubr.bf16.mxu0 %v1993
        %2566 = vmatmul.mubr.bf16.gmra.mrb[0].mxu0 %v1750
        %v2567 = vpop.f32.mrb[0].mxu0
        %v2568 = vadd.f32 0.0, %v2567
        %v2569 = vpop.f32.mrb[0].mxu0
        %v2570 = vadd.f32 0.0, %v2569
        %v2571 = vpop.f32.mrb[0].mxu0
        %v2572 = vadd.f32 0.0, %v2571
        %v2573 = vpop.f32.mrb[0].mxu0
        %v2574 = vadd.f32 0.0, %v2573
        %2575 = vmatprep.mubr.bf16.mxu0 %v1996
        %2576 = vmatmul.mubr.bf16.gmra.mrb[0].mxu0 %v1752
        %v2577 = vpop.f32.mrb[0].mxu0
        %v2578 = vadd.f32 0.0, %v2577
        %v2579 = vpop.f32.mrb[0].mxu0
        %v2580 = vadd.f32 0.0, %v2579
        %v2581 = vpop.f32.mrb[0].mxu0
        %v2582 = vadd.f32 0.0, %v2581
        %v2583 = vpop.f32.mrb[0].mxu0
        %v2584 = vadd.f32 0.0, %v2583
        %2585 = vmatprep.mubr.bf16.mxu0 %v1999
        %2586 = vmatmul.mubr.bf16.gmra.mrb[0].mxu0 %v1754
        %v2587 = vpop.f32.mrb[0].mxu0
        %v2588 = vadd.f32 0.0, %v2587
        %v2589 = vpop.f32.mrb[0].mxu0
        %v2590 = vadd.f32 0.0, %v2589
        %v2591 = vpop.f32.mrb[0].mxu0
        %v2592 = vadd.f32 0.0, %v2591
        %v2593 = vpop.f32.mrb[0].mxu0
        %v2594 = vadd.f32 0.0, %v2593
        %2595 = vmatprep.mubr.bf16.mxu0 %v2002
        %2596 = vmatmul.mubr.bf16.gmra.mrb[0].mxu0 %v1756
        %v2597 = vpop.f32.mrb[0].mxu0
        %v2598 = vadd.f32 0.0, %v2597
        %v2599 = vpop.f32.mrb[0].mxu0
        %v2600 = vadd.f32 0.0, %v2599
        %v2601 = vpop.f32.mrb[0].mxu0
        %v2602 = vadd.f32 0.0, %v2601
        %v2603 = vpop.f32.mrb[0].mxu0
        %v2604 = vadd.f32 0.0, %v2603
        %2605 = vmatprep.mubr.bf16.mxu0 %v2005
        %2606 = vmatmul.mubr.bf16.gmra.mrb[0].mxu0 %v1758
        %v2607 = vpop.f32.mrb[0].mxu0
        %v2608 = vadd.f32 0.0, %v2607
        %v2609 = vpop.f32.mrb[0].mxu0
        %v2610 = vadd.f32 0.0, %v2609
        %v2611 = vpop.f32.mrb[0].mxu0
        %v2612 = vadd.f32 0.0, %v2611
        %v2613 = vpop.f32.mrb[0].mxu0
        %v2614 = vadd.f32 0.0, %v2613
        %2615 = vmatprep.mubr.bf16.mxu0 %v2008
        %2616 = vmatmul.mubr.bf16.gmra.mrb[0].mxu0 %v1760
        %v2617 = vpop.f32.mrb[0].mxu0
        %v2618 = vadd.f32 0.0, %v2617
        %v2619 = vpop.f32.mrb[0].mxu0
        %v2620 = vadd.f32 0.0, %v2619
        %v2621 = vpop.f32.mrb[0].mxu0
        %v2622 = vadd.f32 0.0, %v2621
        %v2623 = vpop.f32.mrb[0].mxu0
        %v2624 = vadd.f32 0.0, %v2623
        %2625 = vmatprep.mubr.bf16.mxu0 %v2011
        %2626 = vmatmul.mubr.bf16.gmra.mrb[0].mxu0 %v1762
        %v2627 = vpop.f32.mrb[0].mxu0
        %v2628 = vadd.f32 0.0, %v2627
        %v2629 = vpop.f32.mrb[0].mxu0
        %v2630 = vadd.f32 0.0, %v2629
        %v2631 = vpop.f32.mrb[0].mxu0
        %v2632 = vadd.f32 0.0, %v2631
        %v2633 = vpop.f32.mrb[0].mxu0
        %v2634 = vadd.f32 0.0, %v2633
        %2635 = vmatprep.mubr.bf16.mxu0 %v2014
        %2636 = vmatmul.mubr.bf16.gmra.mrb[0].mxu0 %v1764
        %v2637 = vpop.f32.mrb[0].mxu0
        %v2638 = vadd.f32 0.0, %v2637
        %v2639 = vpop.f32.mrb[0].mxu0
        %v2640 = vadd.f32 0.0, %v2639
        %v2641 = vpop.f32.mrb[0].mxu0
        %v2642 = vadd.f32 0.0, %v2641
        %v2643 = vpop.f32.mrb[0].mxu0
        %v2644 = vadd.f32 0.0, %v2643
        %2645 = vmatprep.mubr.bf16.mxu0 %v2017
        %2646 = vmatmul.mubr.bf16.gmra.mrb[0].mxu0 %v1766
        %v2647 = vpop.f32.mrb[0].mxu0
        %v2648 = vadd.f32 0.0, %v2647
        %v2649 = vpop.f32.mrb[0].mxu0
        %v2650 = vadd.f32 0.0, %v2649
        %v2651 = vpop.f32.mrb[0].mxu0
        %v2652 = vadd.f32 0.0, %v2651
        %v2653 = vpop.f32.mrb[0].mxu0
        %v2654 = vadd.f32 0.0, %v2653
        %2655 = vmatprep.mubr.bf16.mxu0 %v2020
        %2656 = vmatmul.mubr.bf16.gmra.mrb[0].mxu0 %v1768
        %v2657 = vpop.f32.mrb[0].mxu0
        %v2658 = vadd.f32 0.0, %v2657
        %v2659 = vpop.f32.mrb[0].mxu0
        %v2660 = vadd.f32 0.0, %v2659
        %v2661 = vpop.f32.mrb[0].mxu0
        %v2662 = vadd.f32 0.0, %v2661
        %v2663 = vpop.f32.mrb[0].mxu0
        %v2664 = vadd.f32 0.0, %v2663
        %2665 = vmatprep.mubr.bf16.mxu0 %v2023
        %2666 = vmatmul.mubr.bf16.gmra.mrb[0].mxu0 %v1770
        %v2667 = vpop.f32.mrb[0].mxu0
        %v2668 = vadd.f32 0.0, %v2667
        %v2669 = vpop.f32.mrb[0].mxu0
        %v2670 = vadd.f32 0.0, %v2669
        %v2671 = vpop.f32.mrb[0].mxu0
        %v2672 = vadd.f32 0.0, %v2671
        %v2673 = vpop.f32.mrb[0].mxu0
        %v2674 = vadd.f32 0.0, %v2673
        %2675 = vmatprep.mubr.bf16.mxu0 %v2026
        %2676 = vmatmul.mubr.bf16.gmra.mrb[0].mxu0 %v1772
        %v2677 = vpop.f32.mrb[0].mxu0
        %v2678 = vadd.f32 0.0, %v2677
        %v2679 = vpop.f32.mrb[0].mxu0
        %v2680 = vadd.f32 0.0, %v2679
        %v2681 = vpop.f32.mrb[0].mxu0
        %v2682 = vadd.f32 0.0, %v2681
        %v2683 = vpop.f32.mrb[0].mxu0
        %v2684 = vadd.f32 0.0, %v2683
        %2685 = vmatprep.mubr.bf16.mxu0 %v2029
        %2686 = vmatmul.mubr.bf16.gmra.mrb[0].mxu0 %v1774
        %v2687 = vpop.f32.mrb[0].mxu0
        %v2688 = vadd.f32 0.0, %v2687
        %v2689 = vpop.f32.mrb[0].mxu0
        %v2690 = vadd.f32 0.0, %v2689
        %v2691 = vpop.f32.mrb[0].mxu0
        %v2692 = vadd.f32 0.0, %v2691
        %v2693 = vpop.f32.mrb[0].mxu0
        %v2694 = vadd.f32 0.0, %v2693
        %2695 = vmatprep.mubr.bf16.mxu0 %v2032
        %2696 = vmatmul.mubr.bf16.gmra.mrb[0].mxu0 %v1776
        %v2697 = vpop.f32.mrb[0].mxu0
        %v2698 = vadd.f32 0.0, %v2697
        %v2699 = vpop.f32.mrb[0].mxu0
        %v2700 = vadd.f32 0.0, %v2699
        %v2701 = vpop.f32.mrb[0].mxu0
        %v2702 = vadd.f32 0.0, %v2701
        %v2703 = vpop.f32.mrb[0].mxu0
        %v2704 = vadd.f32 0.0, %v2703
        %2705 = vmatprep.mubr.bf16.mxu0 %v2035
        %2706 = vmatmul.mubr.bf16.gmra.mrb[0].mxu0 %v1778
        %v2707 = vpop.f32.mrb[0].mxu0
        %v2708 = vadd.f32 0.0, %v2707
        %v2709 = vpop.f32.mrb[0].mxu0
        %v2710 = vadd.f32 0.0, %v2709
        %v2711 = vpop.f32.mrb[0].mxu0
        %v2712 = vadd.f32 0.0, %v2711
        %v2713 = vpop.f32.mrb[0].mxu0
        %v2714 = vadd.f32 0.0, %v2713
        %2715 = vdwg.mxu0
        %v2716 = vmul.f32 %v2078, 0.01
        %v2717 = vmul.f32 %v2080, 0.01
        %v2718 = vmul.f32 %v2082, 0.01
        %v2719 = vmul.f32 %v2084, 0.01
        %v2720 = vmul.f32 %v2088, 0.01
        %v2721 = vmul.f32 %v2090, 0.01
        %v2722 = vmul.f32 %v2092, 0.01
        %v2723 = vmul.f32 %v2094, 0.01
        %v2724 = vmul.f32 %v2098, 0.01
        %v2725 = vmul.f32 %v2100, 0.01
        %v2726 = vmul.f32 %v2102, 0.01
        %v2727 = vmul.f32 %v2104, 0.01
        %v2728 = vmul.f32 %v2108, 0.01
        %v2729 = vmul.f32 %v2110, 0.01
        %v2730 = vmul.f32 %v2112, 0.01
        %v2731 = vmul.f32 %v2114, 0.01
        %v2732 = vmul.f32 %v2118, 0.01
        %v2733 = vmul.f32 %v2120, 0.01
        %v2734 = vmul.f32 %v2122, 0.01
        %v2735 = vmul.f32 %v2124, 0.01
        %v2736 = vmul.f32 %v2128, 0.01
        %v2737 = vmul.f32 %v2130, 0.01
        %v2738 = vmul.f32 %v2132, 0.01
        %v2739 = vmul.f32 %v2134, 0.01
        %v2740 = vmul.f32 %v2138, 0.01
        %v2741 = vmul.f32 %v2140, 0.01
        %v2742 = vmul.f32 %v2142, 0.01
        %v2743 = vmul.f32 %v2144, 0.01
        %v2744 = vmul.f32 %v2148, 0.01
        %v2745 = vmul.f32 %v2150, 0.01
        %v2746 = vmul.f32 %v2152, 0.01
        %v2747 = vmul.f32 %v2154, 0.01
        %v2748 = vmul.f32 %v2158, 0.01
        %v2749 = vmul.f32 %v2160, 0.01
        %v2750 = vmul.f32 %v2162, 0.01
        %v2751 = vmul.f32 %v2164, 0.01
        %v2752 = vmul.f32 %v2168, 0.01
        %v2753 = vmul.f32 %v2170, 0.01
        %v2754 = vmul.f32 %v2172, 0.01
        %v2755 = vmul.f32 %v2174, 0.01
        %v2756 = vmul.f32 %v2178, 0.01
        %v2757 = vmul.f32 %v2180, 0.01
        %v2758 = vmul.f32 %v2182, 0.01
        %v2759 = vmul.f32 %v2184, 0.01
        %v2760 = vmul.f32 %v2188, 0.01
        %v2761 = vmul.f32 %v2190, 0.01
        %v2762 = vmul.f32 %v2192, 0.01
        %v2763 = vmul.f32 %v2194, 0.01
        %v2764 = vmul.f32 %v2198, 0.01
        %v2765 = vmul.f32 %v2200, 0.01
        %v2766 = vmul.f32 %v2202, 0.01
        %v2767 = vmul.f32 %v2204, 0.01
        %v2768 = vmul.f32 %v2208, 0.01
        %v2769 = vmul.f32 %v2210, 0.01
        %v2770 = vmul.f32 %v2212, 0.01
        %v2771 = vmul.f32 %v2214, 0.01
        %v2772 = vmul.f32 %v2218, 0.01
        %v2773 = vmul.f32 %v2220, 0.01
        %v2774 = vmul.f32 %v2222, 0.01
        %v2775 = vmul.f32 %v2224, 0.01
        %v2776 = vmul.f32 %v2228, 0.01
        %v2777 = vmul.f32 %v2230, 0.01
        %v2778 = vmul.f32 %v2232, 0.01
        %v2779 = vmul.f32 %v2234, 0.01
        %v2780 = vmul.f32 %v2238, 0.01
        %v2781 = vmul.f32 %v2240, 0.01
        %v2782 = vmul.f32 %v2242, 0.01
        %v2783 = vmul.f32 %v2244, 0.01
        %v2784 = vmul.f32 %v2248, 0.01
        %v2785 = vmul.f32 %v2250, 0.01
        %v2786 = vmul.f32 %v2252, 0.01
        %v2787 = vmul.f32 %v2254, 0.01
        %v2788 = vmul.f32 %v2258, 0.01
        %v2789 = vmul.f32 %v2260, 0.01
        %v2790 = vmul.f32 %v2262, 0.01
        %v2791 = vmul.f32 %v2264, 0.01
        %v2792 = vmul.f32 %v2268, 0.01
        %v2793 = vmul.f32 %v2270, 0.01
        %v2794 = vmul.f32 %v2272, 0.01
        %v2795 = vmul.f32 %v2274, 0.01
        %v2796 = vmul.f32 %v2278, 0.01
        %v2797 = vmul.f32 %v2280, 0.01
        %v2798 = vmul.f32 %v2282, 0.01
        %v2799 = vmul.f32 %v2284, 0.01
        %v2800 = vmul.f32 %v2288, 0.01
        %v2801 = vmul.f32 %v2290, 0.01
        %v2802 = vmul.f32 %v2292, 0.01
        %v2803 = vmul.f32 %v2294, 0.01
        %v2804 = vmul.f32 %v2298, 0.01
        %v2805 = vmul.f32 %v2300, 0.01
        %v2806 = vmul.f32 %v2302, 0.01
        %v2807 = vmul.f32 %v2304, 0.01
        %v2808 = vmul.f32 %v2308, 0.01
        %v2809 = vmul.f32 %v2310, 0.01
        %v2810 = vmul.f32 %v2312, 0.01
        %v2811 = vmul.f32 %v2314, 0.01
        %v2812 = vmul.f32 %v2318, 0.01
        %v2813 = vmul.f32 %v2320, 0.01
        %v2814 = vmul.f32 %v2322, 0.01
        %v2815 = vmul.f32 %v2324, 0.01
        %v2816 = vmul.f32 %v2328, 0.01
        %v2817 = vmul.f32 %v2330, 0.01
        %v2818 = vmul.f32 %v2332, 0.01
        %v2819 = vmul.f32 %v2334, 0.01
        %v2820 = vmul.f32 %v2338, 0.01
        %v2821 = vmul.f32 %v2340, 0.01
        %v2822 = vmul.f32 %v2342, 0.01
        %v2823 = vmul.f32 %v2344, 0.01
        %v2824 = vmul.f32 %v2348, 0.01
        %v2825 = vmul.f32 %v2350, 0.01
        %v2826 = vmul.f32 %v2352, 0.01
        %v2827 = vmul.f32 %v2354, 0.01
        %v2828 = vmul.f32 %v2358, 0.01
        %v2829 = vmul.f32 %v2360, 0.01
        %v2830 = vmul.f32 %v2362, 0.01
        %v2831 = vmul.f32 %v2364, 0.01
        %v2832 = vmul.f32 %v2368, 0.01
        %v2833 = vmul.f32 %v2370, 0.01
        %v2834 = vmul.f32 %v2372, 0.01
        %v2835 = vmul.f32 %v2374, 0.01
        %v2836 = vmul.f32 %v2378, 0.01
        %v2837 = vmul.f32 %v2380, 0.01
        %v2838 = vmul.f32 %v2382, 0.01
        %v2839 = vmul.f32 %v2384, 0.01
        %v2840 = vmul.f32 %v2388, 0.01
        %v2841 = vmul.f32 %v2390, 0.01
        %v2842 = vmul.f32 %v2392, 0.01
        %v2843 = vmul.f32 %v2394, 0.01
        %v2844 = vmul.f32 %v2398, 0.01
        %v2845 = vmul.f32 %v2400, 0.01
        %v2846 = vmul.f32 %v2402, 0.01
        %v2847 = vmul.f32 %v2404, 0.01
        %v2848 = vmul.f32 %v2408, 0.01
        %v2849 = vmul.f32 %v2410, 0.01
        %v2850 = vmul.f32 %v2412, 0.01
        %v2851 = vmul.f32 %v2414, 0.01
        %v2852 = vmul.f32 %v2418, 0.01
        %v2853 = vmul.f32 %v2420, 0.01
        %v2854 = vmul.f32 %v2422, 0.01
        %v2855 = vmul.f32 %v2424, 0.01
        %v2856 = vmul.f32 %v2428, 0.01
        %v2857 = vmul.f32 %v2430, 0.01
        %v2858 = vmul.f32 %v2432, 0.01
        %v2859 = vmul.f32 %v2434, 0.01
        %v2860 = vmul.f32 %v2438, 0.01
        %v2861 = vmul.f32 %v2440, 0.01
        %v2862 = vmul.f32 %v2442, 0.01
        %v2863 = vmul.f32 %v2444, 0.01
        %v2864 = vmul.f32 %v2448, 0.01
        %v2865 = vmul.f32 %v2450, 0.01
        %v2866 = vmul.f32 %v2452, 0.01
        %v2867 = vmul.f32 %v2454, 0.01
        %v2868 = vmul.f32 %v2458, 0.01
        %v2869 = vmul.f32 %v2460, 0.01
        %v2870 = vmul.f32 %v2462, 0.01
        %v2871 = vmul.f32 %v2464, 0.01
        %v2872 = vmul.f32 %v2468, 0.01
        %v2873 = vmul.f32 %v2470, 0.01
        %v2874 = vmul.f32 %v2472, 0.01
        %v2875 = vmul.f32 %v2474, 0.01
        %v2876 = vmul.f32 %v2478, 0.01
        %v2877 = vmul.f32 %v2480, 0.01
        %v2878 = vmul.f32 %v2482, 0.01
        %v2879 = vmul.f32 %v2484, 0.01
        %v2880 = vmul.f32 %v2488, 0.01
        %v2881 = vmul.f32 %v2490, 0.01
        %v2882 = vmul.f32 %v2492, 0.01
        %v2883 = vmul.f32 %v2494, 0.01
        %v2884 = vmul.f32 %v2498, 0.01
        %v2885 = vmul.f32 %v2500, 0.01
        %v2886 = vmul.f32 %v2502, 0.01
        %v2887 = vmul.f32 %v2504, 0.01
        %v2888 = vmul.f32 %v2508, 0.01
        %v2889 = vmul.f32 %v2510, 0.01
        %v2890 = vmul.f32 %v2512, 0.01
        %v2891 = vmul.f32 %v2514, 0.01
        %v2892 = vmul.f32 %v2518, 0.01
        %v2893 = vmul.f32 %v2520, 0.01
        %v2894 = vmul.f32 %v2522, 0.01
        %v2895 = vmul.f32 %v2524, 0.01
        %v2896 = vmul.f32 %v2528, 0.01
        %v2897 = vmul.f32 %v2530, 0.01
        %v2898 = vmul.f32 %v2532, 0.01
        %v2899 = vmul.f32 %v2534, 0.01
        %v2900 = vmul.f32 %v2538, 0.01
        %v2901 = vmul.f32 %v2540, 0.01
        %v2902 = vmul.f32 %v2542, 0.01
        %v2903 = vmul.f32 %v2544, 0.01
        %v2904 = vmul.f32 %v2548, 0.01
        %v2905 = vmul.f32 %v2550, 0.01
        %v2906 = vmul.f32 %v2552, 0.01
        %v2907 = vmul.f32 %v2554, 0.01
        %v2908 = vmul.f32 %v2558, 0.01
        %v2909 = vmul.f32 %v2560, 0.01
        %v2910 = vmul.f32 %v2562, 0.01
        %v2911 = vmul.f32 %v2564, 0.01
        %v2912 = vmul.f32 %v2568, 0.01
        %v2913 = vmul.f32 %v2570, 0.01
        %v2914 = vmul.f32 %v2572, 0.01
        %v2915 = vmul.f32 %v2574, 0.01
        %v2916 = vmul.f32 %v2578, 0.01
        %v2917 = vmul.f32 %v2580, 0.01
        %v2918 = vmul.f32 %v2582, 0.01
        %v2919 = vmul.f32 %v2584, 0.01
        %v2920 = vmul.f32 %v2588, 0.01
        %v2921 = vmul.f32 %v2590, 0.01
        %v2922 = vmul.f32 %v2592, 0.01
        %v2923 = vmul.f32 %v2594, 0.01
        %v2924 = vmul.f32 %v2598, 0.01
        %v2925 = vmul.f32 %v2600, 0.01
        %v2926 = vmul.f32 %v2602, 0.01
        %v2927 = vmul.f32 %v2604, 0.01
        %v2928 = vmul.f32 %v2608, 0.01
        %v2929 = vmul.f32 %v2610, 0.01
        %v2930 = vmul.f32 %v2612, 0.01
        %v2931 = vmul.f32 %v2614, 0.01
        %v2932 = vmul.f32 %v2618, 0.01
        %v2933 = vmul.f32 %v2620, 0.01
        %v2934 = vmul.f32 %v2622, 0.01
        %v2935 = vmul.f32 %v2624, 0.01
        %v2936 = vmul.f32 %v2628, 0.01
        %v2937 = vmul.f32 %v2630, 0.01
        %v2938 = vmul.f32 %v2632, 0.01
        %v2939 = vmul.f32 %v2634, 0.01
        %v2940 = vmul.f32 %v2638, 0.01
        %v2941 = vmul.f32 %v2640, 0.01
        %v2942 = vmul.f32 %v2642, 0.01
        %v2943 = vmul.f32 %v2644, 0.01
        %v2944 = vmul.f32 %v2648, 0.01
        %v2945 = vmul.f32 %v2650, 0.01
        %v2946 = vmul.f32 %v2652, 0.01
        %v2947 = vmul.f32 %v2654, 0.01
        %v2948 = vmul.f32 %v2658, 0.01
        %v2949 = vmul.f32 %v2660, 0.01
        %v2950 = vmul.f32 %v2662, 0.01
        %v2951 = vmul.f32 %v2664, 0.01
        %v2952 = vmul.f32 %v2668, 0.01
        %v2953 = vmul.f32 %v2670, 0.01
        %v2954 = vmul.f32 %v2672, 0.01
        %v2955 = vmul.f32 %v2674, 0.01
        %v2956 = vmul.f32 %v2678, 0.01
        %v2957 = vmul.f32 %v2680, 0.01
        %v2958 = vmul.f32 %v2682, 0.01
        %v2959 = vmul.f32 %v2684, 0.01
        %v2960 = vmul.f32 %v2688, 0.01
        %v2961 = vmul.f32 %v2690, 0.01
        %v2962 = vmul.f32 %v2692, 0.01
        %v2963 = vmul.f32 %v2694, 0.01
        %v2964 = vmul.f32 %v2698, 0.01
        %v2965 = vmul.f32 %v2700, 0.01
        %v2966 = vmul.f32 %v2702, 0.01
        %v2967 = vmul.f32 %v2704, 0.01
        %v2968 = vmul.f32 %v2708, 0.01
        %v2969 = vmul.f32 %v2710, 0.01
        %v2970 = vmul.f32 %v2712, 0.01
        %v2971 = vmul.f32 %v2714, 0.01
        %v2972 = vmax.f32 %v2078, %v2716
        %v2973 = vmax.f32 %v2080, %v2717
        %v2974 = vmax.f32 %v2082, %v2718
        %v2975 = vmax.f32 %v2084, %v2719
        %v2976 = vmax.f32 %v2088, %v2720
        %v2977 = vmax.f32 %v2090, %v2721
        %v2978 = vmax.f32 %v2092, %v2722
        %v2979 = vmax.f32 %v2094, %v2723
        %v2980 = vmax.f32 %v2098, %v2724
        %v2981 = vmax.f32 %v2100, %v2725
        %v2982 = vmax.f32 %v2102, %v2726
        %v2983 = vmax.f32 %v2104, %v2727
        %v2984 = vmax.f32 %v2108, %v2728
        %v2985 = vmax.f32 %v2110, %v2729
        %v2986 = vmax.f32 %v2112, %v2730
        %v2987 = vmax.f32 %v2114, %v2731
        %v2988 = vmax.f32 %v2118, %v2732
        %v2989 = vmax.f32 %v2120, %v2733
        %v2990 = vmax.f32 %v2122, %v2734
        %v2991 = vmax.f32 %v2124, %v2735
        %v2992 = vmax.f32 %v2128, %v2736
        %v2993 = vmax.f32 %v2130, %v2737
        %v2994 = vmax.f32 %v2132, %v2738
        %v2995 = vmax.f32 %v2134, %v2739
        %v2996 = vmax.f32 %v2138, %v2740
        %v2997 = vmax.f32 %v2140, %v2741
        %v2998 = vmax.f32 %v2142, %v2742
        %v2999 = vmax.f32 %v2144, %v2743
        %v3000 = vmax.f32 %v2148, %v2744
        %v3001 = vmax.f32 %v2150, %v2745
        %v3002 = vmax.f32 %v2152, %v2746
        %v3003 = vmax.f32 %v2154, %v2747
        %v3004 = vmax.f32 %v2158, %v2748
        %v3005 = vmax.f32 %v2160, %v2749
        %v3006 = vmax.f32 %v2162, %v2750
        %v3007 = vmax.f32 %v2164, %v2751
        %v3008 = vmax.f32 %v2168, %v2752
        %v3009 = vmax.f32 %v2170, %v2753
        %v3010 = vmax.f32 %v2172, %v2754
        %v3011 = vmax.f32 %v2174, %v2755
        %v3012 = vmax.f32 %v2178, %v2756
        %v3013 = vmax.f32 %v2180, %v2757
        %v3014 = vmax.f32 %v2182, %v2758
        %v3015 = vmax.f32 %v2184, %v2759
        %v3016 = vmax.f32 %v2188, %v2760
        %v3017 = vmax.f32 %v2190, %v2761
        %v3018 = vmax.f32 %v2192, %v2762
        %v3019 = vmax.f32 %v2194, %v2763
        %v3020 = vmax.f32 %v2198, %v2764
        %v3021 = vmax.f32 %v2200, %v2765
        %v3022 = vmax.f32 %v2202, %v2766
        %v3023 = vmax.f32 %v2204, %v2767
        %v3024 = vmax.f32 %v2208, %v2768
        %v3025 = vmax.f32 %v2210, %v2769
        %v3026 = vmax.f32 %v2212, %v2770
        %v3027 = vmax.f32 %v2214, %v2771
        %v3028 = vmax.f32 %v2218, %v2772
        %v3029 = vmax.f32 %v2220, %v2773
        %v3030 = vmax.f32 %v2222, %v2774
        %v3031 = vmax.f32 %v2224, %v2775
        %v3032 = vmax.f32 %v2228, %v2776
        %v3033 = vmax.f32 %v2230, %v2777
        %v3034 = vmax.f32 %v2232, %v2778
        %v3035 = vmax.f32 %v2234, %v2779
        %v3036 = vmax.f32 %v2238, %v2780
        %v3037 = vmax.f32 %v2240, %v2781
        %v3038 = vmax.f32 %v2242, %v2782
        %v3039 = vmax.f32 %v2244, %v2783
        %v3040 = vmax.f32 %v2248, %v2784
        %v3041 = vmax.f32 %v2250, %v2785
        %v3042 = vmax.f32 %v2252, %v2786
        %v3043 = vmax.f32 %v2254, %v2787
        %v3044 = vmax.f32 %v2258, %v2788
        %v3045 = vmax.f32 %v2260, %v2789
        %v3046 = vmax.f32 %v2262, %v2790
        %v3047 = vmax.f32 %v2264, %v2791
        %v3048 = vmax.f32 %v2268, %v2792
        %v3049 = vmax.f32 %v2270, %v2793
        %v3050 = vmax.f32 %v2272, %v2794
        %v3051 = vmax.f32 %v2274, %v2795
        %v3052 = vmax.f32 %v2278, %v2796
        %v3053 = vmax.f32 %v2280, %v2797
        %v3054 = vmax.f32 %v2282, %v2798
        %v3055 = vmax.f32 %v2284, %v2799
        %v3056 = vmax.f32 %v2288, %v2800
        %v3057 = vmax.f32 %v2290, %v2801
        %v3058 = vmax.f32 %v2292, %v2802
        %v3059 = vmax.f32 %v2294, %v2803
        %v3060 = vmax.f32 %v2298, %v2804
        %v3061 = vmax.f32 %v2300, %v2805
        %v3062 = vmax.f32 %v2302, %v2806
        %v3063 = vmax.f32 %v2304, %v2807
        %v3064 = vmax.f32 %v2308, %v2808
        %v3065 = vmax.f32 %v2310, %v2809
        %v3066 = vmax.f32 %v2312, %v2810
        %v3067 = vmax.f32 %v2314, %v2811
        %v3068 = vmax.f32 %v2318, %v2812
        %v3069 = vmax.f32 %v2320, %v2813
        %v3070 = vmax.f32 %v2322, %v2814
        %v3071 = vmax.f32 %v2324, %v2815
        %v3072 = vmax.f32 %v2328, %v2816
        %v3073 = vmax.f32 %v2330, %v2817
        %v3074 = vmax.f32 %v2332, %v2818
        %v3075 = vmax.f32 %v2334, %v2819
        %v3076 = vmax.f32 %v2338, %v2820
        %v3077 = vmax.f32 %v2340, %v2821
        %v3078 = vmax.f32 %v2342, %v2822
        %v3079 = vmax.f32 %v2344, %v2823
        %v3080 = vmax.f32 %v2348, %v2824
        %v3081 = vmax.f32 %v2350, %v2825
        %v3082 = vmax.f32 %v2352, %v2826
        %v3083 = vmax.f32 %v2354, %v2827
        %v3084 = vmax.f32 %v2358, %v2828
        %v3085 = vmax.f32 %v2360, %v2829
        %v3086 = vmax.f32 %v2362, %v2830
        %v3087 = vmax.f32 %v2364, %v2831
        %v3088 = vmax.f32 %v2368, %v2832
        %v3089 = vmax.f32 %v2370, %v2833
        %v3090 = vmax.f32 %v2372, %v2834
        %v3091 = vmax.f32 %v2374, %v2835
        %v3092 = vmax.f32 %v2378, %v2836
        %v3093 = vmax.f32 %v2380, %v2837
        %v3094 = vmax.f32 %v2382, %v2838
        %v3095 = vmax.f32 %v2384, %v2839
        %v3096 = vmax.f32 %v2388, %v2840
        %v3097 = vmax.f32 %v2390, %v2841
        %v3098 = vmax.f32 %v2392, %v2842
        %v3099 = vmax.f32 %v2394, %v2843
        %v3100 = vmax.f32 %v2398, %v2844
        %v3101 = vmax.f32 %v2400, %v2845
        %v3102 = vmax.f32 %v2402, %v2846
        %v3103 = vmax.f32 %v2404, %v2847
        %v3104 = vmax.f32 %v2408, %v2848
        %v3105 = vmax.f32 %v2410, %v2849
        %v3106 = vmax.f32 %v2412, %v2850
        %v3107 = vmax.f32 %v2414, %v2851
        %v3108 = vmax.f32 %v2418, %v2852
        %v3109 = vmax.f32 %v2420, %v2853
        %v3110 = vmax.f32 %v2422, %v2854
        %v3111 = vmax.f32 %v2424, %v2855
        %v3112 = vmax.f32 %v2428, %v2856
        %v3113 = vmax.f32 %v2430, %v2857
        %v3114 = vmax.f32 %v2432, %v2858
        %v3115 = vmax.f32 %v2434, %v2859
        %v3116 = vmax.f32 %v2438, %v2860
        %v3117 = vmax.f32 %v2440, %v2861
        %v3118 = vmax.f32 %v2442, %v2862
        %v3119 = vmax.f32 %v2444, %v2863
        %v3120 = vmax.f32 %v2448, %v2864
        %v3121 = vmax.f32 %v2450, %v2865
        %v3122 = vmax.f32 %v2452, %v2866
        %v3123 = vmax.f32 %v2454, %v2867
        %v3124 = vmax.f32 %v2458, %v2868
        %v3125 = vmax.f32 %v2460, %v2869
        %v3126 = vmax.f32 %v2462, %v2870
        %v3127 = vmax.f32 %v2464, %v2871
        %v3128 = vmax.f32 %v2468, %v2872
        %v3129 = vmax.f32 %v2470, %v2873
        %v3130 = vmax.f32 %v2472, %v2874
        %v3131 = vmax.f32 %v2474, %v2875
        %v3132 = vmax.f32 %v2478, %v2876
        %v3133 = vmax.f32 %v2480, %v2877
        %v3134 = vmax.f32 %v2482, %v2878
        %v3135 = vmax.f32 %v2484, %v2879
        %v3136 = vmax.f32 %v2488, %v2880
        %v3137 = vmax.f32 %v2490, %v2881
        %v3138 = vmax.f32 %v2492, %v2882
        %v3139 = vmax.f32 %v2494, %v2883
        %v3140 = vmax.f32 %v2498, %v2884
        %v3141 = vmax.f32 %v2500, %v2885
        %v3142 = vmax.f32 %v2502, %v2886
        %v3143 = vmax.f32 %v2504, %v2887
        %v3144 = vmax.f32 %v2508, %v2888
        %v3145 = vmax.f32 %v2510, %v2889
        %v3146 = vmax.f32 %v2512, %v2890
        %v3147 = vmax.f32 %v2514, %v2891
        %v3148 = vmax.f32 %v2518, %v2892
        %v3149 = vmax.f32 %v2520, %v2893
        %v3150 = vmax.f32 %v2522, %v2894
        %v3151 = vmax.f32 %v2524, %v2895
        %v3152 = vmax.f32 %v2528, %v2896
        %v3153 = vmax.f32 %v2530, %v2897
        %v3154 = vmax.f32 %v2532, %v2898
        %v3155 = vmax.f32 %v2534, %v2899
        %v3156 = vmax.f32 %v2538, %v2900
        %v3157 = vmax.f32 %v2540, %v2901
        %v3158 = vmax.f32 %v2542, %v2902
        %v3159 = vmax.f32 %v2544, %v2903
        %v3160 = vmax.f32 %v2548, %v2904
        %v3161 = vmax.f32 %v2550, %v2905
        %v3162 = vmax.f32 %v2552, %v2906
        %v3163 = vmax.f32 %v2554, %v2907
        %v3164 = vmax.f32 %v2558, %v2908
        %v3165 = vmax.f32 %v2560, %v2909
        %v3166 = vmax.f32 %v2562, %v2910
        %v3167 = vmax.f32 %v2564, %v2911
        %v3168 = vmax.f32 %v2568, %v2912
        %v3169 = vmax.f32 %v2570, %v2913
        %v3170 = vmax.f32 %v2572, %v2914
        %v3171 = vmax.f32 %v2574, %v2915
        %v3172 = vmax.f32 %v2578, %v2916
        %v3173 = vmax.f32 %v2580, %v2917
        %v3174 = vmax.f32 %v2582, %v2918
        %v3175 = vmax.f32 %v2584, %v2919
        %v3176 = vmax.f32 %v2588, %v2920
        %v3177 = vmax.f32 %v2590, %v2921
        %v3178 = vmax.f32 %v2592, %v2922
        %v3179 = vmax.f32 %v2594, %v2923
        %v3180 = vmax.f32 %v2598, %v2924
        %v3181 = vmax.f32 %v2600, %v2925
        %v3182 = vmax.f32 %v2602, %v2926
        %v3183 = vmax.f32 %v2604, %v2927
        %v3184 = vmax.f32 %v2608, %v2928
        %v3185 = vmax.f32 %v2610, %v2929
        %v3186 = vmax.f32 %v2612, %v2930
        %v3187 = vmax.f32 %v2614, %v2931
        %v3188 = vmax.f32 %v2618, %v2932
        %v3189 = vmax.f32 %v2620, %v2933
        %v3190 = vmax.f32 %v2622, %v2934
        %v3191 = vmax.f32 %v2624, %v2935
        %v3192 = vmax.f32 %v2628, %v2936
        %v3193 = vmax.f32 %v2630, %v2937
        %v3194 = vmax.f32 %v2632, %v2938
        %v3195 = vmax.f32 %v2634, %v2939
        %v3196 = vmax.f32 %v2638, %v2940
        %v3197 = vmax.f32 %v2640, %v2941
        %v3198 = vmax.f32 %v2642, %v2942
        %v3199 = vmax.f32 %v2644, %v2943
        %v3200 = vmax.f32 %v2648, %v2944
        %v3201 = vmax.f32 %v2650, %v2945
        %v3202 = vmax.f32 %v2652, %v2946
        %v3203 = vmax.f32 %v2654, %v2947
        %v3204 = vmax.f32 %v2658, %v2948
        %v3205 = vmax.f32 %v2660, %v2949
        %v3206 = vmax.f32 %v2662, %v2950
        %v3207 = vmax.f32 %v2664, %v2951
        %v3208 = vmax.f32 %v2668, %v2952
        %v3209 = vmax.f32 %v2670, %v2953
        %v3210 = vmax.f32 %v2672, %v2954
        %v3211 = vmax.f32 %v2674, %v2955
        %v3212 = vmax.f32 %v2678, %v2956
        %v3213 = vmax.f32 %v2680, %v2957
        %v3214 = vmax.f32 %v2682, %v2958
        %v3215 = vmax.f32 %v2684, %v2959
        %v3216 = vmax.f32 %v2688, %v2960
        %v3217 = vmax.f32 %v2690, %v2961
        %v3218 = vmax.f32 %v2692, %v2962
        %v3219 = vmax.f32 %v2694, %v2963
        %v3220 = vmax.f32 %v2698, %v2964
        %v3221 = vmax.f32 %v2700, %v2965
        %v3222 = vmax.f32 %v2702, %v2966
        %v3223 = vmax.f32 %v2704, %v2967
        %v3224 = vmax.f32 %v2708, %v2968
        %v3225 = vmax.f32 %v2710, %v2969
        %v3226 = vmax.f32 %v2712, %v2970
        %v3227 = vmax.f32 %v2714, %v2971
        %v3228 = vpack.c.bf16 %v2974, %v2972
        %v3229 = vpack.c.bf16 %v2975, %v2973
        %v3230 = vpack.c.bf16 %v2978, %v2976
        %v3231 = vpack.c.bf16 %v2979, %v2977
        %v3232 = vpack.c.bf16 %v2982, %v2980
        %v3233 = vpack.c.bf16 %v2983, %v2981
        %v3234 = vpack.c.bf16 %v2986, %v2984
        %v3235 = vpack.c.bf16 %v2987, %v2985
        %v3236 = vpack.c.bf16 %v2990, %v2988
        %v3237 = vpack.c.bf16 %v2991, %v2989
        %v3238 = vpack.c.bf16 %v2994, %v2992
        %v3239 = vpack.c.bf16 %v2995, %v2993
        %v3240 = vpack.c.bf16 %v2998, %v2996
        %v3241 = vpack.c.bf16 %v2999, %v2997
        %v3242 = vpack.c.bf16 %v3002, %v3000
        %v3243 = vpack.c.bf16 %v3003, %v3001
        %v3244 = vpack.c.bf16 %v3006, %v3004
        %v3245 = vpack.c.bf16 %v3007, %v3005
        %v3246 = vpack.c.bf16 %v3010, %v3008
        %v3247 = vpack.c.bf16 %v3011, %v3009
        %v3248 = vpack.c.bf16 %v3014, %v3012
        %v3249 = vpack.c.bf16 %v3015, %v3013
        %v3250 = vpack.c.bf16 %v3018, %v3016
        %v3251 = vpack.c.bf16 %v3019, %v3017
        %v3252 = vpack.c.bf16 %v3022, %v3020
        %v3253 = vpack.c.bf16 %v3023, %v3021
        %v3254 = vpack.c.bf16 %v3026, %v3024
        %v3255 = vpack.c.bf16 %v3027, %v3025
        %v3256 = vpack.c.bf16 %v3030, %v3028
        %v3257 = vpack.c.bf16 %v3031, %v3029
        %v3258 = vpack.c.bf16 %v3034, %v3032
        %v3259 = vpack.c.bf16 %v3035, %v3033
        %v3260 = vpack.c.bf16 %v3038, %v3036
        %v3261 = vpack.c.bf16 %v3039, %v3037
        %v3262 = vpack.c.bf16 %v3042, %v3040
        %v3263 = vpack.c.bf16 %v3043, %v3041
        %v3264 = vpack.c.bf16 %v3046, %v3044
        %v3265 = vpack.c.bf16 %v3047, %v3045
        %v3266 = vpack.c.bf16 %v3050, %v3048
        %v3267 = vpack.c.bf16 %v3051, %v3049
        %v3268 = vpack.c.bf16 %v3054, %v3052
        %v3269 = vpack.c.bf16 %v3055, %v3053
        %v3270 = vpack.c.bf16 %v3058, %v3056
        %v3271 = vpack.c.bf16 %v3059, %v3057
        %v3272 = vpack.c.bf16 %v3062, %v3060
        %v3273 = vpack.c.bf16 %v3063, %v3061
        %v3274 = vpack.c.bf16 %v3066, %v3064
        %v3275 = vpack.c.bf16 %v3067, %v3065
        %v3276 = vpack.c.bf16 %v3070, %v3068
        %v3277 = vpack.c.bf16 %v3071, %v3069
        %v3278 = vpack.c.bf16 %v3074, %v3072
        %v3279 = vpack.c.bf16 %v3075, %v3073
        %v3280 = vpack.c.bf16 %v3078, %v3076
        %v3281 = vpack.c.bf16 %v3079, %v3077
        %v3282 = vpack.c.bf16 %v3082, %v3080
        %v3283 = vpack.c.bf16 %v3083, %v3081
        %v3284 = vpack.c.bf16 %v3086, %v3084
        %v3285 = vpack.c.bf16 %v3087, %v3085
        %v3286 = vpack.c.bf16 %v3090, %v3088
        %v3287 = vpack.c.bf16 %v3091, %v3089
        %v3288 = vpack.c.bf16 %v3094, %v3092
        %v3289 = vpack.c.bf16 %v3095, %v3093
        %v3290 = vpack.c.bf16 %v3098, %v3096
        %v3291 = vpack.c.bf16 %v3099, %v3097
        %v3292 = vpack.c.bf16 %v3102, %v3100
        %v3293 = vpack.c.bf16 %v3103, %v3101
        %v3294 = vpack.c.bf16 %v3106, %v3104
        %v3295 = vpack.c.bf16 %v3107, %v3105
        %v3296 = vpack.c.bf16 %v3110, %v3108
        %v3297 = vpack.c.bf16 %v3111, %v3109
        %v3298 = vpack.c.bf16 %v3114, %v3112
        %v3299 = vpack.c.bf16 %v3115, %v3113
        %v3300 = vpack.c.bf16 %v3118, %v3116
        %v3301 = vpack.c.bf16 %v3119, %v3117
        %v3302 = vpack.c.bf16 %v3122, %v3120
        %v3303 = vpack.c.bf16 %v3123, %v3121
        %v3304 = vpack.c.bf16 %v3126, %v3124
        %v3305 = vpack.c.bf16 %v3127, %v3125
        %v3306 = vpack.c.bf16 %v3130, %v3128
        %v3307 = vpack.c.bf16 %v3131, %v3129
        %v3308 = vpack.c.bf16 %v3134, %v3132
        %v3309 = vpack.c.bf16 %v3135, %v3133
        %v3310 = vpack.c.bf16 %v3138, %v3136
        %v3311 = vpack.c.bf16 %v3139, %v3137
        %v3312 = vpack.c.bf16 %v3142, %v3140
        %v3313 = vpack.c.bf16 %v3143, %v3141
        %v3314 = vpack.c.bf16 %v3146, %v3144
        %v3315 = vpack.c.bf16 %v3147, %v3145
        %v3316 = vpack.c.bf16 %v3150, %v3148
        %v3317 = vpack.c.bf16 %v3151, %v3149
        %v3318 = vpack.c.bf16 %v3154, %v3152
        %v3319 = vpack.c.bf16 %v3155, %v3153
        %v3320 = vpack.c.bf16 %v3158, %v3156
        %v3321 = vpack.c.bf16 %v3159, %v3157
        %v3322 = vpack.c.bf16 %v3162, %v3160
        %v3323 = vpack.c.bf16 %v3163, %v3161
        %v3324 = vpack.c.bf16 %v3166, %v3164
        %v3325 = vpack.c.bf16 %v3167, %v3165
        %v3326 = vpack.c.bf16 %v3170, %v3168
        %v3327 = vpack.c.bf16 %v3171, %v3169
        %v3328 = vpack.c.bf16 %v3174, %v3172
        %v3329 = vpack.c.bf16 %v3175, %v3173
        %v3330 = vpack.c.bf16 %v3178, %v3176
        %v3331 = vpack.c.bf16 %v3179, %v3177
        %v3332 = vpack.c.bf16 %v3182, %v3180
        %v3333 = vpack.c.bf16 %v3183, %v3181
        %v3334 = vpack.c.bf16 %v3186, %v3184
        %v3335 = vpack.c.bf16 %v3187, %v3185
        %v3336 = vpack.c.bf16 %v3190, %v3188
        %v3337 = vpack.c.bf16 %v3191, %v3189
        %v3338 = vpack.c.bf16 %v3194, %v3192
        %v3339 = vpack.c.bf16 %v3195, %v3193
        %v3340 = vpack.c.bf16 %v3198, %v3196
        %v3341 = vpack.c.bf16 %v3199, %v3197
        %v3342 = vpack.c.bf16 %v3202, %v3200
        %v3343 = vpack.c.bf16 %v3203, %v3201
        %v3344 = vpack.c.bf16 %v3206, %v3204
        %v3345 = vpack.c.bf16 %v3207, %v3205
        %v3346 = vpack.c.bf16 %v3210, %v3208
        %v3347 = vpack.c.bf16 %v3211, %v3209
        %v3348 = vpack.c.bf16 %v3214, %v3212
        %v3349 = vpack.c.bf16 %v3215, %v3213
        %v3350 = vpack.c.bf16 %v3218, %v3216
        %v3351 = vpack.c.bf16 %v3219, %v3217
        %v3352 = vpack.c.bf16 %v3222, %v3220
        %v3353 = vpack.c.bf16 %v3223, %v3221
        %v3354 = vpack.c.bf16 %v3226, %v3224
        %v3355 = vpack.c.bf16 %v3227, %v3225
        %v3484 = vunpack.c.l.b16 %v3228
        %v3485 = vunpack.c.l.b16 %v3229
        %v3486 = vunpack.c.h.b16 %v3228
        %v3487 = vunpack.c.h.b16 %v3229
        %v3488 = vunpack.c.l.b16 %v3230
        %v3489 = vunpack.c.l.b16 %v3231
        %v3490 = vunpack.c.h.b16 %v3230
        %v3491 = vunpack.c.h.b16 %v3231
        %v3492 = vunpack.c.l.b16 %v3232
        %v3493 = vunpack.c.l.b16 %v3233
        %v3494 = vunpack.c.h.b16 %v3232
        %v3495 = vunpack.c.h.b16 %v3233
        %v3496 = vunpack.c.l.b16 %v3234
        %v3497 = vunpack.c.l.b16 %v3235
        %v3498 = vunpack.c.h.b16 %v3234
        %v3499 = vunpack.c.h.b16 %v3235
        %v3500 = vunpack.c.l.b16 %v3236
        %v3501 = vunpack.c.l.b16 %v3237
        %v3502 = vunpack.c.h.b16 %v3236
        %v3503 = vunpack.c.h.b16 %v3237
        %v3504 = vunpack.c.l.b16 %v3238
        %v3505 = vunpack.c.l.b16 %v3239
        %v3506 = vunpack.c.h.b16 %v3238
        %v3507 = vunpack.c.h.b16 %v3239
        %v3508 = vunpack.c.l.b16 %v3240
        %v3509 = vunpack.c.l.b16 %v3241
        %v3510 = vunpack.c.h.b16 %v3240
        %v3511 = vunpack.c.h.b16 %v3241
        %v3512 = vunpack.c.l.b16 %v3242
        %v3513 = vunpack.c.l.b16 %v3243
        %v3514 = vunpack.c.h.b16 %v3242
        %v3515 = vunpack.c.h.b16 %v3243
        %v3516 = vunpack.c.l.b16 %v3244
        %v3517 = vunpack.c.l.b16 %v3245
        %v3518 = vunpack.c.h.b16 %v3244
        %v3519 = vunpack.c.h.b16 %v3245
        %v3520 = vunpack.c.l.b16 %v3246
        %v3521 = vunpack.c.l.b16 %v3247
        %v3522 = vunpack.c.h.b16 %v3246
        %v3523 = vunpack.c.h.b16 %v3247
        %v3524 = vunpack.c.l.b16 %v3248
        %v3525 = vunpack.c.l.b16 %v3249
        %v3526 = vunpack.c.h.b16 %v3248
        %v3527 = vunpack.c.h.b16 %v3249
        %v3528 = vunpack.c.l.b16 %v3250
        %v3529 = vunpack.c.l.b16 %v3251
        %v3530 = vunpack.c.h.b16 %v3250
        %v3531 = vunpack.c.h.b16 %v3251
        %v3532 = vunpack.c.l.b16 %v3252
        %v3533 = vunpack.c.l.b16 %v3253
        %v3534 = vunpack.c.h.b16 %v3252
        %v3535 = vunpack.c.h.b16 %v3253
        %v3536 = vunpack.c.l.b16 %v3254
        %v3537 = vunpack.c.l.b16 %v3255
        %v3538 = vunpack.c.h.b16 %v3254
        %v3539 = vunpack.c.h.b16 %v3255
        %v3540 = vunpack.c.l.b16 %v3256
        %v3541 = vunpack.c.l.b16 %v3257
        %v3542 = vunpack.c.h.b16 %v3256
        %v3543 = vunpack.c.h.b16 %v3257
        %v3544 = vunpack.c.l.b16 %v3258
        %v3545 = vunpack.c.l.b16 %v3259
        %v3546 = vunpack.c.h.b16 %v3258
        %v3547 = vunpack.c.h.b16 %v3259
        %v3548 = vunpack.c.l.b16 %v3260
        %v3549 = vunpack.c.l.b16 %v3261
        %v3550 = vunpack.c.h.b16 %v3260
        %v3551 = vunpack.c.h.b16 %v3261
        %v3552 = vunpack.c.l.b16 %v3262
        %v3553 = vunpack.c.l.b16 %v3263
        %v3554 = vunpack.c.h.b16 %v3262
        %v3555 = vunpack.c.h.b16 %v3263
        %v3556 = vunpack.c.l.b16 %v3264
        %v3557 = vunpack.c.l.b16 %v3265
        %v3558 = vunpack.c.h.b16 %v3264
        %v3559 = vunpack.c.h.b16 %v3265
        %v3560 = vunpack.c.l.b16 %v3266
        %v3561 = vunpack.c.l.b16 %v3267
        %v3562 = vunpack.c.h.b16 %v3266
        %v3563 = vunpack.c.h.b16 %v3267
        %v3564 = vunpack.c.l.b16 %v3268
        %v3565 = vunpack.c.l.b16 %v3269
        %v3566 = vunpack.c.h.b16 %v3268
        %v3567 = vunpack.c.h.b16 %v3269
        %v3568 = vunpack.c.l.b16 %v3270
        %v3569 = vunpack.c.l.b16 %v3271
        %v3570 = vunpack.c.h.b16 %v3270
        %v3571 = vunpack.c.h.b16 %v3271
        %v3572 = vunpack.c.l.b16 %v3272
        %v3573 = vunpack.c.l.b16 %v3273
        %v3574 = vunpack.c.h.b16 %v3272
        %v3575 = vunpack.c.h.b16 %v3273
        %v3576 = vunpack.c.l.b16 %v3274
        %v3577 = vunpack.c.l.b16 %v3275
        %v3578 = vunpack.c.h.b16 %v3274
        %v3579 = vunpack.c.h.b16 %v3275
        %v3580 = vunpack.c.l.b16 %v3276
        %v3581 = vunpack.c.l.b16 %v3277
        %v3582 = vunpack.c.h.b16 %v3276
        %v3583 = vunpack.c.h.b16 %v3277
        %v3584 = vunpack.c.l.b16 %v3278
        %v3585 = vunpack.c.l.b16 %v3279
        %v3586 = vunpack.c.h.b16 %v3278
        %v3587 = vunpack.c.h.b16 %v3279
        %v3588 = vunpack.c.l.b16 %v3280
        %v3589 = vunpack.c.l.b16 %v3281
        %v3590 = vunpack.c.h.b16 %v3280
        %v3591 = vunpack.c.h.b16 %v3281
        %v3592 = vunpack.c.l.b16 %v3282
        %v3593 = vunpack.c.l.b16 %v3283
        %v3594 = vunpack.c.h.b16 %v3282
        %v3595 = vunpack.c.h.b16 %v3283
        %v3596 = vunpack.c.l.b16 %v3284
        %v3597 = vunpack.c.l.b16 %v3285
        %v3598 = vunpack.c.h.b16 %v3284
        %v3599 = vunpack.c.h.b16 %v3285
        %v3600 = vunpack.c.l.b16 %v3286
        %v3601 = vunpack.c.l.b16 %v3287
        %v3602 = vunpack.c.h.b16 %v3286
        %v3603 = vunpack.c.h.b16 %v3287
        %v3604 = vunpack.c.l.b16 %v3288
        %v3605 = vunpack.c.l.b16 %v3289
        %v3606 = vunpack.c.h.b16 %v3288
        %v3607 = vunpack.c.h.b16 %v3289
        %v3608 = vunpack.c.l.b16 %v3290
        %v3609 = vunpack.c.l.b16 %v3291
        %v3610 = vunpack.c.h.b16 %v3290
        %v3611 = vunpack.c.h.b16 %v3291
        %v3612 = vunpack.c.l.b16 %v3292
        %v3613 = vunpack.c.l.b16 %v3293
        %v3614 = vunpack.c.h.b16 %v3292
        %v3615 = vunpack.c.h.b16 %v3293
        %v3616 = vunpack.c.l.b16 %v3294
        %v3617 = vunpack.c.l.b16 %v3295
        %v3618 = vunpack.c.h.b16 %v3294
        %v3619 = vunpack.c.h.b16 %v3295
        %v3620 = vunpack.c.l.b16 %v3296
        %v3621 = vunpack.c.l.b16 %v3297
        %v3622 = vunpack.c.h.b16 %v3296
        %v3623 = vunpack.c.h.b16 %v3297
        %v3624 = vunpack.c.l.b16 %v3298
        %v3625 = vunpack.c.l.b16 %v3299
        %v3626 = vunpack.c.h.b16 %v3298
        %v3627 = vunpack.c.h.b16 %v3299
        %v3628 = vunpack.c.l.b16 %v3300
        %v3629 = vunpack.c.l.b16 %v3301
        %v3630 = vunpack.c.h.b16 %v3300
        %v3631 = vunpack.c.h.b16 %v3301
        %v3632 = vunpack.c.l.b16 %v3302
        %v3633 = vunpack.c.l.b16 %v3303
        %v3634 = vunpack.c.h.b16 %v3302
        %v3635 = vunpack.c.h.b16 %v3303
        %v3636 = vunpack.c.l.b16 %v3304
        %v3637 = vunpack.c.l.b16 %v3305
        %v3638 = vunpack.c.h.b16 %v3304
        %v3639 = vunpack.c.h.b16 %v3305
        %v3640 = vunpack.c.l.b16 %v3306
        %v3641 = vunpack.c.l.b16 %v3307
        %v3642 = vunpack.c.h.b16 %v3306
        %v3643 = vunpack.c.h.b16 %v3307
        %v3644 = vunpack.c.l.b16 %v3308
        %v3645 = vunpack.c.l.b16 %v3309
        %v3646 = vunpack.c.h.b16 %v3308
        %v3647 = vunpack.c.h.b16 %v3309
        %v3648 = vunpack.c.l.b16 %v3310
        %v3649 = vunpack.c.l.b16 %v3311
        %v3650 = vunpack.c.h.b16 %v3310
        %v3651 = vunpack.c.h.b16 %v3311
        %v3652 = vunpack.c.l.b16 %v3312
        %v3653 = vunpack.c.l.b16 %v3313
        %v3654 = vunpack.c.h.b16 %v3312
        %v3655 = vunpack.c.h.b16 %v3313
        %v3656 = vunpack.c.l.b16 %v3314
        %v3657 = vunpack.c.l.b16 %v3315
        %v3658 = vunpack.c.h.b16 %v3314
        %v3659 = vunpack.c.h.b16 %v3315
        %v3660 = vunpack.c.l.b16 %v3316
        %v3661 = vunpack.c.l.b16 %v3317
        %v3662 = vunpack.c.h.b16 %v3316
        %v3663 = vunpack.c.h.b16 %v3317
        %v3664 = vunpack.c.l.b16 %v3318
        %v3665 = vunpack.c.l.b16 %v3319
        %v3666 = vunpack.c.h.b16 %v3318
        %v3667 = vunpack.c.h.b16 %v3319
        %v3668 = vunpack.c.l.b16 %v3320
        %v3669 = vunpack.c.l.b16 %v3321
        %v3670 = vunpack.c.h.b16 %v3320
        %v3671 = vunpack.c.h.b16 %v3321
        %v3672 = vunpack.c.l.b16 %v3322
        %v3673 = vunpack.c.l.b16 %v3323
        %v3674 = vunpack.c.h.b16 %v3322
        %v3675 = vunpack.c.h.b16 %v3323
        %v3676 = vunpack.c.l.b16 %v3324
        %v3677 = vunpack.c.l.b16 %v3325
        %v3678 = vunpack.c.h.b16 %v3324
        %v3679 = vunpack.c.h.b16 %v3325
        %v3680 = vunpack.c.l.b16 %v3326
        %v3681 = vunpack.c.l.b16 %v3327
        %v3682 = vunpack.c.h.b16 %v3326
        %v3683 = vunpack.c.h.b16 %v3327
        %v3684 = vunpack.c.l.b16 %v3328
        %v3685 = vunpack.c.l.b16 %v3329
        %v3686 = vunpack.c.h.b16 %v3328
        %v3687 = vunpack.c.h.b16 %v3329
        %v3688 = vunpack.c.l.b16 %v3330
        %v3689 = vunpack.c.l.b16 %v3331
        %v3690 = vunpack.c.h.b16 %v3330
        %v3691 = vunpack.c.h.b16 %v3331
        %v3692 = vunpack.c.l.b16 %v3332
        %v3693 = vunpack.c.l.b16 %v3333
        %v3694 = vunpack.c.h.b16 %v3332
        %v3695 = vunpack.c.h.b16 %v3333
        %v3696 = vunpack.c.l.b16 %v3334
        %v3697 = vunpack.c.l.b16 %v3335
        %v3698 = vunpack.c.h.b16 %v3334
        %v3699 = vunpack.c.h.b16 %v3335
        %v3700 = vunpack.c.l.b16 %v3336
        %v3701 = vunpack.c.l.b16 %v3337
        %v3702 = vunpack.c.h.b16 %v3336
        %v3703 = vunpack.c.h.b16 %v3337
        %v3704 = vunpack.c.l.b16 %v3338
        %v3705 = vunpack.c.l.b16 %v3339
        %v3706 = vunpack.c.h.b16 %v3338
        %v3707 = vunpack.c.h.b16 %v3339
        %v3708 = vunpack.c.l.b16 %v3340
        %v3709 = vunpack.c.l.b16 %v3341
        %v3710 = vunpack.c.h.b16 %v3340
        %v3711 = vunpack.c.h.b16 %v3341
        %v3712 = vunpack.c.l.b16 %v3342
        %v3713 = vunpack.c.l.b16 %v3343
        %v3714 = vunpack.c.h.b16 %v3342
        %v3715 = vunpack.c.h.b16 %v3343
        %v3716 = vunpack.c.l.b16 %v3344
        %v3717 = vunpack.c.l.b16 %v3345
        %v3718 = vunpack.c.h.b16 %v3344
        %v3719 = vunpack.c.h.b16 %v3345
        %v3720 = vunpack.c.l.b16 %v3346
        %v3721 = vunpack.c.l.b16 %v3347
        %v3722 = vunpack.c.h.b16 %v3346
        %v3723 = vunpack.c.h.b16 %v3347
        %v3724 = vunpack.c.l.b16 %v3348
        %v3725 = vunpack.c.l.b16 %v3349
        %v3726 = vunpack.c.h.b16 %v3348
        %v3727 = vunpack.c.h.b16 %v3349
        %v3728 = vunpack.c.l.b16 %v3350
        %v3729 = vunpack.c.l.b16 %v3351
        %v3730 = vunpack.c.h.b16 %v3350
        %v3731 = vunpack.c.h.b16 %v3351
        %v3732 = vunpack.c.l.b16 %v3352
        %v3733 = vunpack.c.l.b16 %v3353
        %v3734 = vunpack.c.h.b16 %v3352
        %v3735 = vunpack.c.h.b16 %v3353
        %v3736 = vunpack.c.l.b16 %v3354
        %v3737 = vunpack.c.l.b16 %v3355
        %v3738 = vunpack.c.h.b16 %v3354
        %v3739 = vunpack.c.h.b16 %v3355
        %v3740 = vpack.c.b16 %v3485, %v3484
        %v3741 = vpack.c.b16 %v3487, %v3486
        %v3742 = vpack.c.b16 %v3489, %v3488
        %v3743 = vpack.c.b16 %v3491, %v3490
        %v3744 = vpack.c.b16 %v3493, %v3492
        %v3745 = vpack.c.b16 %v3495, %v3494
        %v3746 = vpack.c.b16 %v3497, %v3496
        %v3747 = vpack.c.b16 %v3499, %v3498
        %v3748 = vpack.c.b16 %v3501, %v3500
        %v3749 = vpack.c.b16 %v3503, %v3502
        %v3750 = vpack.c.b16 %v3505, %v3504
        %v3751 = vpack.c.b16 %v3507, %v3506
        %v3752 = vpack.c.b16 %v3509, %v3508
        %v3753 = vpack.c.b16 %v3511, %v3510
        %v3754 = vpack.c.b16 %v3513, %v3512
        %v3755 = vpack.c.b16 %v3515, %v3514
        %v3756 = vpack.c.b16 %v3517, %v3516
        %v3757 = vpack.c.b16 %v3519, %v3518
        %v3758 = vpack.c.b16 %v3521, %v3520
        %v3759 = vpack.c.b16 %v3523, %v3522
        %v3760 = vpack.c.b16 %v3525, %v3524
        %v3761 = vpack.c.b16 %v3527, %v3526
        %v3762 = vpack.c.b16 %v3529, %v3528
        %v3763 = vpack.c.b16 %v3531, %v3530
        %v3764 = vpack.c.b16 %v3533, %v3532
        %v3765 = vpack.c.b16 %v3535, %v3534
        %v3766 = vpack.c.b16 %v3537, %v3536
        %v3767 = vpack.c.b16 %v3539, %v3538
        %v3768 = vpack.c.b16 %v3541, %v3540
        %v3769 = vpack.c.b16 %v3543, %v3542
        %v3770 = vpack.c.b16 %v3545, %v3544
        %v3771 = vpack.c.b16 %v3547, %v3546
        %v3772 = vpack.c.b16 %v3549, %v3548
        %v3773 = vpack.c.b16 %v3551, %v3550
        %v3774 = vpack.c.b16 %v3553, %v3552
        %v3775 = vpack.c.b16 %v3555, %v3554
        %v3776 = vpack.c.b16 %v3557, %v3556
        %v3777 = vpack.c.b16 %v3559, %v3558
        %v3778 = vpack.c.b16 %v3561, %v3560
        %v3779 = vpack.c.b16 %v3563, %v3562
        %v3780 = vpack.c.b16 %v3565, %v3564
        %v3781 = vpack.c.b16 %v3567, %v3566
        %v3782 = vpack.c.b16 %v3569, %v3568
        %v3783 = vpack.c.b16 %v3571, %v3570
        %v3784 = vpack.c.b16 %v3573, %v3572
        %v3785 = vpack.c.b16 %v3575, %v3574
        %v3786 = vpack.c.b16 %v3577, %v3576
        %v3787 = vpack.c.b16 %v3579, %v3578
        %v3788 = vpack.c.b16 %v3581, %v3580
        %v3789 = vpack.c.b16 %v3583, %v3582
        %v3790 = vpack.c.b16 %v3585, %v3584
        %v3791 = vpack.c.b16 %v3587, %v3586
        %v3792 = vpack.c.b16 %v3589, %v3588
        %v3793 = vpack.c.b16 %v3591, %v3590
        %v3794 = vpack.c.b16 %v3593, %v3592
        %v3795 = vpack.c.b16 %v3595, %v3594
        %v3796 = vpack.c.b16 %v3597, %v3596
        %v3797 = vpack.c.b16 %v3599, %v3598
        %v3798 = vpack.c.b16 %v3601, %v3600
        %v3799 = vpack.c.b16 %v3603, %v3602
        %v3800 = vpack.c.b16 %v3605, %v3604
        %v3801 = vpack.c.b16 %v3607, %v3606
        %v3802 = vpack.c.b16 %v3609, %v3608
        %v3803 = vpack.c.b16 %v3611, %v3610
        %v3804 = vpack.c.b16 %v3613, %v3612
        %v3805 = vpack.c.b16 %v3615, %v3614
        %v3806 = vpack.c.b16 %v3617, %v3616
        %v3807 = vpack.c.b16 %v3619, %v3618
        %v3808 = vpack.c.b16 %v3621, %v3620
        %v3809 = vpack.c.b16 %v3623, %v3622
        %v3810 = vpack.c.b16 %v3625, %v3624
        %v3811 = vpack.c.b16 %v3627, %v3626
        %v3812 = vpack.c.b16 %v3629, %v3628
        %v3813 = vpack.c.b16 %v3631, %v3630
        %v3814 = vpack.c.b16 %v3633, %v3632
        %v3815 = vpack.c.b16 %v3635, %v3634
        %v3816 = vpack.c.b16 %v3637, %v3636
        %v3817 = vpack.c.b16 %v3639, %v3638
        %v3818 = vpack.c.b16 %v3641, %v3640
        %v3819 = vpack.c.b16 %v3643, %v3642
        %v3820 = vpack.c.b16 %v3645, %v3644
        %v3821 = vpack.c.b16 %v3647, %v3646
        %v3822 = vpack.c.b16 %v3649, %v3648
        %v3823 = vpack.c.b16 %v3651, %v3650
        %v3824 = vpack.c.b16 %v3653, %v3652
        %v3825 = vpack.c.b16 %v3655, %v3654
        %v3826 = vpack.c.b16 %v3657, %v3656
        %v3827 = vpack.c.b16 %v3659, %v3658
        %v3828 = vpack.c.b16 %v3661, %v3660
        %v3829 = vpack.c.b16 %v3663, %v3662
        %v3830 = vpack.c.b16 %v3665, %v3664
        %v3831 = vpack.c.b16 %v3667, %v3666
        %v3832 = vpack.c.b16 %v3669, %v3668
        %v3833 = vpack.c.b16 %v3671, %v3670
        %v3834 = vpack.c.b16 %v3673, %v3672
        %v3835 = vpack.c.b16 %v3675, %v3674
        %v3836 = vpack.c.b16 %v3677, %v3676
        %v3837 = vpack.c.b16 %v3679, %v3678
        %v3838 = vpack.c.b16 %v3681, %v3680
        %v3839 = vpack.c.b16 %v3683, %v3682
        %v3840 = vpack.c.b16 %v3685, %v3684
        %v3841 = vpack.c.b16 %v3687, %v3686
        %v3842 = vpack.c.b16 %v3689, %v3688
        %v3843 = vpack.c.b16 %v3691, %v3690
        %v3844 = vpack.c.b16 %v3693, %v3692
        %v3845 = vpack.c.b16 %v3695, %v3694
        %v3846 = vpack.c.b16 %v3697, %v3696
        %v3847 = vpack.c.b16 %v3699, %v3698
        %v3848 = vpack.c.b16 %v3701, %v3700
        %v3849 = vpack.c.b16 %v3703, %v3702
        %v3850 = vpack.c.b16 %v3705, %v3704
        %v3851 = vpack.c.b16 %v3707, %v3706
        %v3852 = vpack.c.b16 %v3709, %v3708
        %v3853 = vpack.c.b16 %v3711, %v3710
        %v3854 = vpack.c.b16 %v3713, %v3712
        %v3855 = vpack.c.b16 %v3715, %v3714
        %v3856 = vpack.c.b16 %v3717, %v3716
        %v3857 = vpack.c.b16 %v3719, %v3718
        %v3858 = vpack.c.b16 %v3721, %v3720
        %v3859 = vpack.c.b16 %v3723, %v3722
        %v3860 = vpack.c.b16 %v3725, %v3724
        %v3861 = vpack.c.b16 %v3727, %v3726
        %v3862 = vpack.c.b16 %v3729, %v3728
        %v3863 = vpack.c.b16 %v3731, %v3730
        %v3864 = vpack.c.b16 %v3733, %v3732
        %v3865 = vpack.c.b16 %v3735, %v3734
        %v3866 = vpack.c.b16 %v3737, %v3736
        %v3867 = vpack.c.b16 %v3739, %v3738
        %3996 = vst [vmem:[%s269] sm:$0xff] %v3740
        %3997 = vst [vmem:[%s269 + $0x8] sm:$0xff] %v3741
        %3998 = vst [vmem:[%s269 + $0x10] sm:$0xff] %v3742
        %3999 = vst [vmem:[%s269 + $0x18] sm:$0xff] %v3743
        %4000 = vst [vmem:[%s269 + $0x20] sm:$0xff] %v3744
        %4001 = vst [vmem:[%s269 + $0x28] sm:$0xff] %v3745
        %4002 = vst [vmem:[%s269 + $0x30] sm:$0xff] %v3746
        %4003 = vst [vmem:[%s269 + $0x38] sm:$0xff] %v3747
        %4004 = vst [vmem:[%s269 + $0x40] sm:$0xff] %v3748
        %4005 = vst [vmem:[%s269 + $0x48] sm:$0xff] %v3749
        %4006 = vst [vmem:[%s269 + $0x50] sm:$0xff] %v3750
        %4007 = vst [vmem:[%s269 + $0x58] sm:$0xff] %v3751
        %4008 = vst [vmem:[%s269 + $0x60] sm:$0xff] %v3752
        %4009 = vst [vmem:[%s269 + $0x68] sm:$0xff] %v3753
        %4010 = vst [vmem:[%s269 + $0x70] sm:$0xff] %v3754
        %4011 = vst [vmem:[%s269 + $0x78] sm:$0xff] %v3755
        %4012 = vst [vmem:[%s269 + $0x80] sm:$0xff] %v3756
        %4013 = vst [vmem:[%s269 + $0x88] sm:$0xff] %v3757
        %4014 = vst [vmem:[%s269 + $0x90] sm:$0xff] %v3758
        %4015 = vst [vmem:[%s269 + $0x98] sm:$0xff] %v3759
        %4016 = vst [vmem:[%s269 + $0xa0] sm:$0xff] %v3760
        %4017 = vst [vmem:[%s269 + $0xa8] sm:$0xff] %v3761
        %4018 = vst [vmem:[%s269 + $0xb0] sm:$0xff] %v3762
        %4019 = vst [vmem:[%s269 + $0xb8] sm:$0xff] %v3763
        %4020 = vst [vmem:[%s269 + $0xc0] sm:$0xff] %v3764
        %4021 = vst [vmem:[%s269 + $0xc8] sm:$0xff] %v3765
        %4022 = vst [vmem:[%s269 + $0xd0] sm:$0xff] %v3766
        %4023 = vst [vmem:[%s269 + $0xd8] sm:$0xff] %v3767
        %4024 = vst [vmem:[%s269 + $0xe0] sm:$0xff] %v3768
        %4025 = vst [vmem:[%s269 + $0xe8] sm:$0xff] %v3769
        %4026 = vst [vmem:[%s269 + $0xf0] sm:$0xff] %v3770
        %4027 = vst [vmem:[%s269 + $0xf8] sm:$0xff] %v3771
        %4028 = vst [vmem:[%s269 + $0x100] sm:$0xff] %v3772
        %4029 = vst [vmem:[%s269 + $0x108] sm:$0xff] %v3773
        %4030 = vst [vmem:[%s269 + $0x110] sm:$0xff] %v3774
        %4031 = vst [vmem:[%s269 + $0x118] sm:$0xff] %v3775
        %4032 = vst [vmem:[%s269 + $0x120] sm:$0xff] %v3776
        %4033 = vst [vmem:[%s269 + $0x128] sm:$0xff] %v3777
        %4034 = vst [vmem:[%s269 + $0x130] sm:$0xff] %v3778
        %4035 = vst [vmem:[%s269 + $0x138] sm:$0xff] %v3779
        %4036 = vst [vmem:[%s269 + $0x140] sm:$0xff] %v3780
        %4037 = vst [vmem:[%s269 + $0x148] sm:$0xff] %v3781
        %4038 = vst [vmem:[%s269 + $0x150] sm:$0xff] %v3782
        %4039 = vst [vmem:[%s269 + $0x158] sm:$0xff] %v3783
        %4040 = vst [vmem:[%s269 + $0x160] sm:$0xff] %v3784
        %4041 = vst [vmem:[%s269 + $0x168] sm:$0xff] %v3785
        %4042 = vst [vmem:[%s269 + $0x170] sm:$0xff] %v3786
        %4043 = vst [vmem:[%s269 + $0x178] sm:$0xff] %v3787
        %4044 = vst [vmem:[%s269 + $0x180] sm:$0xff] %v3788
        %4045 = vst [vmem:[%s269 + $0x188] sm:$0xff] %v3789
        %4046 = vst [vmem:[%s269 + $0x190] sm:$0xff] %v3790
        %4047 = vst [vmem:[%s269 + $0x198] sm:$0xff] %v3791
        %4048 = vst [vmem:[%s269 + $0x1a0] sm:$0xff] %v3792
        %4049 = vst [vmem:[%s269 + $0x1a8] sm:$0xff] %v3793
        %4050 = vst [vmem:[%s269 + $0x1b0] sm:$0xff] %v3794
        %4051 = vst [vmem:[%s269 + $0x1b8] sm:$0xff] %v3795
        %4052 = vst [vmem:[%s269 + $0x1c0] sm:$0xff] %v3796
        %4053 = vst [vmem:[%s269 + $0x1c8] sm:$0xff] %v3797
        %4054 = vst [vmem:[%s269 + $0x1d0] sm:$0xff] %v3798
        %4055 = vst [vmem:[%s269 + $0x1d8] sm:$0xff] %v3799
        %4056 = vst [vmem:[%s269 + $0x1e0] sm:$0xff] %v3800
        %4057 = vst [vmem:[%s269 + $0x1e8] sm:$0xff] %v3801
        %4058 = vst [vmem:[%s269 + $0x1f0] sm:$0xff] %v3802
        %4059 = vst [vmem:[%s269 + $0x1f8] sm:$0xff] %v3803
        %4060 = vst [vmem:[%s269 + $0x200] sm:$0xff] %v3804
        %4061 = vst [vmem:[%s269 + $0x208] sm:$0xff] %v3805
        %4062 = vst [vmem:[%s269 + $0x210] sm:$0xff] %v3806
        %4063 = vst [vmem:[%s269 + $0x218] sm:$0xff] %v3807
        %4064 = vst [vmem:[%s269 + $0x220] sm:$0xff] %v3808
        %4065 = vst [vmem:[%s269 + $0x228] sm:$0xff] %v3809
        %4066 = vst [vmem:[%s269 + $0x230] sm:$0xff] %v3810
        %4067 = vst [vmem:[%s269 + $0x238] sm:$0xff] %v3811
        %4068 = vst [vmem:[%s269 + $0x240] sm:$0xff] %v3812
        %4069 = vst [vmem:[%s269 + $0x248] sm:$0xff] %v3813
        %4070 = vst [vmem:[%s269 + $0x250] sm:$0xff] %v3814
        %4071 = vst [vmem:[%s269 + $0x258] sm:$0xff] %v3815
        %4072 = vst [vmem:[%s269 + $0x260] sm:$0xff] %v3816
        %4073 = vst [vmem:[%s269 + $0x268] sm:$0xff] %v3817
        %4074 = vst [vmem:[%s269 + $0x270] sm:$0xff] %v3818
        %4075 = vst [vmem:[%s269 + $0x278] sm:$0xff] %v3819
        %4076 = vst [vmem:[%s269 + $0x280] sm:$0xff] %v3820
        %4077 = vst [vmem:[%s269 + $0x288] sm:$0xff] %v3821
        %4078 = vst [vmem:[%s269 + $0x290] sm:$0xff] %v3822
        %4079 = vst [vmem:[%s269 + $0x298] sm:$0xff] %v3823
        %4080 = vst [vmem:[%s269 + $0x2a0] sm:$0xff] %v3824
        %4081 = vst [vmem:[%s269 + $0x2a8] sm:$0xff] %v3825
        %4082 = vst [vmem:[%s269 + $0x2b0] sm:$0xff] %v3826
        %4083 = vst [vmem:[%s269 + $0x2b8] sm:$0xff] %v3827
        %4084 = vst [vmem:[%s269 + $0x2c0] sm:$0xff] %v3828
        %4085 = vst [vmem:[%s269 + $0x2c8] sm:$0xff] %v3829
        %4086 = vst [vmem:[%s269 + $0x2d0] sm:$0xff] %v3830
        %4087 = vst [vmem:[%s269 + $0x2d8] sm:$0xff] %v3831
        %4088 = vst [vmem:[%s269 + $0x2e0] sm:$0xff] %v3832
        %4089 = vst [vmem:[%s269 + $0x2e8] sm:$0xff] %v3833
        %4090 = vst [vmem:[%s269 + $0x2f0] sm:$0xff] %v3834
        %4091 = vst [vmem:[%s269 + $0x2f8] sm:$0xff] %v3835
        %4092 = vst [vmem:[%s269 + $0x300] sm:$0xff] %v3836
        %4093 = vst [vmem:[%s269 + $0x308] sm:$0xff] %v3837
        %4094 = vst [vmem:[%s269 + $0x310] sm:$0xff] %v3838
        %4095 = vst [vmem:[%s269 + $0x318] sm:$0xff] %v3839
        %4096 = vst [vmem:[%s269 + $0x320] sm:$0xff] %v3840
        %4097 = vst [vmem:[%s269 + $0x328] sm:$0xff] %v3841
        %4098 = vst [vmem:[%s269 + $0x330] sm:$0xff] %v3842
        %4099 = vst [vmem:[%s269 + $0x338] sm:$0xff] %v3843
        %4100 = vst [vmem:[%s269 + $0x340] sm:$0xff] %v3844
        %4101 = vst [vmem:[%s269 + $0x348] sm:$0xff] %v3845
        %4102 = vst [vmem:[%s269 + $0x350] sm:$0xff] %v3846
        %4103 = vst [vmem:[%s269 + $0x358] sm:$0xff] %v3847
        %4104 = vst [vmem:[%s269 + $0x360] sm:$0xff] %v3848
        %4105 = vst [vmem:[%s269 + $0x368] sm:$0xff] %v3849
        %4106 = vst [vmem:[%s269 + $0x370] sm:$0xff] %v3850
        %4107 = vst [vmem:[%s269 + $0x378] sm:$0xff] %v3851
        %4108 = vst [vmem:[%s269 + $0x380] sm:$0xff] %v3852
        %4109 = vst [vmem:[%s269 + $0x388] sm:$0xff] %v3853
        %4110 = vst [vmem:[%s269 + $0x390] sm:$0xff] %v3854
        %4111 = vst [vmem:[%s269 + $0x398] sm:$0xff] %v3855
        %4112 = vst [vmem:[%s269 + $0x3a0] sm:$0xff] %v3856
        %4113 = vst [vmem:[%s269 + $0x3a8] sm:$0xff] %v3857
        %4114 = vst [vmem:[%s269 + $0x3b0] sm:$0xff] %v3858
        %4115 = vst [vmem:[%s269 + $0x3b8] sm:$0xff] %v3859
        %4116 = vst [vmem:[%s269 + $0x3c0] sm:$0xff] %v3860
        %4117 = vst [vmem:[%s269 + $0x3c8] sm:$0xff] %v3861
        %4118 = vst [vmem:[%s269 + $0x3d0] sm:$0xff] %v3862
        %4119 = vst [vmem:[%s269 + $0x3d8] sm:$0xff] %v3863
        %4120 = vst [vmem:[%s269 + $0x3e0] sm:$0xff] %v3864
        %4121 = vst [vmem:[%s269 + $0x3e8] sm:$0xff] %v3865
        %4122 = vst [vmem:[%s269 + $0x3f0] sm:$0xff] %v3866
        %4123 = vst [vmem:[%s269 + $0x3f8] sm:$0xff] %v3867
        %s4124 = sand.u32 %s175, 1
        %s4125 = scalar_lea.sflag [#allocation3], %s4124
        %s4126 = sand.u32 %s175, 1
        %s4127 = smul.addr %s4126, 1024
        %s4128 = scalar_lea.vmem [#allocation2], %s4127
        // Predicated region
        $region45: #{tpu_custom_call.1} parent=43 // pred_check
          %p4129 = pneg %p185
        $region46: #{tpu_custom_call.1} parent=43 // pred_check_branch
          %4131 = sbr.rel (%p4129) target = $region48
        $region47: #{tpu_custom_call.1} parent=43 // pred_region
          %s4132 = smul.u32 2, %s25
          %s4134 = ssub.s32 16384, 16384
          %4135 = vsyncadd %s4125, %s4134
          %s4136 = smul.addr %s24, 256
          %s4137 = sadd.s32 %s4132, %s4136
          %s4138 = smul.addr %s4137, 64
          %s4139 = scalar_lea.hbm %s6, %s4138
          %s4140 = sshll.u32 %s4128, 4
          %s4141 = int_to_ptr.vmem [resolvable:$true] %s4140
          %4146 = dma.vmem_to_hbm [thread:$0]  %s4141, 16384, %s4139, %s4125, 128, 128, 8
        $region48: #{tpu_custom_call.1} parent=43 // pred_fallthru
          _
      $region44: #{tpu_custom_call.1} parent=5 // pred_fallthru
        _
      %p4147 = scmp.le.s32.totalorder 2, %s15
      // Predicated region
      $region49: #{tpu_custom_call.1} parent=5 // pred_check
        %p4148 = pneg %p4147
      $region50: #{tpu_custom_call.1} parent=5 // pred_check_branch
        %4150 = sbr.rel (%p4148) target = $region52
      $region51: #{tpu_custom_call.1} parent=5 // pred_region
        %s4151 = ssub.s32 %s15, 2
        // Predicated region
        $region53: #{tpu_custom_call.1} parent=51 // pred_check
          %p4152 = pneg %p191
        $region54: #{tpu_custom_call.1} parent=51 // pred_check_branch
          %4154 = sbr.rel (%p4152) target = $region56
        $region55: #{tpu_custom_call.1} parent=51 // pred_region
          %s4155 = sand.u32 %s176, 1
          %s4156 = scalar_lea.sflag [#allocation3], %s4155
          %s4157 = sand.u32 %s176, 1
          %s4158 = smul.addr %s4157, 1024
          %s4159 = scalar_lea.vmem [#allocation2], %s4158
          %4160 = dma.done %s4156, 16384
        $region56: #{tpu_custom_call.1} parent=51 // pred_fallthru
          _
      $region52: #{tpu_custom_call.1} parent=5 // pred_fallthru
        _
    $region6: #{tpu_custom_call.1} parent=1 // loop_footer
      %s19 = sadd.s32 1, %s15
    $region7: #{tpu_custom_call.1} parent=1 // loop_footer_branch
      %14 = sbr.rel target = $region3
    $region8: #{tpu_custom_call.1} parent=1 // loop_exit
      _
    %4161 = vsyncpa [#allocation3], 1
    %s4162 = scalar_lea.sflag [#allocation3], 1
    %4163 = vsyncpa %s4162, 1

</llo_original>
